<compile_context>
chip_gen: v6e
topology: v6e:2x2x1
jax: 0.10.0
libtpu: 0.0.40
codegen_flags: <defaults>
</compile_context>

<pallas_src>
import functools
import numpy as np
import jax
import jax.numpy as jnp
from jax.experimental import pallas as pl
from jax.experimental.pallas import tpu as pltpu


# ----------------------------------------------------------------------------
# Pallas kernel 1: tiled matmul (bf16 in, f32 accumulate) with fused epilogue
# (bias [+ residual] [+ ReLU] + cast) in the last-k step.
# ----------------------------------------------------------------------------
def _mm_kernel(a_ref, w_ref, bias_ref, o_ref, acc_ref, *, relu):
    @pl.when(pl.program_id(2) == 0)
    def _():
        acc_ref[...] = jnp.zeros_like(acc_ref)

    acc_ref[...] += jnp.dot(a_ref[...], w_ref[...],
                            preferred_element_type=jnp.float32)

    @pl.when(pl.program_id(2) == pl.num_programs(2) - 1)
    def _():
        y = acc_ref[...] + bias_ref[...]
        if relu:
            y = jnp.maximum(y, 0.0)
        o_ref[...] = y.astype(o_ref.dtype)


def _mm_res_kernel(a_ref, w_ref, bias_ref, res_ref, o_ref, acc_ref, *, relu):
    @pl.when(pl.program_id(2) == 0)
    def _():
        acc_ref[...] = jnp.zeros_like(acc_ref)

    acc_ref[...] += jnp.dot(a_ref[...], w_ref[...],
                            preferred_element_type=jnp.float32)

    @pl.when(pl.program_id(2) == pl.num_programs(2) - 1)
    def _():
        y = acc_ref[...] + bias_ref[...] + res_ref[...]
        if relu:
            y = jnp.maximum(y, 0.0)
        o_ref[...] = y.astype(o_ref.dtype)


def _round_up(x, m):
    return (x + m - 1) // m * m


def _pad2(x, r, c):
    R, C = x.shape
    if R == r and C == c:
        return x
    return jnp.pad(x, ((0, r - R), (0, c - C)))


def fused_matmul(a, w, bias, *, relu=False, residual=None):
    """(M,K) @ (K,N) + bias [+ residual] [-> ReLU], f32 accumulate, bf16 operands."""
    M, K = a.shape
    Kw, N = w.shape
    assert K == Kw
    # Shape-adaptive tiles (sublane mult of 16 for bf16 packing, lane mult of 128).
    tm = min(_round_up(M, 16), 128)
    tn = min(_round_up(N, 128), 256)
    tk = min(_round_up(K, 128), 512)
    Mp, Np, Kp = _round_up(M, tm), _round_up(N, tn), _round_up(K, tk)

    a_p = _pad2(a.astype(jnp.bfloat16), Mp, Kp)
    w_p = _pad2(w.astype(jnp.bfloat16), Kp, Np)
    bias_p = _pad2(bias.reshape(1, -1).astype(jnp.float32), 1, Np)

    a_spec = pl.BlockSpec((tm, tk), lambda i, j, k: (i, k))
    w_spec = pl.BlockSpec((tk, tn), lambda i, j, k: (k, j))
    b_spec = pl.BlockSpec((1, tn), lambda i, j, k: (0, j))
    o_spec = pl.BlockSpec((tm, tn), lambda i, j, k: (i, j))
    grid = (Mp // tm, Np // tn, Kp // tk)

    if residual is None:
        kernel = functools.partial(_mm_kernel, relu=relu)
        in_specs = [a_spec, w_spec, b_spec]
        operands = (a_p, w_p, bias_p)
    else:
        r_p = _pad2(residual.astype(jnp.float32), Mp, Np)
        kernel = functools.partial(_mm_res_kernel, relu=relu)
        in_specs = [a_spec, w_spec, b_spec,
                    pl.BlockSpec((tm, tn), lambda i, j, k: (i, j))]
        operands = (a_p, w_p, bias_p, r_p)

    out = pl.pallas_call(
        kernel,
        out_shape=jax.ShapeDtypeStruct((Mp, Np), jnp.float32),
        grid_spec=pltpu.PrefetchScalarGridSpec(
            num_scalar_prefetch=0,
            grid=grid,
            in_specs=in_specs,
            out_specs=o_spec,
            scratch_shapes=[pltpu.VMEM((tm, tn), jnp.float32)]),
        compiler_params=pltpu.CompilerParams(
            dimension_semantics=("parallel", "parallel", "arbitrary")),
    )(*operands)
    return out[:M, :N]


# ----------------------------------------------------------------------------
# Pallas kernel 2: fused complex multi-head attention.  One grid program per
# batch element, all heads in one block.  Complex parts are packed along the
# last axis so each head needs ONE score dot and ONE PV dot:
#   S = [qr|qi] @ [kr|ki]^T * scale  (= Re(QK^H)/sqrt(d));  P = softmax(S);
#   [out_r|out_i] = P @ [vr|vi]
# ----------------------------------------------------------------------------
def _attn_kernel(q_ref, k_ref, v_ref, o_ref, *, scale):
    q = q_ref[...]          # (H, L, 2*hd) bf16
    k = k_ref[...]
    v = v_ref[...]
    s = jnp.einsum('hqd,hkd->hqk', q, k,
                   preferred_element_type=jnp.float32) * scale
    m = jnp.max(s, axis=-1, keepdims=True)
    p = jnp.exp(s - m)
    p = p * pl.reciprocal(jnp.sum(p, axis=-1, keepdims=True), approx=True)
    o_ref[...] = jnp.einsum('hqk,hkd->hqd', p.astype(v.dtype), v,
                            preferred_element_type=jnp.float32)
    # TODO(synk): attn_mask (causal) and the `rescale`/`squared_norm`/`minus_im`
    # score variants of the unavailable reference encoder are not applied here.


def pallas_attention(q, k, v, num_heads, scale):
    NH, L, D2 = q.shape          # NH = batch * heads, D2 = 2*head_dim
    H = num_heads
    Nb = NH // H
    spec = pl.BlockSpec((H, L, D2), lambda n: (n, 0, 0))
    kernel = functools.partial(_attn_kernel, scale=scale)
    return pl.pallas_call(
        kernel,
        out_shape=jax.ShapeDtypeStruct((NH, L, D2), jnp.float32),
        grid_spec=pltpu.PrefetchScalarGridSpec(
            num_scalar_prefetch=0,
            grid=(Nb,),
            in_specs=[spec, spec, spec],
            out_specs=spec),
        compiler_params=pltpu.CompilerParams(dimension_semantics=("parallel",)),
    )(q, k, v)


# ----------------------------------------------------------------------------
# Complex building blocks on "ab-concatenated" activations ([real || imag]).
# ----------------------------------------------------------------------------
def complex_linear_ab(ab, Wblk, bblk, *, relu=False, residual=None):
    """ab: (..., 2*fin); Wblk: (2*fin, 2*fout) = [[Wr,Wi],[-Wi,Wr]] (prebuilt, bf16)."""
    lead = ab.shape[:-1]
    fout2 = Wblk.shape[1]
    x = ab.reshape(-1, ab.shape[-1])
    res = residual.reshape(-1, fout2) if residual is not None else None
    y = fused_matmul(x, Wblk, bblk, relu=relu, residual=res)
    return y.reshape(*lead, fout2)


def _im2col_nwc(x, k):
    """x: (B, W, C) -> (B*Wout, k*C) patches (valid conv, stride 1)."""
    B, W, C = x.shape
    Wout = W - k + 1
    idx = jnp.arange(Wout)[:, None] + jnp.arange(k)[None, :]   # (Wout, k)
    patches = x[:, idx, :]                                     # (B, Wout, k, C)
    return patches.reshape(B * Wout, k * C), Wout


def conv_block_ab(ab, Wblk, bblk, k):
    """ab: (B, W, 2*Cin) NWC concatenated; Wblk prebuilt for the (k, part, c) order."""
    B = ab.shape[0]
    patches, Wout = _im2col_nwc(ab, k)
    y = fused_matmul(patches, Wblk, bblk)        # (B*Wout, 2*Cout)
    return y.reshape(B, Wout, -1)


def batchnorm_ab(x, gamma, beta, eps=1e-5):
    # TODO(synk): reference ComplexBatchNorm1d may do complex whitening / running
    # stats; naive per-part BN with batch statistics is used here.
    mean = jnp.mean(x, axis=(0, 1), keepdims=True)
    var = jnp.var(x, axis=(0, 1), keepdims=True)
    g2 = jnp.concatenate([gamma, gamma])
    b2 = jnp.concatenate([beta, beta])
    return (x - mean) / jnp.sqrt(var + eps) * g2 + b2


def maxpool_nwc(x, k=2, s=2):
    B, W, C = x.shape
    Wout = (W - k) // s + 1
    return jnp.max(x[:, :Wout * s, :].reshape(B, Wout, s, C), axis=2)


def layernorm(x, g, b, eps=1e-5):
    m = jnp.mean(x, axis=-1, keepdims=True)
    v = jnp.var(x, axis=-1, keepdims=True)
    return (x - m) / jnp.sqrt(v + eps) * g + b


def complex_layernorm(ab, g, b, eps=1e-5):
    """Per-part LayerNorm with shared gamma/beta on [real || imag] activations."""
    E = g.shape[0]
    x = ab.reshape(*ab.shape[:-1], 2, E)
    m = jnp.mean(x, axis=-1, keepdims=True)
    v = jnp.var(x, axis=-1, keepdims=True)
    xn = (x - m) / jnp.sqrt(v + eps) * g + b
    return xn.reshape(ab.shape)


def complex_mha_ab(ab_ln, lp, num_heads, residual):
    L, N, twoE = ab_ln.shape
    E = twoE // 2
    hd = E // num_heads

    # Fused QKV projection: one (M, 2E) @ (2E, 6E) matmul.
    qkv = complex_linear_ab(ab_ln, lp['Wqkv'], lp['bqkv'])     # (L, N, 6E)
    qr, qi, kr, ki, vr, vi = [qkv[..., i * E:(i + 1) * E] for i in range(6)]

    def pack(xr, xi):   # (L, N, E) x2 -> (N*H, L, 2*hd) bf16, [real | imag] per head
        x = jnp.concatenate([xr.reshape(L, N, num_heads, hd),
                             xi.reshape(L, N, num_heads, hd)], axis=-1)
        return jnp.transpose(x, (1, 2, 0, 3)).reshape(
            N * num_heads, L, 2 * hd).astype(jnp.bfloat16)

    o = pallas_attention(pack(qr, qi), pack(kr, ki), pack(vr, vi),
                         num_heads, scale=1.0 / float(np.sqrt(hd)))
    o = o.reshape(N, num_heads, L, 2 * hd)
    o_r = jnp.transpose(o[..., :hd], (2, 0, 1, 3)).reshape(L, N, E)
    o_i = jnp.transpose(o[..., hd:], (2, 0, 1, 3)).reshape(L, N, E)
    o_ab = jnp.concatenate([o_r, o_i], axis=-1)                 # (L, N, 2E)

    # Output projection with the residual add fused into the epilogue.
    return complex_linear_ab(o_ab, lp['Wo'], lp['bo'], residual=residual)


# ----------------------------------------------------------------------------
# Model config / parameters (block weights prebuilt in bf16) / forward
# ----------------------------------------------------------------------------
CONV_CFG = [(1, 16, 6), (16, 32, 3), (32, 64, 3), (64, 64, 3), (64, 128, 3)]


def init_params(key, d_a, embed_dim, hidden, out_dim, n_layers):
    keys = iter(jax.random.split(key, 512))

    def rnd(fan_in, shape):
        return jax.random.normal(next(keys), shape, jnp.float32) / np.sqrt(fan_in)

    def clin_block(fi, fo):
        Wr, Wi = rnd(fi, (fi, fo)), rnd(fi, (fi, fo))
        W = jnp.concatenate([jnp.concatenate([Wr, Wi], 1),
                             jnp.concatenate([-Wi, Wr], 1)], 0).astype(jnp.bfloat16)
        return W, jnp.zeros((2 * fo,), jnp.float32)

    p = {'conv': []}
    for (cin, cout, k) in CONV_CFG:
        Wr, Wi = rnd(cin * k, (cout, cin, k)), rnd(cin * k, (cout, cin, k))
        Wr_t, Wi_t = jnp.transpose(Wr, (2, 1, 0)), jnp.transpose(Wi, (2, 1, 0))
        top = jnp.concatenate([Wr_t, Wi_t], -1)        # rows fed by real patches
        bot = jnp.concatenate([-Wi_t, Wr_t], -1)       # rows fed by imag patches
        Wblk = jnp.stack([top, bot], 1).reshape(k * 2 * cin, 2 * cout).astype(jnp.bfloat16)
        p['conv'].append(dict(
            W=Wblk, b=jnp.zeros((2 * cout,), jnp.float32),
            bn_g=jnp.ones((cout,), jnp.float32), bn_b=jnp.zeros((cout,), jnp.float32)))

    p['proj_W'], p['proj_b'] = clin_block(d_a, embed_dim)
    ff = 4 * embed_dim
    p['layers'] = []
    for _ in range(n_layers):
        Wq, bq = clin_block(embed_dim, embed_dim)
        Wk, bk = clin_block(embed_dim, embed_dim)
        Wv, bv = clin_block(embed_dim, embed_dim)
        Wo, bo = clin_block(embed_dim, embed_dim)
        W1, b1 = clin_block(embed_dim, ff)
        W2, b2 = clin_block(ff, embed_dim)
        p['layers'].append(dict(
            ln1_g=jnp.ones((embed_dim,), jnp.float32),
            ln1_b=jnp.zeros((embed_dim,), jnp.float32),
            ln2_g=jnp.ones((embed_dim,), jnp.float32),
            ln2_b=jnp.zeros((embed_dim,), jnp.float32),
            Wqkv=jnp.concatenate([Wq, Wk, Wv], axis=1),      # (2E, 6E)
            bqkv=jnp.concatenate([bq, bk, bv]),
            Wo=Wo, bo=bo, W1=W1, b1=b1, W2=W2, b2=b2))

    p['norm_g'] = jnp.ones((2 * embed_dim,), jnp.float32)
    p['norm_b'] = jnp.zeros((2 * embed_dim,), jnp.float32)
    p['fc1_W'] = rnd(2 * embed_dim, (2 * embed_dim, hidden)).astype(jnp.bfloat16)
    p['fc1_b'] = jnp.zeros((hidden,), jnp.float32)
    p['fc2_W'] = rnd(hidden, (hidden, out_dim)).astype(jnp.bfloat16)
    p['fc2_b'] = jnp.zeros((out_dim,), jnp.float32)
    return p


def forward(params, x, *, num_heads):
    """x: (seq_len L, batch N, n_features).  Returns (L, N, output_dim)."""
    L, N, F = x.shape
    half = F // 2
    # NWC layout with concatenated [real || imag] channels.
    a = x[:, :, :half].reshape(L * N, half, 1)
    b = x[:, :, half:].reshape(L * N, half, 1)
    ab = jnp.concatenate([a, b], axis=-1)                    # (B, W, 2)

    # conv front-end: 5 x (ComplexConv1d -> ComplexBN -> ComplexReLU -> ComplexMaxPool(2,2))
    for cp, (cin, cout, k) in zip(params['conv'], CONV_CFG):
        ab = conv_block_ab(ab, cp['W'], cp['b'], k)
        ab = batchnorm_ab(ab, cp['bn_g'], cp['bn_b'])
        ab = jnp.maximum(ab, 0.0)
        ab = maxpool_nwc(ab)

    # ComplexFlatten (channel-major per part, like PyTorch NCW flatten)
    B, Wf, C2 = ab.shape
    C = C2 // 2
    ar = jnp.transpose(ab[:, :, :C], (0, 2, 1)).reshape(B, C * Wf)
    ai = jnp.transpose(ab[:, :, C:], (0, 2, 1)).reshape(B, C * Wf)
    ab = jnp.concatenate([ar, ai], axis=-1).reshape(L, N, -1)   # (L, N, 2*d_a)

    # ComplexLinear projection to embed_dim
    ab = complex_linear_ab(ab, params['proj_W'], params['proj_b'])   # (L, N, 2E)

    # pre-LN complex transformer encoder blocks (dropout = inference no-op)
    for lp in params['layers']:
        res = ab
        abn = complex_layernorm(ab, lp['ln1_g'], lp['ln1_b'])
        ab = complex_mha_ab(abn, lp, num_heads, residual=res)       # residual fused

        res = ab
        abn = complex_layernorm(ab, lp['ln2_g'], lp['ln2_b'])
        h = complex_linear_ab(abn, lp['W1'], lp['b1'], relu=True)   # ReLU fused
        ab = complex_linear_ab(h, lp['W2'], lp['b2'], residual=res)  # residual fused

    # ab is already torch.cat([h_as, h_bs], dim=-1)
    h = layernorm(ab, params['norm_g'], params['norm_b'])           # pre_ln=True path
    h2 = h.reshape(-1, h.shape[-1])
    h2 = fused_matmul(h2, params['fc1_W'], params['fc1_b'], relu=True)  # bias+ReLU fused
    out = fused_matmul(h2, params['fc2_W'], params['fc2_b'])
    return out.reshape(L, N, -1)


if __name__ == "__main__":
    # Small shapes consistent with the module's conv stack (input half-width must
    # survive 5 conv+pool stages -> use 100; d_a = 128 channels * final width 1).
    L, N = 8, 2
    input_half = 100
    n_features = 2 * input_half
    embed_dim, num_heads, hidden, output_dim, n_layers = 32, 4, 32, 16, 2
    d_a = 128

    key = jax.random.PRNGKey(0)
    pkey, xkey = jax.random.split(key)
    params = init_params(pkey, d_a, embed_dim, hidden, output_dim, n_layers)
    x = jax.random.normal(xkey, (L, N, n_features), jnp.float32)

    fwd = jax.jit(functools.partial(forward, num_heads=num_heads))
    y = fwd(params, x)
    jax.block_until_ready(y)
    assert y.shape == (L, N, output_dim)
    print("KERNEL_OK")
</pallas_src>

<mosaic_0001>
module attributes {stable_mosaic.version = 11 : i64} {
  func.func @_mm_kernel(%arg0: i32, %arg1: i32, %arg2: i32, %arg3: memref<128x128xbf16, #tpu.memory_space<vmem>>, %arg4: memref<128x128xbf16, #tpu.memory_space<vmem>>, %arg5: memref<1x128xf32, #tpu.memory_space<vmem>>, %arg6: memref<128x128xf32, #tpu.memory_space<vmem>>, %arg7: memref<128x128xf32, #tpu.memory_space<vmem>>) attributes {dimension_semantics = [#tpu.dimension_semantics<parallel>, #tpu.dimension_semantics<parallel>, #tpu.dimension_semantics<arbitrary>], iteration_bounds = array<i64: 12, 1, 1>, scalar_prefetch = 0 : i64, scratch_operands = 1 : i64, tpu.core_type = #tpu.core_type<tc>, window_params = [{transform_indices = @transform_0, window_bounds = array<i64: 128, 128>}, {transform_indices = @transform_1, window_bounds = array<i64: 128, 128>}, {transform_indices = @transform_2, window_bounds = array<i64: 1, 128>}, {transform_indices = @transform_3, window_bounds = array<i64: 128, 128>}]} {
    %c0_i32 = arith.constant 0 : i32
    %0 = arith.cmpi eq, %arg2, %c0_i32 : i32
    %1 = arith.extui %0 : i1 to i32
    %c0_i32_0 = arith.constant 0 : i32
    %2 = arith.cmpi ne, %1, %c0_i32_0 : i32
    scf.if %2 {
      %cst_10 = arith.constant 0.000000e+00 : f32
      %12 = vector.broadcast %cst_10 : f32 to vector<128x128xf32>
      %c0_11 = arith.constant 0 : index
      %c0_12 = arith.constant 0 : index
      %13 = vector.load %arg7[%c0_11, %c0_12] : memref<128x128xf32, #tpu.memory_space<vmem>>, vector<128x128xf32>
      tpu.vector_store %arg7[%c0_11, %c0_12], %12 {strides = array<i32>} : memref<128x128xf32, #tpu.memory_space<vmem>>, vector<128x128xf32>,
    } else {
    }
    %c0 = arith.constant 0 : index
    %c0_1 = arith.constant 0 : index
    %3 = vector.load %arg7[%c0, %c0_1] : memref<128x128xf32, #tpu.memory_space<vmem>>, vector<128x128xf32>
    %c0_2 = arith.constant 0 : index
    %c0_3 = arith.constant 0 : index
    %4 = vector.load %arg3[%c0_2, %c0_3] : memref<128x128xbf16, #tpu.memory_space<vmem>>, vector<128x128xbf16>
    %c0_4 = arith.constant 0 : index
    %c0_5 = arith.constant 0 : index
    %5 = vector.load %arg4[%c0_4, %c0_5] : memref<128x128xbf16, #tpu.memory_space<vmem>>, vector<128x128xbf16>
    %cst = arith.constant dense<0.000000e+00> : vector<128x128xf32>
    %6 = tpu.matmul %4, %5, %cst {dimension_numbers = #tpu.dot_dimension_numbers<[1], [0], [0], [1], [0, 0, 1, 1], [], []>} : vector<128x128xbf16>, vector<128x128xbf16>, vector<128x128xf32> -> vector<128x128xf32>
    %7 = arith.addf %3, %6 : vector<128x128xf32>
    %c0_6 = arith.constant 0 : index
    %c0_7 = arith.constant 0 : index
    %8 = vector.load %arg7[%c0_6, %c0_7] : memref<128x128xf32, #tpu.memory_space<vmem>>, vector<128x128xf32>
    tpu.vector_store %arg7[%c0_6, %c0_7], %7 {strides = array<i32>} : memref<128x128xf32, #tpu.memory_space<vmem>>, vector<128x128xf32>,
    %c0_i32_8 = arith.constant 0 : i32
    %9 = arith.cmpi eq, %arg2, %c0_i32_8 : i32
    %10 = arith.extui %9 : i1 to i32
    %c0_i32_9 = arith.constant 0 : i32
    %11 = arith.cmpi ne, %10, %c0_i32_9 : i32
    scf.if %11 {
      %c0_10 = arith.constant 0 : index
      %c0_11 = arith.constant 0 : index
      %12 = vector.load %arg7[%c0_10, %c0_11] : memref<128x128xf32, #tpu.memory_space<vmem>>, vector<128x128xf32>
      %c0_12 = arith.constant 0 : index
      %c0_13 = arith.constant 0 : index
      %13 = vector.load %arg5[%c0_12, %c0_13] : memref<1x128xf32, #tpu.memory_space<vmem>>, vector<1x128xf32>
      %14 = vector.broadcast %13 : vector<1x128xf32> to vector<128x128xf32>
      %15 = arith.addf %12, %14 : vector<128x128xf32>
      %c0_14 = arith.constant 0 : index
      %c0_15 = arith.constant 0 : index
      %16 = vector.load %arg6[%c0_14, %c0_15] : memref<128x128xf32, #tpu.memory_space<vmem>>, vector<128x128xf32>
      tpu.vector_store %arg6[%c0_14, %c0_15], %15 {strides = array<i32>} : memref<128x128xf32, #tpu.memory_space<vmem>>, vector<128x128xf32>,
    } else {
    }
    return
  }
  func.func @transform_0(%arg0: i32, %arg1: i32, %arg2: i32) -> (i32, i32) {
    %c0_i32 = arith.constant 0 : i32
    return %arg0, %arg2 : i32, i32
  }
  func.func @transform_1(%arg0: i32, %arg1: i32, %arg2: i32) -> (i32, i32) {
    %c0_i32 = arith.constant 0 : i32
    return %arg2, %arg1 : i32, i32
  }
  func.func @transform_2(%arg0: i32, %arg1: i32, %arg2: i32) -> (i32, i32) {
    %c0_i32 = arith.constant 0 : i32
    %c0_i32_0 = arith.constant 0 : i32
    return %c0_i32, %arg1 : i32, i32
  }
  func.func @transform_3(%arg0: i32, %arg1: i32, %arg2: i32) -> (i32, i32) {
    %c0_i32 = arith.constant 0 : i32
    return %arg0, %arg1 : i32, i32
  }
}

module attributes {stable_mosaic.version = 11 : i64} {
  func.func @_mm_kernel(%arg0: i32, %arg1: i32, %arg2: i32, %arg3: memref<128x128xbf16, #tpu.memory_space<vmem>>, %arg4: memref<128x128xbf16, #tpu.memory_space<vmem>>, %arg5: memref<1x128xf32, #tpu.memory_space<vmem>>, %arg6: memref<128x128xf32, #tpu.memory_space<vmem>>, %arg7: memref<128x128xf32, #tpu.memory_space<vmem>>) attributes {dimension_semantics = [#tpu.dimension_semantics<parallel>, #tpu.dimension_semantics<parallel>, #tpu.dimension_semantics<arbitrary>], iteration_bounds = array<i64: 6, 1, 1>, scalar_prefetch = 0 : i64, scratch_operands = 1 : i64, tpu.core_type = #tpu.core_type<tc>, window_params = [{transform_indices = @transform_0, window_bounds = array<i64: 128, 128>}, {transform_indices = @transform_1, window_bounds = array<i64: 128, 128>}, {transform_indices = @transform_2, window_bounds = array<i64: 1, 128>}, {transform_indices = @transform_3, window_bounds = array<i64: 128, 128>}]} {
    %c0_i32 = arith.constant 0 : i32
    %0 = arith.cmpi eq, %arg2, %c0_i32 : i32
    %1 = arith.extui %0 : i1 to i32
    %c0_i32_0 = arith.constant 0 : i32
    %2 = arith.cmpi ne, %1, %c0_i32_0 : i32
    scf.if %2 {
      %cst_10 = arith.constant 0.000000e+00 : f32
      %12 = vector.broadcast %cst_10 : f32 to vector<128x128xf32>
      %c0_11 = arith.constant 0 : index
      %c0_12 = arith.constant 0 : index
      %13 = vector.load %arg7[%c0_11, %c0_12] : memref<128x128xf32, #tpu.memory_space<vmem>>, vector<128x128xf32>
      tpu.vector_store %arg7[%c0_11, %c0_12], %12 {strides = array<i32>} : memref<128x128xf32, #tpu.memory_space<vmem>>, vector<128x128xf32>,
    } else {
    }
    %c0 = arith.constant 0 : index
    %c0_1 = arith.constant 0 : index
    %3 = vector.load %arg7[%c0, %c0_1] : memref<128x128xf32, #tpu.memory_space<vmem>>, vector<128x128xf32>
    %c0_2 = arith.constant 0 : index
    %c0_3 = arith.constant 0 : index
    %4 = vector.load %arg3[%c0_2, %c0_3] : memref<128x128xbf16, #tpu.memory_space<vmem>>, vector<128x128xbf16>
    %c0_4 = arith.constant 0 : index
    %c0_5 = arith.constant 0 : index
    %5 = vector.load %arg4[%c0_4, %c0_5] : memref<128x128xbf16, #tpu.memory_space<vmem>>, vector<128x128xbf16>
    %cst = arith.constant dense<0.000000e+00> : vector<128x128xf32>
    %6 = tpu.matmul %4, %5, %cst {dimension_numbers = #tpu.dot_dimension_numbers<[1], [0], [0], [1], [0, 0, 1, 1], [], []>} : vector<128x128xbf16>, vector<128x128xbf16>, vector<128x128xf32> -> vector<128x128xf32>
    %7 = arith.addf %3, %6 : vector<128x128xf32>
    %c0_6 = arith.constant 0 : index
    %c0_7 = arith.constant 0 : index
    %8 = vector.load %arg7[%c0_6, %c0_7] : memref<128x128xf32, #tpu.memory_space<vmem>>, vector<128x128xf32>
    tpu.vector_store %arg7[%c0_6, %c0_7], %7 {strides = array<i32>} : memref<128x128xf32, #tpu.memory_space<vmem>>, vector<128x128xf32>,
    %c0_i32_8 = arith.constant 0 : i32
    %9 = arith.cmpi eq, %arg2, %c0_i32_8 : i32
    %10 = arith.extui %9 : i1 to i32
    %c0_i32_9 = arith.constant 0 : i32
    %11 = arith.cmpi ne, %10, %c0_i32_9 : i32
    scf.if %11 {
      %c0_10 = arith.constant 0 : index
      %c0_11 = arith.constant 0 : index
      %12 = vector.load %arg7[%c0_10, %c0_11] : memref<128x128xf32, #tpu.memory_space<vmem>>, vector<128x128xf32>
      %c0_12 = arith.constant 0 : index
      %c0_13 = arith.constant 0 : index
      %13 = vector.load %arg5[%c0_12, %c0_13] : memref<1x128xf32, #tpu.memory_space<vmem>>, vector<1x128xf32>
      %14 = vector.broadcast %13 : vector<1x128xf32> to vector<128x128xf32>
      %15 = arith.addf %12, %14 : vector<128x128xf32>
      %c0_14 = arith.constant 0 : index
      %c0_15 = arith.constant 0 : index
      %16 = vector.load %arg6[%c0_14, %c0_15] : memref<128x128xf32, #tpu.memory_space<vmem>>, vector<128x128xf32>
      tpu.vector_store %arg6[%c0_14, %c0_15], %15 {strides = array<i32>} : memref<128x128xf32, #tpu.memory_space<vmem>>, vector<128x128xf32>,
    } else {
    }
    return
  }
  func.func @transform_0(%arg0: i32, %arg1: i32, %arg2: i32) -> (i32, i32) {
    %c0_i32 = arith.constant 0 : i32
    return %arg0, %arg2 : i32, i32
  }
  func.func @transform_1(%arg0: i32, %arg1: i32, %arg2: i32) -> (i32, i32) {
    %c0_i32 = arith.constant 0 : i32
    return %arg2, %arg1 : i32, i32
  }
  func.func @transform_2(%arg0: i32, %arg1: i32, %arg2: i32) -> (i32, i32) {
    %c0_i32 = arith.constant 0 : i32
    %c0_i32_0 = arith.constant 0 : i32
    return %c0_i32, %arg1 : i32, i32
  }
  func.func @transform_3(%arg0: i32, %arg1: i32, %arg2: i32) -> (i32, i32) {
    %c0_i32 = arith.constant 0 : i32
    return %arg0, %arg1 : i32, i32
  }
}

module attributes {stable_mosaic.version = 11 : i64} {
  func.func @_mm_kernel(%arg0: i32, %arg1: i32, %arg2: i32, %arg3: memref<128x256xbf16, #tpu.memory_space<vmem>>, %arg4: memref<256x128xbf16, #tpu.memory_space<vmem>>, %arg5: memref<1x128xf32, #tpu.memory_space<vmem>>, %arg6: memref<128x128xf32, #tpu.memory_space<vmem>>, %arg7: memref<128x128xf32, #tpu.memory_space<vmem>>) attributes {dimension_semantics = [#tpu.dimension_semantics<parallel>, #tpu.dimension_semantics<parallel>, #tpu.dimension_semantics<arbitrary>], iteration_bounds = array<i64: 3, 1, 1>, scalar_prefetch = 0 : i64, scratch_operands = 1 : i64, tpu.core_type = #tpu.core_type<tc>, window_params = [{transform_indices = @transform_0, window_bounds = array<i64: 128, 256>}, {transform_indices = @transform_1, window_bounds = array<i64: 256, 128>}, {transform_indices = @transform_2, window_bounds = array<i64: 1, 128>}, {transform_indices = @transform_3, window_bounds = array<i64: 128, 128>}]} {
    %c0_i32 = arith.constant 0 : i32
    %0 = arith.cmpi eq, %arg2, %c0_i32 : i32
    %1 = arith.extui %0 : i1 to i32
    %c0_i32_0 = arith.constant 0 : i32
    %2 = arith.cmpi ne, %1, %c0_i32_0 : i32
    scf.if %2 {
      %cst_10 = arith.constant 0.000000e+00 : f32
      %12 = vector.broadcast %cst_10 : f32 to vector<128x128xf32>
      %c0_11 = arith.constant 0 : index
      %c0_12 = arith.constant 0 : index
      %13 = vector.load %arg7[%c0_11, %c0_12] : memref<128x128xf32, #tpu.memory_space<vmem>>, vector<128x128xf32>
      tpu.vector_store %arg7[%c0_11, %c0_12], %12 {strides = array<i32>} : memref<128x128xf32, #tpu.memory_space<vmem>>, vector<128x128xf32>,
    } else {
    }
    %c0 = arith.constant 0 : index
    %c0_1 = arith.constant 0 : index
    %3 = vector.load %arg7[%c0, %c0_1] : memref<128x128xf32, #tpu.memory_space<vmem>>, vector<128x128xf32>
    %c0_2 = arith.constant 0 : index
    %c0_3 = arith.constant 0 : index
    %4 = vector.load %arg3[%c0_2, %c0_3] : memref<128x256xbf16, #tpu.memory_space<vmem>>, vector<128x256xbf16>
    %c0_4 = arith.constant 0 : index
    %c0_5 = arith.constant 0 : index
    %5 = vector.load %arg4[%c0_4, %c0_5] : memref<256x128xbf16, #tpu.memory_space<vmem>>, vector<256x128xbf16>
    %cst = arith.constant dense<0.000000e+00> : vector<128x128xf32>
    %6 = tpu.matmul %4, %5, %cst {dimension_numbers = #tpu.dot_dimension_numbers<[1], [0], [0], [1], [0, 0, 1, 1], [], []>} : vector<128x256xbf16>, vector<256x128xbf16>, vector<128x128xf32> -> vector<128x128xf32>
    %7 = arith.addf %3, %6 : vector<128x128xf32>
    %c0_6 = arith.constant 0 : index
    %c0_7 = arith.constant 0 : index
    %8 = vector.load %arg7[%c0_6, %c0_7] : memref<128x128xf32, #tpu.memory_space<vmem>>, vector<128x128xf32>
    tpu.vector_store %arg7[%c0_6, %c0_7], %7 {strides = array<i32>} : memref<128x128xf32, #tpu.memory_space<vmem>>, vector<128x128xf32>,
    %c0_i32_8 = arith.constant 0 : i32
    %9 = arith.cmpi eq, %arg2, %c0_i32_8 : i32
    %10 = arith.extui %9 : i1 to i32
    %c0_i32_9 = arith.constant 0 : i32
    %11 = arith.cmpi ne, %10, %c0_i32_9 : i32
    scf.if %11 {
      %c0_10 = arith.constant 0 : index
      %c0_11 = arith.constant 0 : index
      %12 = vector.load %arg7[%c0_10, %c0_11] : memref<128x128xf32, #tpu.memory_space<vmem>>, vector<128x128xf32>
      %c0_12 = arith.constant 0 : index
      %c0_13 = arith.constant 0 : index
      %13 = vector.load %arg5[%c0_12, %c0_13] : memref<1x128xf32, #tpu.memory_space<vmem>>, vector<1x128xf32>
      %14 = vector.broadcast %13 : vector<1x128xf32> to vector<128x128xf32>
      %15 = arith.addf %12, %14 : vector<128x128xf32>
      %c0_14 = arith.constant 0 : index
      %c0_15 = arith.constant 0 : index
      %16 = vector.load %arg6[%c0_14, %c0_15] : memref<128x128xf32, #tpu.memory_space<vmem>>, vector<128x128xf32>
      tpu.vector_store %arg6[%c0_14, %c0_15], %15 {strides = array<i32>} : memref<128x128xf32, #tpu.memory_space<vmem>>, vector<128x128xf32>,
    } else {
    }
    return
  }
  func.func @transform_0(%arg0: i32, %arg1: i32, %arg2: i32) -> (i32, i32) {
    %c0_i32 = arith.constant 0 : i32
    return %arg0, %arg2 : i32, i32
  }
  func.func @transform_1(%arg0: i32, %arg1: i32, %arg2: i32) -> (i32, i32) {
    %c0_i32 = arith.constant 0 : i32
    return %arg2, %arg1 : i32, i32
  }
  func.func @transform_2(%arg0: i32, %arg1: i32, %arg2: i32) -> (i32, i32) {
    %c0_i32 = arith.constant 0 : i32
    %c0_i32_0 = arith.constant 0 : i32
    return %c0_i32, %arg1 : i32, i32
  }
  func.func @transform_3(%arg0: i32, %arg1: i32, %arg2: i32) -> (i32, i32) {
    %c0_i32 = arith.constant 0 : i32
    return %arg0, %arg1 : i32, i32
  }
}

module attributes {stable_mosaic.version = 11 : i64} {
  func.func @_mm_kernel(%arg0: i32, %arg1: i32, %arg2: i32, %arg3: memref<128x384xbf16, #tpu.memory_space<vmem>>, %arg4: memref<384x128xbf16, #tpu.memory_space<vmem>>, %arg5: memref<1x128xf32, #tpu.memory_space<vmem>>, %arg6: memref<128x128xf32, #tpu.memory_space<vmem>>, %arg7: memref<128x128xf32, #tpu.memory_space<vmem>>) attributes {dimension_semantics = [#tpu.dimension_semantics<parallel>, #tpu.dimension_semantics<parallel>, #tpu.dimension_semantics<arbitrary>], iteration_bounds = array<i64: 1, 1, 1>, scalar_prefetch = 0 : i64, scratch_operands = 1 : i64, tpu.core_type = #tpu.core_type<tc>, window_params = [{transform_indices = @transform_0, window_bounds = array<i64: 128, 384>}, {transform_indices = @transform_1, window_bounds = array<i64: 384, 128>}, {transform_indices = @transform_2, window_bounds = array<i64: 1, 128>}, {transform_indices = @transform_3, window_bounds = array<i64: 128, 128>}]} {
    %c0_i32 = arith.constant 0 : i32
    %0 = arith.cmpi eq, %arg2, %c0_i32 : i32
    %1 = arith.extui %0 : i1 to i32
    %c0_i32_0 = arith.constant 0 : i32
    %2 = arith.cmpi ne, %1, %c0_i32_0 : i32
    scf.if %2 {
      %cst_10 = arith.constant 0.000000e+00 : f32
      %12 = vector.broadcast %cst_10 : f32 to vector<128x128xf32>
      %c0_11 = arith.constant 0 : index
      %c0_12 = arith.constant 0 : index
      %13 = vector.load %arg7[%c0_11, %c0_12] : memref<128x128xf32, #tpu.memory_space<vmem>>, vector<128x128xf32>
      tpu.vector_store %arg7[%c0_11, %c0_12], %12 {strides = array<i32>} : memref<128x128xf32, #tpu.memory_space<vmem>>, vector<128x128xf32>,
    } else {
    }
    %c0 = arith.constant 0 : index
    %c0_1 = arith.constant 0 : index
    %3 = vector.load %arg7[%c0, %c0_1] : memref<128x128xf32, #tpu.memory_space<vmem>>, vector<128x128xf32>
    %c0_2 = arith.constant 0 : index
    %c0_3 = arith.constant 0 : index
    %4 = vector.load %arg3[%c0_2, %c0_3] : memref<128x384xbf16, #tpu.memory_space<vmem>>, vector<128x384xbf16>
    %c0_4 = arith.constant 0 : index
    %c0_5 = arith.constant 0 : index
    %5 = vector.load %arg4[%c0_4, %c0_5] : memref<384x128xbf16, #tpu.memory_space<vmem>>, vector<384x128xbf16>
    %cst = arith.constant dense<0.000000e+00> : vector<128x128xf32>
    %6 = tpu.matmul %4, %5, %cst {dimension_numbers = #tpu.dot_dimension_numbers<[1], [0], [0], [1], [0, 0, 1, 1], [], []>} : vector<128x384xbf16>, vector<384x128xbf16>, vector<128x128xf32> -> vector<128x128xf32>
    %7 = arith.addf %3, %6 : vector<128x128xf32>
    %c0_6 = arith.constant 0 : index
    %c0_7 = arith.constant 0 : index
    %8 = vector.load %arg7[%c0_6, %c0_7] : memref<128x128xf32, #tpu.memory_space<vmem>>, vector<128x128xf32>
    tpu.vector_store %arg7[%c0_6, %c0_7], %7 {strides = array<i32>} : memref<128x128xf32, #tpu.memory_space<vmem>>, vector<128x128xf32>,
    %c0_i32_8 = arith.constant 0 : i32
    %9 = arith.cmpi eq, %arg2, %c0_i32_8 : i32
    %10 = arith.extui %9 : i1 to i32
    %c0_i32_9 = arith.constant 0 : i32
    %11 = arith.cmpi ne, %10, %c0_i32_9 : i32
    scf.if %11 {
      %c0_10 = arith.constant 0 : index
      %c0_11 = arith.constant 0 : index
      %12 = vector.load %arg7[%c0_10, %c0_11] : memref<128x128xf32, #tpu.memory_space<vmem>>, vector<128x128xf32>
      %c0_12 = arith.constant 0 : index
      %c0_13 = arith.constant 0 : index
      %13 = vector.load %arg5[%c0_12, %c0_13] : memref<1x128xf32, #tpu.memory_space<vmem>>, vector<1x128xf32>
      %14 = vector.broadcast %13 : vector<1x128xf32> to vector<128x128xf32>
      %15 = arith.addf %12, %14 : vector<128x128xf32>
      %c0_14 = arith.constant 0 : index
      %c0_15 = arith.constant 0 : index
      %16 = vector.load %arg6[%c0_14, %c0_15] : memref<128x128xf32, #tpu.memory_space<vmem>>, vector<128x128xf32>
      tpu.vector_store %arg6[%c0_14, %c0_15], %15 {strides = array<i32>} : memref<128x128xf32, #tpu.memory_space<vmem>>, vector<128x128xf32>,
    } else {
    }
    return
  }
  func.func @transform_0(%arg0: i32, %arg1: i32, %arg2: i32) -> (i32, i32) {
    %c0_i32 = arith.constant 0 : i32
    return %arg0, %arg2 : i32, i32
  }
  func.func @transform_1(%arg0: i32, %arg1: i32, %arg2: i32) -> (i32, i32) {
    %c0_i32 = arith.constant 0 : i32
    return %arg2, %arg1 : i32, i32
  }
  func.func @transform_2(%arg0: i32, %arg1: i32, %arg2: i32) -> (i32, i32) {
    %c0_i32 = arith.constant 0 : i32
    %c0_i32_0 = arith.constant 0 : i32
    return %c0_i32, %arg1 : i32, i32
  }
  func.func @transform_3(%arg0: i32, %arg1: i32, %arg2: i32) -> (i32, i32) {
    %c0_i32 = arith.constant 0 : i32
    return %arg0, %arg1 : i32, i32
  }
}

module attributes {stable_mosaic.version = 11 : i64} {
  func.func @_mm_kernel(%arg0: i32, %arg1: i32, %arg2: i32, %arg3: memref<32x384xbf16, #tpu.memory_space<vmem>>, %arg4: memref<384x256xbf16, #tpu.memory_space<vmem>>, %arg5: memref<1x256xf32, #tpu.memory_space<vmem>>, %arg6: memref<32x256xf32, #tpu.memory_space<vmem>>, %arg7: memref<32x256xf32, #tpu.memory_space<vmem>>) attributes {dimension_semantics = [#tpu.dimension_semantics<parallel>, #tpu.dimension_semantics<parallel>, #tpu.dimension_semantics<arbitrary>], iteration_bounds = array<i64: 1, 1, 1>, scalar_prefetch = 0 : i64, scratch_operands = 1 : i64, tpu.core_type = #tpu.core_type<tc>, window_params = [{transform_indices = @transform_0, window_bounds = array<i64: 32, 384>}, {transform_indices = @transform_1, window_bounds = array<i64: 384, 256>}, {transform_indices = @transform_2, window_bounds = array<i64: 1, 256>}, {transform_indices = @transform_3, window_bounds = array<i64: 32, 256>}]} {
    %c0_i32 = arith.constant 0 : i32
    %0 = arith.cmpi eq, %arg2, %c0_i32 : i32
    %1 = arith.extui %0 : i1 to i32
    %c0_i32_0 = arith.constant 0 : i32
    %2 = arith.cmpi ne, %1, %c0_i32_0 : i32
    scf.if %2 {
      %cst_10 = arith.constant 0.000000e+00 : f32
      %12 = vector.broadcast %cst_10 : f32 to vector<32x256xf32>
      %c0_11 = arith.constant 0 : index
      %c0_12 = arith.constant 0 : index
      %13 = vector.load %arg7[%c0_11, %c0_12] : memref<32x256xf32, #tpu.memory_space<vmem>>, vector<32x256xf32>
      tpu.vector_store %arg7[%c0_11, %c0_12], %12 {strides = array<i32>} : memref<32x256xf32, #tpu.memory_space<vmem>>, vector<32x256xf32>,
    } else {
    }
    %c0 = arith.constant 0 : index
    %c0_1 = arith.constant 0 : index
    %3 = vector.load %arg7[%c0, %c0_1] : memref<32x256xf32, #tpu.memory_space<vmem>>, vector<32x256xf32>
    %c0_2 = arith.constant 0 : index
    %c0_3 = arith.constant 0 : index
    %4 = vector.load %arg3[%c0_2, %c0_3] : memref<32x384xbf16, #tpu.memory_space<vmem>>, vector<32x384xbf16>
    %c0_4 = arith.constant 0 : index
    %c0_5 = arith.constant 0 : index
    %5 = vector.load %arg4[%c0_4, %c0_5] : memref<384x256xbf16, #tpu.memory_space<vmem>>, vector<384x256xbf16>
    %cst = arith.constant dense<0.000000e+00> : vector<32x256xf32>
    %6 = tpu.matmul %4, %5, %cst {dimension_numbers = #tpu.dot_dimension_numbers<[1], [0], [0], [1], [0, 0, 1, 1], [], []>} : vector<32x384xbf16>, vector<384x256xbf16>, vector<32x256xf32> -> vector<32x256xf32>
    %7 = arith.addf %3, %6 : vector<32x256xf32>
    %c0_6 = arith.constant 0 : index
    %c0_7 = arith.constant 0 : index
    %8 = vector.load %arg7[%c0_6, %c0_7] : memref<32x256xf32, #tpu.memory_space<vmem>>, vector<32x256xf32>
    tpu.vector_store %arg7[%c0_6, %c0_7], %7 {strides = array<i32>} : memref<32x256xf32, #tpu.memory_space<vmem>>, vector<32x256xf32>,
    %c0_i32_8 = arith.constant 0 : i32
    %9 = arith.cmpi eq, %arg2, %c0_i32_8 : i32
    %10 = arith.extui %9 : i1 to i32
    %c0_i32_9 = arith.constant 0 : i32
    %11 = arith.cmpi ne, %10, %c0_i32_9 : i32
    scf.if %11 {
      %c0_10 = arith.constant 0 : index
      %c0_11 = arith.constant 0 : index
      %12 = vector.load %arg7[%c0_10, %c0_11] : memref<32x256xf32, #tpu.memory_space<vmem>>, vector<32x256xf32>
      %c0_12 = arith.constant 0 : index
      %c0_13 = arith.constant 0 : index
      %13 = vector.load %arg5[%c0_12, %c0_13] : memref<1x256xf32, #tpu.memory_space<vmem>>, vector<1x256xf32>
      %14 = vector.broadcast %13 : vector<1x256xf32> to vector<32x256xf32>
      %15 = arith.addf %12, %14 : vector<32x256xf32>
      %c0_14 = arith.constant 0 : index
      %c0_15 = arith.constant 0 : index
      %16 = vector.load %arg6[%c0_14, %c0_15] : memref<32x256xf32, #tpu.memory_space<vmem>>, vector<32x256xf32>
      tpu.vector_store %arg6[%c0_14, %c0_15], %15 {strides = array<i32>} : memref<32x256xf32, #tpu.memory_space<vmem>>, vector<32x256xf32>,
    } else {
    }
    return
  }
  func.func @transform_0(%arg0: i32, %arg1: i32, %arg2: i32) -> (i32, i32) {
    %c0_i32 = arith.constant 0 : i32
    return %arg0, %arg2 : i32, i32
  }
  func.func @transform_1(%arg0: i32, %arg1: i32, %arg2: i32) -> (i32, i32) {
    %c0_i32 = arith.constant 0 : i32
    return %arg2, %arg1 : i32, i32
  }
  func.func @transform_2(%arg0: i32, %arg1: i32, %arg2: i32) -> (i32, i32) {
    %c0_i32 = arith.constant 0 : i32
    %c0_i32_0 = arith.constant 0 : i32
    return %c0_i32, %arg1 : i32, i32
  }
  func.func @transform_3(%arg0: i32, %arg1: i32, %arg2: i32) -> (i32, i32) {
    %c0_i32 = arith.constant 0 : i32
    return %arg0, %arg1 : i32, i32
  }
}

module attributes {stable_mosaic.version = 11 : i64} {
  func.func @_mm_kernel(%arg0: i32, %arg1: i32, %arg2: i32, %arg3: memref<16x256xbf16, #tpu.memory_space<vmem>>, %arg4: memref<256x128xbf16, #tpu.memory_space<vmem>>, %arg5: memref<1x128xf32, #tpu.memory_space<vmem>>, %arg6: memref<16x128xf32, #tpu.memory_space<vmem>>, %arg7: memref<16x128xf32, #tpu.memory_space<vmem>>) attributes {dimension_semantics = [#tpu.dimension_semantics<parallel>, #tpu.dimension_semantics<parallel>, #tpu.dimension_semantics<arbitrary>], iteration_bounds = array<i64: 1, 1, 1>, scalar_prefetch = 0 : i64, scratch_operands = 1 : i64, tpu.core_type = #tpu.core_type<tc>, window_params = [{transform_indices = @transform_0, window_bounds = array<i64: 16, 256>}, {transform_indices = @transform_1, window_bounds = array<i64: 256, 128>}, {transform_indices = @transform_2, window_bounds = array<i64: 1, 128>}, {transform_indices = @transform_3, window_bounds = array<i64: 16, 128>}]} {
    %c0_i32 = arith.constant 0 : i32
    %0 = arith.cmpi eq, %arg2, %c0_i32 : i32
    %1 = arith.extui %0 : i1 to i32
    %c0_i32_0 = arith.constant 0 : i32
    %2 = arith.cmpi ne, %1, %c0_i32_0 : i32
    scf.if %2 {
      %cst_10 = arith.constant 0.000000e+00 : f32
      %12 = vector.broadcast %cst_10 : f32 to vector<16x128xf32>
      %c0_11 = arith.constant 0 : index
      %c0_12 = arith.constant 0 : index
      %13 = vector.load %arg7[%c0_11, %c0_12] : memref<16x128xf32, #tpu.memory_space<vmem>>, vector<16x128xf32>
      tpu.vector_store %arg7[%c0_11, %c0_12], %12 {strides = array<i32>} : memref<16x128xf32, #tpu.memory_space<vmem>>, vector<16x128xf32>,
    } else {
    }
    %c0 = arith.constant 0 : index
    %c0_1 = arith.constant 0 : index
    %3 = vector.load %arg7[%c0, %c0_1] : memref<16x128xf32, #tpu.memory_space<vmem>>, vector<16x128xf32>
    %c0_2 = arith.constant 0 : index
    %c0_3 = arith.constant 0 : index
    %4 = vector.load %arg3[%c0_2, %c0_3] : memref<16x256xbf16, #tpu.memory_space<vmem>>, vector<16x256xbf16>
    %c0_4 = arith.constant 0 : index
    %c0_5 = arith.constant 0 : index
    %5 = vector.load %arg4[%c0_4, %c0_5] : memref<256x128xbf16, #tpu.memory_space<vmem>>, vector<256x128xbf16>
    %cst = arith.constant dense<0.000000e+00> : vector<16x128xf32>
    %6 = tpu.matmul %4, %5, %cst {dimension_numbers = #tpu.dot_dimension_numbers<[1], [0], [0], [1], [0, 0, 1, 1], [], []>} : vector<16x256xbf16>, vector<256x128xbf16>, vector<16x128xf32> -> vector<16x128xf32>
    %7 = arith.addf %3, %6 : vector<16x128xf32>
    %c0_6 = arith.constant 0 : index
    %c0_7 = arith.constant 0 : index
    %8 = vector.load %arg7[%c0_6, %c0_7] : memref<16x128xf32, #tpu.memory_space<vmem>>, vector<16x128xf32>
    tpu.vector_store %arg7[%c0_6, %c0_7], %7 {strides = array<i32>} : memref<16x128xf32, #tpu.memory_space<vmem>>, vector<16x128xf32>,
    %c0_i32_8 = arith.constant 0 : i32
    %9 = arith.cmpi eq, %arg2, %c0_i32_8 : i32
    %10 = arith.extui %9 : i1 to i32
    %c0_i32_9 = arith.constant 0 : i32
    %11 = arith.cmpi ne, %10, %c0_i32_9 : i32
    scf.if %11 {
      %c0_10 = arith.constant 0 : index
      %c0_11 = arith.constant 0 : index
      %12 = vector.load %arg7[%c0_10, %c0_11] : memref<16x128xf32, #tpu.memory_space<vmem>>, vector<16x128xf32>
      %c0_12 = arith.constant 0 : index
      %c0_13 = arith.constant 0 : index
      %13 = vector.load %arg5[%c0_12, %c0_13] : memref<1x128xf32, #tpu.memory_space<vmem>>, vector<1x128xf32>
      %14 = vector.broadcast %13 : vector<1x128xf32> to vector<16x128xf32>
      %15 = arith.addf %12, %14 : vector<16x128xf32>
      %c0_14 = arith.constant 0 : index
      %c0_15 = arith.constant 0 : index
      %16 = vector.load %arg6[%c0_14, %c0_15] : memref<16x128xf32, #tpu.memory_space<vmem>>, vector<16x128xf32>
      tpu.vector_store %arg6[%c0_14, %c0_15], %15 {strides = array<i32>} : memref<16x128xf32, #tpu.memory_space<vmem>>, vector<16x128xf32>,
    } else {
    }
    return
  }
  func.func @transform_0(%arg0: i32, %arg1: i32, %arg2: i32) -> (i32, i32) {
    %c0_i32 = arith.constant 0 : i32
    return %arg0, %arg2 : i32, i32
  }
  func.func @transform_1(%arg0: i32, %arg1: i32, %arg2: i32) -> (i32, i32) {
    %c0_i32 = arith.constant 0 : i32
    return %arg2, %arg1 : i32, i32
  }
  func.func @transform_2(%arg0: i32, %arg1: i32, %arg2: i32) -> (i32, i32) {
    %c0_i32 = arith.constant 0 : i32
    %c0_i32_0 = arith.constant 0 : i32
    return %c0_i32, %arg1 : i32, i32
  }
  func.func @transform_3(%arg0: i32, %arg1: i32, %arg2: i32) -> (i32, i32) {
    %c0_i32 = arith.constant 0 : i32
    return %arg0, %arg1 : i32, i32
  }
}

module attributes {stable_mosaic.version = 11 : i64} {
  func.func @_mm_kernel(%arg0: i32, %arg1: i32, %arg2: i32, %arg3: memref<16x128xbf16, #tpu.memory_space<vmem>>, %arg4: memref<128x256xbf16, #tpu.memory_space<vmem>>, %arg5: memref<1x256xf32, #tpu.memory_space<vmem>>, %arg6: memref<16x256xf32, #tpu.memory_space<vmem>>, %arg7: memref<16x256xf32, #tpu.memory_space<vmem>>) attributes {dimension_semantics = [#tpu.dimension_semantics<parallel>, #tpu.dimension_semantics<parallel>, #tpu.dimension_semantics<arbitrary>], iteration_bounds = array<i64: 1, 1, 1>, scalar_prefetch = 0 : i64, scratch_operands = 1 : i64, tpu.core_type = #tpu.core_type<tc>, window_params = [{transform_indices = @transform_0, window_bounds = array<i64: 16, 128>}, {transform_indices = @transform_1, window_bounds = array<i64: 128, 256>}, {transform_indices = @transform_2, window_bounds = array<i64: 1, 256>}, {transform_indices = @transform_3, window_bounds = array<i64: 16, 256>}]} {
    %c0_i32 = arith.constant 0 : i32
    %0 = arith.cmpi eq, %arg2, %c0_i32 : i32
    %1 = arith.extui %0 : i1 to i32
    %c0_i32_0 = arith.constant 0 : i32
    %2 = arith.cmpi ne, %1, %c0_i32_0 : i32
    scf.if %2 {
      %cst_10 = arith.constant 0.000000e+00 : f32
      %12 = vector.broadcast %cst_10 : f32 to vector<16x256xf32>
      %c0_11 = arith.constant 0 : index
      %c0_12 = arith.constant 0 : index
      %13 = vector.load %arg7[%c0_11, %c0_12] : memref<16x256xf32, #tpu.memory_space<vmem>>, vector<16x256xf32>
      tpu.vector_store %arg7[%c0_11, %c0_12], %12 {strides = array<i32>} : memref<16x256xf32, #tpu.memory_space<vmem>>, vector<16x256xf32>,
    } else {
    }
    %c0 = arith.constant 0 : index
    %c0_1 = arith.constant 0 : index
    %3 = vector.load %arg7[%c0, %c0_1] : memref<16x256xf32, #tpu.memory_space<vmem>>, vector<16x256xf32>
    %c0_2 = arith.constant 0 : index
    %c0_3 = arith.constant 0 : index
    %4 = vector.load %arg3[%c0_2, %c0_3] : memref<16x128xbf16, #tpu.memory_space<vmem>>, vector<16x128xbf16>
    %c0_4 = arith.constant 0 : index
    %c0_5 = arith.constant 0 : index
    %5 = vector.load %arg4[%c0_4, %c0_5] : memref<128x256xbf16, #tpu.memory_space<vmem>>, vector<128x256xbf16>
    %cst = arith.constant dense<0.000000e+00> : vector<16x256xf32>
    %6 = tpu.matmul %4, %5, %cst {dimension_numbers = #tpu.dot_dimension_numbers<[1], [0], [0], [1], [0, 0, 1, 1], [], []>} : vector<16x128xbf16>, vector<128x256xbf16>, vector<16x256xf32> -> vector<16x256xf32>
    %7 = arith.addf %3, %6 : vector<16x256xf32>
    %c0_6 = arith.constant 0 : index
    %c0_7 = arith.constant 0 : index
    %8 = vector.load %arg7[%c0_6, %c0_7] : memref<16x256xf32, #tpu.memory_space<vmem>>, vector<16x256xf32>
    tpu.vector_store %arg7[%c0_6, %c0_7], %7 {strides = array<i32>} : memref<16x256xf32, #tpu.memory_space<vmem>>, vector<16x256xf32>,
    %c0_i32_8 = arith.constant 0 : i32
    %9 = arith.cmpi eq, %arg2, %c0_i32_8 : i32
    %10 = arith.extui %9 : i1 to i32
    %c0_i32_9 = arith.constant 0 : i32
    %11 = arith.cmpi ne, %10, %c0_i32_9 : i32
    scf.if %11 {
      %c0_10 = arith.constant 0 : index
      %c0_11 = arith.constant 0 : index
      %12 = vector.load %arg7[%c0_10, %c0_11] : memref<16x256xf32, #tpu.memory_space<vmem>>, vector<16x256xf32>
      %c0_12 = arith.constant 0 : index
      %c0_13 = arith.constant 0 : index
      %13 = vector.load %arg5[%c0_12, %c0_13] : memref<1x256xf32, #tpu.memory_space<vmem>>, vector<1x256xf32>
      %14 = vector.broadcast %13 : vector<1x256xf32> to vector<16x256xf32>
      %15 = arith.addf %12, %14 : vector<16x256xf32>
      %c0_14 = arith.constant 0 : index
      %c0_15 = arith.constant 0 : index
      %16 = vector.load %arg6[%c0_14, %c0_15] : memref<16x256xf32, #tpu.memory_space<vmem>>, vector<16x256xf32>
      tpu.vector_store %arg6[%c0_14, %c0_15], %15 {strides = array<i32>} : memref<16x256xf32, #tpu.memory_space<vmem>>, vector<16x256xf32>,
    } else {
    }
    return
  }
  func.func @transform_0(%arg0: i32, %arg1: i32, %arg2: i32) -> (i32, i32) {
    %c0_i32 = arith.constant 0 : i32
    return %arg0, %arg2 : i32, i32
  }
  func.func @transform_1(%arg0: i32, %arg1: i32, %arg2: i32) -> (i32, i32) {
    %c0_i32 = arith.constant 0 : i32
    return %arg2, %arg1 : i32, i32
  }
  func.func @transform_2(%arg0: i32, %arg1: i32, %arg2: i32) -> (i32, i32) {
    %c0_i32 = arith.constant 0 : i32
    %c0_i32_0 = arith.constant 0 : i32
    return %c0_i32, %arg1 : i32, i32
  }
  func.func @transform_3(%arg0: i32, %arg1: i32, %arg2: i32) -> (i32, i32) {
    %c0_i32 = arith.constant 0 : i32
    return %arg0, %arg1 : i32, i32
  }
}

module attributes {stable_mosaic.version = 11 : i64} {
  func.func @_attn_kernel(%arg0: i32, %arg1: memref<4x8x16xbf16, #tpu.memory_space<vmem>>, %arg2: memref<4x8x16xbf16, #tpu.memory_space<vmem>>, %arg3: memref<4x8x16xbf16, #tpu.memory_space<vmem>>, %arg4: memref<4x8x16xf32, #tpu.memory_space<vmem>>) attributes {dimension_semantics = [#tpu.dimension_semantics<parallel>], iteration_bounds = array<i64: 2>, scalar_prefetch = 0 : i64, scratch_operands = 0 : i64, tpu.core_type = #tpu.core_type<tc>, window_params = [{transform_indices = @transform_0, window_bounds = array<i64: 4, 8, 16>}, {transform_indices = @transform_1, window_bounds = array<i64: 4, 8, 16>}, {transform_indices = @transform_2, window_bounds = array<i64: 4, 8, 16>}, {transform_indices = @transform_3, window_bounds = array<i64: 4, 8, 16>}]} {
    %c0 = arith.constant 0 : index
    %c0_0 = arith.constant 0 : index
    %c0_1 = arith.constant 0 : index
    %0 = vector.load %arg1[%c0, %c0_0, %c0_1] : memref<4x8x16xbf16, #tpu.memory_space<vmem>>, vector<4x8x16xbf16>
    %c0_2 = arith.constant 0 : index
    %c0_3 = arith.constant 0 : index
    %c0_4 = arith.constant 0 : index
    %1 = vector.load %arg2[%c0_2, %c0_3, %c0_4] : memref<4x8x16xbf16, #tpu.memory_space<vmem>>, vector<4x8x16xbf16>
    %c0_5 = arith.constant 0 : index
    %c0_6 = arith.constant 0 : index
    %c0_7 = arith.constant 0 : index
    %2 = vector.load %arg3[%c0_5, %c0_6, %c0_7] : memref<4x8x16xbf16, #tpu.memory_space<vmem>>, vector<4x8x16xbf16>
    "tpu.trace_start"() <{level = 10 : i32, message = "hqd,hkd->hqk"}> : () -> ()
    %cst = arith.constant dense<0.000000e+00> : vector<4x8x8xf32>
    %3 = tpu.matmul %0, %1, %cst {dimension_numbers = #tpu.dot_dimension_numbers<[2], [2], [1], [1], [0, 0, 0, 1, 1, 1], [0], [0]>} : vector<4x8x16xbf16>, vector<4x8x16xbf16>, vector<4x8x8xf32> -> vector<4x8x8xf32>
    "tpu.trace_stop"() : () -> ()
    %cst_8 = arith.constant 0.353553385 : f32
    %4 = vector.broadcast %cst_8 : f32 to vector<4x8x8xf32>
    %5 = arith.mulf %3, %4 : vector<4x8x8xf32>
    %cst_9 = arith.constant dense<0xFF800000> : vector<4x8xf32>
    %6 = vector.multi_reduction <maximumf>, %5, %cst_9 [2] : vector<4x8x8xf32> to vector<4x8xf32>
    %7 = vector.shape_cast %6 : vector<4x8xf32> to vector<4x8x1xf32>
    %8 = vector.broadcast %7 : vector<4x8x1xf32> to vector<4x8x8xf32>
    %9 = arith.subf %5, %8 : vector<4x8x8xf32>
    %10 = math.exp %9 : vector<4x8x8xf32>
    %cst_10 = arith.constant dense<0.000000e+00> : vector<4x8xf32>
    %11 = vector.multi_reduction <add>, %10, %cst_10 [2] : vector<4x8x8xf32> to vector<4x8xf32>
    %12 = vector.shape_cast %11 : vector<4x8xf32> to vector<4x8x1xf32>
    %13 = tpu.reciprocal %12 {approx = true} : vector<4x8x1xf32> -> vector<4x8x1xf32>
    %14 = vector.broadcast %13 : vector<4x8x1xf32> to vector<4x8x8xf32>
    %15 = arith.mulf %10, %14 : vector<4x8x8xf32>
    %16 = arith.truncf %15 : vector<4x8x8xf32> to vector<4x8x8xbf16>
    "tpu.trace_start"() <{level = 10 : i32, message = "hqk,hkd->hqd"}> : () -> ()
    %cst_11 = arith.constant dense<0.000000e+00> : vector<4x8x16xf32>
    %17 = tpu.matmul %16, %2, %cst_11 {dimension_numbers = #tpu.dot_dimension_numbers<[2], [1], [1], [2], [0, 0, 0, 1, 1, 2], [0], [0]>} : vector<4x8x8xbf16>, vector<4x8x16xbf16>, vector<4x8x16xf32> -> vector<4x8x16xf32>
    "tpu.trace_stop"() : () -> ()
    %c0_12 = arith.constant 0 : index
    %c0_13 = arith.constant 0 : index
    %c0_14 = arith.constant 0 : index
    %18 = vector.load %arg4[%c0_12, %c0_13, %c0_14] : memref<4x8x16xf32, #tpu.memory_space<vmem>>, vector<4x8x16xf32>
    tpu.vector_store %arg4[%c0_12, %c0_13, %c0_14], %17 {strides = array<i32>} : memref<4x8x16xf32, #tpu.memory_space<vmem>>, vector<4x8x16xf32>,
    return
  }
  func.func @transform_0(%arg0: i32) -> (i32, i32, i32) {
    %c0_i32 = arith.constant 0 : i32
    %c0_i32_0 = arith.constant 0 : i32
    %c0_i32_1 = arith.constant 0 : i32
    return %arg0, %c0_i32, %c0_i32_0 : i32, i32, i32
  }
  func.func @transform_1(%arg0: i32) -> (i32, i32, i32) {
    %c0_i32 = arith.constant 0 : i32
    %c0_i32_0 = arith.constant 0 : i32
    %c0_i32_1 = arith.constant 0 : i32
    return %arg0, %c0_i32, %c0_i32_0 : i32, i32, i32
  }
  func.func @transform_2(%arg0: i32) -> (i32, i32, i32) {
    %c0_i32 = arith.constant 0 : i32
    %c0_i32_0 = arith.constant 0 : i32
    %c0_i32_1 = arith.constant 0 : i32
    return %arg0, %c0_i32, %c0_i32_0 : i32, i32, i32
  }
  func.func @transform_3(%arg0: i32) -> (i32, i32, i32) {
    %c0_i32 = arith.constant 0 : i32
    %c0_i32_0 = arith.constant 0 : i32
    %c0_i32_1 = arith.constant 0 : i32
    return %arg0, %c0_i32, %c0_i32_0 : i32, i32, i32
  }
}

module attributes {stable_mosaic.version = 11 : i64} {
  func.func @_mm_res_kernel(%arg0: i32, %arg1: i32, %arg2: i32, %arg3: memref<16x128xbf16, #tpu.memory_space<vmem>>, %arg4: memref<128x128xbf16, #tpu.memory_space<vmem>>, %arg5: memref<1x128xf32, #tpu.memory_space<vmem>>, %arg6: memref<16x128xf32, #tpu.memory_space<vmem>>, %arg7: memref<16x128xf32, #tpu.memory_space<vmem>>, %arg8: memref<16x128xf32, #tpu.memory_space<vmem>>) attributes {dimension_semantics = [#tpu.dimension_semantics<parallel>, #tpu.dimension_semantics<parallel>, #tpu.dimension_semantics<arbitrary>], iteration_bounds = array<i64: 1, 1, 1>, scalar_prefetch = 0 : i64, scratch_operands = 1 : i64, tpu.core_type = #tpu.core_type<tc>, window_params = [{transform_indices = @transform_0, window_bounds = array<i64: 16, 128>}, {transform_indices = @transform_1, window_bounds = array<i64: 128, 128>}, {transform_indices = @transform_2, window_bounds = array<i64: 1, 128>}, {transform_indices = @transform_3, window_bounds = array<i64: 16, 128>}, {transform_indices = @transform_4, window_bounds = array<i64: 16, 128>}]} {
    %c0_i32 = arith.constant 0 : i32
    %0 = arith.cmpi eq, %arg2, %c0_i32 : i32
    %1 = arith.extui %0 : i1 to i32
    %c0_i32_0 = arith.constant 0 : i32
    %2 = arith.cmpi ne, %1, %c0_i32_0 : i32
    scf.if %2 {
      %cst_10 = arith.constant 0.000000e+00 : f32
      %12 = vector.broadcast %cst_10 : f32 to vector<16x128xf32>
      %c0_11 = arith.constant 0 : index
      %c0_12 = arith.constant 0 : index
      %13 = vector.load %arg8[%c0_11, %c0_12] : memref<16x128xf32, #tpu.memory_space<vmem>>, vector<16x128xf32>
      tpu.vector_store %arg8[%c0_11, %c0_12], %12 {strides = array<i32>} : memref<16x128xf32, #tpu.memory_space<vmem>>, vector<16x128xf32>,
    } else {
    }
    %c0 = arith.constant 0 : index
    %c0_1 = arith.constant 0 : index
    %3 = vector.load %arg8[%c0, %c0_1] : memref<16x128xf32, #tpu.memory_space<vmem>>, vector<16x128xf32>
    %c0_2 = arith.constant 0 : index
    %c0_3 = arith.constant 0 : index
    %4 = vector.load %arg3[%c0_2, %c0_3] : memref<16x128xbf16, #tpu.memory_space<vmem>>, vector<16x128xbf16>
    %c0_4 = arith.constant 0 : index
    %c0_5 = arith.constant 0 : index
    %5 = vector.load %arg4[%c0_4, %c0_5] : memref<128x128xbf16, #tpu.memory_space<vmem>>, vector<128x128xbf16>
    %cst = arith.constant dense<0.000000e+00> : vector<16x128xf32>
    %6 = tpu.matmul %4, %5, %cst {dimension_numbers = #tpu.dot_dimension_numbers<[1], [0], [0], [1], [0, 0, 1, 1], [], []>} : vector<16x128xbf16>, vector<128x128xbf16>, vector<16x128xf32> -> vector<16x128xf32>
    %7 = arith.addf %3, %6 : vector<16x128xf32>
    %c0_6 = arith.constant 0 : index
    %c0_7 = arith.constant 0 : index
    %8 = vector.load %arg8[%c0_6, %c0_7] : memref<16x128xf32, #tpu.memory_space<vmem>>, vector<16x128xf32>
    tpu.vector_store %arg8[%c0_6, %c0_7], %7 {strides = array<i32>} : memref<16x128xf32, #tpu.memory_space<vmem>>, vector<16x128xf32>,
    %c0_i32_8 = arith.constant 0 : i32
    %9 = arith.cmpi eq, %arg2, %c0_i32_8 : i32
    %10 = arith.extui %9 : i1 to i32
    %c0_i32_9 = arith.constant 0 : i32
    %11 = arith.cmpi ne, %10, %c0_i32_9 : i32
    scf.if %11 {
      %c0_10 = arith.constant 0 : index
      %c0_11 = arith.constant 0 : index
      %12 = vector.load %arg8[%c0_10, %c0_11] : memref<16x128xf32, #tpu.memory_space<vmem>>, vector<16x128xf32>
      %c0_12 = arith.constant 0 : index
      %c0_13 = arith.constant 0 : index
      %13 = vector.load %arg5[%c0_12, %c0_13] : memref<1x128xf32, #tpu.memory_space<vmem>>, vector<1x128xf32>
      %14 = vector.broadcast %13 : vector<1x128xf32> to vector<16x128xf32>
      %15 = arith.addf %12, %14 : vector<16x128xf32>
      %c0_14 = arith.constant 0 : index
      %c0_15 = arith.constant 0 : index
      %16 = vector.load %arg6[%c0_14, %c0_15] : memref<16x128xf32, #tpu.memory_space<vmem>>, vector<16x128xf32>
      %17 = arith.addf %15, %16 : vector<16x128xf32>
      %c0_16 = arith.constant 0 : index
      %c0_17 = arith.constant 0 : index
      %18 = vector.load %arg7[%c0_16, %c0_17] : memref<16x128xf32, #tpu.memory_space<vmem>>, vector<16x128xf32>
      tpu.vector_store %arg7[%c0_16, %c0_17], %17 {strides = array<i32>} : memref<16x128xf32, #tpu.memory_space<vmem>>, vector<16x128xf32>,
    } else {
    }
    return
  }
  func.func @transform_0(%arg0: i32, %arg1: i32, %arg2: i32) -> (i32, i32) {
    %c0_i32 = arith.constant 0 : i32
    return %arg0, %arg2 : i32, i32
  }
  func.func @transform_1(%arg0: i32, %arg1: i32, %arg2: i32) -> (i32, i32) {
    %c0_i32 = arith.constant 0 : i32
    return %arg2, %arg1 : i32, i32
  }
  func.func @transform_2(%arg0: i32, %arg1: i32, %arg2: i32) -> (i32, i32) {
    %c0_i32 = arith.constant 0 : i32
    %c0_i32_0 = arith.constant 0 : i32
    return %c0_i32, %arg1 : i32, i32
  }
  func.func @transform_3(%arg0: i32, %arg1: i32, %arg2: i32) -> (i32, i32) {
    %c0_i32 = arith.constant 0 : i32
    return %arg0, %arg1 : i32, i32
  }
  func.func @transform_4(%arg0: i32, %arg1: i32, %arg2: i32) -> (i32, i32) {
    %c0_i32 = arith.constant 0 : i32
    return %arg0, %arg1 : i32, i32
  }
}

module attributes {stable_mosaic.version = 11 : i64} {
  func.func @_mm_kernel(%arg0: i32, %arg1: i32, %arg2: i32, %arg3: memref<16x128xbf16, #tpu.memory_space<vmem>>, %arg4: memref<128x256xbf16, #tpu.memory_space<vmem>>, %arg5: memref<1x256xf32, #tpu.memory_space<vmem>>, %arg6: memref<16x256xf32, #tpu.memory_space<vmem>>, %arg7: memref<16x256xf32, #tpu.memory_space<vmem>>) attributes {dimension_semantics = [#tpu.dimension_semantics<parallel>, #tpu.dimension_semantics<parallel>, #tpu.dimension_semantics<arbitrary>], iteration_bounds = array<i64: 1, 1, 1>, scalar_prefetch = 0 : i64, scratch_operands = 1 : i64, tpu.core_type = #tpu.core_type<tc>, window_params = [{transform_indices = @transform_0, window_bounds = array<i64: 16, 128>}, {transform_indices = @transform_1, window_bounds = array<i64: 128, 256>}, {transform_indices = @transform_2, window_bounds = array<i64: 1, 256>}, {transform_indices = @transform_3, window_bounds = array<i64: 16, 256>}]} {
    %c0_i32 = arith.constant 0 : i32
    %0 = arith.cmpi eq, %arg2, %c0_i32 : i32
    %1 = arith.extui %0 : i1 to i32
    %c0_i32_0 = arith.constant 0 : i32
    %2 = arith.cmpi ne, %1, %c0_i32_0 : i32
    scf.if %2 {
      %cst_10 = arith.constant 0.000000e+00 : f32
      %12 = vector.broadcast %cst_10 : f32 to vector<16x256xf32>
      %c0_11 = arith.constant 0 : index
      %c0_12 = arith.constant 0 : index
      %13 = vector.load %arg7[%c0_11, %c0_12] : memref<16x256xf32, #tpu.memory_space<vmem>>, vector<16x256xf32>
      tpu.vector_store %arg7[%c0_11, %c0_12], %12 {strides = array<i32>} : memref<16x256xf32, #tpu.memory_space<vmem>>, vector<16x256xf32>,
    } else {
    }
    %c0 = arith.constant 0 : index
    %c0_1 = arith.constant 0 : index
    %3 = vector.load %arg7[%c0, %c0_1] : memref<16x256xf32, #tpu.memory_space<vmem>>, vector<16x256xf32>
    %c0_2 = arith.constant 0 : index
    %c0_3 = arith.constant 0 : index
    %4 = vector.load %arg3[%c0_2, %c0_3] : memref<16x128xbf16, #tpu.memory_space<vmem>>, vector<16x128xbf16>
    %c0_4 = arith.constant 0 : index
    %c0_5 = arith.constant 0 : index
    %5 = vector.load %arg4[%c0_4, %c0_5] : memref<128x256xbf16, #tpu.memory_space<vmem>>, vector<128x256xbf16>
    %cst = arith.constant dense<0.000000e+00> : vector<16x256xf32>
    %6 = tpu.matmul %4, %5, %cst {dimension_numbers = #tpu.dot_dimension_numbers<[1], [0], [0], [1], [0, 0, 1, 1], [], []>} : vector<16x128xbf16>, vector<128x256xbf16>, vector<16x256xf32> -> vector<16x256xf32>
    %7 = arith.addf %3, %6 : vector<16x256xf32>
    %c0_6 = arith.constant 0 : index
    %c0_7 = arith.constant 0 : index
    %8 = vector.load %arg7[%c0_6, %c0_7] : memref<16x256xf32, #tpu.memory_space<vmem>>, vector<16x256xf32>
    tpu.vector_store %arg7[%c0_6, %c0_7], %7 {strides = array<i32>} : memref<16x256xf32, #tpu.memory_space<vmem>>, vector<16x256xf32>,
    %c0_i32_8 = arith.constant 0 : i32
    %9 = arith.cmpi eq, %arg2, %c0_i32_8 : i32
    %10 = arith.extui %9 : i1 to i32
    %c0_i32_9 = arith.constant 0 : i32
    %11 = arith.cmpi ne, %10, %c0_i32_9 : i32
    scf.if %11 {
      %c0_10 = arith.constant 0 : index
      %c0_11 = arith.constant 0 : index
      %12 = vector.load %arg7[%c0_10, %c0_11] : memref<16x256xf32, #tpu.memory_space<vmem>>, vector<16x256xf32>
      %c0_12 = arith.constant 0 : index
      %c0_13 = arith.constant 0 : index
      %13 = vector.load %arg5[%c0_12, %c0_13] : memref<1x256xf32, #tpu.memory_space<vmem>>, vector<1x256xf32>
      %14 = vector.broadcast %13 : vector<1x256xf32> to vector<16x256xf32>
      %15 = arith.addf %12, %14 : vector<16x256xf32>
      %cst_14 = arith.constant 0.000000e+00 : f32
      %16 = vector.broadcast %cst_14 : f32 to vector<16x256xf32>
      %17 = arith.maximumf %15, %16 : vector<16x256xf32>
      %c0_15 = arith.constant 0 : index
      %c0_16 = arith.constant 0 : index
      %18 = vector.load %arg6[%c0_15, %c0_16] : memref<16x256xf32, #tpu.memory_space<vmem>>, vector<16x256xf32>
      tpu.vector_store %arg6[%c0_15, %c0_16], %17 {strides = array<i32>} : memref<16x256xf32, #tpu.memory_space<vmem>>, vector<16x256xf32>,
    } else {
    }
    return
  }
  func.func @transform_0(%arg0: i32, %arg1: i32, %arg2: i32) -> (i32, i32) {
    %c0_i32 = arith.constant 0 : i32
    return %arg0, %arg2 : i32, i32
  }
  func.func @transform_1(%arg0: i32, %arg1: i32, %arg2: i32) -> (i32, i32) {
    %c0_i32 = arith.constant 0 : i32
    return %arg2, %arg1 : i32, i32
  }
  func.func @transform_2(%arg0: i32, %arg1: i32, %arg2: i32) -> (i32, i32) {
    %c0_i32 = arith.constant 0 : i32
    %c0_i32_0 = arith.constant 0 : i32
    return %c0_i32, %arg1 : i32, i32
  }
  func.func @transform_3(%arg0: i32, %arg1: i32, %arg2: i32) -> (i32, i32) {
    %c0_i32 = arith.constant 0 : i32
    return %arg0, %arg1 : i32, i32
  }
}

module attributes {stable_mosaic.version = 11 : i64} {
  func.func @_mm_res_kernel(%arg0: i32, %arg1: i32, %arg2: i32, %arg3: memref<16x256xbf16, #tpu.memory_space<vmem>>, %arg4: memref<256x128xbf16, #tpu.memory_space<vmem>>, %arg5: memref<1x128xf32, #tpu.memory_space<vmem>>, %arg6: memref<16x128xf32, #tpu.memory_space<vmem>>, %arg7: memref<16x128xf32, #tpu.memory_space<vmem>>, %arg8: memref<16x128xf32, #tpu.memory_space<vmem>>) attributes {dimension_semantics = [#tpu.dimension_semantics<parallel>, #tpu.dimension_semantics<parallel>, #tpu.dimension_semantics<arbitrary>], iteration_bounds = array<i64: 1, 1, 1>, scalar_prefetch = 0 : i64, scratch_operands = 1 : i64, tpu.core_type = #tpu.core_type<tc>, window_params = [{transform_indices = @transform_0, window_bounds = array<i64: 16, 256>}, {transform_indices = @transform_1, window_bounds = array<i64: 256, 128>}, {transform_indices = @transform_2, window_bounds = array<i64: 1, 128>}, {transform_indices = @transform_3, window_bounds = array<i64: 16, 128>}, {transform_indices = @transform_4, window_bounds = array<i64: 16, 128>}]} {
    %c0_i32 = arith.constant 0 : i32
    %0 = arith.cmpi eq, %arg2, %c0_i32 : i32
    %1 = arith.extui %0 : i1 to i32
    %c0_i32_0 = arith.constant 0 : i32
    %2 = arith.cmpi ne, %1, %c0_i32_0 : i32
    scf.if %2 {
      %cst_10 = arith.constant 0.000000e+00 : f32
      %12 = vector.broadcast %cst_10 : f32 to vector<16x128xf32>
      %c0_11 = arith.constant 0 : index
      %c0_12 = arith.constant 0 : index
      %13 = vector.load %arg8[%c0_11, %c0_12] : memref<16x128xf32, #tpu.memory_space<vmem>>, vector<16x128xf32>
      tpu.vector_store %arg8[%c0_11, %c0_12], %12 {strides = array<i32>} : memref<16x128xf32, #tpu.memory_space<vmem>>, vector<16x128xf32>,
    } else {
    }
    %c0 = arith.constant 0 : index
    %c0_1 = arith.constant 0 : index
    %3 = vector.load %arg8[%c0, %c0_1] : memref<16x128xf32, #tpu.memory_space<vmem>>, vector<16x128xf32>
    %c0_2 = arith.constant 0 : index
    %c0_3 = arith.constant 0 : index
    %4 = vector.load %arg3[%c0_2, %c0_3] : memref<16x256xbf16, #tpu.memory_space<vmem>>, vector<16x256xbf16>
    %c0_4 = arith.constant 0 : index
    %c0_5 = arith.constant 0 : index
    %5 = vector.load %arg4[%c0_4, %c0_5] : memref<256x128xbf16, #tpu.memory_space<vmem>>, vector<256x128xbf16>
    %cst = arith.constant dense<0.000000e+00> : vector<16x128xf32>
    %6 = tpu.matmul %4, %5, %cst {dimension_numbers = #tpu.dot_dimension_numbers<[1], [0], [0], [1], [0, 0, 1, 1], [], []>} : vector<16x256xbf16>, vector<256x128xbf16>, vector<16x128xf32> -> vector<16x128xf32>
    %7 = arith.addf %3, %6 : vector<16x128xf32>
    %c0_6 = arith.constant 0 : index
    %c0_7 = arith.constant 0 : index
    %8 = vector.load %arg8[%c0_6, %c0_7] : memref<16x128xf32, #tpu.memory_space<vmem>>, vector<16x128xf32>
    tpu.vector_store %arg8[%c0_6, %c0_7], %7 {strides = array<i32>} : memref<16x128xf32, #tpu.memory_space<vmem>>, vector<16x128xf32>,
    %c0_i32_8 = arith.constant 0 : i32
    %9 = arith.cmpi eq, %arg2, %c0_i32_8 : i32
    %10 = arith.extui %9 : i1 to i32
    %c0_i32_9 = arith.constant 0 : i32
    %11 = arith.cmpi ne, %10, %c0_i32_9 : i32
    scf.if %11 {
      %c0_10 = arith.constant 0 : index
      %c0_11 = arith.constant 0 : index
      %12 = vector.load %arg8[%c0_10, %c0_11] : memref<16x128xf32, #tpu.memory_space<vmem>>, vector<16x128xf32>
      %c0_12 = arith.constant 0 : index
      %c0_13 = arith.constant 0 : index
      %13 = vector.load %arg5[%c0_12, %c0_13] : memref<1x128xf32, #tpu.memory_space<vmem>>, vector<1x128xf32>
      %14 = vector.broadcast %13 : vector<1x128xf32> to vector<16x128xf32>
      %15 = arith.addf %12, %14 : vector<16x128xf32>
      %c0_14 = arith.constant 0 : index
      %c0_15 = arith.constant 0 : index
      %16 = vector.load %arg6[%c0_14, %c0_15] : memref<16x128xf32, #tpu.memory_space<vmem>>, vector<16x128xf32>
      %17 = arith.addf %15, %16 : vector<16x128xf32>
      %c0_16 = arith.constant 0 : index
      %c0_17 = arith.constant 0 : index
      %18 = vector.load %arg7[%c0_16, %c0_17] : memref<16x128xf32, #tpu.memory_space<vmem>>, vector<16x128xf32>
      tpu.vector_store %arg7[%c0_16, %c0_17], %17 {strides = array<i32>} : memref<16x128xf32, #tpu.memory_space<vmem>>, vector<16x128xf32>,
    } else {
    }
    return
  }
  func.func @transform_0(%arg0: i32, %arg1: i32, %arg2: i32) -> (i32, i32) {
    %c0_i32 = arith.constant 0 : i32
    return %arg0, %arg2 : i32, i32
  }
  func.func @transform_1(%arg0: i32, %arg1: i32, %arg2: i32) -> (i32, i32) {
    %c0_i32 = arith.constant 0 : i32
    return %arg2, %arg1 : i32, i32
  }
  func.func @transform_2(%arg0: i32, %arg1: i32, %arg2: i32) -> (i32, i32) {
    %c0_i32 = arith.constant 0 : i32
    %c0_i32_0 = arith.constant 0 : i32
    return %c0_i32, %arg1 : i32, i32
  }
  func.func @transform_3(%arg0: i32, %arg1: i32, %arg2: i32) -> (i32, i32) {
    %c0_i32 = arith.constant 0 : i32
    return %arg0, %arg1 : i32, i32
  }
  func.func @transform_4(%arg0: i32, %arg1: i32, %arg2: i32) -> (i32, i32) {
    %c0_i32 = arith.constant 0 : i32
    return %arg0, %arg1 : i32, i32
  }
}

module attributes {stable_mosaic.version = 11 : i64} {
  func.func @_mm_kernel(%arg0: i32, %arg1: i32, %arg2: i32, %arg3: memref<16x128xbf16, #tpu.memory_space<vmem>>, %arg4: memref<128x128xbf16, #tpu.memory_space<vmem>>, %arg5: memref<1x128xf32, #tpu.memory_space<vmem>>, %arg6: memref<16x128xf32, #tpu.memory_space<vmem>>, %arg7: memref<16x128xf32, #tpu.memory_space<vmem>>) attributes {dimension_semantics = [#tpu.dimension_semantics<parallel>, #tpu.dimension_semantics<parallel>, #tpu.dimension_semantics<arbitrary>], iteration_bounds = array<i64: 1, 1, 1>, scalar_prefetch = 0 : i64, scratch_operands = 1 : i64, tpu.core_type = #tpu.core_type<tc>, window_params = [{transform_indices = @transform_0, window_bounds = array<i64: 16, 128>}, {transform_indices = @transform_1, window_bounds = array<i64: 128, 128>}, {transform_indices = @transform_2, window_bounds = array<i64: 1, 128>}, {transform_indices = @transform_3, window_bounds = array<i64: 16, 128>}]} {
    %c0_i32 = arith.constant 0 : i32
    %0 = arith.cmpi eq, %arg2, %c0_i32 : i32
    %1 = arith.extui %0 : i1 to i32
    %c0_i32_0 = arith.constant 0 : i32
    %2 = arith.cmpi ne, %1, %c0_i32_0 : i32
    scf.if %2 {
      %cst_10 = arith.constant 0.000000e+00 : f32
      %12 = vector.broadcast %cst_10 : f32 to vector<16x128xf32>
      %c0_11 = arith.constant 0 : index
      %c0_12 = arith.constant 0 : index
      %13 = vector.load %arg7[%c0_11, %c0_12] : memref<16x128xf32, #tpu.memory_space<vmem>>, vector<16x128xf32>
      tpu.vector_store %arg7[%c0_11, %c0_12], %12 {strides = array<i32>} : memref<16x128xf32, #tpu.memory_space<vmem>>, vector<16x128xf32>,
    } else {
    }
    %c0 = arith.constant 0 : index
    %c0_1 = arith.constant 0 : index
    %3 = vector.load %arg7[%c0, %c0_1] : memref<16x128xf32, #tpu.memory_space<vmem>>, vector<16x128xf32>
    %c0_2 = arith.constant 0 : index
    %c0_3 = arith.constant 0 : index
    %4 = vector.load %arg3[%c0_2, %c0_3] : memref<16x128xbf16, #tpu.memory_space<vmem>>, vector<16x128xbf16>
    %c0_4 = arith.constant 0 : index
    %c0_5 = arith.constant 0 : index
    %5 = vector.load %arg4[%c0_4, %c0_5] : memref<128x128xbf16, #tpu.memory_space<vmem>>, vector<128x128xbf16>
    %cst = arith.constant dense<0.000000e+00> : vector<16x128xf32>
    %6 = tpu.matmul %4, %5, %cst {dimension_numbers = #tpu.dot_dimension_numbers<[1], [0], [0], [1], [0, 0, 1, 1], [], []>} : vector<16x128xbf16>, vector<128x128xbf16>, vector<16x128xf32> -> vector<16x128xf32>
    %7 = arith.addf %3, %6 : vector<16x128xf32>
    %c0_6 = arith.constant 0 : index
    %c0_7 = arith.constant 0 : index
    %8 = vector.load %arg7[%c0_6, %c0_7] : memref<16x128xf32, #tpu.memory_space<vmem>>, vector<16x128xf32>
    tpu.vector_store %arg7[%c0_6, %c0_7], %7 {strides = array<i32>} : memref<16x128xf32, #tpu.memory_space<vmem>>, vector<16x128xf32>,
    %c0_i32_8 = arith.constant 0 : i32
    %9 = arith.cmpi eq, %arg2, %c0_i32_8 : i32
    %10 = arith.extui %9 : i1 to i32
    %c0_i32_9 = arith.constant 0 : i32
    %11 = arith.cmpi ne, %10, %c0_i32_9 : i32
    scf.if %11 {
      %c0_10 = arith.constant 0 : index
      %c0_11 = arith.constant 0 : index
      %12 = vector.load %arg7[%c0_10, %c0_11] : memref<16x128xf32, #tpu.memory_space<vmem>>, vector<16x128xf32>
      %c0_12 = arith.constant 0 : index
      %c0_13 = arith.constant 0 : index
      %13 = vector.load %arg5[%c0_12, %c0_13] : memref<1x128xf32, #tpu.memory_space<vmem>>, vector<1x128xf32>
      %14 = vector.broadcast %13 : vector<1x128xf32> to vector<16x128xf32>
      %15 = arith.addf %12, %14 : vector<16x128xf32>
      %cst_14 = arith.constant 0.000000e+00 : f32
      %16 = vector.broadcast %cst_14 : f32 to vector<16x128xf32>
      %17 = arith.maximumf %15, %16 : vector<16x128xf32>
      %c0_15 = arith.constant 0 : index
      %c0_16 = arith.constant 0 : index
      %18 = vector.load %arg6[%c0_15, %c0_16] : memref<16x128xf32, #tpu.memory_space<vmem>>, vector<16x128xf32>
      tpu.vector_store %arg6[%c0_15, %c0_16], %17 {strides = array<i32>} : memref<16x128xf32, #tpu.memory_space<vmem>>, vector<16x128xf32>,
    } else {
    }
    return
  }
  func.func @transform_0(%arg0: i32, %arg1: i32, %arg2: i32) -> (i32, i32) {
    %c0_i32 = arith.constant 0 : i32
    return %arg0, %arg2 : i32, i32
  }
  func.func @transform_1(%arg0: i32, %arg1: i32, %arg2: i32) -> (i32, i32) {
    %c0_i32 = arith.constant 0 : i32
    return %arg2, %arg1 : i32, i32
  }
  func.func @transform_2(%arg0: i32, %arg1: i32, %arg2: i32) -> (i32, i32) {
    %c0_i32 = arith.constant 0 : i32
    %c0_i32_0 = arith.constant 0 : i32
    return %c0_i32, %arg1 : i32, i32
  }
  func.func @transform_3(%arg0: i32, %arg1: i32, %arg2: i32) -> (i32, i32) {
    %c0_i32 = arith.constant 0 : i32
    return %arg0, %arg1 : i32, i32
  }
}

module attributes {stable_mosaic.version = 11 : i64} {
  func.func @_mm_kernel(%arg0: i32, %arg1: i32, %arg2: i32, %arg3: memref<16x128xbf16, #tpu.memory_space<vmem>>, %arg4: memref<128x128xbf16, #tpu.memory_space<vmem>>, %arg5: memref<1x128xf32, #tpu.memory_space<vmem>>, %arg6: memref<16x128xf32, #tpu.memory_space<vmem>>, %arg7: memref<16x128xf32, #tpu.memory_space<vmem>>) attributes {dimension_semantics = [#tpu.dimension_semantics<parallel>, #tpu.dimension_semantics<parallel>, #tpu.dimension_semantics<arbitrary>], iteration_bounds = array<i64: 1, 1, 1>, scalar_prefetch = 0 : i64, scratch_operands = 1 : i64, tpu.core_type = #tpu.core_type<tc>, window_params = [{transform_indices = @transform_0, window_bounds = array<i64: 16, 128>}, {transform_indices = @transform_1, window_bounds = array<i64: 128, 128>}, {transform_indices = @transform_2, window_bounds = array<i64: 1, 128>}, {transform_indices = @transform_3, window_bounds = array<i64: 16, 128>}]} {
    %c0_i32 = arith.constant 0 : i32
    %0 = arith.cmpi eq, %arg2, %c0_i32 : i32
    %1 = arith.extui %0 : i1 to i32
    %c0_i32_0 = arith.constant 0 : i32
    %2 = arith.cmpi ne, %1, %c0_i32_0 : i32
    scf.if %2 {
      %cst_10 = arith.constant 0.000000e+00 : f32
      %12 = vector.broadcast %cst_10 : f32 to vector<16x128xf32>
      %c0_11 = arith.constant 0 : index
      %c0_12 = arith.constant 0 : index
      %13 = vector.load %arg7[%c0_11, %c0_12] : memref<16x128xf32, #tpu.memory_space<vmem>>, vector<16x128xf32>
      tpu.vector_store %arg7[%c0_11, %c0_12], %12 {strides = array<i32>} : memref<16x128xf32, #tpu.memory_space<vmem>>, vector<16x128xf32>,
    } else {
    }
    %c0 = arith.constant 0 : index
    %c0_1 = arith.constant 0 : index
    %3 = vector.load %arg7[%c0, %c0_1] : memref<16x128xf32, #tpu.memory_space<vmem>>, vector<16x128xf32>
    %c0_2 = arith.constant 0 : index
    %c0_3 = arith.constant 0 : index
    %4 = vector.load %arg3[%c0_2, %c0_3] : memref<16x128xbf16, #tpu.memory_space<vmem>>, vector<16x128xbf16>
    %c0_4 = arith.constant 0 : index
    %c0_5 = arith.constant 0 : index
    %5 = vector.load %arg4[%c0_4, %c0_5] : memref<128x128xbf16, #tpu.memory_space<vmem>>, vector<128x128xbf16>
    %cst = arith.constant dense<0.000000e+00> : vector<16x128xf32>
    %6 = tpu.matmul %4, %5, %cst {dimension_numbers = #tpu.dot_dimension_numbers<[1], [0], [0], [1], [0, 0, 1, 1], [], []>} : vector<16x128xbf16>, vector<128x128xbf16>, vector<16x128xf32> -> vector<16x128xf32>
    %7 = arith.addf %3, %6 : vector<16x128xf32>
    %c0_6 = arith.constant 0 : index
    %c0_7 = arith.constant 0 : index
    %8 = vector.load %arg7[%c0_6, %c0_7] : memref<16x128xf32, #tpu.memory_space<vmem>>, vector<16x128xf32>
    tpu.vector_store %arg7[%c0_6, %c0_7], %7 {strides = array<i32>} : memref<16x128xf32, #tpu.memory_space<vmem>>, vector<16x128xf32>,
    %c0_i32_8 = arith.constant 0 : i32
    %9 = arith.cmpi eq, %arg2, %c0_i32_8 : i32
    %10 = arith.extui %9 : i1 to i32
    %c0_i32_9 = arith.constant 0 : i32
    %11 = arith.cmpi ne, %10, %c0_i32_9 : i32
    scf.if %11 {
      %c0_10 = arith.constant 0 : index
      %c0_11 = arith.constant 0 : index
      %12 = vector.load %arg7[%c0_10, %c0_11] : memref<16x128xf32, #tpu.memory_space<vmem>>, vector<16x128xf32>
      %c0_12 = arith.constant 0 : index
      %c0_13 = arith.constant 0 : index
      %13 = vector.load %arg5[%c0_12, %c0_13] : memref<1x128xf32, #tpu.memory_space<vmem>>, vector<1x128xf32>
      %14 = vector.broadcast %13 : vector<1x128xf32> to vector<16x128xf32>
      %15 = arith.addf %12, %14 : vector<16x128xf32>
      %c0_14 = arith.constant 0 : index
      %c0_15 = arith.constant 0 : index
      %16 = vector.load %arg6[%c0_14, %c0_15] : memref<16x128xf32, #tpu.memory_space<vmem>>, vector<16x128xf32>
      tpu.vector_store %arg6[%c0_14, %c0_15], %15 {strides = array<i32>} : memref<16x128xf32, #tpu.memory_space<vmem>>, vector<16x128xf32>,
    } else {
    }
    return
  }
  func.func @transform_0(%arg0: i32, %arg1: i32, %arg2: i32) -> (i32, i32) {
    %c0_i32 = arith.constant 0 : i32
    return %arg0, %arg2 : i32, i32
  }
  func.func @transform_1(%arg0: i32, %arg1: i32, %arg2: i32) -> (i32, i32) {
    %c0_i32 = arith.constant 0 : i32
    return %arg2, %arg1 : i32, i32
  }
  func.func @transform_2(%arg0: i32, %arg1: i32, %arg2: i32) -> (i32, i32) {
    %c0_i32 = arith.constant 0 : i32
    %c0_i32_0 = arith.constant 0 : i32
    return %c0_i32, %arg1 : i32, i32
  }
  func.func @transform_3(%arg0: i32, %arg1: i32, %arg2: i32) -> (i32, i32) {
    %c0_i32 = arith.constant 0 : i32
    return %arg0, %arg1 : i32, i32
  }
}

</mosaic_0001>

<llo_original>
// kernel: forward.18
$region0: #{forward.18}
  #allocation0 [shape = 'u32[]', space=smem, size = 0x4, offset = 0x4, fixed_abs, tag = 'smem constant byte address 0x4 - core index']
  #allocation1 [shape = 'u32[144,128]{1,0:T(1,128)}', space=vmem, size = 0x12000, scoped, tag = 'internal scratch']
  #allocation2 [shape = 'f32[128,128]{1,0:T(8,128)}', space=vmem, size = 0x10000, scoped, tag = 'scratch operand']
  %s0 = inlined_call_operand.vmem [shape: bf16[1536,128], index: 0, kind: input, shape index: {}]
  %s1 = inlined_call_operand.vmem [shape: bf16[128,128], index: 1, kind: input, shape index: {}]
  %s2 = inlined_call_operand.vmem [shape: f32[1,128], index: 2, kind: input, shape index: {}]
  %s3 = inlined_call_operand.vmem [shape: f32[1536,128], index: 3, kind: output, shape index: {}]
  %s4 = sld [smem:[#allocation0]]
  $region53: #{forward.18} parent=0
    _
  %s6 = ssub.s32 1, %s4
  %s7 = scalar_select 0, %s6, %s4
  loop: start=0, step=1, limit=14
  $region2: #{forward.18} parent=0 // loop_pre_header
    _
  $region3: #{forward.18} parent=0 // loop_header
    %s9 = sphi 0, %s13
    %p10 = scmp.ge.s32.totalorder %s9, 14
    %s16 = sphi 0, %s35
    %s17 = sphi 0, %s31
    %s18 = sphi 0, %s27
    %s19 = sphi 0, %s16
    %s20 = sphi 0, %s17
    %s21 = sphi 0, %s18
    %s22 = sphi 0, %s19
    %s23 = sphi 0, %s20
    %s24 = sphi 0, %s21
    %s40 = sphi 0, %s42
    %s43 = sphi 0, %s40
    %s44 = sphi 0, %s43
    %s60 = sphi 0, %s44
    %s68 = sphi 0, %s70
    %s71 = sphi 0, %s68
    %s72 = sphi 0, %s71
    %s88 = sphi 0, %s72
    %s94 = sphi 0, %s96
    %s97 = sphi 0, %s94
    %s98 = sphi 0, %s97
    %s114 = sphi 0, %s98
    %s122 = sphi 0, %s124
    %s125 = sphi 0, %s122
    %s126 = sphi 0, %s125
    %s142 = sphi 0, %s126
  $region4: #{forward.18} parent=0 // loop_header_branch
    %12 = sbr.rel (%p10) target = $region8
  $region5: #{forward.18} parent=0 // loop_body
    %s14 = ssub.s32 %s9, 1
    %s15 = ssub.s32 %s9, 2
    %s25 = sadd.s32 1, %s18
    %p26 = scmp.ge.s32.totalorder %s25, 1
    %s27 = scalar_select %p26, 0, %s25
    %s28 = sadd.s32 1, %s17
    %s29 = scalar_select %p26, %s28, %s17
    %p30 = scmp.ge.s32.totalorder %s29, 1
    %s31 = scalar_select %p30, 0, %s29
    %s32 = sadd.s32 1, %s16
    %s33 = scalar_select %p30, %s32, %s16
    %p34 = scmp.ge.s32.totalorder %s33, 12
    %s35 = scalar_select %p34, 0, %s33
    %s36 = ssub.s32 %s16, %s35
    %s37 = ssub.s32 %s18, %s27
    %s38 = sor.u32 %s36, %s37
    %p39 = scmp.eq.s32.totalorder %s38, 0
    %s41 = sadd.s32 %s40, 1
    %s42 = scalar_select %p39, %s40, %s41
    %p45 = pneg %p39
    %p46 = scmp.eq.s32.totalorder %s9, 11
    %p47 = por %p45, %p46
    %p48 = scmp.ne.s32.totalorder %s40, %s43
    %p49 = scmp.eq.s32.totalorder %s9, 0
    %p50 = por %p48, %p49
    %p51 = scmp.ne.s32.totalorder %s40, %s43
    %p52 = scmp.eq.s32.totalorder %s14, 11
    %p53 = por %p51, %p52
    %p54 = scmp.ne.s32.totalorder %s43, %s44
    %p55 = scmp.eq.s32.totalorder %s14, 0
    %p56 = por %p54, %p55
    %p57 = scmp.ne.s32.totalorder %s43, %s44
    %p58 = scmp.eq.s32.totalorder %s15, 11
    %p59 = por %p57, %p58
    %p61 = scmp.ne.s32.totalorder %s44, %s60
    %p62 = scmp.eq.s32.totalorder %s15, 0
    %p63 = por %p61, %p62
    %s64 = ssub.s32 %s18, %s27
    %s65 = ssub.s32 %s17, %s31
    %s66 = sor.u32 %s64, %s65
    %p67 = scmp.eq.s32.totalorder %s66, 0
    %s69 = sadd.s32 %s68, 1
    %s70 = scalar_select %p67, %s68, %s69
    %p73 = pneg %p67
    %p74 = scmp.eq.s32.totalorder %s9, 11
    %p75 = por %p73, %p74
    %p76 = scmp.ne.s32.totalorder %s68, %s71
    %p77 = scmp.eq.s32.totalorder %s9, 0
    %p78 = por %p76, %p77
    %p79 = scmp.ne.s32.totalorder %s68, %s71
    %p80 = scmp.eq.s32.totalorder %s14, 11
    %p81 = por %p79, %p80
    %p82 = scmp.ne.s32.totalorder %s71, %s72
    %p83 = scmp.eq.s32.totalorder %s14, 0
    %p84 = por %p82, %p83
    %p85 = scmp.ne.s32.totalorder %s71, %s72
    %p86 = scmp.eq.s32.totalorder %s15, 11
    %p87 = por %p85, %p86
    %p89 = scmp.ne.s32.totalorder %s72, %s88
    %p90 = scmp.eq.s32.totalorder %s15, 0
    %p91 = por %p89, %p90
    %s92 = ssub.s32 %s17, %s31
    %p93 = scmp.eq.s32.totalorder %s92, 0
    %s95 = sadd.s32 %s94, 1
    %s96 = scalar_select %p93, %s94, %s95
    %p99 = pneg %p93
    %p100 = scmp.eq.s32.totalorder %s9, 11
    %p101 = por %p99, %p100
    %p102 = scmp.ne.s32.totalorder %s94, %s97
    %p103 = scmp.eq.s32.totalorder %s9, 0
    %p104 = por %p102, %p103
    %p105 = scmp.ne.s32.totalorder %s94, %s97
    %p106 = scmp.eq.s32.totalorder %s14, 11
    %p107 = por %p105, %p106
    %p108 = scmp.ne.s32.totalorder %s97, %s98
    %p109 = scmp.eq.s32.totalorder %s14, 0
    %p110 = por %p108, %p109
    %p111 = scmp.ne.s32.totalorder %s97, %s98
    %p112 = scmp.eq.s32.totalorder %s15, 11
    %p113 = por %p111, %p112
    %p115 = scmp.ne.s32.totalorder %s98, %s114
    %p116 = scmp.eq.s32.totalorder %s15, 0
    %p117 = por %p115, %p116
    %s118 = ssub.s32 %s16, %s35
    %s119 = ssub.s32 %s17, %s31
    %s120 = sor.u32 %s118, %s119
    %p121 = scmp.eq.s32.totalorder %s120, 0
    %s123 = sadd.s32 %s122, 1
    %s124 = scalar_select %p121, %s122, %s123
    %p127 = pneg %p121
    %p128 = scmp.eq.s32.totalorder %s9, 11
    %p129 = por %p127, %p128
    %p130 = scmp.ne.s32.totalorder %s122, %s125
    %p131 = scmp.eq.s32.totalorder %s9, 0
    %p132 = por %p130, %p131
    %p133 = scmp.ne.s32.totalorder %s122, %s125
    %p134 = scmp.eq.s32.totalorder %s14, 11
    %p135 = por %p133, %p134
    %p136 = scmp.ne.s32.totalorder %s125, %s126
    %p137 = scmp.eq.s32.totalorder %s14, 0
    %p138 = por %p136, %p137
    %p139 = scmp.ne.s32.totalorder %s125, %s126
    %p140 = scmp.eq.s32.totalorder %s15, 11
    %p141 = por %p139, %p140
    %p143 = scmp.ne.s32.totalorder %s126, %s142
    %p144 = scmp.eq.s32.totalorder %s15, 0
    %p145 = por %p143, %p144
    %p146 = scmp.le.s32.totalorder 1, %s9
    %p147 = scmp.lt.s32.totalorder %s9, 13
    %p148 = pnand %p146, %p147
    %p149 = pneg %p148
    // Predicated region
    $region9: #{forward.18} parent=5 // pred_check
      _
    $region10: #{forward.18} parent=5 // pred_check_branch
      %151 = sbr.rel (%p148) target = $region12
    $region11: #{forward.18} parent=5 // pred_region
      %s152 = ssub.s32 %s9, 1
      // Predicated region
      $region13: #{forward.18} parent=11 // pred_check
        %p153 = pneg %p84
      $region14: #{forward.18} parent=11 // pred_check_branch
        %155 = sbr.rel (%p153) target = $region16
      $region15: #{forward.18} parent=11 // pred_region
        %s156 = smul.u32 16, %s21
        %p157 = scmp.lt.s32.totalorder %s156, 15
        %s158 = scalar_select %p157, %s156, 15
        %p159 = scmp.lt.s32.totalorder %s20, 0
        %s160 = scalar_select %p159, %s20, 0
        %s161 = sadd.s32 %s160, %s158
        %s162 = smul.addr %s161, 4
        %s163 = scalar_lea.vmem %s1, %s162
        %s164 = smul.u32 16, %s21
      $region16: #{forward.18} parent=11 // pred_fallthru
        _
      // Predicated region
      $region17: #{forward.18} parent=11 // pred_check
        %p165 = pneg %p110
      $region18: #{forward.18} parent=11 // pred_check_branch
        %167 = sbr.rel (%p165) target = $region20
      $region19: #{forward.18} parent=11 // pred_region
        %p168 = scmp.lt.s32.totalorder %s20, 0
        %s169 = scalar_select %p168, %s20, 0
        %s170 = scalar_lea.vmem %s2, %s169
      $region20: #{forward.18} parent=11 // pred_fallthru
        _
    $region12: #{forward.18} parent=5 // pred_fallthru
      _
    %p171 = scmp.lt.s32.totalorder %s9, 12
    // Predicated region
    $region21: #{forward.18} parent=5 // pred_check
      %p172 = pneg %p171
    $region22: #{forward.18} parent=5 // pred_check_branch
      %174 = sbr.rel (%p172) target = $region24
    $region23: #{forward.18} parent=5 // pred_region
      // Predicated region
      $region25: #{forward.18} parent=23 // pred_check
        %p175 = pneg %p50
      $region26: #{forward.18} parent=23 // pred_check_branch
        %177 = sbr.rel (%p175) target = $region28
      $region27: #{forward.18} parent=23 // pred_region
        %s178 = smul.u32 16, %s16
        %p179 = scmp.lt.s32.totalorder %s178, 191
        %s180 = scalar_select %p179, %s178, 191
        %p181 = scmp.lt.s32.totalorder %s18, 0
        %s182 = scalar_select %p181, %s18, 0
        %s183 = sadd.s32 %s182, %s180
        %s184 = smul.addr %s183, 4
        %s185 = scalar_lea.vmem %s0, %s184
        %s186 = smul.u32 16, %s16
      $region28: #{forward.18} parent=23 // pred_fallthru
        _
    $region24: #{forward.18} parent=5 // pred_fallthru
      _
    %p187 = scmp.le.s32.totalorder 1, %s9
    %p188 = scmp.lt.s32.totalorder %s9, 13
    %p189 = pnand %p187, %p188
    %p190 = pneg %p189
    // Predicated region
    $region29: #{forward.18} parent=5 // pred_check
      _
    $region30: #{forward.18} parent=5 // pred_check_branch
      %192 = sbr.rel (%p189) target = $region32
    $region31: #{forward.18} parent=5 // pred_region
      %s193 = ssub.s32 %s9, 1
      %s194 = smul.u32 16, %s19
      %p195 = scmp.lt.s32.totalorder %s194, 191
      %s196 = scalar_select %p195, %s194, 191
      %p197 = scmp.lt.s32.totalorder %s21, 0
      %s198 = scalar_select %p197, %s21, 0
      %s199 = sadd.s32 %s198, %s196
      %s200 = smul.addr %s199, 4
      %s201 = scalar_lea.vmem %s0, %s200
      %p202 = pneg %p56
      %p203 = pneg %p53
      %s204 = smul.u32 16, %s21
      %p205 = scmp.lt.s32.totalorder %s204, 15
      %s206 = scalar_select %p205, %s204, 15
      %p207 = scmp.lt.s32.totalorder %s20, 0
      %s208 = scalar_select %p207, %s20, 0
      %s209 = sadd.s32 %s208, %s206
      %s210 = smul.addr %s209, 4
      %s211 = scalar_lea.vmem %s1, %s210
      %p212 = pneg %p84
      %p213 = pneg %p81
      %p214 = scmp.lt.s32.totalorder %s20, 0
      %s215 = scalar_select %p214, %s20, 0
      %s216 = scalar_lea.vmem %s2, %s215
      %p217 = pneg %p110
      %p218 = pneg %p107
      %p219 = pneg %p138
      %p220 = pneg %p135
      %s221 = smul.u32 16, %s19
      %p222 = scmp.lt.s32.totalorder %s221, 191
      %s223 = scalar_select %p222, %s221, 191
      %p224 = scmp.lt.s32.totalorder %s20, 0
      %s225 = scalar_select %p224, %s20, 0
      %s226 = sadd.s32 %s225, %s223
      %s227 = smul.addr %s226, 8
      %s228 = scalar_lea.vmem %s3, %s227
      %s229 = smul.u32 16, %s19
      %p230 = scmp.lt.s32.totalorder %s229, 191
      %s231 = scalar_select %p230, %s229, 191
      %p232 = scmp.lt.s32.totalorder %s21, 0
      %s233 = scalar_select %p232, %s21, 0
      %s234 = sadd.s32 %s233, %s231
      %s235 = smul.addr %s234, 4
      %s236 = scalar_lea.vmem %s0, %s235
      %s237 = smul.u32 16, %s19
      %s238 = smul.u32 16, %s21
      %p239 = scmp.lt.s32.totalorder %s238, 15
      %s240 = scalar_select %p239, %s238, 15
      %p241 = scmp.lt.s32.totalorder %s20, 0
      %s242 = scalar_select %p241, %s20, 0
      %s243 = sadd.s32 %s242, %s240
      %s244 = smul.addr %s243, 4
      %s245 = scalar_lea.vmem %s1, %s244
      %s246 = smul.u32 16, %s21
      %p247 = scmp.lt.s32.totalorder %s20, 0
      %s248 = scalar_select %p247, %s20, 0
      %s249 = scalar_lea.vmem %s2, %s248
      %s250 = smul.u32 16, %s19
      %p251 = scmp.lt.s32.totalorder %s250, 191
      %s252 = scalar_select %p251, %s250, 191
      %p253 = scmp.lt.s32.totalorder %s20, 0
      %s254 = scalar_select %p253, %s20, 0
      %s255 = sadd.s32 %s254, %s252
      %s256 = smul.addr %s255, 8
      %s257 = scalar_lea.vmem %s3, %s256
      %s258 = smul.u32 16, %s19
      %p260 = scmp.eq.s32.totalorder %s21, 0
      // Predicated region
      $region33: #{forward.18} parent=31 // pred_check
        %p261 = pneg %p260
      $region34: #{forward.18} parent=31 // pred_check_branch
        %263 = sbr.rel (%p261) target = $region36
      $region35: #{forward.18} parent=31 // pred_region
        %264 = vst [vmem:[#allocation2] sm:$0xff] 0.0
        %265 = vst [vmem:[#allocation2 + $0x8] sm:$0xff] 0.0
        %266 = vst [vmem:[#allocation2 + $0x10] sm:$0xff] 0.0
        %267 = vst [vmem:[#allocation2 + $0x18] sm:$0xff] 0.0
        %268 = vst [vmem:[#allocation2 + $0x20] sm:$0xff] 0.0
        %269 = vst [vmem:[#allocation2 + $0x28] sm:$0xff] 0.0
        %270 = vst [vmem:[#allocation2 + $0x30] sm:$0xff] 0.0
        %271 = vst [vmem:[#allocation2 + $0x38] sm:$0xff] 0.0
        %272 = vst [vmem:[#allocation2 + $0x40] sm:$0xff] 0.0
        %273 = vst [vmem:[#allocation2 + $0x48] sm:$0xff] 0.0
        %274 = vst [vmem:[#allocation2 + $0x50] sm:$0xff] 0.0
        %275 = vst [vmem:[#allocation2 + $0x58] sm:$0xff] 0.0
        %276 = vst [vmem:[#allocation2 + $0x60] sm:$0xff] 0.0
        %277 = vst [vmem:[#allocation2 + $0x68] sm:$0xff] 0.0
        %278 = vst [vmem:[#allocation2 + $0x70] sm:$0xff] 0.0
        %279 = vst [vmem:[#allocation2 + $0x78] sm:$0xff] 0.0
      $region36: #{forward.18} parent=31 // pred_fallthru
        _
      %v280 = vld [vmem:[#allocation2] sm:$0xff]
      %v281 = vld [vmem:[#allocation2 + $0x8] sm:$0xff]
      %v282 = vld [vmem:[#allocation2 + $0x10] sm:$0xff]
      %v283 = vld [vmem:[#allocation2 + $0x18] sm:$0xff]
      %v284 = vld [vmem:[#allocation2 + $0x20] sm:$0xff]
      %v285 = vld [vmem:[#allocation2 + $0x28] sm:$0xff]
      %v286 = vld [vmem:[#allocation2 + $0x30] sm:$0xff]
      %v287 = vld [vmem:[#allocation2 + $0x38] sm:$0xff]
      %v288 = vld [vmem:[#allocation2 + $0x40] sm:$0xff]
      %v289 = vld [vmem:[#allocation2 + $0x48] sm:$0xff]
      %v290 = vld [vmem:[#allocation2 + $0x50] sm:$0xff]
      %v291 = vld [vmem:[#allocation2 + $0x58] sm:$0xff]
      %v292 = vld [vmem:[#allocation2 + $0x60] sm:$0xff]
      %v293 = vld [vmem:[#allocation2 + $0x68] sm:$0xff]
      %v294 = vld [vmem:[#allocation2 + $0x70] sm:$0xff]
      %v295 = vld [vmem:[#allocation2 + $0x78] sm:$0xff]
      %v296 = vld [vmem:[%s236] sm:$0xf]
      %v297 = vld [vmem:[%s236 + $0x4] sm:$0xf]
      %v298 = vld [vmem:[%s236 + $0x8] sm:$0xf]
      %v299 = vld [vmem:[%s236 + $0xc] sm:$0xf]
      %v300 = vld [vmem:[%s236 + $0x10] sm:$0xf]
      %v301 = vld [vmem:[%s236 + $0x14] sm:$0xf]
      %v302 = vld [vmem:[%s236 + $0x18] sm:$0xf]
      %v303 = vld [vmem:[%s236 + $0x1c] sm:$0xf]
      %v304 = vld [vmem:[%s236 + $0x20] sm:$0xf]
      %v305 = vld [vmem:[%s236 + $0x24] sm:$0xf]
      %v306 = vld [vmem:[%s236 + $0x28] sm:$0xf]
      %v307 = vld [vmem:[%s236 + $0x2c] sm:$0xf]
      %v308 = vld [vmem:[%s236 + $0x30] sm:$0xf]
      %v309 = vld [vmem:[%s236 + $0x34] sm:$0xf]
      %v310 = vld [vmem:[%s236 + $0x38] sm:$0xf]
      %v311 = vld [vmem:[%s236 + $0x3c] sm:$0xf]
      %v312 = vld [vmem:[%s245] sm:$0xf]
      %v313 = vld [vmem:[%s245 + $0x4] sm:$0xf]
      %v314 = vld [vmem:[%s245 + $0x8] sm:$0xf]
      %v315 = vld [vmem:[%s245 + $0xc] sm:$0xf]
      %v316 = vld [vmem:[%s245 + $0x10] sm:$0xf]
      %v317 = vld [vmem:[%s245 + $0x14] sm:$0xf]
      %v318 = vld [vmem:[%s245 + $0x18] sm:$0xf]
      %v319 = vld [vmem:[%s245 + $0x1c] sm:$0xf]
      %v320 = vld [vmem:[%s245 + $0x20] sm:$0xf]
      %v321 = vld [vmem:[%s245 + $0x24] sm:$0xf]
      %v322 = vld [vmem:[%s245 + $0x28] sm:$0xf]
      %v323 = vld [vmem:[%s245 + $0x2c] sm:$0xf]
      %v324 = vld [vmem:[%s245 + $0x30] sm:$0xf]
      %v325 = vld [vmem:[%s245 + $0x34] sm:$0xf]
      %v326 = vld [vmem:[%s245 + $0x38] sm:$0xf]
      %v327 = vld [vmem:[%s245 + $0x3c] sm:$0xf]
      %v344 = vunpack.c.l.b16 %v296
      %v345 = vunpack.c.l.b16 %v297
      %v346 = vunpack.c.l.b16 %v298
      %v347 = vunpack.c.l.b16 %v299
      %v348 = vunpack.c.l.b16 %v300
      %v349 = vunpack.c.l.b16 %v301
      %v350 = vunpack.c.l.b16 %v302
      %v351 = vunpack.c.l.b16 %v303
      %v352 = vunpack.c.l.b16 %v304
      %v353 = vunpack.c.l.b16 %v305
      %v354 = vunpack.c.l.b16 %v306
      %v355 = vunpack.c.l.b16 %v307
      %v356 = vunpack.c.l.b16 %v308
      %v357 = vunpack.c.l.b16 %v309
      %v358 = vunpack.c.l.b16 %v310
      %v359 = vunpack.c.l.b16 %v311
      %v360 = vpack.c.b16 %v345, %v344
      %v361 = vpack.c.b16 %v347, %v346
      %v362 = vpack.c.b16 %v349, %v348
      %v363 = vpack.c.b16 %v351, %v350
      %v364 = vpack.c.b16 %v353, %v352
      %v365 = vpack.c.b16 %v355, %v354
      %v366 = vpack.c.b16 %v357, %v356
      %v367 = vpack.c.b16 %v359, %v358
      %v392 = vunpack.c.l.b16 %v312
      %v393 = vunpack.c.l.b16 %v313
      %v394 = vunpack.c.l.b16 %v314
      %v395 = vunpack.c.l.b16 %v315
      %v396 = vunpack.c.l.b16 %v316
      %v397 = vunpack.c.l.b16 %v317
      %v398 = vunpack.c.l.b16 %v318
      %v399 = vunpack.c.l.b16 %v319
      %v400 = vunpack.c.l.b16 %v320
      %v401 = vunpack.c.l.b16 %v321
      %v402 = vunpack.c.l.b16 %v322
      %v403 = vunpack.c.l.b16 %v323
      %v404 = vunpack.c.l.b16 %v324
      %v405 = vunpack.c.l.b16 %v325
      %v406 = vunpack.c.l.b16 %v326
      %v407 = vunpack.c.l.b16 %v327
      %v408 = vpack.c.b16 %v393, %v392
      %v409 = vpack.c.b16 %v395, %v394
      %v410 = vpack.c.b16 %v397, %v396
      %v411 = vpack.c.b16 %v399, %v398
      %v412 = vpack.c.b16 %v401, %v400
      %v413 = vpack.c.b16 %v403, %v402
      %v414 = vpack.c.b16 %v405, %v404
      %v415 = vpack.c.b16 %v407, %v406
      %424 = vmatprep.subr.bf16.mxu0 0
      %425 = vmatpush1.bf16.msra.mxu0 %v415
      %426 = vmatprep.subr.bf16.mxu0 0
      %427 = vmatpush1.bf16.msra.mxu0 %v414
      %428 = vmatprep.subr.bf16.mxu0 0
      %429 = vmatpush1.bf16.msra.mxu0 %v413
      %430 = vmatprep.subr.bf16.mxu0 0
      %431 = vmatpush1.bf16.msra.mxu0 %v412
      %432 = vmatprep.subr.bf16.mxu0 0
      %433 = vmatpush1.bf16.msra.mxu0 %v411
      %434 = vmatprep.subr.bf16.mxu0 0
      %435 = vmatpush1.bf16.msra.mxu0 %v410
      %436 = vmatprep.subr.bf16.mxu0 0
      %437 = vmatpush1.bf16.msra.mxu0 %v409
      %438 = vmatprep.subr.bf16.mxu0 0
      %439 = vmatpush1.bf16.msra.mxu0 %v408
      %440 = vmatprep.subr.bf16.mxu0 0
      %441 = vmatpush2.bf16.msra.mxu0 0
      %442 = vmatprep.subr.bf16.mxu0 0
      %443 = vmatpush2.bf16.msra.mxu0 0
      %444 = vmatprep.subr.bf16.mxu0 0
      %445 = vmatpush2.bf16.msra.mxu0 0
      %446 = vmatprep.subr.bf16.mxu0 0
      %447 = vmatpush2.bf16.msra.mxu0 0
      %448 = vmatprep.subr.bf16.mxu0 0
      %449 = vmatpush2.bf16.msra.mxu0 0
      %450 = vmatprep.subr.bf16.mxu0 0
      %451 = vmatpush2.bf16.msra.mxu0 0
      %452 = vmatprep.subr.bf16.mxu0 0
      %453 = vmatpush2.bf16.msra.mxu0 0
      %454 = vmatprep.subr.bf16.mxu0 0
      %455 = vmatpush2.bf16.msra.mxu0 0
      %456 = vmatprep.mubr.bf16.mxu0 0
      %457 = vmatmul.mubr.bf16.gmra.mxu0 %v360
      %v458 = vpop.f32.mrf.mxu0
      %v459 = vadd.f32 0.0, %v458
      %v460 = vpop.f32.mrf.mxu0
      %v461 = vpop.f32.mrf.mxu0
      %v462 = vadd.f32 0.0, %v461
      %v463 = vpop.f32.mrf.mxu0
      %464 = vmatprep.mubr.bf16.mxu0 0
      %465 = vmatmul.mubr.bf16.gmra.mxu0 %v361
      %v466 = vpop.f32.mrf.mxu0
      %v467 = vadd.f32 0.0, %v466
      %v468 = vpop.f32.mrf.mxu0
      %v469 = vpop.f32.mrf.mxu0
      %v470 = vadd.f32 0.0, %v469
      %v471 = vpop.f32.mrf.mxu0
      %472 = vmatprep.mubr.bf16.mxu0 0
      %473 = vmatmul.mubr.bf16.gmra.mxu0 %v362
      %v474 = vpop.f32.mrf.mxu0
      %v475 = vadd.f32 0.0, %v474
      %v476 = vpop.f32.mrf.mxu0
      %v477 = vpop.f32.mrf.mxu0
      %v478 = vadd.f32 0.0, %v477
      %v479 = vpop.f32.mrf.mxu0
      %480 = vmatprep.mubr.bf16.mxu0 0
      %481 = vmatmul.mubr.bf16.gmra.mxu0 %v363
      %v482 = vpop.f32.mrf.mxu0
      %v483 = vadd.f32 0.0, %v482
      %v484 = vpop.f32.mrf.mxu0
      %v485 = vpop.f32.mrf.mxu0
      %v486 = vadd.f32 0.0, %v485
      %v487 = vpop.f32.mrf.mxu0
      %488 = vmatprep.mubr.bf16.mxu0 0
      %489 = vmatmul.mubr.bf16.gmra.mxu0 %v364
      %v490 = vpop.f32.mrf.mxu0
      %v491 = vadd.f32 0.0, %v490
      %v492 = vpop.f32.mrf.mxu0
      %v493 = vpop.f32.mrf.mxu0
      %v494 = vadd.f32 0.0, %v493
      %v495 = vpop.f32.mrf.mxu0
      %496 = vmatprep.mubr.bf16.mxu0 0
      %497 = vmatmul.mubr.bf16.gmra.mxu0 %v365
      %v498 = vpop.f32.mrf.mxu0
      %v499 = vadd.f32 0.0, %v498
      %v500 = vpop.f32.mrf.mxu0
      %v501 = vpop.f32.mrf.mxu0
      %v502 = vadd.f32 0.0, %v501
      %v503 = vpop.f32.mrf.mxu0
      %504 = vmatprep.mubr.bf16.mxu0 0
      %505 = vmatmul.mubr.bf16.gmra.mxu0 %v366
      %v506 = vpop.f32.mrf.mxu0
      %v507 = vadd.f32 0.0, %v506
      %v508 = vpop.f32.mrf.mxu0
      %v509 = vpop.f32.mrf.mxu0
      %v510 = vadd.f32 0.0, %v509
      %v511 = vpop.f32.mrf.mxu0
      %512 = vmatprep.mubr.bf16.mxu0 0
      %513 = vmatmul.mubr.bf16.gmra.mxu0 %v367
      %v514 = vpop.f32.mrf.mxu0
      %v515 = vadd.f32 0.0, %v514
      %v516 = vpop.f32.mrf.mxu0
      %v517 = vpop.f32.mrf.mxu0
      %v518 = vadd.f32 0.0, %v517
      %v519 = vpop.f32.mrf.mxu0
      %520 = vdwg.mxu0
      %v521 = vadd.f32 %v280, %v459
      %v522 = vadd.f32 %v281, %v462
      %v523 = vadd.f32 %v282, %v467
      %v524 = vadd.f32 %v283, %v470
      %v525 = vadd.f32 %v284, %v475
      %v526 = vadd.f32 %v285, %v478
      %v527 = vadd.f32 %v286, %v483
      %v528 = vadd.f32 %v287, %v486
      %v529 = vadd.f32 %v288, %v491
      %v530 = vadd.f32 %v289, %v494
      %v531 = vadd.f32 %v290, %v499
      %v532 = vadd.f32 %v291, %v502
      %v533 = vadd.f32 %v292, %v507
      %v534 = vadd.f32 %v293, %v510
      %v535 = vadd.f32 %v294, %v515
      %v536 = vadd.f32 %v295, %v518
      %537 = vst [vmem:[#allocation2] sm:$0xff] %v521
      %538 = vst [vmem:[#allocation2 + $0x8] sm:$0xff] %v522
      %539 = vst [vmem:[#allocation2 + $0x10] sm:$0xff] %v523
      %540 = vst [vmem:[#allocation2 + $0x18] sm:$0xff] %v524
      %541 = vst [vmem:[#allocation2 + $0x20] sm:$0xff] %v525
      %542 = vst [vmem:[#allocation2 + $0x28] sm:$0xff] %v526
      %543 = vst [vmem:[#allocation2 + $0x30] sm:$0xff] %v527
      %544 = vst [vmem:[#allocation2 + $0x38] sm:$0xff] %v528
      %545 = vst [vmem:[#allocation2 + $0x40] sm:$0xff] %v529
      %546 = vst [vmem:[#allocation2 + $0x48] sm:$0xff] %v530
      %547 = vst [vmem:[#allocation2 + $0x50] sm:$0xff] %v531
      %548 = vst [vmem:[#allocation2 + $0x58] sm:$0xff] %v532
      %549 = vst [vmem:[#allocation2 + $0x60] sm:$0xff] %v533
      %550 = vst [vmem:[#allocation2 + $0x68] sm:$0xff] %v534
      %551 = vst [vmem:[#allocation2 + $0x70] sm:$0xff] %v535
      %552 = vst [vmem:[#allocation2 + $0x78] sm:$0xff] %v536
      // Predicated region
      $region37: #{forward.18} parent=31 // pred_check
        %p553 = pneg %p260
      $region38: #{forward.18} parent=31 // pred_check_branch
        %555 = sbr.rel (%p553) target = $region40
      $region39: #{forward.18} parent=31 // pred_region
        %v556 = vld [vmem:[#allocation2] sm:$0xff]
        %v557 = vld [vmem:[#allocation2 + $0x8] sm:$0xff]
        %v558 = vld [vmem:[#allocation2 + $0x10] sm:$0xff]
        %v559 = vld [vmem:[#allocation2 + $0x18] sm:$0xff]
        %v560 = vld [vmem:[#allocation2 + $0x20] sm:$0xff]
        %v561 = vld [vmem:[#allocation2 + $0x28] sm:$0xff]
        %v562 = vld [vmem:[#allocation2 + $0x30] sm:$0xff]
        %v563 = vld [vmem:[#allocation2 + $0x38] sm:$0xff]
        %v564 = vld [vmem:[#allocation2 + $0x40] sm:$0xff]
        %v565 = vld [vmem:[#allocation2 + $0x48] sm:$0xff]
        %v566 = vld [vmem:[#allocation2 + $0x50] sm:$0xff]
        %v567 = vld [vmem:[#allocation2 + $0x58] sm:$0xff]
        %v568 = vld [vmem:[#allocation2 + $0x60] sm:$0xff]
        %v569 = vld [vmem:[#allocation2 + $0x68] sm:$0xff]
        %v570 = vld [vmem:[#allocation2 + $0x70] sm:$0xff]
        %v571 = vld [vmem:[#allocation2 + $0x78] sm:$0xff]
        %v572 = vld [vmem:[%s249] sm:$0x1]
        %v574 = vlaneseq
        %v575 = vshrl.u32 %v574, 7
        %v576 = vsub.s32 0, %v575
        %v577 = vrot.slane %v572, %v576
        %v579 = vadd.f32 %v556, %v577
        %v580 = vadd.f32 %v557, %v577
        %v581 = vadd.f32 %v558, %v577
        %v582 = vadd.f32 %v559, %v577
        %v583 = vadd.f32 %v560, %v577
        %v584 = vadd.f32 %v561, %v577
        %v585 = vadd.f32 %v562, %v577
        %v586 = vadd.f32 %v563, %v577
        %v587 = vadd.f32 %v564, %v577
        %v588 = vadd.f32 %v565, %v577
        %v589 = vadd.f32 %v566, %v577
        %v590 = vadd.f32 %v567, %v577
        %v591 = vadd.f32 %v568, %v577
        %v592 = vadd.f32 %v569, %v577
        %v593 = vadd.f32 %v570, %v577
        %v594 = vadd.f32 %v571, %v577
        %595 = vst [vmem:[%s257] sm:$0xff] %v579
        %596 = vst [vmem:[%s257 + $0x8] sm:$0xff] %v580
        %597 = vst [vmem:[%s257 + $0x10] sm:$0xff] %v581
        %598 = vst [vmem:[%s257 + $0x18] sm:$0xff] %v582
        %599 = vst [vmem:[%s257 + $0x20] sm:$0xff] %v583
        %600 = vst [vmem:[%s257 + $0x28] sm:$0xff] %v584
        %601 = vst [vmem:[%s257 + $0x30] sm:$0xff] %v585
        %602 = vst [vmem:[%s257 + $0x38] sm:$0xff] %v586
        %603 = vst [vmem:[%s257 + $0x40] sm:$0xff] %v587
        %604 = vst [vmem:[%s257 + $0x48] sm:$0xff] %v588
        %605 = vst [vmem:[%s257 + $0x50] sm:$0xff] %v589
        %606 = vst [vmem:[%s257 + $0x58] sm:$0xff] %v590
        %607 = vst [vmem:[%s257 + $0x60] sm:$0xff] %v591
        %608 = vst [vmem:[%s257 + $0x68] sm:$0xff] %v592
        %609 = vst [vmem:[%s257 + $0x70] sm:$0xff] %v593
        %610 = vst [vmem:[%s257 + $0x78] sm:$0xff] %v594
      $region40: #{forward.18} parent=31 // pred_fallthru
        _
      %s611 = smul.u32 16, %s19
      %p612 = scmp.lt.s32.totalorder %s611, 191
      %s613 = scalar_select %p612, %s611, 191
      %p614 = scmp.lt.s32.totalorder %s20, 0
      %s615 = scalar_select %p614, %s20, 0
      %s616 = sadd.s32 %s615, %s613
      %s617 = smul.addr %s616, 8
      %s618 = scalar_lea.vmem %s3, %s617
      // Predicated region
      $region41: #{forward.18} parent=31 // pred_check
        %p619 = pneg %p135
      $region42: #{forward.18} parent=31 // pred_check_branch
        %621 = sbr.rel (%p619) target = $region44
      $region43: #{forward.18} parent=31 // pred_region
        %s622 = smul.u32 16, %s19
      $region44: #{forward.18} parent=31 // pred_fallthru
        _
    $region32: #{forward.18} parent=5 // pred_fallthru
      _
    %p623 = scmp.le.s32.totalorder 2, %s9
    // Predicated region
    $region45: #{forward.18} parent=5 // pred_check
      %p624 = pneg %p623
    $region46: #{forward.18} parent=5 // pred_check_branch
      %626 = sbr.rel (%p624) target = $region48
    $region47: #{forward.18} parent=5 // pred_region
      %s627 = ssub.s32 %s9, 2
      // Predicated region
      $region49: #{forward.18} parent=47 // pred_check
        %p628 = pneg %p141
      $region50: #{forward.18} parent=47 // pred_check_branch
        %630 = sbr.rel (%p628) target = $region52
      $region51: #{forward.18} parent=47 // pred_region
        %s631 = smul.u32 16, %s22
        %p632 = scmp.lt.s32.totalorder %s631, 191
        %s633 = scalar_select %p632, %s631, 191
        %p634 = scmp.lt.s32.totalorder %s23, 0
        %s635 = scalar_select %p634, %s23, 0
        %s636 = sadd.s32 %s635, %s633
        %s637 = smul.addr %s636, 8
        %s638 = scalar_lea.vmem %s3, %s637
      $region52: #{forward.18} parent=47 // pred_fallthru
        _
    $region48: #{forward.18} parent=5 // pred_fallthru
      _
  $region6: #{forward.18} parent=0 // loop_footer
    %s13 = sadd.s32 1, %s9
  $region7: #{forward.18} parent=0 // loop_footer_branch
    %8 = sbr.rel target = $region3
  $region8: #{forward.18} parent=0 // loop_exit
    _

// kernel: forward.19
$region0: #{forward.19}
  #allocation0 [shape = 'u32[]', space=smem, size = 0x4, offset = 0x4, fixed_abs, tag = 'smem constant byte address 0x4 - core index']
  #allocation1 [shape = 'u32[144,128]{1,0:T(1,128)}', space=vmem, size = 0x12000, scoped, tag = 'internal scratch']
  #allocation2 [shape = 'f32[128,128]{1,0:T(8,128)}', space=vmem, size = 0x10000, scoped, tag = 'scratch operand']
  %s0 = inlined_call_operand.vmem [shape: bf16[768,128], index: 0, kind: input, shape index: {}]
  %s1 = inlined_call_operand.vmem [shape: bf16[128,128], index: 1, kind: input, shape index: {}]
  %s2 = inlined_call_operand.vmem [shape: f32[1,128], index: 2, kind: input, shape index: {}]
  %s3 = inlined_call_operand.vmem [shape: f32[768,128], index: 3, kind: output, shape index: {}]
  %s4 = sld [smem:[#allocation0]]
  $region53: #{forward.19} parent=0
    _
  %s6 = ssub.s32 1, %s4
  %s7 = scalar_select 0, %s6, %s4
  loop: start=0, step=1, limit=8
  $region2: #{forward.19} parent=0 // loop_pre_header
    _
  $region3: #{forward.19} parent=0 // loop_header
    %s9 = sphi 0, %s13
    %p10 = scmp.ge.s32.totalorder %s9, 8
    %s16 = sphi 0, %s35
    %s17 = sphi 0, %s31
    %s18 = sphi 0, %s27
    %s19 = sphi 0, %s16
    %s20 = sphi 0, %s17
    %s21 = sphi 0, %s18
    %s22 = sphi 0, %s19
    %s23 = sphi 0, %s20
    %s24 = sphi 0, %s21
    %s40 = sphi 0, %s42
    %s43 = sphi 0, %s40
    %s44 = sphi 0, %s43
    %s60 = sphi 0, %s44
    %s68 = sphi 0, %s70
    %s71 = sphi 0, %s68
    %s72 = sphi 0, %s71
    %s88 = sphi 0, %s72
    %s94 = sphi 0, %s96
    %s97 = sphi 0, %s94
    %s98 = sphi 0, %s97
    %s114 = sphi 0, %s98
    %s122 = sphi 0, %s124
    %s125 = sphi 0, %s122
    %s126 = sphi 0, %s125
    %s142 = sphi 0, %s126
  $region4: #{forward.19} parent=0 // loop_header_branch
    %12 = sbr.rel (%p10) target = $region8
  $region5: #{forward.19} parent=0 // loop_body
    %s14 = ssub.s32 %s9, 1
    %s15 = ssub.s32 %s9, 2
    %s25 = sadd.s32 1, %s18
    %p26 = scmp.ge.s32.totalorder %s25, 1
    %s27 = scalar_select %p26, 0, %s25
    %s28 = sadd.s32 1, %s17
    %s29 = scalar_select %p26, %s28, %s17
    %p30 = scmp.ge.s32.totalorder %s29, 1
    %s31 = scalar_select %p30, 0, %s29
    %s32 = sadd.s32 1, %s16
    %s33 = scalar_select %p30, %s32, %s16
    %p34 = scmp.ge.s32.totalorder %s33, 6
    %s35 = scalar_select %p34, 0, %s33
    %s36 = ssub.s32 %s16, %s35
    %s37 = ssub.s32 %s18, %s27
    %s38 = sor.u32 %s36, %s37
    %p39 = scmp.eq.s32.totalorder %s38, 0
    %s41 = sadd.s32 %s40, 1
    %s42 = scalar_select %p39, %s40, %s41
    %p45 = pneg %p39
    %p46 = scmp.eq.s32.totalorder %s9, 5
    %p47 = por %p45, %p46
    %p48 = scmp.ne.s32.totalorder %s40, %s43
    %p49 = scmp.eq.s32.totalorder %s9, 0
    %p50 = por %p48, %p49
    %p51 = scmp.ne.s32.totalorder %s40, %s43
    %p52 = scmp.eq.s32.totalorder %s14, 5
    %p53 = por %p51, %p52
    %p54 = scmp.ne.s32.totalorder %s43, %s44
    %p55 = scmp.eq.s32.totalorder %s14, 0
    %p56 = por %p54, %p55
    %p57 = scmp.ne.s32.totalorder %s43, %s44
    %p58 = scmp.eq.s32.totalorder %s15, 5
    %p59 = por %p57, %p58
    %p61 = scmp.ne.s32.totalorder %s44, %s60
    %p62 = scmp.eq.s32.totalorder %s15, 0
    %p63 = por %p61, %p62
    %s64 = ssub.s32 %s18, %s27
    %s65 = ssub.s32 %s17, %s31
    %s66 = sor.u32 %s64, %s65
    %p67 = scmp.eq.s32.totalorder %s66, 0
    %s69 = sadd.s32 %s68, 1
    %s70 = scalar_select %p67, %s68, %s69
    %p73 = pneg %p67
    %p74 = scmp.eq.s32.totalorder %s9, 5
    %p75 = por %p73, %p74
    %p76 = scmp.ne.s32.totalorder %s68, %s71
    %p77 = scmp.eq.s32.totalorder %s9, 0
    %p78 = por %p76, %p77
    %p79 = scmp.ne.s32.totalorder %s68, %s71
    %p80 = scmp.eq.s32.totalorder %s14, 5
    %p81 = por %p79, %p80
    %p82 = scmp.ne.s32.totalorder %s71, %s72
    %p83 = scmp.eq.s32.totalorder %s14, 0
    %p84 = por %p82, %p83
    %p85 = scmp.ne.s32.totalorder %s71, %s72
    %p86 = scmp.eq.s32.totalorder %s15, 5
    %p87 = por %p85, %p86
    %p89 = scmp.ne.s32.totalorder %s72, %s88
    %p90 = scmp.eq.s32.totalorder %s15, 0
    %p91 = por %p89, %p90
    %s92 = ssub.s32 %s17, %s31
    %p93 = scmp.eq.s32.totalorder %s92, 0
    %s95 = sadd.s32 %s94, 1
    %s96 = scalar_select %p93, %s94, %s95
    %p99 = pneg %p93
    %p100 = scmp.eq.s32.totalorder %s9, 5
    %p101 = por %p99, %p100
    %p102 = scmp.ne.s32.totalorder %s94, %s97
    %p103 = scmp.eq.s32.totalorder %s9, 0
    %p104 = por %p102, %p103
    %p105 = scmp.ne.s32.totalorder %s94, %s97
    %p106 = scmp.eq.s32.totalorder %s14, 5
    %p107 = por %p105, %p106
    %p108 = scmp.ne.s32.totalorder %s97, %s98
    %p109 = scmp.eq.s32.totalorder %s14, 0
    %p110 = por %p108, %p109
    %p111 = scmp.ne.s32.totalorder %s97, %s98
    %p112 = scmp.eq.s32.totalorder %s15, 5
    %p113 = por %p111, %p112
    %p115 = scmp.ne.s32.totalorder %s98, %s114
    %p116 = scmp.eq.s32.totalorder %s15, 0
    %p117 = por %p115, %p116
    %s118 = ssub.s32 %s16, %s35
    %s119 = ssub.s32 %s17, %s31
    %s120 = sor.u32 %s118, %s119
    %p121 = scmp.eq.s32.totalorder %s120, 0
    %s123 = sadd.s32 %s122, 1
    %s124 = scalar_select %p121, %s122, %s123
    %p127 = pneg %p121
    %p128 = scmp.eq.s32.totalorder %s9, 5
    %p129 = por %p127, %p128
    %p130 = scmp.ne.s32.totalorder %s122, %s125
    %p131 = scmp.eq.s32.totalorder %s9, 0
    %p132 = por %p130, %p131
    %p133 = scmp.ne.s32.totalorder %s122, %s125
    %p134 = scmp.eq.s32.totalorder %s14, 5
    %p135 = por %p133, %p134
    %p136 = scmp.ne.s32.totalorder %s125, %s126
    %p137 = scmp.eq.s32.totalorder %s14, 0
    %p138 = por %p136, %p137
    %p139 = scmp.ne.s32.totalorder %s125, %s126
    %p140 = scmp.eq.s32.totalorder %s15, 5
    %p141 = por %p139, %p140
    %p143 = scmp.ne.s32.totalorder %s126, %s142
    %p144 = scmp.eq.s32.totalorder %s15, 0
    %p145 = por %p143, %p144
    %p146 = scmp.le.s32.totalorder 1, %s9
    %p147 = scmp.lt.s32.totalorder %s9, 7
    %p148 = pnand %p146, %p147
    %p149 = pneg %p148
    // Predicated region
    $region9: #{forward.19} parent=5 // pred_check
      _
    $region10: #{forward.19} parent=5 // pred_check_branch
      %151 = sbr.rel (%p148) target = $region12
    $region11: #{forward.19} parent=5 // pred_region
      %s152 = ssub.s32 %s9, 1
      // Predicated region
      $region13: #{forward.19} parent=11 // pred_check
        %p153 = pneg %p84
      $region14: #{forward.19} parent=11 // pred_check_branch
        %155 = sbr.rel (%p153) target = $region16
      $region15: #{forward.19} parent=11 // pred_region
        %s156 = smul.u32 16, %s21
        %p157 = scmp.lt.s32.totalorder %s156, 15
        %s158 = scalar_select %p157, %s156, 15
        %p159 = scmp.lt.s32.totalorder %s20, 0
        %s160 = scalar_select %p159, %s20, 0
        %s161 = sadd.s32 %s160, %s158
        %s162 = smul.addr %s161, 4
        %s163 = scalar_lea.vmem %s1, %s162
        %s164 = smul.u32 16, %s21
      $region16: #{forward.19} parent=11 // pred_fallthru
        _
      // Predicated region
      $region17: #{forward.19} parent=11 // pred_check
        %p165 = pneg %p110
      $region18: #{forward.19} parent=11 // pred_check_branch
        %167 = sbr.rel (%p165) target = $region20
      $region19: #{forward.19} parent=11 // pred_region
        %p168 = scmp.lt.s32.totalorder %s20, 0
        %s169 = scalar_select %p168, %s20, 0
        %s170 = scalar_lea.vmem %s2, %s169
      $region20: #{forward.19} parent=11 // pred_fallthru
        _
    $region12: #{forward.19} parent=5 // pred_fallthru
      _
    %p171 = scmp.lt.s32.totalorder %s9, 6
    // Predicated region
    $region21: #{forward.19} parent=5 // pred_check
      %p172 = pneg %p171
    $region22: #{forward.19} parent=5 // pred_check_branch
      %174 = sbr.rel (%p172) target = $region24
    $region23: #{forward.19} parent=5 // pred_region
      // Predicated region
      $region25: #{forward.19} parent=23 // pred_check
        %p175 = pneg %p50
      $region26: #{forward.19} parent=23 // pred_check_branch
        %177 = sbr.rel (%p175) target = $region28
      $region27: #{forward.19} parent=23 // pred_region
        %s178 = smul.u32 16, %s16
        %p179 = scmp.lt.s32.totalorder %s178, 95
        %s180 = scalar_select %p179, %s178, 95
        %p181 = scmp.lt.s32.totalorder %s18, 0
        %s182 = scalar_select %p181, %s18, 0
        %s183 = sadd.s32 %s182, %s180
        %s184 = smul.addr %s183, 4
        %s185 = scalar_lea.vmem %s0, %s184
        %s186 = smul.u32 16, %s16
      $region28: #{forward.19} parent=23 // pred_fallthru
        _
    $region24: #{forward.19} parent=5 // pred_fallthru
      _
    %p187 = scmp.le.s32.totalorder 1, %s9
    %p188 = scmp.lt.s32.totalorder %s9, 7
    %p189 = pnand %p187, %p188
    %p190 = pneg %p189
    // Predicated region
    $region29: #{forward.19} parent=5 // pred_check
      _
    $region30: #{forward.19} parent=5 // pred_check_branch
      %192 = sbr.rel (%p189) target = $region32
    $region31: #{forward.19} parent=5 // pred_region
      %s193 = ssub.s32 %s9, 1
      %s194 = smul.u32 16, %s19
      %p195 = scmp.lt.s32.totalorder %s194, 95
      %s196 = scalar_select %p195, %s194, 95
      %p197 = scmp.lt.s32.totalorder %s21, 0
      %s198 = scalar_select %p197, %s21, 0
      %s199 = sadd.s32 %s198, %s196
      %s200 = smul.addr %s199, 4
      %s201 = scalar_lea.vmem %s0, %s200
      %p202 = pneg %p56
      %p203 = pneg %p53
      %s204 = smul.u32 16, %s21
      %p205 = scmp.lt.s32.totalorder %s204, 15
      %s206 = scalar_select %p205, %s204, 15
      %p207 = scmp.lt.s32.totalorder %s20, 0
      %s208 = scalar_select %p207, %s20, 0
      %s209 = sadd.s32 %s208, %s206
      %s210 = smul.addr %s209, 4
      %s211 = scalar_lea.vmem %s1, %s210
      %p212 = pneg %p84
      %p213 = pneg %p81
      %p214 = scmp.lt.s32.totalorder %s20, 0
      %s215 = scalar_select %p214, %s20, 0
      %s216 = scalar_lea.vmem %s2, %s215
      %p217 = pneg %p110
      %p218 = pneg %p107
      %p219 = pneg %p138
      %p220 = pneg %p135
      %s221 = smul.u32 16, %s19
      %p222 = scmp.lt.s32.totalorder %s221, 95
      %s223 = scalar_select %p222, %s221, 95
      %p224 = scmp.lt.s32.totalorder %s20, 0
      %s225 = scalar_select %p224, %s20, 0
      %s226 = sadd.s32 %s225, %s223
      %s227 = smul.addr %s226, 8
      %s228 = scalar_lea.vmem %s3, %s227
      %s229 = smul.u32 16, %s19
      %p230 = scmp.lt.s32.totalorder %s229, 95
      %s231 = scalar_select %p230, %s229, 95
      %p232 = scmp.lt.s32.totalorder %s21, 0
      %s233 = scalar_select %p232, %s21, 0
      %s234 = sadd.s32 %s233, %s231
      %s235 = smul.addr %s234, 4
      %s236 = scalar_lea.vmem %s0, %s235
      %s237 = smul.u32 16, %s19
      %s238 = smul.u32 16, %s21
      %p239 = scmp.lt.s32.totalorder %s238, 15
      %s240 = scalar_select %p239, %s238, 15
      %p241 = scmp.lt.s32.totalorder %s20, 0
      %s242 = scalar_select %p241, %s20, 0
      %s243 = sadd.s32 %s242, %s240
      %s244 = smul.addr %s243, 4
      %s245 = scalar_lea.vmem %s1, %s244
      %s246 = smul.u32 16, %s21
      %p247 = scmp.lt.s32.totalorder %s20, 0
      %s248 = scalar_select %p247, %s20, 0
      %s249 = scalar_lea.vmem %s2, %s248
      %s250 = smul.u32 16, %s19
      %p251 = scmp.lt.s32.totalorder %s250, 95
      %s252 = scalar_select %p251, %s250, 95
      %p253 = scmp.lt.s32.totalorder %s20, 0
      %s254 = scalar_select %p253, %s20, 0
      %s255 = sadd.s32 %s254, %s252
      %s256 = smul.addr %s255, 8
      %s257 = scalar_lea.vmem %s3, %s256
      %s258 = smul.u32 16, %s19
      %p260 = scmp.eq.s32.totalorder %s21, 0
      // Predicated region
      $region33: #{forward.19} parent=31 // pred_check
        %p261 = pneg %p260
      $region34: #{forward.19} parent=31 // pred_check_branch
        %263 = sbr.rel (%p261) target = $region36
      $region35: #{forward.19} parent=31 // pred_region
        %264 = vst [vmem:[#allocation2] sm:$0xff] 0.0
        %265 = vst [vmem:[#allocation2 + $0x8] sm:$0xff] 0.0
        %266 = vst [vmem:[#allocation2 + $0x10] sm:$0xff] 0.0
        %267 = vst [vmem:[#allocation2 + $0x18] sm:$0xff] 0.0
        %268 = vst [vmem:[#allocation2 + $0x20] sm:$0xff] 0.0
        %269 = vst [vmem:[#allocation2 + $0x28] sm:$0xff] 0.0
        %270 = vst [vmem:[#allocation2 + $0x30] sm:$0xff] 0.0
        %271 = vst [vmem:[#allocation2 + $0x38] sm:$0xff] 0.0
        %272 = vst [vmem:[#allocation2 + $0x40] sm:$0xff] 0.0
        %273 = vst [vmem:[#allocation2 + $0x48] sm:$0xff] 0.0
        %274 = vst [vmem:[#allocation2 + $0x50] sm:$0xff] 0.0
        %275 = vst [vmem:[#allocation2 + $0x58] sm:$0xff] 0.0
        %276 = vst [vmem:[#allocation2 + $0x60] sm:$0xff] 0.0
        %277 = vst [vmem:[#allocation2 + $0x68] sm:$0xff] 0.0
        %278 = vst [vmem:[#allocation2 + $0x70] sm:$0xff] 0.0
        %279 = vst [vmem:[#allocation2 + $0x78] sm:$0xff] 0.0
      $region36: #{forward.19} parent=31 // pred_fallthru
        _
      %v280 = vld [vmem:[#allocation2] sm:$0xff]
      %v281 = vld [vmem:[#allocation2 + $0x8] sm:$0xff]
      %v282 = vld [vmem:[#allocation2 + $0x10] sm:$0xff]
      %v283 = vld [vmem:[#allocation2 + $0x18] sm:$0xff]
      %v284 = vld [vmem:[#allocation2 + $0x20] sm:$0xff]
      %v285 = vld [vmem:[#allocation2 + $0x28] sm:$0xff]
      %v286 = vld [vmem:[#allocation2 + $0x30] sm:$0xff]
      %v287 = vld [vmem:[#allocation2 + $0x38] sm:$0xff]
      %v288 = vld [vmem:[#allocation2 + $0x40] sm:$0xff]
      %v289 = vld [vmem:[#allocation2 + $0x48] sm:$0xff]
      %v290 = vld [vmem:[#allocation2 + $0x50] sm:$0xff]
      %v291 = vld [vmem:[#allocation2 + $0x58] sm:$0xff]
      %v292 = vld [vmem:[#allocation2 + $0x60] sm:$0xff]
      %v293 = vld [vmem:[#allocation2 + $0x68] sm:$0xff]
      %v294 = vld [vmem:[#allocation2 + $0x70] sm:$0xff]
      %v295 = vld [vmem:[#allocation2 + $0x78] sm:$0xff]
      %v296 = vld [vmem:[%s236] sm:$0xf]
      %v297 = vld [vmem:[%s236 + $0x4] sm:$0xf]
      %v298 = vld [vmem:[%s236 + $0x8] sm:$0xf]
      %v299 = vld [vmem:[%s236 + $0xc] sm:$0xf]
      %v300 = vld [vmem:[%s236 + $0x10] sm:$0xf]
      %v301 = vld [vmem:[%s236 + $0x14] sm:$0xf]
      %v302 = vld [vmem:[%s236 + $0x18] sm:$0xf]
      %v303 = vld [vmem:[%s236 + $0x1c] sm:$0xf]
      %v304 = vld [vmem:[%s236 + $0x20] sm:$0xf]
      %v305 = vld [vmem:[%s236 + $0x24] sm:$0xf]
      %v306 = vld [vmem:[%s236 + $0x28] sm:$0xf]
      %v307 = vld [vmem:[%s236 + $0x2c] sm:$0xf]
      %v308 = vld [vmem:[%s236 + $0x30] sm:$0xf]
      %v309 = vld [vmem:[%s236 + $0x34] sm:$0xf]
      %v310 = vld [vmem:[%s236 + $0x38] sm:$0xf]
      %v311 = vld [vmem:[%s236 + $0x3c] sm:$0xf]
      %v312 = vld [vmem:[%s245] sm:$0xf]
      %v313 = vld [vmem:[%s245 + $0x4] sm:$0xf]
      %v314 = vld [vmem:[%s245 + $0x8] sm:$0xf]
      %v315 = vld [vmem:[%s245 + $0xc] sm:$0xf]
      %v316 = vld [vmem:[%s245 + $0x10] sm:$0xf]
      %v317 = vld [vmem:[%s245 + $0x14] sm:$0xf]
      %v318 = vld [vmem:[%s245 + $0x18] sm:$0xf]
      %v319 = vld [vmem:[%s245 + $0x1c] sm:$0xf]
      %v320 = vld [vmem:[%s245 + $0x20] sm:$0xf]
      %v321 = vld [vmem:[%s245 + $0x24] sm:$0xf]
      %v322 = vld [vmem:[%s245 + $0x28] sm:$0xf]
      %v323 = vld [vmem:[%s245 + $0x2c] sm:$0xf]
      %v324 = vld [vmem:[%s245 + $0x30] sm:$0xf]
      %v325 = vld [vmem:[%s245 + $0x34] sm:$0xf]
      %v326 = vld [vmem:[%s245 + $0x38] sm:$0xf]
      %v327 = vld [vmem:[%s245 + $0x3c] sm:$0xf]
      %v344 = vunpack.c.l.b16 %v296
      %v345 = vunpack.c.l.b16 %v297
      %v346 = vunpack.c.l.b16 %v298
      %v347 = vunpack.c.l.b16 %v299
      %v348 = vunpack.c.l.b16 %v300
      %v349 = vunpack.c.l.b16 %v301
      %v350 = vunpack.c.l.b16 %v302
      %v351 = vunpack.c.l.b16 %v303
      %v352 = vunpack.c.l.b16 %v304
      %v353 = vunpack.c.l.b16 %v305
      %v354 = vunpack.c.l.b16 %v306
      %v355 = vunpack.c.l.b16 %v307
      %v356 = vunpack.c.l.b16 %v308
      %v357 = vunpack.c.l.b16 %v309
      %v358 = vunpack.c.l.b16 %v310
      %v359 = vunpack.c.l.b16 %v311
      %v360 = vpack.c.b16 %v345, %v344
      %v361 = vpack.c.b16 %v347, %v346
      %v362 = vpack.c.b16 %v349, %v348
      %v363 = vpack.c.b16 %v351, %v350
      %v364 = vpack.c.b16 %v353, %v352
      %v365 = vpack.c.b16 %v355, %v354
      %v366 = vpack.c.b16 %v357, %v356
      %v367 = vpack.c.b16 %v359, %v358
      %v392 = vunpack.c.l.b16 %v312
      %v393 = vunpack.c.l.b16 %v313
      %v394 = vunpack.c.l.b16 %v314
      %v395 = vunpack.c.l.b16 %v315
      %v396 = vunpack.c.l.b16 %v316
      %v397 = vunpack.c.l.b16 %v317
      %v398 = vunpack.c.l.b16 %v318
      %v399 = vunpack.c.l.b16 %v319
      %v400 = vunpack.c.l.b16 %v320
      %v401 = vunpack.c.l.b16 %v321
      %v402 = vunpack.c.l.b16 %v322
      %v403 = vunpack.c.l.b16 %v323
      %v404 = vunpack.c.l.b16 %v324
      %v405 = vunpack.c.l.b16 %v325
      %v406 = vunpack.c.l.b16 %v326
      %v407 = vunpack.c.l.b16 %v327
      %v408 = vpack.c.b16 %v393, %v392
      %v409 = vpack.c.b16 %v395, %v394
      %v410 = vpack.c.b16 %v397, %v396
      %v411 = vpack.c.b16 %v399, %v398
      %v412 = vpack.c.b16 %v401, %v400
      %v413 = vpack.c.b16 %v403, %v402
      %v414 = vpack.c.b16 %v405, %v404
      %v415 = vpack.c.b16 %v407, %v406
      %424 = vmatprep.subr.bf16.mxu0 0
      %425 = vmatpush1.bf16.msra.mxu0 %v415
      %426 = vmatprep.subr.bf16.mxu0 0
      %427 = vmatpush1.bf16.msra.mxu0 %v414
      %428 = vmatprep.subr.bf16.mxu0 0
      %429 = vmatpush1.bf16.msra.mxu0 %v413
      %430 = vmatprep.subr.bf16.mxu0 0
      %431 = vmatpush1.bf16.msra.mxu0 %v412
      %432 = vmatprep.subr.bf16.mxu0 0
      %433 = vmatpush1.bf16.msra.mxu0 %v411
      %434 = vmatprep.subr.bf16.mxu0 0
      %435 = vmatpush1.bf16.msra.mxu0 %v410
      %436 = vmatprep.subr.bf16.mxu0 0
      %437 = vmatpush1.bf16.msra.mxu0 %v409
      %438 = vmatprep.subr.bf16.mxu0 0
      %439 = vmatpush1.bf16.msra.mxu0 %v408
      %440 = vmatprep.subr.bf16.mxu0 0
      %441 = vmatpush2.bf16.msra.mxu0 0
      %442 = vmatprep.subr.bf16.mxu0 0
      %443 = vmatpush2.bf16.msra.mxu0 0
      %444 = vmatprep.subr.bf16.mxu0 0
      %445 = vmatpush2.bf16.msra.mxu0 0
      %446 = vmatprep.subr.bf16.mxu0 0
      %447 = vmatpush2.bf16.msra.mxu0 0
      %448 = vmatprep.subr.bf16.mxu0 0
      %449 = vmatpush2.bf16.msra.mxu0 0
      %450 = vmatprep.subr.bf16.mxu0 0
      %451 = vmatpush2.bf16.msra.mxu0 0
      %452 = vmatprep.subr.bf16.mxu0 0
      %453 = vmatpush2.bf16.msra.mxu0 0
      %454 = vmatprep.subr.bf16.mxu0 0
      %455 = vmatpush2.bf16.msra.mxu0 0
      %456 = vmatprep.mubr.bf16.mxu0 0
      %457 = vmatmul.mubr.bf16.gmra.mxu0 %v360
      %v458 = vpop.f32.mrf.mxu0
      %v459 = vadd.f32 0.0, %v458
      %v460 = vpop.f32.mrf.mxu0
      %v461 = vpop.f32.mrf.mxu0
      %v462 = vadd.f32 0.0, %v461
      %v463 = vpop.f32.mrf.mxu0
      %464 = vmatprep.mubr.bf16.mxu0 0
      %465 = vmatmul.mubr.bf16.gmra.mxu0 %v361
      %v466 = vpop.f32.mrf.mxu0
      %v467 = vadd.f32 0.0, %v466
      %v468 = vpop.f32.mrf.mxu0
      %v469 = vpop.f32.mrf.mxu0
      %v470 = vadd.f32 0.0, %v469
      %v471 = vpop.f32.mrf.mxu0
      %472 = vmatprep.mubr.bf16.mxu0 0
      %473 = vmatmul.mubr.bf16.gmra.mxu0 %v362
      %v474 = vpop.f32.mrf.mxu0
      %v475 = vadd.f32 0.0, %v474
      %v476 = vpop.f32.mrf.mxu0
      %v477 = vpop.f32.mrf.mxu0
      %v478 = vadd.f32 0.0, %v477
      %v479 = vpop.f32.mrf.mxu0
      %480 = vmatprep.mubr.bf16.mxu0 0
      %481 = vmatmul.mubr.bf16.gmra.mxu0 %v363
      %v482 = vpop.f32.mrf.mxu0
      %v483 = vadd.f32 0.0, %v482
      %v484 = vpop.f32.mrf.mxu0
      %v485 = vpop.f32.mrf.mxu0
      %v486 = vadd.f32 0.0, %v485
      %v487 = vpop.f32.mrf.mxu0
      %488 = vmatprep.mubr.bf16.mxu0 0
      %489 = vmatmul.mubr.bf16.gmra.mxu0 %v364
      %v490 = vpop.f32.mrf.mxu0
      %v491 = vadd.f32 0.0, %v490
      %v492 = vpop.f32.mrf.mxu0
      %v493 = vpop.f32.mrf.mxu0
      %v494 = vadd.f32 0.0, %v493
      %v495 = vpop.f32.mrf.mxu0
      %496 = vmatprep.mubr.bf16.mxu0 0
      %497 = vmatmul.mubr.bf16.gmra.mxu0 %v365
      %v498 = vpop.f32.mrf.mxu0
      %v499 = vadd.f32 0.0, %v498
      %v500 = vpop.f32.mrf.mxu0
      %v501 = vpop.f32.mrf.mxu0
      %v502 = vadd.f32 0.0, %v501
      %v503 = vpop.f32.mrf.mxu0
      %504 = vmatprep.mubr.bf16.mxu0 0
      %505 = vmatmul.mubr.bf16.gmra.mxu0 %v366
      %v506 = vpop.f32.mrf.mxu0
      %v507 = vadd.f32 0.0, %v506
      %v508 = vpop.f32.mrf.mxu0
      %v509 = vpop.f32.mrf.mxu0
      %v510 = vadd.f32 0.0, %v509
      %v511 = vpop.f32.mrf.mxu0
      %512 = vmatprep.mubr.bf16.mxu0 0
      %513 = vmatmul.mubr.bf16.gmra.mxu0 %v367
      %v514 = vpop.f32.mrf.mxu0
      %v515 = vadd.f32 0.0, %v514
      %v516 = vpop.f32.mrf.mxu0
      %v517 = vpop.f32.mrf.mxu0
      %v518 = vadd.f32 0.0, %v517
      %v519 = vpop.f32.mrf.mxu0
      %520 = vdwg.mxu0
      %v521 = vadd.f32 %v280, %v459
      %v522 = vadd.f32 %v281, %v462
      %v523 = vadd.f32 %v282, %v467
      %v524 = vadd.f32 %v283, %v470
      %v525 = vadd.f32 %v284, %v475
      %v526 = vadd.f32 %v285, %v478
      %v527 = vadd.f32 %v286, %v483
      %v528 = vadd.f32 %v287, %v486
      %v529 = vadd.f32 %v288, %v491
      %v530 = vadd.f32 %v289, %v494
      %v531 = vadd.f32 %v290, %v499
      %v532 = vadd.f32 %v291, %v502
      %v533 = vadd.f32 %v292, %v507
      %v534 = vadd.f32 %v293, %v510
      %v535 = vadd.f32 %v294, %v515
      %v536 = vadd.f32 %v295, %v518
      %537 = vst [vmem:[#allocation2] sm:$0xff] %v521
      %538 = vst [vmem:[#allocation2 + $0x8] sm:$0xff] %v522
      %539 = vst [vmem:[#allocation2 + $0x10] sm:$0xff] %v523
      %540 = vst [vmem:[#allocation2 + $0x18] sm:$0xff] %v524
      %541 = vst [vmem:[#allocation2 + $0x20] sm:$0xff] %v525
      %542 = vst [vmem:[#allocation2 + $0x28] sm:$0xff] %v526
      %543 = vst [vmem:[#allocation2 + $0x30] sm:$0xff] %v527
      %544 = vst [vmem:[#allocation2 + $0x38] sm:$0xff] %v528
      %545 = vst [vmem:[#allocation2 + $0x40] sm:$0xff] %v529
      %546 = vst [vmem:[#allocation2 + $0x48] sm:$0xff] %v530
      %547 = vst [vmem:[#allocation2 + $0x50] sm:$0xff] %v531
      %548 = vst [vmem:[#allocation2 + $0x58] sm:$0xff] %v532
      %549 = vst [vmem:[#allocation2 + $0x60] sm:$0xff] %v533
      %550 = vst [vmem:[#allocation2 + $0x68] sm:$0xff] %v534
      %551 = vst [vmem:[#allocation2 + $0x70] sm:$0xff] %v535
      %552 = vst [vmem:[#allocation2 + $0x78] sm:$0xff] %v536
      // Predicated region
      $region37: #{forward.19} parent=31 // pred_check
        %p553 = pneg %p260
      $region38: #{forward.19} parent=31 // pred_check_branch
        %555 = sbr.rel (%p553) target = $region40
      $region39: #{forward.19} parent=31 // pred_region
        %v556 = vld [vmem:[#allocation2] sm:$0xff]
        %v557 = vld [vmem:[#allocation2 + $0x8] sm:$0xff]
        %v558 = vld [vmem:[#allocation2 + $0x10] sm:$0xff]
        %v559 = vld [vmem:[#allocation2 + $0x18] sm:$0xff]
        %v560 = vld [vmem:[#allocation2 + $0x20] sm:$0xff]
        %v561 = vld [vmem:[#allocation2 + $0x28] sm:$0xff]
        %v562 = vld [vmem:[#allocation2 + $0x30] sm:$0xff]
        %v563 = vld [vmem:[#allocation2 + $0x38] sm:$0xff]
        %v564 = vld [vmem:[#allocation2 + $0x40] sm:$0xff]
        %v565 = vld [vmem:[#allocation2 + $0x48] sm:$0xff]
        %v566 = vld [vmem:[#allocation2 + $0x50] sm:$0xff]
        %v567 = vld [vmem:[#allocation2 + $0x58] sm:$0xff]
        %v568 = vld [vmem:[#allocation2 + $0x60] sm:$0xff]
        %v569 = vld [vmem:[#allocation2 + $0x68] sm:$0xff]
        %v570 = vld [vmem:[#allocation2 + $0x70] sm:$0xff]
        %v571 = vld [vmem:[#allocation2 + $0x78] sm:$0xff]
        %v572 = vld [vmem:[%s249] sm:$0x1]
        %v574 = vlaneseq
        %v575 = vshrl.u32 %v574, 7
        %v576 = vsub.s32 0, %v575
        %v577 = vrot.slane %v572, %v576
        %v579 = vadd.f32 %v556, %v577
        %v580 = vadd.f32 %v557, %v577
        %v581 = vadd.f32 %v558, %v577
        %v582 = vadd.f32 %v559, %v577
        %v583 = vadd.f32 %v560, %v577
        %v584 = vadd.f32 %v561, %v577
        %v585 = vadd.f32 %v562, %v577
        %v586 = vadd.f32 %v563, %v577
        %v587 = vadd.f32 %v564, %v577
        %v588 = vadd.f32 %v565, %v577
        %v589 = vadd.f32 %v566, %v577
        %v590 = vadd.f32 %v567, %v577
        %v591 = vadd.f32 %v568, %v577
        %v592 = vadd.f32 %v569, %v577
        %v593 = vadd.f32 %v570, %v577
        %v594 = vadd.f32 %v571, %v577
        %595 = vst [vmem:[%s257] sm:$0xff] %v579
        %596 = vst [vmem:[%s257 + $0x8] sm:$0xff] %v580
        %597 = vst [vmem:[%s257 + $0x10] sm:$0xff] %v581
        %598 = vst [vmem:[%s257 + $0x18] sm:$0xff] %v582
        %599 = vst [vmem:[%s257 + $0x20] sm:$0xff] %v583
        %600 = vst [vmem:[%s257 + $0x28] sm:$0xff] %v584
        %601 = vst [vmem:[%s257 + $0x30] sm:$0xff] %v585
        %602 = vst [vmem:[%s257 + $0x38] sm:$0xff] %v586
        %603 = vst [vmem:[%s257 + $0x40] sm:$0xff] %v587
        %604 = vst [vmem:[%s257 + $0x48] sm:$0xff] %v588
        %605 = vst [vmem:[%s257 + $0x50] sm:$0xff] %v589
        %606 = vst [vmem:[%s257 + $0x58] sm:$0xff] %v590
        %607 = vst [vmem:[%s257 + $0x60] sm:$0xff] %v591
        %608 = vst [vmem:[%s257 + $0x68] sm:$0xff] %v592
        %609 = vst [vmem:[%s257 + $0x70] sm:$0xff] %v593
        %610 = vst [vmem:[%s257 + $0x78] sm:$0xff] %v594
      $region40: #{forward.19} parent=31 // pred_fallthru
        _
      %s611 = smul.u32 16, %s19
      %p612 = scmp.lt.s32.totalorder %s611, 95
      %s613 = scalar_select %p612, %s611, 95
      %p614 = scmp.lt.s32.totalorder %s20, 0
      %s615 = scalar_select %p614, %s20, 0
      %s616 = sadd.s32 %s615, %s613
      %s617 = smul.addr %s616, 8
      %s618 = scalar_lea.vmem %s3, %s617
      // Predicated region
      $region41: #{forward.19} parent=31 // pred_check
        %p619 = pneg %p135
      $region42: #{forward.19} parent=31 // pred_check_branch
        %621 = sbr.rel (%p619) target = $region44
      $region43: #{forward.19} parent=31 // pred_region
        %s622 = smul.u32 16, %s19
      $region44: #{forward.19} parent=31 // pred_fallthru
        _
    $region32: #{forward.19} parent=5 // pred_fallthru
      _
    %p623 = scmp.le.s32.totalorder 2, %s9
    // Predicated region
    $region45: #{forward.19} parent=5 // pred_check
      %p624 = pneg %p623
    $region46: #{forward.19} parent=5 // pred_check_branch
      %626 = sbr.rel (%p624) target = $region48
    $region47: #{forward.19} parent=5 // pred_region
      %s627 = ssub.s32 %s9, 2
      // Predicated region
      $region49: #{forward.19} parent=47 // pred_check
        %p628 = pneg %p141
      $region50: #{forward.19} parent=47 // pred_check_branch
        %630 = sbr.rel (%p628) target = $region52
      $region51: #{forward.19} parent=47 // pred_region
        %s631 = smul.u32 16, %s22
        %p632 = scmp.lt.s32.totalorder %s631, 95
        %s633 = scalar_select %p632, %s631, 95
        %p634 = scmp.lt.s32.totalorder %s23, 0
        %s635 = scalar_select %p634, %s23, 0
        %s636 = sadd.s32 %s635, %s633
        %s637 = smul.addr %s636, 8
        %s638 = scalar_lea.vmem %s3, %s637
      $region52: #{forward.19} parent=47 // pred_fallthru
        _
    $region48: #{forward.19} parent=5 // pred_fallthru
      _
  $region6: #{forward.19} parent=0 // loop_footer
    %s13 = sadd.s32 1, %s9
  $region7: #{forward.19} parent=0 // loop_footer_branch
    %8 = sbr.rel target = $region3
  $region8: #{forward.19} parent=0 // loop_exit
    _

// kernel: forward.20
$region0: #{forward.20}
  #allocation0 [shape = 'u32[]', space=smem, size = 0x4, offset = 0x4, fixed_abs, tag = 'smem constant byte address 0x4 - core index']
  #allocation1 [shape = 'u32[144,128]{1,0:T(1,128)}', space=vmem, size = 0x12000, scoped, tag = 'internal scratch']
  #allocation2 [shape = 'f32[128,128]{1,0:T(8,128)}', space=vmem, size = 0x10000, scoped, tag = 'scratch operand']
  %s0 = inlined_call_operand.vmem [shape: bf16[384,256], index: 0, kind: input, shape index: {}]
  %s1 = inlined_call_operand.vmem [shape: bf16[256,128], index: 1, kind: input, shape index: {}]
  %s2 = inlined_call_operand.vmem [shape: f32[1,128], index: 2, kind: input, shape index: {}]
  %s3 = inlined_call_operand.vmem [shape: f32[384,128], index: 3, kind: output, shape index: {}]
  %s4 = sld [smem:[#allocation0]]
  $region53: #{forward.20} parent=0
    _
  %s6 = ssub.s32 1, %s4
  %s7 = scalar_select 0, %s6, %s4
  loop: start=0, step=1, limit=5
  $region2: #{forward.20} parent=0 // loop_pre_header
    _
  $region3: #{forward.20} parent=0 // loop_header
    %s9 = sphi 0, %s13
    %p10 = scmp.ge.s32.totalorder %s9, 5
    %s16 = sphi 0, %s35
    %s17 = sphi 0, %s31
    %s18 = sphi 0, %s27
    %s19 = sphi 0, %s16
    %s20 = sphi 0, %s17
    %s21 = sphi 0, %s18
    %s22 = sphi 0, %s19
    %s23 = sphi 0, %s20
    %s24 = sphi 0, %s21
    %s40 = sphi 0, %s42
    %s43 = sphi 0, %s40
    %s44 = sphi 0, %s43
    %s60 = sphi 0, %s44
    %s68 = sphi 0, %s70
    %s71 = sphi 0, %s68
    %s72 = sphi 0, %s71
    %s88 = sphi 0, %s72
    %s94 = sphi 0, %s96
    %s97 = sphi 0, %s94
    %s98 = sphi 0, %s97
    %s114 = sphi 0, %s98
    %s122 = sphi 0, %s124
    %s125 = sphi 0, %s122
    %s126 = sphi 0, %s125
    %s142 = sphi 0, %s126
  $region4: #{forward.20} parent=0 // loop_header_branch
    %12 = sbr.rel (%p10) target = $region8
  $region5: #{forward.20} parent=0 // loop_body
    %s14 = ssub.s32 %s9, 1
    %s15 = ssub.s32 %s9, 2
    %s25 = sadd.s32 1, %s18
    %p26 = scmp.ge.s32.totalorder %s25, 1
    %s27 = scalar_select %p26, 0, %s25
    %s28 = sadd.s32 1, %s17
    %s29 = scalar_select %p26, %s28, %s17
    %p30 = scmp.ge.s32.totalorder %s29, 1
    %s31 = scalar_select %p30, 0, %s29
    %s32 = sadd.s32 1, %s16
    %s33 = scalar_select %p30, %s32, %s16
    %p34 = scmp.ge.s32.totalorder %s33, 3
    %s35 = scalar_select %p34, 0, %s33
    %s36 = ssub.s32 %s16, %s35
    %s37 = ssub.s32 %s18, %s27
    %s38 = sor.u32 %s36, %s37
    %p39 = scmp.eq.s32.totalorder %s38, 0
    %s41 = sadd.s32 %s40, 1
    %s42 = scalar_select %p39, %s40, %s41
    %p45 = pneg %p39
    %p46 = scmp.eq.s32.totalorder %s9, 2
    %p47 = por %p45, %p46
    %p48 = scmp.ne.s32.totalorder %s40, %s43
    %p49 = scmp.eq.s32.totalorder %s9, 0
    %p50 = por %p48, %p49
    %p51 = scmp.ne.s32.totalorder %s40, %s43
    %p52 = scmp.eq.s32.totalorder %s14, 2
    %p53 = por %p51, %p52
    %p54 = scmp.ne.s32.totalorder %s43, %s44
    %p55 = scmp.eq.s32.totalorder %s14, 0
    %p56 = por %p54, %p55
    %p57 = scmp.ne.s32.totalorder %s43, %s44
    %p58 = scmp.eq.s32.totalorder %s15, 2
    %p59 = por %p57, %p58
    %p61 = scmp.ne.s32.totalorder %s44, %s60
    %p62 = scmp.eq.s32.totalorder %s15, 0
    %p63 = por %p61, %p62
    %s64 = ssub.s32 %s18, %s27
    %s65 = ssub.s32 %s17, %s31
    %s66 = sor.u32 %s64, %s65
    %p67 = scmp.eq.s32.totalorder %s66, 0
    %s69 = sadd.s32 %s68, 1
    %s70 = scalar_select %p67, %s68, %s69
    %p73 = pneg %p67
    %p74 = scmp.eq.s32.totalorder %s9, 2
    %p75 = por %p73, %p74
    %p76 = scmp.ne.s32.totalorder %s68, %s71
    %p77 = scmp.eq.s32.totalorder %s9, 0
    %p78 = por %p76, %p77
    %p79 = scmp.ne.s32.totalorder %s68, %s71
    %p80 = scmp.eq.s32.totalorder %s14, 2
    %p81 = por %p79, %p80
    %p82 = scmp.ne.s32.totalorder %s71, %s72
    %p83 = scmp.eq.s32.totalorder %s14, 0
    %p84 = por %p82, %p83
    %p85 = scmp.ne.s32.totalorder %s71, %s72
    %p86 = scmp.eq.s32.totalorder %s15, 2
    %p87 = por %p85, %p86
    %p89 = scmp.ne.s32.totalorder %s72, %s88
    %p90 = scmp.eq.s32.totalorder %s15, 0
    %p91 = por %p89, %p90
    %s92 = ssub.s32 %s17, %s31
    %p93 = scmp.eq.s32.totalorder %s92, 0
    %s95 = sadd.s32 %s94, 1
    %s96 = scalar_select %p93, %s94, %s95
    %p99 = pneg %p93
    %p100 = scmp.eq.s32.totalorder %s9, 2
    %p101 = por %p99, %p100
    %p102 = scmp.ne.s32.totalorder %s94, %s97
    %p103 = scmp.eq.s32.totalorder %s9, 0
    %p104 = por %p102, %p103
    %p105 = scmp.ne.s32.totalorder %s94, %s97
    %p106 = scmp.eq.s32.totalorder %s14, 2
    %p107 = por %p105, %p106
    %p108 = scmp.ne.s32.totalorder %s97, %s98
    %p109 = scmp.eq.s32.totalorder %s14, 0
    %p110 = por %p108, %p109
    %p111 = scmp.ne.s32.totalorder %s97, %s98
    %p112 = scmp.eq.s32.totalorder %s15, 2
    %p113 = por %p111, %p112
    %p115 = scmp.ne.s32.totalorder %s98, %s114
    %p116 = scmp.eq.s32.totalorder %s15, 0
    %p117 = por %p115, %p116
    %s118 = ssub.s32 %s16, %s35
    %s119 = ssub.s32 %s17, %s31
    %s120 = sor.u32 %s118, %s119
    %p121 = scmp.eq.s32.totalorder %s120, 0
    %s123 = sadd.s32 %s122, 1
    %s124 = scalar_select %p121, %s122, %s123
    %p127 = pneg %p121
    %p128 = scmp.eq.s32.totalorder %s9, 2
    %p129 = por %p127, %p128
    %p130 = scmp.ne.s32.totalorder %s122, %s125
    %p131 = scmp.eq.s32.totalorder %s9, 0
    %p132 = por %p130, %p131
    %p133 = scmp.ne.s32.totalorder %s122, %s125
    %p134 = scmp.eq.s32.totalorder %s14, 2
    %p135 = por %p133, %p134
    %p136 = scmp.ne.s32.totalorder %s125, %s126
    %p137 = scmp.eq.s32.totalorder %s14, 0
    %p138 = por %p136, %p137
    %p139 = scmp.ne.s32.totalorder %s125, %s126
    %p140 = scmp.eq.s32.totalorder %s15, 2
    %p141 = por %p139, %p140
    %p143 = scmp.ne.s32.totalorder %s126, %s142
    %p144 = scmp.eq.s32.totalorder %s15, 0
    %p145 = por %p143, %p144
    %p146 = scmp.le.s32.totalorder 1, %s9
    %p147 = scmp.lt.s32.totalorder %s9, 4
    %p148 = pnand %p146, %p147
    %p149 = pneg %p148
    // Predicated region
    $region9: #{forward.20} parent=5 // pred_check
      _
    $region10: #{forward.20} parent=5 // pred_check_branch
      %151 = sbr.rel (%p148) target = $region12
    $region11: #{forward.20} parent=5 // pred_region
      %s152 = ssub.s32 %s9, 1
      // Predicated region
      $region13: #{forward.20} parent=11 // pred_check
        %p153 = pneg %p84
      $region14: #{forward.20} parent=11 // pred_check_branch
        %155 = sbr.rel (%p153) target = $region16
      $region15: #{forward.20} parent=11 // pred_region
        %s156 = smul.u32 32, %s21
        %p157 = scmp.lt.s32.totalorder %s156, 31
        %s158 = scalar_select %p157, %s156, 31
        %p159 = scmp.lt.s32.totalorder %s20, 0
        %s160 = scalar_select %p159, %s20, 0
        %s161 = sadd.s32 %s160, %s158
        %s162 = smul.addr %s161, 4
        %s163 = scalar_lea.vmem %s1, %s162
        %s164 = smul.u32 32, %s21
      $region16: #{forward.20} parent=11 // pred_fallthru
        _
      // Predicated region
      $region17: #{forward.20} parent=11 // pred_check
        %p165 = pneg %p110
      $region18: #{forward.20} parent=11 // pred_check_branch
        %167 = sbr.rel (%p165) target = $region20
      $region19: #{forward.20} parent=11 // pred_region
        %p168 = scmp.lt.s32.totalorder %s20, 0
        %s169 = scalar_select %p168, %s20, 0
        %s170 = scalar_lea.vmem %s2, %s169
      $region20: #{forward.20} parent=11 // pred_fallthru
        _
    $region12: #{forward.20} parent=5 // pred_fallthru
      _
    %p171 = scmp.lt.s32.totalorder %s9, 3
    // Predicated region
    $region21: #{forward.20} parent=5 // pred_check
      %p172 = pneg %p171
    $region22: #{forward.20} parent=5 // pred_check_branch
      %174 = sbr.rel (%p172) target = $region24
    $region23: #{forward.20} parent=5 // pred_region
      // Predicated region
      $region25: #{forward.20} parent=23 // pred_check
        %p175 = pneg %p50
      $region26: #{forward.20} parent=23 // pred_check_branch
        %177 = sbr.rel (%p175) target = $region28
      $region27: #{forward.20} parent=23 // pred_region
        %s178 = smul.u32 16, %s16
        %s179 = smul.u32 2, %s18
        %p180 = scmp.lt.s32.totalorder %s178, 47
        %s181 = scalar_select %p180, %s178, 47
        %p182 = scmp.lt.s32.totalorder %s179, 1
        %s183 = scalar_select %p182, %s179, 1
        %s184 = smul.addr %s181, 2
        %s185 = sadd.s32 %s183, %s184
        %s186 = smul.addr %s185, 4
        %s187 = scalar_lea.vmem %s0, %s186
        %s188 = smul.u32 16, %s16
        %s189 = smul.u32 2, %s18
      $region28: #{forward.20} parent=23 // pred_fallthru
        _
    $region24: #{forward.20} parent=5 // pred_fallthru
      _
    %p190 = scmp.le.s32.totalorder 1, %s9
    %p191 = scmp.lt.s32.totalorder %s9, 4
    %p192 = pnand %p190, %p191
    %p193 = pneg %p192
    // Predicated region
    $region29: #{forward.20} parent=5 // pred_check
      _
    $region30: #{forward.20} parent=5 // pred_check_branch
      %195 = sbr.rel (%p192) target = $region32
    $region31: #{forward.20} parent=5 // pred_region
      %s196 = ssub.s32 %s9, 1
      %s197 = smul.u32 16, %s19
      %s198 = smul.u32 2, %s21
      %p199 = scmp.lt.s32.totalorder %s197, 47
      %s200 = scalar_select %p199, %s197, 47
      %p201 = scmp.lt.s32.totalorder %s198, 1
      %s202 = scalar_select %p201, %s198, 1
      %s203 = smul.addr %s200, 2
      %s204 = sadd.s32 %s202, %s203
      %s205 = smul.addr %s204, 4
      %s206 = scalar_lea.vmem %s0, %s205
      %p207 = pneg %p56
      %p208 = pneg %p53
      %s209 = smul.u32 32, %s21
      %p210 = scmp.lt.s32.totalorder %s209, 31
      %s211 = scalar_select %p210, %s209, 31
      %p212 = scmp.lt.s32.totalorder %s20, 0
      %s213 = scalar_select %p212, %s20, 0
      %s214 = sadd.s32 %s213, %s211
      %s215 = smul.addr %s214, 4
      %s216 = scalar_lea.vmem %s1, %s215
      %p217 = pneg %p84
      %p218 = pneg %p81
      %p219 = scmp.lt.s32.totalorder %s20, 0
      %s220 = scalar_select %p219, %s20, 0
      %s221 = scalar_lea.vmem %s2, %s220
      %p222 = pneg %p110
      %p223 = pneg %p107
      %p224 = pneg %p138
      %p225 = pneg %p135
      %s226 = smul.u32 16, %s19
      %p227 = scmp.lt.s32.totalorder %s226, 47
      %s228 = scalar_select %p227, %s226, 47
      %p229 = scmp.lt.s32.totalorder %s20, 0
      %s230 = scalar_select %p229, %s20, 0
      %s231 = sadd.s32 %s230, %s228
      %s232 = smul.addr %s231, 8
      %s233 = scalar_lea.vmem %s3, %s232
      %s234 = smul.u32 16, %s19
      %s235 = smul.u32 2, %s21
      %p236 = scmp.lt.s32.totalorder %s234, 47
      %s237 = scalar_select %p236, %s234, 47
      %p238 = scmp.lt.s32.totalorder %s235, 1
      %s239 = scalar_select %p238, %s235, 1
      %s240 = smul.addr %s237, 2
      %s241 = sadd.s32 %s239, %s240
      %s242 = smul.addr %s241, 4
      %s243 = scalar_lea.vmem %s0, %s242
      %s244 = smul.u32 16, %s19
      %s245 = smul.u32 2, %s21
      %s246 = smul.u32 32, %s21
      %p247 = scmp.lt.s32.totalorder %s246, 31
      %s248 = scalar_select %p247, %s246, 31
      %p249 = scmp.lt.s32.totalorder %s20, 0
      %s250 = scalar_select %p249, %s20, 0
      %s251 = sadd.s32 %s250, %s248
      %s252 = smul.addr %s251, 4
      %s253 = scalar_lea.vmem %s1, %s252
      %s254 = smul.u32 32, %s21
      %p255 = scmp.lt.s32.totalorder %s20, 0
      %s256 = scalar_select %p255, %s20, 0
      %s257 = scalar_lea.vmem %s2, %s256
      %s258 = smul.u32 16, %s19
      %p259 = scmp.lt.s32.totalorder %s258, 47
      %s260 = scalar_select %p259, %s258, 47
      %p261 = scmp.lt.s32.totalorder %s20, 0
      %s262 = scalar_select %p261, %s20, 0
      %s263 = sadd.s32 %s262, %s260
      %s264 = smul.addr %s263, 8
      %s265 = scalar_lea.vmem %s3, %s264
      %s266 = smul.u32 16, %s19
      %p268 = scmp.eq.s32.totalorder %s21, 0
      // Predicated region
      $region33: #{forward.20} parent=31 // pred_check
        %p269 = pneg %p268
      $region34: #{forward.20} parent=31 // pred_check_branch
        %271 = sbr.rel (%p269) target = $region36
      $region35: #{forward.20} parent=31 // pred_region
        %272 = vst [vmem:[#allocation2] sm:$0xff] 0.0
        %273 = vst [vmem:[#allocation2 + $0x8] sm:$0xff] 0.0
        %274 = vst [vmem:[#allocation2 + $0x10] sm:$0xff] 0.0
        %275 = vst [vmem:[#allocation2 + $0x18] sm:$0xff] 0.0
        %276 = vst [vmem:[#allocation2 + $0x20] sm:$0xff] 0.0
        %277 = vst [vmem:[#allocation2 + $0x28] sm:$0xff] 0.0
        %278 = vst [vmem:[#allocation2 + $0x30] sm:$0xff] 0.0
        %279 = vst [vmem:[#allocation2 + $0x38] sm:$0xff] 0.0
        %280 = vst [vmem:[#allocation2 + $0x40] sm:$0xff] 0.0
        %281 = vst [vmem:[#allocation2 + $0x48] sm:$0xff] 0.0
        %282 = vst [vmem:[#allocation2 + $0x50] sm:$0xff] 0.0
        %283 = vst [vmem:[#allocation2 + $0x58] sm:$0xff] 0.0
        %284 = vst [vmem:[#allocation2 + $0x60] sm:$0xff] 0.0
        %285 = vst [vmem:[#allocation2 + $0x68] sm:$0xff] 0.0
        %286 = vst [vmem:[#allocation2 + $0x70] sm:$0xff] 0.0
        %287 = vst [vmem:[#allocation2 + $0x78] sm:$0xff] 0.0
      $region36: #{forward.20} parent=31 // pred_fallthru
        _
      %v288 = vld [vmem:[#allocation2] sm:$0xff]
      %v289 = vld [vmem:[#allocation2 + $0x8] sm:$0xff]
      %v290 = vld [vmem:[#allocation2 + $0x10] sm:$0xff]
      %v291 = vld [vmem:[#allocation2 + $0x18] sm:$0xff]
      %v292 = vld [vmem:[#allocation2 + $0x20] sm:$0xff]
      %v293 = vld [vmem:[#allocation2 + $0x28] sm:$0xff]
      %v294 = vld [vmem:[#allocation2 + $0x30] sm:$0xff]
      %v295 = vld [vmem:[#allocation2 + $0x38] sm:$0xff]
      %v296 = vld [vmem:[#allocation2 + $0x40] sm:$0xff]
      %v297 = vld [vmem:[#allocation2 + $0x48] sm:$0xff]
      %v298 = vld [vmem:[#allocation2 + $0x50] sm:$0xff]
      %v299 = vld [vmem:[#allocation2 + $0x58] sm:$0xff]
      %v300 = vld [vmem:[#allocation2 + $0x60] sm:$0xff]
      %v301 = vld [vmem:[#allocation2 + $0x68] sm:$0xff]
      %v302 = vld [vmem:[#allocation2 + $0x70] sm:$0xff]
      %v303 = vld [vmem:[#allocation2 + $0x78] sm:$0xff]
      %v304 = vld [vmem:[%s243] sm:$0xff]
      %v305 = vld [vmem:[%s243 + $0x8] sm:$0xff]
      %v306 = vld [vmem:[%s243 + $0x10] sm:$0xff]
      %v307 = vld [vmem:[%s243 + $0x18] sm:$0xff]
      %v308 = vld [vmem:[%s243 + $0x20] sm:$0xff]
      %v309 = vld [vmem:[%s243 + $0x28] sm:$0xff]
      %v310 = vld [vmem:[%s243 + $0x30] sm:$0xff]
      %v311 = vld [vmem:[%s243 + $0x38] sm:$0xff]
      %v312 = vld [vmem:[%s243 + $0x40] sm:$0xff]
      %v313 = vld [vmem:[%s243 + $0x48] sm:$0xff]
      %v314 = vld [vmem:[%s243 + $0x50] sm:$0xff]
      %v315 = vld [vmem:[%s243 + $0x58] sm:$0xff]
      %v316 = vld [vmem:[%s243 + $0x60] sm:$0xff]
      %v317 = vld [vmem:[%s243 + $0x68] sm:$0xff]
      %v318 = vld [vmem:[%s243 + $0x70] sm:$0xff]
      %v319 = vld [vmem:[%s243 + $0x78] sm:$0xff]
      %v320 = vld [vmem:[%s253] sm:$0xf]
      %v321 = vld [vmem:[%s253 + $0x4] sm:$0xf]
      %v322 = vld [vmem:[%s253 + $0x8] sm:$0xf]
      %v323 = vld [vmem:[%s253 + $0xc] sm:$0xf]
      %v324 = vld [vmem:[%s253 + $0x10] sm:$0xf]
      %v325 = vld [vmem:[%s253 + $0x14] sm:$0xf]
      %v326 = vld [vmem:[%s253 + $0x18] sm:$0xf]
      %v327 = vld [vmem:[%s253 + $0x1c] sm:$0xf]
      %v328 = vld [vmem:[%s253 + $0x20] sm:$0xf]
      %v329 = vld [vmem:[%s253 + $0x24] sm:$0xf]
      %v330 = vld [vmem:[%s253 + $0x28] sm:$0xf]
      %v331 = vld [vmem:[%s253 + $0x2c] sm:$0xf]
      %v332 = vld [vmem:[%s253 + $0x30] sm:$0xf]
      %v333 = vld [vmem:[%s253 + $0x34] sm:$0xf]
      %v334 = vld [vmem:[%s253 + $0x38] sm:$0xf]
      %v335 = vld [vmem:[%s253 + $0x3c] sm:$0xf]
      %v336 = vld [vmem:[%s253 + $0x40] sm:$0xf]
      %v337 = vld [vmem:[%s253 + $0x44] sm:$0xf]
      %v338 = vld [vmem:[%s253 + $0x48] sm:$0xf]
      %v339 = vld [vmem:[%s253 + $0x4c] sm:$0xf]
      %v340 = vld [vmem:[%s253 + $0x50] sm:$0xf]
      %v341 = vld [vmem:[%s253 + $0x54] sm:$0xf]
      %v342 = vld [vmem:[%s253 + $0x58] sm:$0xf]
      %v343 = vld [vmem:[%s253 + $0x5c] sm:$0xf]
      %v344 = vld [vmem:[%s253 + $0x60] sm:$0xf]
      %v345 = vld [vmem:[%s253 + $0x64] sm:$0xf]
      %v346 = vld [vmem:[%s253 + $0x68] sm:$0xf]
      %v347 = vld [vmem:[%s253 + $0x6c] sm:$0xf]
      %v348 = vld [vmem:[%s253 + $0x70] sm:$0xf]
      %v349 = vld [vmem:[%s253 + $0x74] sm:$0xf]
      %v350 = vld [vmem:[%s253 + $0x78] sm:$0xf]
      %v351 = vld [vmem:[%s253 + $0x7c] sm:$0xf]
      %v368 = vunpack.c.l.b16 %v304
      %v369 = vunpack.c.h.b16 %v304
      %v370 = vunpack.c.l.b16 %v305
      %v371 = vunpack.c.h.b16 %v305
      %v372 = vunpack.c.l.b16 %v306
      %v373 = vunpack.c.h.b16 %v306
      %v374 = vunpack.c.l.b16 %v307
      %v375 = vunpack.c.h.b16 %v307
      %v376 = vunpack.c.l.b16 %v308
      %v377 = vunpack.c.h.b16 %v308
      %v378 = vunpack.c.l.b16 %v309
      %v379 = vunpack.c.h.b16 %v309
      %v380 = vunpack.c.l.b16 %v310
      %v381 = vunpack.c.h.b16 %v310
      %v382 = vunpack.c.l.b16 %v311
      %v383 = vunpack.c.h.b16 %v311
      %v384 = vunpack.c.l.b16 %v312
      %v385 = vunpack.c.h.b16 %v312
      %v386 = vunpack.c.l.b16 %v313
      %v387 = vunpack.c.h.b16 %v313
      %v388 = vunpack.c.l.b16 %v314
      %v389 = vunpack.c.h.b16 %v314
      %v390 = vunpack.c.l.b16 %v315
      %v391 = vunpack.c.h.b16 %v315
      %v392 = vunpack.c.l.b16 %v316
      %v393 = vunpack.c.h.b16 %v316
      %v394 = vunpack.c.l.b16 %v317
      %v395 = vunpack.c.h.b16 %v317
      %v396 = vunpack.c.l.b16 %v318
      %v397 = vunpack.c.h.b16 %v318
      %v398 = vunpack.c.l.b16 %v319
      %v399 = vunpack.c.h.b16 %v319
      %v400 = vpack.c.b16 %v370, %v368
      %v401 = vpack.c.b16 %v371, %v369
      %v402 = vpack.c.b16 %v374, %v372
      %v403 = vpack.c.b16 %v375, %v373
      %v404 = vpack.c.b16 %v378, %v376
      %v405 = vpack.c.b16 %v379, %v377
      %v406 = vpack.c.b16 %v382, %v380
      %v407 = vpack.c.b16 %v383, %v381
      %v408 = vpack.c.b16 %v386, %v384
      %v409 = vpack.c.b16 %v387, %v385
      %v410 = vpack.c.b16 %v390, %v388
      %v411 = vpack.c.b16 %v391, %v389
      %v412 = vpack.c.b16 %v394, %v392
      %v413 = vpack.c.b16 %v395, %v393
      %v414 = vpack.c.b16 %v398, %v396
      %v415 = vpack.c.b16 %v399, %v397
      %v464 = vunpack.c.l.b16 %v320
      %v465 = vunpack.c.l.b16 %v321
      %v466 = vunpack.c.l.b16 %v322
      %v467 = vunpack.c.l.b16 %v323
      %v468 = vunpack.c.l.b16 %v324
      %v469 = vunpack.c.l.b16 %v325
      %v470 = vunpack.c.l.b16 %v326
      %v471 = vunpack.c.l.b16 %v327
      %v472 = vunpack.c.l.b16 %v328
      %v473 = vunpack.c.l.b16 %v329
      %v474 = vunpack.c.l.b16 %v330
      %v475 = vunpack.c.l.b16 %v331
      %v476 = vunpack.c.l.b16 %v332
      %v477 = vunpack.c.l.b16 %v333
      %v478 = vunpack.c.l.b16 %v334
      %v479 = vunpack.c.l.b16 %v335
      %v480 = vunpack.c.l.b16 %v336
      %v481 = vunpack.c.l.b16 %v337
      %v482 = vunpack.c.l.b16 %v338
      %v483 = vunpack.c.l.b16 %v339
      %v484 = vunpack.c.l.b16 %v340
      %v485 = vunpack.c.l.b16 %v341
      %v486 = vunpack.c.l.b16 %v342
      %v487 = vunpack.c.l.b16 %v343
      %v488 = vunpack.c.l.b16 %v344
      %v489 = vunpack.c.l.b16 %v345
      %v490 = vunpack.c.l.b16 %v346
      %v491 = vunpack.c.l.b16 %v347
      %v492 = vunpack.c.l.b16 %v348
      %v493 = vunpack.c.l.b16 %v349
      %v494 = vunpack.c.l.b16 %v350
      %v495 = vunpack.c.l.b16 %v351
      %v496 = vpack.c.b16 %v465, %v464
      %v497 = vpack.c.b16 %v467, %v466
      %v498 = vpack.c.b16 %v469, %v468
      %v499 = vpack.c.b16 %v471, %v470
      %v500 = vpack.c.b16 %v473, %v472
      %v501 = vpack.c.b16 %v475, %v474
      %v502 = vpack.c.b16 %v477, %v476
      %v503 = vpack.c.b16 %v479, %v478
      %v504 = vpack.c.b16 %v481, %v480
      %v505 = vpack.c.b16 %v483, %v482
      %v506 = vpack.c.b16 %v485, %v484
      %v507 = vpack.c.b16 %v487, %v486
      %v508 = vpack.c.b16 %v489, %v488
      %v509 = vpack.c.b16 %v491, %v490
      %v510 = vpack.c.b16 %v493, %v492
      %v511 = vpack.c.b16 %v495, %v494
      %528 = vmatprep.subr.bf16.mxu0 0
      %529 = vmatpush1.bf16.msra.mxu0 %v503
      %530 = vmatprep.subr.bf16.mxu0 0
      %531 = vmatpush1.bf16.msra.mxu0 %v502
      %532 = vmatprep.subr.bf16.mxu0 0
      %533 = vmatpush1.bf16.msra.mxu0 %v501
      %534 = vmatprep.subr.bf16.mxu0 0
      %535 = vmatpush1.bf16.msra.mxu0 %v500
      %536 = vmatprep.subr.bf16.mxu0 0
      %537 = vmatpush1.bf16.msra.mxu0 %v499
      %538 = vmatprep.subr.bf16.mxu0 0
      %539 = vmatpush1.bf16.msra.mxu0 %v498
      %540 = vmatprep.subr.bf16.mxu0 0
      %541 = vmatpush1.bf16.msra.mxu0 %v497
      %542 = vmatprep.subr.bf16.mxu0 0
      %543 = vmatpush1.bf16.msra.mxu0 %v496
      %544 = vmatprep.subr.bf16.mxu0 0
      %545 = vmatpush2.bf16.msra.mxu0 %v511
      %546 = vmatprep.subr.bf16.mxu0 0
      %547 = vmatpush2.bf16.msra.mxu0 %v510
      %548 = vmatprep.subr.bf16.mxu0 0
      %549 = vmatpush2.bf16.msra.mxu0 %v509
      %550 = vmatprep.subr.bf16.mxu0 0
      %551 = vmatpush2.bf16.msra.mxu0 %v508
      %552 = vmatprep.subr.bf16.mxu0 0
      %553 = vmatpush2.bf16.msra.mxu0 %v507
      %554 = vmatprep.subr.bf16.mxu0 0
      %555 = vmatpush2.bf16.msra.mxu0 %v506
      %556 = vmatprep.subr.bf16.mxu0 0
      %557 = vmatpush2.bf16.msra.mxu0 %v505
      %558 = vmatprep.subr.bf16.mxu0 0
      %559 = vmatpush2.bf16.msra.mxu0 %v504
      %560 = vmatprep.mubr.bf16.mxu0 %v401
      %561 = vmatmul.mubr.bf16.gmra.mxu0 %v400
      %v562 = vpop.f32.mrf.mxu0
      %v563 = vadd.f32 0.0, %v562
      %v564 = vpop.f32.mrf.mxu0
      %v565 = vpop.f32.mrf.mxu0
      %v566 = vadd.f32 0.0, %v565
      %v567 = vpop.f32.mrf.mxu0
      %568 = vmatprep.mubr.bf16.mxu0 %v403
      %569 = vmatmul.mubr.bf16.gmra.mxu0 %v402
      %v570 = vpop.f32.mrf.mxu0
      %v571 = vadd.f32 0.0, %v570
      %v572 = vpop.f32.mrf.mxu0
      %v573 = vpop.f32.mrf.mxu0
      %v574 = vadd.f32 0.0, %v573
      %v575 = vpop.f32.mrf.mxu0
      %576 = vmatprep.mubr.bf16.mxu0 %v405
      %577 = vmatmul.mubr.bf16.gmra.mxu0 %v404
      %v578 = vpop.f32.mrf.mxu0
      %v579 = vadd.f32 0.0, %v578
      %v580 = vpop.f32.mrf.mxu0
      %v581 = vpop.f32.mrf.mxu0
      %v582 = vadd.f32 0.0, %v581
      %v583 = vpop.f32.mrf.mxu0
      %584 = vmatprep.mubr.bf16.mxu0 %v407
      %585 = vmatmul.mubr.bf16.gmra.mxu0 %v406
      %v586 = vpop.f32.mrf.mxu0
      %v587 = vadd.f32 0.0, %v586
      %v588 = vpop.f32.mrf.mxu0
      %v589 = vpop.f32.mrf.mxu0
      %v590 = vadd.f32 0.0, %v589
      %v591 = vpop.f32.mrf.mxu0
      %592 = vmatprep.mubr.bf16.mxu0 %v409
      %593 = vmatmul.mubr.bf16.gmra.mxu0 %v408
      %v594 = vpop.f32.mrf.mxu0
      %v595 = vadd.f32 0.0, %v594
      %v596 = vpop.f32.mrf.mxu0
      %v597 = vpop.f32.mrf.mxu0
      %v598 = vadd.f32 0.0, %v597
      %v599 = vpop.f32.mrf.mxu0
      %600 = vmatprep.mubr.bf16.mxu0 %v411
      %601 = vmatmul.mubr.bf16.gmra.mxu0 %v410
      %v602 = vpop.f32.mrf.mxu0
      %v603 = vadd.f32 0.0, %v602
      %v604 = vpop.f32.mrf.mxu0
      %v605 = vpop.f32.mrf.mxu0
      %v606 = vadd.f32 0.0, %v605
      %v607 = vpop.f32.mrf.mxu0
      %608 = vmatprep.mubr.bf16.mxu0 %v413
      %609 = vmatmul.mubr.bf16.gmra.mxu0 %v412
      %v610 = vpop.f32.mrf.mxu0
      %v611 = vadd.f32 0.0, %v610
      %v612 = vpop.f32.mrf.mxu0
      %v613 = vpop.f32.mrf.mxu0
      %v614 = vadd.f32 0.0, %v613
      %v615 = vpop.f32.mrf.mxu0
      %616 = vmatprep.mubr.bf16.mxu0 %v415
      %617 = vmatmul.mubr.bf16.gmra.mxu0 %v414
      %v618 = vpop.f32.mrf.mxu0
      %v619 = vadd.f32 0.0, %v618
      %v620 = vpop.f32.mrf.mxu0
      %v621 = vpop.f32.mrf.mxu0
      %v622 = vadd.f32 0.0, %v621
      %v623 = vpop.f32.mrf.mxu0
      %624 = vdwg.mxu0
      %v625 = vadd.f32 %v288, %v563
      %v626 = vadd.f32 %v289, %v566
      %v627 = vadd.f32 %v290, %v571
      %v628 = vadd.f32 %v291, %v574
      %v629 = vadd.f32 %v292, %v579
      %v630 = vadd.f32 %v293, %v582
      %v631 = vadd.f32 %v294, %v587
      %v632 = vadd.f32 %v295, %v590
      %v633 = vadd.f32 %v296, %v595
      %v634 = vadd.f32 %v297, %v598
      %v635 = vadd.f32 %v298, %v603
      %v636 = vadd.f32 %v299, %v606
      %v637 = vadd.f32 %v300, %v611
      %v638 = vadd.f32 %v301, %v614
      %v639 = vadd.f32 %v302, %v619
      %v640 = vadd.f32 %v303, %v622
      %641 = vst [vmem:[#allocation2] sm:$0xff] %v625
      %642 = vst [vmem:[#allocation2 + $0x8] sm:$0xff] %v626
      %643 = vst [vmem:[#allocation2 + $0x10] sm:$0xff] %v627
      %644 = vst [vmem:[#allocation2 + $0x18] sm:$0xff] %v628
      %645 = vst [vmem:[#allocation2 + $0x20] sm:$0xff] %v629
      %646 = vst [vmem:[#allocation2 + $0x28] sm:$0xff] %v630
      %647 = vst [vmem:[#allocation2 + $0x30] sm:$0xff] %v631
      %648 = vst [vmem:[#allocation2 + $0x38] sm:$0xff] %v632
      %649 = vst [vmem:[#allocation2 + $0x40] sm:$0xff] %v633
      %650 = vst [vmem:[#allocation2 + $0x48] sm:$0xff] %v634
      %651 = vst [vmem:[#allocation2 + $0x50] sm:$0xff] %v635
      %652 = vst [vmem:[#allocation2 + $0x58] sm:$0xff] %v636
      %653 = vst [vmem:[#allocation2 + $0x60] sm:$0xff] %v637
      %654 = vst [vmem:[#allocation2 + $0x68] sm:$0xff] %v638
      %655 = vst [vmem:[#allocation2 + $0x70] sm:$0xff] %v639
      %656 = vst [vmem:[#allocation2 + $0x78] sm:$0xff] %v640
      // Predicated region
      $region37: #{forward.20} parent=31 // pred_check
        %p657 = pneg %p268
      $region38: #{forward.20} parent=31 // pred_check_branch
        %659 = sbr.rel (%p657) target = $region40
      $region39: #{forward.20} parent=31 // pred_region
        %v660 = vld [vmem:[#allocation2] sm:$0xff]
        %v661 = vld [vmem:[#allocation2 + $0x8] sm:$0xff]
        %v662 = vld [vmem:[#allocation2 + $0x10] sm:$0xff]
        %v663 = vld [vmem:[#allocation2 + $0x18] sm:$0xff]
        %v664 = vld [vmem:[#allocation2 + $0x20] sm:$0xff]
        %v665 = vld [vmem:[#allocation2 + $0x28] sm:$0xff]
        %v666 = vld [vmem:[#allocation2 + $0x30] sm:$0xff]
        %v667 = vld [vmem:[#allocation2 + $0x38] sm:$0xff]
        %v668 = vld [vmem:[#allocation2 + $0x40] sm:$0xff]
        %v669 = vld [vmem:[#allocation2 + $0x48] sm:$0xff]
        %v670 = vld [vmem:[#allocation2 + $0x50] sm:$0xff]
        %v671 = vld [vmem:[#allocation2 + $0x58] sm:$0xff]
        %v672 = vld [vmem:[#allocation2 + $0x60] sm:$0xff]
        %v673 = vld [vmem:[#allocation2 + $0x68] sm:$0xff]
        %v674 = vld [vmem:[#allocation2 + $0x70] sm:$0xff]
        %v675 = vld [vmem:[#allocation2 + $0x78] sm:$0xff]
        %v676 = vld [vmem:[%s257] sm:$0x1]
        %v678 = vlaneseq
        %v679 = vshrl.u32 %v678, 7
        %v680 = vsub.s32 0, %v679
        %v681 = vrot.slane %v676, %v680
        %v683 = vadd.f32 %v660, %v681
        %v684 = vadd.f32 %v661, %v681
        %v685 = vadd.f32 %v662, %v681
        %v686 = vadd.f32 %v663, %v681
        %v687 = vadd.f32 %v664, %v681
        %v688 = vadd.f32 %v665, %v681
        %v689 = vadd.f32 %v666, %v681
        %v690 = vadd.f32 %v667, %v681
        %v691 = vadd.f32 %v668, %v681
        %v692 = vadd.f32 %v669, %v681
        %v693 = vadd.f32 %v670, %v681
        %v694 = vadd.f32 %v671, %v681
        %v695 = vadd.f32 %v672, %v681
        %v696 = vadd.f32 %v673, %v681
        %v697 = vadd.f32 %v674, %v681
        %v698 = vadd.f32 %v675, %v681
        %699 = vst [vmem:[%s265] sm:$0xff] %v683
        %700 = vst [vmem:[%s265 + $0x8] sm:$0xff] %v684
        %701 = vst [vmem:[%s265 + $0x10] sm:$0xff] %v685
        %702 = vst [vmem:[%s265 + $0x18] sm:$0xff] %v686
        %703 = vst [vmem:[%s265 + $0x20] sm:$0xff] %v687
        %704 = vst [vmem:[%s265 + $0x28] sm:$0xff] %v688
        %705 = vst [vmem:[%s265 + $0x30] sm:$0xff] %v689
        %706 = vst [vmem:[%s265 + $0x38] sm:$0xff] %v690
        %707 = vst [vmem:[%s265 + $0x40] sm:$0xff] %v691
        %708 = vst [vmem:[%s265 + $0x48] sm:$0xff] %v692
        %709 = vst [vmem:[%s265 + $0x50] sm:$0xff] %v693
        %710 = vst [vmem:[%s265 + $0x58] sm:$0xff] %v694
        %711 = vst [vmem:[%s265 + $0x60] sm:$0xff] %v695
        %712 = vst [vmem:[%s265 + $0x68] sm:$0xff] %v696
        %713 = vst [vmem:[%s265 + $0x70] sm:$0xff] %v697
        %714 = vst [vmem:[%s265 + $0x78] sm:$0xff] %v698
      $region40: #{forward.20} parent=31 // pred_fallthru
        _
      %s715 = smul.u32 16, %s19
      %p716 = scmp.lt.s32.totalorder %s715, 47
      %s717 = scalar_select %p716, %s715, 47
      %p718 = scmp.lt.s32.totalorder %s20, 0
      %s719 = scalar_select %p718, %s20, 0
      %s720 = sadd.s32 %s719, %s717
      %s721 = smul.addr %s720, 8
      %s722 = scalar_lea.vmem %s3, %s721
      // Predicated region
      $region41: #{forward.20} parent=31 // pred_check
        %p723 = pneg %p135
      $region42: #{forward.20} parent=31 // pred_check_branch
        %725 = sbr.rel (%p723) target = $region44
      $region43: #{forward.20} parent=31 // pred_region
        %s726 = smul.u32 16, %s19
      $region44: #{forward.20} parent=31 // pred_fallthru
        _
    $region32: #{forward.20} parent=5 // pred_fallthru
      _
    %p727 = scmp.le.s32.totalorder 2, %s9
    // Predicated region
    $region45: #{forward.20} parent=5 // pred_check
      %p728 = pneg %p727
    $region46: #{forward.20} parent=5 // pred_check_branch
      %730 = sbr.rel (%p728) target = $region48
    $region47: #{forward.20} parent=5 // pred_region
      %s731 = ssub.s32 %s9, 2
      // Predicated region
      $region49: #{forward.20} parent=47 // pred_check
        %p732 = pneg %p141
      $region50: #{forward.20} parent=47 // pred_check_branch
        %734 = sbr.rel (%p732) target = $region52
      $region51: #{forward.20} parent=47 // pred_region
        %s735 = smul.u32 16, %s22
        %p736 = scmp.lt.s32.totalorder %s735, 47
        %s737 = scalar_select %p736, %s735, 47
        %p738 = scmp.lt.s32.totalorder %s23, 0
        %s739 = scalar_select %p738, %s23, 0
        %s740 = sadd.s32 %s739, %s737
        %s741 = smul.addr %s740, 8
        %s742 = scalar_lea.vmem %s3, %s741
      $region52: #{forward.20} parent=47 // pred_fallthru
        _
    $region48: #{forward.20} parent=5 // pred_fallthru
      _
  $region6: #{forward.20} parent=0 // loop_footer
    %s13 = sadd.s32 1, %s9
  $region7: #{forward.20} parent=0 // loop_footer_branch
    %8 = sbr.rel target = $region3
  $region8: #{forward.20} parent=0 // loop_exit
    _

// kernel: forward.21
$region0: #{forward.21}
  #allocation0 [shape = 'u32[]', space=smem, size = 0x4, offset = 0x4, fixed_abs, tag = 'smem constant byte address 0x4 - core index']
  #allocation1 [shape = 'u32[144,128]{1,0:T(1,128)}', space=vmem, size = 0x12000, scoped, tag = 'internal scratch']
  #allocation2 [shape = 'f32[128,128]{1,0:T(8,128)}', space=vmem, size = 0x10000, scoped, tag = 'scratch operand']
  %s0 = inlined_call_operand.vmem [shape: bf16[128,384], index: 0, kind: input, shape index: {}]
  %s1 = inlined_call_operand.vmem [shape: bf16[384,128], index: 1, kind: input, shape index: {}]
  %s2 = inlined_call_operand.vmem [shape: f32[1,128], index: 2, kind: input, shape index: {}]
  %s3 = inlined_call_operand.vmem [shape: f32[128,128], index: 3, kind: output, shape index: {}]
  %s4 = sld [smem:[#allocation0]]
  $region30: #{forward.21} parent=0
    _
  %s6 = ssub.s32 1, %s4
  %s7 = scalar_select 0, %s6, %s4
  // Predicated region
  $region2: #{forward.21} parent=0 // pred_check
    _
  $region3: #{forward.21} parent=0 // pred_check_branch
    %9 = sbr.rel (0) target = $region5
  $region4: #{forward.21} parent=0 // pred_region
    _
  $region5: #{forward.21} parent=0 // pred_fallthru
    _
  // Predicated region
  $region6: #{forward.21} parent=0 // pred_check
    _
  $region7: #{forward.21} parent=0 // pred_check_branch
    %11 = sbr.rel (0) target = $region9
  $region8: #{forward.21} parent=0 // pred_region
    _
  $region9: #{forward.21} parent=0 // pred_fallthru
    _
  // Predicated region
  $region10: #{forward.21} parent=0 // pred_check
    _
  $region11: #{forward.21} parent=0 // pred_check_branch
    %13 = sbr.rel (0) target = $region13
  $region12: #{forward.21} parent=0 // pred_region
    _
  $region13: #{forward.21} parent=0 // pred_fallthru
    _
  %p15 = scmp.eq.s32.totalorder 0, 0
  // Predicated region
  $region14: #{forward.21} parent=0 // pred_check
    %p16 = pneg %p15
  $region15: #{forward.21} parent=0 // pred_check_branch
    %18 = sbr.rel (%p16) target = $region17
  $region16: #{forward.21} parent=0 // pred_region
    %19 = vst [vmem:[#allocation2] sm:$0xff] 0.0
    %20 = vst [vmem:[#allocation2 + $0x8] sm:$0xff] 0.0
    %21 = vst [vmem:[#allocation2 + $0x10] sm:$0xff] 0.0
    %22 = vst [vmem:[#allocation2 + $0x18] sm:$0xff] 0.0
    %23 = vst [vmem:[#allocation2 + $0x20] sm:$0xff] 0.0
    %24 = vst [vmem:[#allocation2 + $0x28] sm:$0xff] 0.0
    %25 = vst [vmem:[#allocation2 + $0x30] sm:$0xff] 0.0
    %26 = vst [vmem:[#allocation2 + $0x38] sm:$0xff] 0.0
    %27 = vst [vmem:[#allocation2 + $0x40] sm:$0xff] 0.0
    %28 = vst [vmem:[#allocation2 + $0x48] sm:$0xff] 0.0
    %29 = vst [vmem:[#allocation2 + $0x50] sm:$0xff] 0.0
    %30 = vst [vmem:[#allocation2 + $0x58] sm:$0xff] 0.0
    %31 = vst [vmem:[#allocation2 + $0x60] sm:$0xff] 0.0
    %32 = vst [vmem:[#allocation2 + $0x68] sm:$0xff] 0.0
    %33 = vst [vmem:[#allocation2 + $0x70] sm:$0xff] 0.0
    %34 = vst [vmem:[#allocation2 + $0x78] sm:$0xff] 0.0
  $region17: #{forward.21} parent=0 // pred_fallthru
    _
  %v35 = vld [vmem:[#allocation2] sm:$0xff]
  %v36 = vld [vmem:[#allocation2 + $0x8] sm:$0xff]
  %v37 = vld [vmem:[#allocation2 + $0x10] sm:$0xff]
  %v38 = vld [vmem:[#allocation2 + $0x18] sm:$0xff]
  %v39 = vld [vmem:[#allocation2 + $0x20] sm:$0xff]
  %v40 = vld [vmem:[#allocation2 + $0x28] sm:$0xff]
  %v41 = vld [vmem:[#allocation2 + $0x30] sm:$0xff]
  %v42 = vld [vmem:[#allocation2 + $0x38] sm:$0xff]
  %v43 = vld [vmem:[#allocation2 + $0x40] sm:$0xff]
  %v44 = vld [vmem:[#allocation2 + $0x48] sm:$0xff]
  %v45 = vld [vmem:[#allocation2 + $0x50] sm:$0xff]
  %v46 = vld [vmem:[#allocation2 + $0x58] sm:$0xff]
  %v47 = vld [vmem:[#allocation2 + $0x60] sm:$0xff]
  %v48 = vld [vmem:[#allocation2 + $0x68] sm:$0xff]
  %v49 = vld [vmem:[#allocation2 + $0x70] sm:$0xff]
  %v50 = vld [vmem:[#allocation2 + $0x78] sm:$0xff]
  %v51 = vld [vmem:[%s0] sm:$0xff]
  %v52 = vld [vmem:[%s0 + $0x8] sm:$0xf]
  %v53 = vld [vmem:[%s0 + $0xc] sm:$0xff]
  %v54 = vld [vmem:[%s0 + $0x14] sm:$0xf]
  %v55 = vld [vmem:[%s0 + $0x18] sm:$0xff]
  %v56 = vld [vmem:[%s0 + $0x20] sm:$0xf]
  %v57 = vld [vmem:[%s0 + $0x24] sm:$0xff]
  %v58 = vld [vmem:[%s0 + $0x2c] sm:$0xf]
  %v59 = vld [vmem:[%s0 + $0x30] sm:$0xff]
  %v60 = vld [vmem:[%s0 + $0x38] sm:$0xf]
  %v61 = vld [vmem:[%s0 + $0x3c] sm:$0xff]
  %v62 = vld [vmem:[%s0 + $0x44] sm:$0xf]
  %v63 = vld [vmem:[%s0 + $0x48] sm:$0xff]
  %v64 = vld [vmem:[%s0 + $0x50] sm:$0xf]
  %v65 = vld [vmem:[%s0 + $0x54] sm:$0xff]
  %v66 = vld [vmem:[%s0 + $0x5c] sm:$0xf]
  %v67 = vld [vmem:[%s0 + $0x60] sm:$0xff]
  %v68 = vld [vmem:[%s0 + $0x68] sm:$0xf]
  %v69 = vld [vmem:[%s0 + $0x6c] sm:$0xff]
  %v70 = vld [vmem:[%s0 + $0x74] sm:$0xf]
  %v71 = vld [vmem:[%s0 + $0x78] sm:$0xff]
  %v72 = vld [vmem:[%s0 + $0x80] sm:$0xf]
  %v73 = vld [vmem:[%s0 + $0x84] sm:$0xff]
  %v74 = vld [vmem:[%s0 + $0x8c] sm:$0xf]
  %v75 = vld [vmem:[%s0 + $0x90] sm:$0xff]
  %v76 = vld [vmem:[%s0 + $0x98] sm:$0xf]
  %v77 = vld [vmem:[%s0 + $0x9c] sm:$0xff]
  %v78 = vld [vmem:[%s0 + $0xa4] sm:$0xf]
  %v79 = vld [vmem:[%s0 + $0xa8] sm:$0xff]
  %v80 = vld [vmem:[%s0 + $0xb0] sm:$0xf]
  %v81 = vld [vmem:[%s0 + $0xb4] sm:$0xff]
  %v82 = vld [vmem:[%s0 + $0xbc] sm:$0xf]
  %v83 = vld [vmem:[%s1] sm:$0xf]
  %v84 = vld [vmem:[%s1 + $0x4] sm:$0xf]
  %v85 = vld [vmem:[%s1 + $0x8] sm:$0xf]
  %v86 = vld [vmem:[%s1 + $0xc] sm:$0xf]
  %v87 = vld [vmem:[%s1 + $0x10] sm:$0xf]
  %v88 = vld [vmem:[%s1 + $0x14] sm:$0xf]
  %v89 = vld [vmem:[%s1 + $0x18] sm:$0xf]
  %v90 = vld [vmem:[%s1 + $0x1c] sm:$0xf]
  %v91 = vld [vmem:[%s1 + $0x20] sm:$0xf]
  %v92 = vld [vmem:[%s1 + $0x24] sm:$0xf]
  %v93 = vld [vmem:[%s1 + $0x28] sm:$0xf]
  %v94 = vld [vmem:[%s1 + $0x2c] sm:$0xf]
  %v95 = vld [vmem:[%s1 + $0x30] sm:$0xf]
  %v96 = vld [vmem:[%s1 + $0x34] sm:$0xf]
  %v97 = vld [vmem:[%s1 + $0x38] sm:$0xf]
  %v98 = vld [vmem:[%s1 + $0x3c] sm:$0xf]
  %v99 = vld [vmem:[%s1 + $0x40] sm:$0xf]
  %v100 = vld [vmem:[%s1 + $0x44] sm:$0xf]
  %v101 = vld [vmem:[%s1 + $0x48] sm:$0xf]
  %v102 = vld [vmem:[%s1 + $0x4c] sm:$0xf]
  %v103 = vld [vmem:[%s1 + $0x50] sm:$0xf]
  %v104 = vld [vmem:[%s1 + $0x54] sm:$0xf]
  %v105 = vld [vmem:[%s1 + $0x58] sm:$0xf]
  %v106 = vld [vmem:[%s1 + $0x5c] sm:$0xf]
  %v107 = vld [vmem:[%s1 + $0x60] sm:$0xf]
  %v108 = vld [vmem:[%s1 + $0x64] sm:$0xf]
  %v109 = vld [vmem:[%s1 + $0x68] sm:$0xf]
  %v110 = vld [vmem:[%s1 + $0x6c] sm:$0xf]
  %v111 = vld [vmem:[%s1 + $0x70] sm:$0xf]
  %v112 = vld [vmem:[%s1 + $0x74] sm:$0xf]
  %v113 = vld [vmem:[%s1 + $0x78] sm:$0xf]
  %v114 = vld [vmem:[%s1 + $0x7c] sm:$0xf]
  %v115 = vld [vmem:[%s1 + $0x80] sm:$0xf]
  %v116 = vld [vmem:[%s1 + $0x84] sm:$0xf]
  %v117 = vld [vmem:[%s1 + $0x88] sm:$0xf]
  %v118 = vld [vmem:[%s1 + $0x8c] sm:$0xf]
  %v119 = vld [vmem:[%s1 + $0x90] sm:$0xf]
  %v120 = vld [vmem:[%s1 + $0x94] sm:$0xf]
  %v121 = vld [vmem:[%s1 + $0x98] sm:$0xf]
  %v122 = vld [vmem:[%s1 + $0x9c] sm:$0xf]
  %v123 = vld [vmem:[%s1 + $0xa0] sm:$0xf]
  %v124 = vld [vmem:[%s1 + $0xa4] sm:$0xf]
  %v125 = vld [vmem:[%s1 + $0xa8] sm:$0xf]
  %v126 = vld [vmem:[%s1 + $0xac] sm:$0xf]
  %v127 = vld [vmem:[%s1 + $0xb0] sm:$0xf]
  %v128 = vld [vmem:[%s1 + $0xb4] sm:$0xf]
  %v129 = vld [vmem:[%s1 + $0xb8] sm:$0xf]
  %v130 = vld [vmem:[%s1 + $0xbc] sm:$0xf]
  %v163 = vunpack.c.l.b16 %v51
  %v164 = vunpack.c.h.b16 %v51
  %v165 = vunpack.c.l.b16 %v52
  %v166 = vunpack.c.l.b16 %v53
  %v167 = vunpack.c.h.b16 %v53
  %v168 = vunpack.c.l.b16 %v54
  %v169 = vunpack.c.l.b16 %v55
  %v170 = vunpack.c.h.b16 %v55
  %v171 = vunpack.c.l.b16 %v56
  %v172 = vunpack.c.l.b16 %v57
  %v173 = vunpack.c.h.b16 %v57
  %v174 = vunpack.c.l.b16 %v58
  %v175 = vunpack.c.l.b16 %v59
  %v176 = vunpack.c.h.b16 %v59
  %v177 = vunpack.c.l.b16 %v60
  %v178 = vunpack.c.l.b16 %v61
  %v179 = vunpack.c.h.b16 %v61
  %v180 = vunpack.c.l.b16 %v62
  %v181 = vunpack.c.l.b16 %v63
  %v182 = vunpack.c.h.b16 %v63
  %v183 = vunpack.c.l.b16 %v64
  %v184 = vunpack.c.l.b16 %v65
  %v185 = vunpack.c.h.b16 %v65
  %v186 = vunpack.c.l.b16 %v66
  %v187 = vunpack.c.l.b16 %v67
  %v188 = vunpack.c.h.b16 %v67
  %v189 = vunpack.c.l.b16 %v68
  %v190 = vunpack.c.l.b16 %v69
  %v191 = vunpack.c.h.b16 %v69
  %v192 = vunpack.c.l.b16 %v70
  %v193 = vunpack.c.l.b16 %v71
  %v194 = vunpack.c.h.b16 %v71
  %v195 = vunpack.c.l.b16 %v72
  %v196 = vunpack.c.l.b16 %v73
  %v197 = vunpack.c.h.b16 %v73
  %v198 = vunpack.c.l.b16 %v74
  %v199 = vunpack.c.l.b16 %v75
  %v200 = vunpack.c.h.b16 %v75
  %v201 = vunpack.c.l.b16 %v76
  %v202 = vunpack.c.l.b16 %v77
  %v203 = vunpack.c.h.b16 %v77
  %v204 = vunpack.c.l.b16 %v78
  %v205 = vunpack.c.l.b16 %v79
  %v206 = vunpack.c.h.b16 %v79
  %v207 = vunpack.c.l.b16 %v80
  %v208 = vunpack.c.l.b16 %v81
  %v209 = vunpack.c.h.b16 %v81
  %v210 = vunpack.c.l.b16 %v82
  %v211 = vpack.c.b16 %v166, %v163
  %v212 = vpack.c.b16 %v167, %v164
  %v213 = vpack.c.b16 %v168, %v165
  %v214 = vpack.c.b16 %v172, %v169
  %v215 = vpack.c.b16 %v173, %v170
  %v216 = vpack.c.b16 %v174, %v171
  %v217 = vpack.c.b16 %v178, %v175
  %v218 = vpack.c.b16 %v179, %v176
  %v219 = vpack.c.b16 %v180, %v177
  %v220 = vpack.c.b16 %v184, %v181
  %v221 = vpack.c.b16 %v185, %v182
  %v222 = vpack.c.b16 %v186, %v183
  %v223 = vpack.c.b16 %v190, %v187
  %v224 = vpack.c.b16 %v191, %v188
  %v225 = vpack.c.b16 %v192, %v189
  %v226 = vpack.c.b16 %v196, %v193
  %v227 = vpack.c.b16 %v197, %v194
  %v228 = vpack.c.b16 %v198, %v195
  %v229 = vpack.c.b16 %v202, %v199
  %v230 = vpack.c.b16 %v203, %v200
  %v231 = vpack.c.b16 %v204, %v201
  %v232 = vpack.c.b16 %v208, %v205
  %v233 = vpack.c.b16 %v209, %v206
  %v234 = vpack.c.b16 %v210, %v207
  %v307 = vunpack.c.l.b16 %v83
  %v308 = vunpack.c.l.b16 %v84
  %v309 = vunpack.c.l.b16 %v85
  %v310 = vunpack.c.l.b16 %v86
  %v311 = vunpack.c.l.b16 %v87
  %v312 = vunpack.c.l.b16 %v88
  %v313 = vunpack.c.l.b16 %v89
  %v314 = vunpack.c.l.b16 %v90
  %v315 = vunpack.c.l.b16 %v91
  %v316 = vunpack.c.l.b16 %v92
  %v317 = vunpack.c.l.b16 %v93
  %v318 = vunpack.c.l.b16 %v94
  %v319 = vunpack.c.l.b16 %v95
  %v320 = vunpack.c.l.b16 %v96
  %v321 = vunpack.c.l.b16 %v97
  %v322 = vunpack.c.l.b16 %v98
  %v323 = vunpack.c.l.b16 %v99
  %v324 = vunpack.c.l.b16 %v100
  %v325 = vunpack.c.l.b16 %v101
  %v326 = vunpack.c.l.b16 %v102
  %v327 = vunpack.c.l.b16 %v103
  %v328 = vunpack.c.l.b16 %v104
  %v329 = vunpack.c.l.b16 %v105
  %v330 = vunpack.c.l.b16 %v106
  %v331 = vunpack.c.l.b16 %v107
  %v332 = vunpack.c.l.b16 %v108
  %v333 = vunpack.c.l.b16 %v109
  %v334 = vunpack.c.l.b16 %v110
  %v335 = vunpack.c.l.b16 %v111
  %v336 = vunpack.c.l.b16 %v112
  %v337 = vunpack.c.l.b16 %v113
  %v338 = vunpack.c.l.b16 %v114
  %v339 = vunpack.c.l.b16 %v115
  %v340 = vunpack.c.l.b16 %v116
  %v341 = vunpack.c.l.b16 %v117
  %v342 = vunpack.c.l.b16 %v118
  %v343 = vunpack.c.l.b16 %v119
  %v344 = vunpack.c.l.b16 %v120
  %v345 = vunpack.c.l.b16 %v121
  %v346 = vunpack.c.l.b16 %v122
  %v347 = vunpack.c.l.b16 %v123
  %v348 = vunpack.c.l.b16 %v124
  %v349 = vunpack.c.l.b16 %v125
  %v350 = vunpack.c.l.b16 %v126
  %v351 = vunpack.c.l.b16 %v127
  %v352 = vunpack.c.l.b16 %v128
  %v353 = vunpack.c.l.b16 %v129
  %v354 = vunpack.c.l.b16 %v130
  %v355 = vpack.c.b16 %v308, %v307
  %v356 = vpack.c.b16 %v310, %v309
  %v357 = vpack.c.b16 %v312, %v311
  %v358 = vpack.c.b16 %v314, %v313
  %v359 = vpack.c.b16 %v316, %v315
  %v360 = vpack.c.b16 %v318, %v317
  %v361 = vpack.c.b16 %v320, %v319
  %v362 = vpack.c.b16 %v322, %v321
  %v363 = vpack.c.b16 %v324, %v323
  %v364 = vpack.c.b16 %v326, %v325
  %v365 = vpack.c.b16 %v328, %v327
  %v366 = vpack.c.b16 %v330, %v329
  %v367 = vpack.c.b16 %v332, %v331
  %v368 = vpack.c.b16 %v334, %v333
  %v369 = vpack.c.b16 %v336, %v335
  %v370 = vpack.c.b16 %v338, %v337
  %v371 = vpack.c.b16 %v340, %v339
  %v372 = vpack.c.b16 %v342, %v341
  %v373 = vpack.c.b16 %v344, %v343
  %v374 = vpack.c.b16 %v346, %v345
  %v375 = vpack.c.b16 %v348, %v347
  %v376 = vpack.c.b16 %v350, %v349
  %v377 = vpack.c.b16 %v352, %v351
  %v378 = vpack.c.b16 %v354, %v353
  %403 = vmatprep.subr.bf16.mxu0 0
  %404 = vmatpush1.bf16.msra.mxu0 %v362
  %405 = vmatprep.subr.bf16.mxu0 0
  %406 = vmatpush1.bf16.msra.mxu0 %v361
  %407 = vmatprep.subr.bf16.mxu0 0
  %408 = vmatpush1.bf16.msra.mxu0 %v360
  %409 = vmatprep.subr.bf16.mxu0 0
  %410 = vmatpush1.bf16.msra.mxu0 %v359
  %411 = vmatprep.subr.bf16.mxu0 0
  %412 = vmatpush1.bf16.msra.mxu0 %v358
  %413 = vmatprep.subr.bf16.mxu0 0
  %414 = vmatpush1.bf16.msra.mxu0 %v357
  %415 = vmatprep.subr.bf16.mxu0 0
  %416 = vmatpush1.bf16.msra.mxu0 %v356
  %417 = vmatprep.subr.bf16.mxu0 0
  %418 = vmatpush1.bf16.msra.mxu0 %v355
  %419 = vmatprep.subr.bf16.mxu0 0
  %420 = vmatpush2.bf16.msra.mxu0 %v370
  %421 = vmatprep.subr.bf16.mxu0 0
  %422 = vmatpush2.bf16.msra.mxu0 %v369
  %423 = vmatprep.subr.bf16.mxu0 0
  %424 = vmatpush2.bf16.msra.mxu0 %v368
  %425 = vmatprep.subr.bf16.mxu0 0
  %426 = vmatpush2.bf16.msra.mxu0 %v367
  %427 = vmatprep.subr.bf16.mxu0 0
  %428 = vmatpush2.bf16.msra.mxu0 %v366
  %429 = vmatprep.subr.bf16.mxu0 0
  %430 = vmatpush2.bf16.msra.mxu0 %v365
  %431 = vmatprep.subr.bf16.mxu0 0
  %432 = vmatpush2.bf16.msra.mxu0 %v364
  %433 = vmatprep.subr.bf16.mxu0 0
  %434 = vmatpush2.bf16.msra.mxu0 %v363
  %435 = vmatprep.mubr.bf16.mxu0 %v212
  %436 = vmatmul.mubr.bf16.gmra.mxu0 %v211
  %v437 = vpop.f32.mrf.mxu0
  %v438 = vadd.f32 0.0, %v437
  %v439 = vpop.f32.mrf.mxu0
  %v440 = vpop.f32.mrf.mxu0
  %v441 = vadd.f32 0.0, %v440
  %v442 = vpop.f32.mrf.mxu0
  %443 = vmatprep.mubr.bf16.mxu0 %v215
  %444 = vmatmul.mubr.bf16.gmra.mxu0 %v214
  %v445 = vpop.f32.mrf.mxu0
  %v446 = vadd.f32 0.0, %v445
  %v447 = vpop.f32.mrf.mxu0
  %v448 = vpop.f32.mrf.mxu0
  %v449 = vadd.f32 0.0, %v448
  %v450 = vpop.f32.mrf.mxu0
  %451 = vmatprep.mubr.bf16.mxu0 %v218
  %452 = vmatmul.mubr.bf16.gmra.mxu0 %v217
  %v453 = vpop.f32.mrf.mxu0
  %v454 = vadd.f32 0.0, %v453
  %v455 = vpop.f32.mrf.mxu0
  %v456 = vpop.f32.mrf.mxu0
  %v457 = vadd.f32 0.0, %v456
  %v458 = vpop.f32.mrf.mxu0
  %459 = vmatprep.mubr.bf16.mxu0 %v221
  %460 = vmatmul.mubr.bf16.gmra.mxu0 %v220
  %v461 = vpop.f32.mrf.mxu0
  %v462 = vadd.f32 0.0, %v461
  %v463 = vpop.f32.mrf.mxu0
  %v464 = vpop.f32.mrf.mxu0
  %v465 = vadd.f32 0.0, %v464
  %v466 = vpop.f32.mrf.mxu0
  %467 = vmatprep.mubr.bf16.mxu0 %v224
  %468 = vmatmul.mubr.bf16.gmra.mxu0 %v223
  %v469 = vpop.f32.mrf.mxu0
  %v470 = vadd.f32 0.0, %v469
  %v471 = vpop.f32.mrf.mxu0
  %v472 = vpop.f32.mrf.mxu0
  %v473 = vadd.f32 0.0, %v472
  %v474 = vpop.f32.mrf.mxu0
  %475 = vmatprep.mubr.bf16.mxu0 %v227
  %476 = vmatmul.mubr.bf16.gmra.mxu0 %v226
  %v477 = vpop.f32.mrf.mxu0
  %v478 = vadd.f32 0.0, %v477
  %v479 = vpop.f32.mrf.mxu0
  %v480 = vpop.f32.mrf.mxu0
  %v481 = vadd.f32 0.0, %v480
  %v482 = vpop.f32.mrf.mxu0
  %483 = vmatprep.mubr.bf16.mxu0 %v230
  %484 = vmatmul.mubr.bf16.gmra.mxu0 %v229
  %v485 = vpop.f32.mrf.mxu0
  %v486 = vadd.f32 0.0, %v485
  %v487 = vpop.f32.mrf.mxu0
  %v488 = vpop.f32.mrf.mxu0
  %v489 = vadd.f32 0.0, %v488
  %v490 = vpop.f32.mrf.mxu0
  %491 = vmatprep.mubr.bf16.mxu0 %v233
  %492 = vmatmul.mubr.bf16.gmra.mxu0 %v232
  %v493 = vpop.f32.mrf.mxu0
  %v494 = vadd.f32 0.0, %v493
  %v495 = vpop.f32.mrf.mxu0
  %v496 = vpop.f32.mrf.mxu0
  %v497 = vadd.f32 0.0, %v496
  %v498 = vpop.f32.mrf.mxu0
  %499 = vdwg.mxu0
  %500 = vmatprep.subr.bf16.mxu0 0
  %501 = vmatpush1.bf16.msra.mxu0 %v378
  %502 = vmatprep.subr.bf16.mxu0 0
  %503 = vmatpush1.bf16.msra.mxu0 %v377
  %504 = vmatprep.subr.bf16.mxu0 0
  %505 = vmatpush1.bf16.msra.mxu0 %v376
  %506 = vmatprep.subr.bf16.mxu0 0
  %507 = vmatpush1.bf16.msra.mxu0 %v375
  %508 = vmatprep.subr.bf16.mxu0 0
  %509 = vmatpush1.bf16.msra.mxu0 %v374
  %510 = vmatprep.subr.bf16.mxu0 0
  %511 = vmatpush1.bf16.msra.mxu0 %v373
  %512 = vmatprep.subr.bf16.mxu0 0
  %513 = vmatpush1.bf16.msra.mxu0 %v372
  %514 = vmatprep.subr.bf16.mxu0 0
  %515 = vmatpush1.bf16.msra.mxu0 %v371
  %516 = vmatprep.subr.bf16.mxu0 0
  %517 = vmatpush2.bf16.msra.mxu0 0
  %518 = vmatprep.subr.bf16.mxu0 0
  %519 = vmatpush2.bf16.msra.mxu0 0
  %520 = vmatprep.subr.bf16.mxu0 0
  %521 = vmatpush2.bf16.msra.mxu0 0
  %522 = vmatprep.subr.bf16.mxu0 0
  %523 = vmatpush2.bf16.msra.mxu0 0
  %524 = vmatprep.subr.bf16.mxu0 0
  %525 = vmatpush2.bf16.msra.mxu0 0
  %526 = vmatprep.subr.bf16.mxu0 0
  %527 = vmatpush2.bf16.msra.mxu0 0
  %528 = vmatprep.subr.bf16.mxu0 0
  %529 = vmatpush2.bf16.msra.mxu0 0
  %530 = vmatprep.subr.bf16.mxu0 0
  %531 = vmatpush2.bf16.msra.mxu0 0
  %532 = vmatprep.mubr.bf16.mxu0 0
  %533 = vmatmul.mubr.bf16.gmra.mxu0 %v213
  %v534 = vpop.f32.mrf.mxu0
  %v535 = vadd.f32 %v438, %v534
  %v536 = vpop.f32.mrf.mxu0
  %v537 = vpop.f32.mrf.mxu0
  %v538 = vadd.f32 %v441, %v537
  %v539 = vpop.f32.mrf.mxu0
  %540 = vmatprep.mubr.bf16.mxu0 0
  %541 = vmatmul.mubr.bf16.gmra.mxu0 %v216
  %v542 = vpop.f32.mrf.mxu0
  %v543 = vadd.f32 %v446, %v542
  %v544 = vpop.f32.mrf.mxu0
  %v545 = vpop.f32.mrf.mxu0
  %v546 = vadd.f32 %v449, %v545
  %v547 = vpop.f32.mrf.mxu0
  %548 = vmatprep.mubr.bf16.mxu0 0
  %549 = vmatmul.mubr.bf16.gmra.mxu0 %v219
  %v550 = vpop.f32.mrf.mxu0
  %v551 = vadd.f32 %v454, %v550
  %v552 = vpop.f32.mrf.mxu0
  %v553 = vpop.f32.mrf.mxu0
  %v554 = vadd.f32 %v457, %v553
  %v555 = vpop.f32.mrf.mxu0
  %556 = vmatprep.mubr.bf16.mxu0 0
  %557 = vmatmul.mubr.bf16.gmra.mxu0 %v222
  %v558 = vpop.f32.mrf.mxu0
  %v559 = vadd.f32 %v462, %v558
  %v560 = vpop.f32.mrf.mxu0
  %v561 = vpop.f32.mrf.mxu0
  %v562 = vadd.f32 %v465, %v561
  %v563 = vpop.f32.mrf.mxu0
  %564 = vmatprep.mubr.bf16.mxu0 0
  %565 = vmatmul.mubr.bf16.gmra.mxu0 %v225
  %v566 = vpop.f32.mrf.mxu0
  %v567 = vadd.f32 %v470, %v566
  %v568 = vpop.f32.mrf.mxu0
  %v569 = vpop.f32.mrf.mxu0
  %v570 = vadd.f32 %v473, %v569
  %v571 = vpop.f32.mrf.mxu0
  %572 = vmatprep.mubr.bf16.mxu0 0
  %573 = vmatmul.mubr.bf16.gmra.mxu0 %v228
  %v574 = vpop.f32.mrf.mxu0
  %v575 = vadd.f32 %v478, %v574
  %v576 = vpop.f32.mrf.mxu0
  %v577 = vpop.f32.mrf.mxu0
  %v578 = vadd.f32 %v481, %v577
  %v579 = vpop.f32.mrf.mxu0
  %580 = vmatprep.mubr.bf16.mxu0 0
  %581 = vmatmul.mubr.bf16.gmra.mxu0 %v231
  %v582 = vpop.f32.mrf.mxu0
  %v583 = vadd.f32 %v486, %v582
  %v584 = vpop.f32.mrf.mxu0
  %v585 = vpop.f32.mrf.mxu0
  %v586 = vadd.f32 %v489, %v585
  %v587 = vpop.f32.mrf.mxu0
  %588 = vmatprep.mubr.bf16.mxu0 0
  %589 = vmatmul.mubr.bf16.gmra.mxu0 %v234
  %v590 = vpop.f32.mrf.mxu0
  %v591 = vadd.f32 %v494, %v590
  %v592 = vpop.f32.mrf.mxu0
  %v593 = vpop.f32.mrf.mxu0
  %v594 = vadd.f32 %v497, %v593
  %v595 = vpop.f32.mrf.mxu0
  %596 = vdwg.mxu0
  %v597 = vadd.f32 %v35, %v535
  %v598 = vadd.f32 %v36, %v538
  %v599 = vadd.f32 %v37, %v543
  %v600 = vadd.f32 %v38, %v546
  %v601 = vadd.f32 %v39, %v551
  %v602 = vadd.f32 %v40, %v554
  %v603 = vadd.f32 %v41, %v559
  %v604 = vadd.f32 %v42, %v562
  %v605 = vadd.f32 %v43, %v567
  %v606 = vadd.f32 %v44, %v570
  %v607 = vadd.f32 %v45, %v575
  %v608 = vadd.f32 %v46, %v578
  %v609 = vadd.f32 %v47, %v583
  %v610 = vadd.f32 %v48, %v586
  %v611 = vadd.f32 %v49, %v591
  %v612 = vadd.f32 %v50, %v594
  %613 = vst [vmem:[#allocation2] sm:$0xff] %v597
  %614 = vst [vmem:[#allocation2 + $0x8] sm:$0xff] %v598
  %615 = vst [vmem:[#allocation2 + $0x10] sm:$0xff] %v599
  %616 = vst [vmem:[#allocation2 + $0x18] sm:$0xff] %v600
  %617 = vst [vmem:[#allocation2 + $0x20] sm:$0xff] %v601
  %618 = vst [vmem:[#allocation2 + $0x28] sm:$0xff] %v602
  %619 = vst [vmem:[#allocation2 + $0x30] sm:$0xff] %v603
  %620 = vst [vmem:[#allocation2 + $0x38] sm:$0xff] %v604
  %621 = vst [vmem:[#allocation2 + $0x40] sm:$0xff] %v605
  %622 = vst [vmem:[#allocation2 + $0x48] sm:$0xff] %v606
  %623 = vst [vmem:[#allocation2 + $0x50] sm:$0xff] %v607
  %624 = vst [vmem:[#allocation2 + $0x58] sm:$0xff] %v608
  %625 = vst [vmem:[#allocation2 + $0x60] sm:$0xff] %v609
  %626 = vst [vmem:[#allocation2 + $0x68] sm:$0xff] %v610
  %627 = vst [vmem:[#allocation2 + $0x70] sm:$0xff] %v611
  %628 = vst [vmem:[#allocation2 + $0x78] sm:$0xff] %v612
  // Predicated region
  $region18: #{forward.21} parent=0 // pred_check
    %p629 = pneg %p15
  $region19: #{forward.21} parent=0 // pred_check_branch
    %631 = sbr.rel (%p629) target = $region21
  $region20: #{forward.21} parent=0 // pred_region
    %v632 = vld [vmem:[#allocation2] sm:$0xff]
    %v633 = vld [vmem:[#allocation2 + $0x8] sm:$0xff]
    %v634 = vld [vmem:[#allocation2 + $0x10] sm:$0xff]
    %v635 = vld [vmem:[#allocation2 + $0x18] sm:$0xff]
    %v636 = vld [vmem:[#allocation2 + $0x20] sm:$0xff]
    %v637 = vld [vmem:[#allocation2 + $0x28] sm:$0xff]
    %v638 = vld [vmem:[#allocation2 + $0x30] sm:$0xff]
    %v639 = vld [vmem:[#allocation2 + $0x38] sm:$0xff]
    %v640 = vld [vmem:[#allocation2 + $0x40] sm:$0xff]
    %v641 = vld [vmem:[#allocation2 + $0x48] sm:$0xff]
    %v642 = vld [vmem:[#allocation2 + $0x50] sm:$0xff]
    %v643 = vld [vmem:[#allocation2 + $0x58] sm:$0xff]
    %v644 = vld [vmem:[#allocation2 + $0x60] sm:$0xff]
    %v645 = vld [vmem:[#allocation2 + $0x68] sm:$0xff]
    %v646 = vld [vmem:[#allocation2 + $0x70] sm:$0xff]
    %v647 = vld [vmem:[#allocation2 + $0x78] sm:$0xff]
    %v648 = vld [vmem:[%s2] sm:$0x1]
    %v650 = vlaneseq
    %v651 = vshrl.u32 %v650, 7
    %v652 = vsub.s32 0, %v651
    %v653 = vrot.slane %v648, %v652
    %v655 = vadd.f32 %v632, %v653
    %v656 = vadd.f32 %v633, %v653
    %v657 = vadd.f32 %v634, %v653
    %v658 = vadd.f32 %v635, %v653
    %v659 = vadd.f32 %v636, %v653
    %v660 = vadd.f32 %v637, %v653
    %v661 = vadd.f32 %v638, %v653
    %v662 = vadd.f32 %v639, %v653
    %v663 = vadd.f32 %v640, %v653
    %v664 = vadd.f32 %v641, %v653
    %v665 = vadd.f32 %v642, %v653
    %v666 = vadd.f32 %v643, %v653
    %v667 = vadd.f32 %v644, %v653
    %v668 = vadd.f32 %v645, %v653
    %v669 = vadd.f32 %v646, %v653
    %v670 = vadd.f32 %v647, %v653
    %671 = vst [vmem:[%s3] sm:$0xff] %v655
    %672 = vst [vmem:[%s3 + $0x8] sm:$0xff] %v656
    %673 = vst [vmem:[%s3 + $0x10] sm:$0xff] %v657
    %674 = vst [vmem:[%s3 + $0x18] sm:$0xff] %v658
    %675 = vst [vmem:[%s3 + $0x20] sm:$0xff] %v659
    %676 = vst [vmem:[%s3 + $0x28] sm:$0xff] %v660
    %677 = vst [vmem:[%s3 + $0x30] sm:$0xff] %v661
    %678 = vst [vmem:[%s3 + $0x38] sm:$0xff] %v662
    %679 = vst [vmem:[%s3 + $0x40] sm:$0xff] %v663
    %680 = vst [vmem:[%s3 + $0x48] sm:$0xff] %v664
    %681 = vst [vmem:[%s3 + $0x50] sm:$0xff] %v665
    %682 = vst [vmem:[%s3 + $0x58] sm:$0xff] %v666
    %683 = vst [vmem:[%s3 + $0x60] sm:$0xff] %v667
    %684 = vst [vmem:[%s3 + $0x68] sm:$0xff] %v668
    %685 = vst [vmem:[%s3 + $0x70] sm:$0xff] %v669
    %686 = vst [vmem:[%s3 + $0x78] sm:$0xff] %v670
  $region21: #{forward.21} parent=0 // pred_fallthru
    _
  // Predicated region
  $region22: #{forward.21} parent=0 // pred_check
    _
  $region23: #{forward.21} parent=0 // pred_check_branch
    %688 = sbr.rel (0) target = $region25
  $region24: #{forward.21} parent=0 // pred_region
    _
  $region25: #{forward.21} parent=0 // pred_fallthru
    _
  // Predicated region
  $region26: #{forward.21} parent=0 // pred_check
    _
  $region27: #{forward.21} parent=0 // pred_check_branch
    %690 = sbr.rel (0) target = $region29
  $region28: #{forward.21} parent=0 // pred_region
    _
  $region29: #{forward.21} parent=0 // pred_fallthru
    _

// kernel: forward.22
$region0: #{forward.22}
  #allocation0 [shape = 'u32[]', space=smem, size = 0x4, offset = 0x4, fixed_abs, tag = 'smem constant byte address 0x4 - core index']
  #allocation1 [shape = 'u32[144,128]{1,0:T(1,128)}', space=vmem, size = 0x12000, scoped, tag = 'internal scratch']
  #allocation2 [shape = 'f32[32,256]{1,0:T(8,128)}', space=vmem, size = 0x8000, scoped, tag = 'scratch operand']
  %s0 = inlined_call_operand.vmem [shape: bf16[32,384], index: 0, kind: input, shape index: {}]
  %s1 = inlined_call_operand.vmem [shape: bf16[384,256], index: 1, kind: input, shape index: {}]
  %s2 = inlined_call_operand.vmem [shape: f32[1,256], index: 2, kind: input, shape index: {}]
  %s3 = inlined_call_operand.vmem [shape: f32[32,256], index: 3, kind: output, shape index: {}]
  %s4 = sld [smem:[#allocation0]]
  $region30: #{forward.22} parent=0
    _
  %s6 = ssub.s32 1, %s4
  %s7 = scalar_select 0, %s6, %s4
  // Predicated region
  $region2: #{forward.22} parent=0 // pred_check
    _
  $region3: #{forward.22} parent=0 // pred_check_branch
    %9 = sbr.rel (0) target = $region5
  $region4: #{forward.22} parent=0 // pred_region
    _
  $region5: #{forward.22} parent=0 // pred_fallthru
    _
  // Predicated region
  $region6: #{forward.22} parent=0 // pred_check
    _
  $region7: #{forward.22} parent=0 // pred_check_branch
    %11 = sbr.rel (0) target = $region9
  $region8: #{forward.22} parent=0 // pred_region
    _
  $region9: #{forward.22} parent=0 // pred_fallthru
    _
  // Predicated region
  $region10: #{forward.22} parent=0 // pred_check
    _
  $region11: #{forward.22} parent=0 // pred_check_branch
    %13 = sbr.rel (0) target = $region13
  $region12: #{forward.22} parent=0 // pred_region
    _
  $region13: #{forward.22} parent=0 // pred_fallthru
    _
  %p15 = scmp.eq.s32.totalorder 0, 0
  // Predicated region
  $region14: #{forward.22} parent=0 // pred_check
    %p16 = pneg %p15
  $region15: #{forward.22} parent=0 // pred_check_branch
    %18 = sbr.rel (%p16) target = $region17
  $region16: #{forward.22} parent=0 // pred_region
    %19 = vst [vmem:[#allocation2] sm:$0xff] 0.0
    %20 = vst [vmem:[#allocation2 + $0x8] sm:$0xff] 0.0
    %21 = vst [vmem:[#allocation2 + $0x10] sm:$0xff] 0.0
    %22 = vst [vmem:[#allocation2 + $0x18] sm:$0xff] 0.0
    %23 = vst [vmem:[#allocation2 + $0x20] sm:$0xff] 0.0
    %24 = vst [vmem:[#allocation2 + $0x28] sm:$0xff] 0.0
    %25 = vst [vmem:[#allocation2 + $0x30] sm:$0xff] 0.0
    %26 = vst [vmem:[#allocation2 + $0x38] sm:$0xff] 0.0
  $region17: #{forward.22} parent=0 // pred_fallthru
    _
  %v27 = vld [vmem:[#allocation2] sm:$0xff]
  %v28 = vld [vmem:[#allocation2 + $0x8] sm:$0xff]
  %v29 = vld [vmem:[#allocation2 + $0x10] sm:$0xff]
  %v30 = vld [vmem:[#allocation2 + $0x18] sm:$0xff]
  %v31 = vld [vmem:[#allocation2 + $0x20] sm:$0xff]
  %v32 = vld [vmem:[#allocation2 + $0x28] sm:$0xff]
  %v33 = vld [vmem:[#allocation2 + $0x30] sm:$0xff]
  %v34 = vld [vmem:[#allocation2 + $0x38] sm:$0xff]
  %v35 = vld [vmem:[%s0] sm:$0xff]
  %v36 = vld [vmem:[%s0 + $0x8] sm:$0xf]
  %v37 = vld [vmem:[%s0 + $0xc] sm:$0xff]
  %v38 = vld [vmem:[%s0 + $0x14] sm:$0xf]
  %v39 = vld [vmem:[%s0 + $0x18] sm:$0xff]
  %v40 = vld [vmem:[%s0 + $0x20] sm:$0xf]
  %v41 = vld [vmem:[%s0 + $0x24] sm:$0xff]
  %v42 = vld [vmem:[%s0 + $0x2c] sm:$0xf]
  %v43 = vld [vmem:[%s1] sm:$0xff]
  %v44 = vld [vmem:[%s1 + $0x8] sm:$0xff]
  %v45 = vld [vmem:[%s1 + $0x10] sm:$0xff]
  %v46 = vld [vmem:[%s1 + $0x18] sm:$0xff]
  %v47 = vld [vmem:[%s1 + $0x20] sm:$0xff]
  %v48 = vld [vmem:[%s1 + $0x28] sm:$0xff]
  %v49 = vld [vmem:[%s1 + $0x30] sm:$0xff]
  %v50 = vld [vmem:[%s1 + $0x38] sm:$0xff]
  %v51 = vld [vmem:[%s1 + $0x40] sm:$0xff]
  %v52 = vld [vmem:[%s1 + $0x48] sm:$0xff]
  %v53 = vld [vmem:[%s1 + $0x50] sm:$0xff]
  %v54 = vld [vmem:[%s1 + $0x58] sm:$0xff]
  %v55 = vld [vmem:[%s1 + $0x60] sm:$0xff]
  %v56 = vld [vmem:[%s1 + $0x68] sm:$0xff]
  %v57 = vld [vmem:[%s1 + $0x70] sm:$0xff]
  %v58 = vld [vmem:[%s1 + $0x78] sm:$0xff]
  %v59 = vld [vmem:[%s1 + $0x80] sm:$0xff]
  %v60 = vld [vmem:[%s1 + $0x88] sm:$0xff]
  %v61 = vld [vmem:[%s1 + $0x90] sm:$0xff]
  %v62 = vld [vmem:[%s1 + $0x98] sm:$0xff]
  %v63 = vld [vmem:[%s1 + $0xa0] sm:$0xff]
  %v64 = vld [vmem:[%s1 + $0xa8] sm:$0xff]
  %v65 = vld [vmem:[%s1 + $0xb0] sm:$0xff]
  %v66 = vld [vmem:[%s1 + $0xb8] sm:$0xff]
  %v67 = vld [vmem:[%s1 + $0xc0] sm:$0xff]
  %v68 = vld [vmem:[%s1 + $0xc8] sm:$0xff]
  %v69 = vld [vmem:[%s1 + $0xd0] sm:$0xff]
  %v70 = vld [vmem:[%s1 + $0xd8] sm:$0xff]
  %v71 = vld [vmem:[%s1 + $0xe0] sm:$0xff]
  %v72 = vld [vmem:[%s1 + $0xe8] sm:$0xff]
  %v73 = vld [vmem:[%s1 + $0xf0] sm:$0xff]
  %v74 = vld [vmem:[%s1 + $0xf8] sm:$0xff]
  %v75 = vld [vmem:[%s1 + $0x100] sm:$0xff]
  %v76 = vld [vmem:[%s1 + $0x108] sm:$0xff]
  %v77 = vld [vmem:[%s1 + $0x110] sm:$0xff]
  %v78 = vld [vmem:[%s1 + $0x118] sm:$0xff]
  %v79 = vld [vmem:[%s1 + $0x120] sm:$0xff]
  %v80 = vld [vmem:[%s1 + $0x128] sm:$0xff]
  %v81 = vld [vmem:[%s1 + $0x130] sm:$0xff]
  %v82 = vld [vmem:[%s1 + $0x138] sm:$0xff]
  %v83 = vld [vmem:[%s1 + $0x140] sm:$0xff]
  %v84 = vld [vmem:[%s1 + $0x148] sm:$0xff]
  %v85 = vld [vmem:[%s1 + $0x150] sm:$0xff]
  %v86 = vld [vmem:[%s1 + $0x158] sm:$0xff]
  %v87 = vld [vmem:[%s1 + $0x160] sm:$0xff]
  %v88 = vld [vmem:[%s1 + $0x168] sm:$0xff]
  %v89 = vld [vmem:[%s1 + $0x170] sm:$0xff]
  %v90 = vld [vmem:[%s1 + $0x178] sm:$0xff]
  %v99 = vunpack.c.l.b16 %v35
  %v100 = vunpack.c.h.b16 %v35
  %v101 = vunpack.c.l.b16 %v36
  %v102 = vunpack.c.l.b16 %v37
  %v103 = vunpack.c.h.b16 %v37
  %v104 = vunpack.c.l.b16 %v38
  %v105 = vunpack.c.l.b16 %v39
  %v106 = vunpack.c.h.b16 %v39
  %v107 = vunpack.c.l.b16 %v40
  %v108 = vunpack.c.l.b16 %v41
  %v109 = vunpack.c.h.b16 %v41
  %v110 = vunpack.c.l.b16 %v42
  %v111 = vpack.c.b16 %v102, %v99
  %v112 = vpack.c.b16 %v103, %v100
  %v113 = vpack.c.b16 %v104, %v101
  %v114 = vpack.c.b16 %v108, %v105
  %v115 = vpack.c.b16 %v109, %v106
  %v116 = vpack.c.b16 %v110, %v107
  %v171 = vunpack.c.l.b16 %v43
  %v172 = vunpack.c.h.b16 %v43
  %v173 = vunpack.c.l.b16 %v44
  %v174 = vunpack.c.h.b16 %v44
  %v175 = vunpack.c.l.b16 %v45
  %v176 = vunpack.c.h.b16 %v45
  %v177 = vunpack.c.l.b16 %v46
  %v178 = vunpack.c.h.b16 %v46
  %v179 = vunpack.c.l.b16 %v47
  %v180 = vunpack.c.h.b16 %v47
  %v181 = vunpack.c.l.b16 %v48
  %v182 = vunpack.c.h.b16 %v48
  %v183 = vunpack.c.l.b16 %v49
  %v184 = vunpack.c.h.b16 %v49
  %v185 = vunpack.c.l.b16 %v50
  %v186 = vunpack.c.h.b16 %v50
  %v187 = vunpack.c.l.b16 %v51
  %v188 = vunpack.c.h.b16 %v51
  %v189 = vunpack.c.l.b16 %v52
  %v190 = vunpack.c.h.b16 %v52
  %v191 = vunpack.c.l.b16 %v53
  %v192 = vunpack.c.h.b16 %v53
  %v193 = vunpack.c.l.b16 %v54
  %v194 = vunpack.c.h.b16 %v54
  %v195 = vunpack.c.l.b16 %v55
  %v196 = vunpack.c.h.b16 %v55
  %v197 = vunpack.c.l.b16 %v56
  %v198 = vunpack.c.h.b16 %v56
  %v199 = vunpack.c.l.b16 %v57
  %v200 = vunpack.c.h.b16 %v57
  %v201 = vunpack.c.l.b16 %v58
  %v202 = vunpack.c.h.b16 %v58
  %v203 = vunpack.c.l.b16 %v59
  %v204 = vunpack.c.h.b16 %v59
  %v205 = vunpack.c.l.b16 %v60
  %v206 = vunpack.c.h.b16 %v60
  %v207 = vunpack.c.l.b16 %v61
  %v208 = vunpack.c.h.b16 %v61
  %v209 = vunpack.c.l.b16 %v62
  %v210 = vunpack.c.h.b16 %v62
  %v211 = vunpack.c.l.b16 %v63
  %v212 = vunpack.c.h.b16 %v63
  %v213 = vunpack.c.l.b16 %v64
  %v214 = vunpack.c.h.b16 %v64
  %v215 = vunpack.c.l.b16 %v65
  %v216 = vunpack.c.h.b16 %v65
  %v217 = vunpack.c.l.b16 %v66
  %v218 = vunpack.c.h.b16 %v66
  %v219 = vunpack.c.l.b16 %v67
  %v220 = vunpack.c.h.b16 %v67
  %v221 = vunpack.c.l.b16 %v68
  %v222 = vunpack.c.h.b16 %v68
  %v223 = vunpack.c.l.b16 %v69
  %v224 = vunpack.c.h.b16 %v69
  %v225 = vunpack.c.l.b16 %v70
  %v226 = vunpack.c.h.b16 %v70
  %v227 = vunpack.c.l.b16 %v71
  %v228 = vunpack.c.h.b16 %v71
  %v229 = vunpack.c.l.b16 %v72
  %v230 = vunpack.c.h.b16 %v72
  %v231 = vunpack.c.l.b16 %v73
  %v232 = vunpack.c.h.b16 %v73
  %v233 = vunpack.c.l.b16 %v74
  %v234 = vunpack.c.h.b16 %v74
  %v235 = vunpack.c.l.b16 %v75
  %v236 = vunpack.c.h.b16 %v75
  %v237 = vunpack.c.l.b16 %v76
  %v238 = vunpack.c.h.b16 %v76
  %v239 = vunpack.c.l.b16 %v77
  %v240 = vunpack.c.h.b16 %v77
  %v241 = vunpack.c.l.b16 %v78
  %v242 = vunpack.c.h.b16 %v78
  %v243 = vunpack.c.l.b16 %v79
  %v244 = vunpack.c.h.b16 %v79
  %v245 = vunpack.c.l.b16 %v80
  %v246 = vunpack.c.h.b16 %v80
  %v247 = vunpack.c.l.b16 %v81
  %v248 = vunpack.c.h.b16 %v81
  %v249 = vunpack.c.l.b16 %v82
  %v250 = vunpack.c.h.b16 %v82
  %v251 = vunpack.c.l.b16 %v83
  %v252 = vunpack.c.h.b16 %v83
  %v253 = vunpack.c.l.b16 %v84
  %v254 = vunpack.c.h.b16 %v84
  %v255 = vunpack.c.l.b16 %v85
  %v256 = vunpack.c.h.b16 %v85
  %v257 = vunpack.c.l.b16 %v86
  %v258 = vunpack.c.h.b16 %v86
  %v259 = vunpack.c.l.b16 %v87
  %v260 = vunpack.c.h.b16 %v87
  %v261 = vunpack.c.l.b16 %v88
  %v262 = vunpack.c.h.b16 %v88
  %v263 = vunpack.c.l.b16 %v89
  %v264 = vunpack.c.h.b16 %v89
  %v265 = vunpack.c.l.b16 %v90
  %v266 = vunpack.c.h.b16 %v90
  %v267 = vpack.c.b16 %v173, %v171
  %v268 = vpack.c.b16 %v174, %v172
  %v269 = vpack.c.b16 %v177, %v175
  %v270 = vpack.c.b16 %v178, %v176
  %v271 = vpack.c.b16 %v181, %v179
  %v272 = vpack.c.b16 %v182, %v180
  %v273 = vpack.c.b16 %v185, %v183
  %v274 = vpack.c.b16 %v186, %v184
  %v275 = vpack.c.b16 %v189, %v187
  %v276 = vpack.c.b16 %v190, %v188
  %v277 = vpack.c.b16 %v193, %v191
  %v278 = vpack.c.b16 %v194, %v192
  %v279 = vpack.c.b16 %v197, %v195
  %v280 = vpack.c.b16 %v198, %v196
  %v281 = vpack.c.b16 %v201, %v199
  %v282 = vpack.c.b16 %v202, %v200
  %v283 = vpack.c.b16 %v205, %v203
  %v284 = vpack.c.b16 %v206, %v204
  %v285 = vpack.c.b16 %v209, %v207
  %v286 = vpack.c.b16 %v210, %v208
  %v287 = vpack.c.b16 %v213, %v211
  %v288 = vpack.c.b16 %v214, %v212
  %v289 = vpack.c.b16 %v217, %v215
  %v290 = vpack.c.b16 %v218, %v216
  %v291 = vpack.c.b16 %v221, %v219
  %v292 = vpack.c.b16 %v222, %v220
  %v293 = vpack.c.b16 %v225, %v223
  %v294 = vpack.c.b16 %v226, %v224
  %v295 = vpack.c.b16 %v229, %v227
  %v296 = vpack.c.b16 %v230, %v228
  %v297 = vpack.c.b16 %v233, %v231
  %v298 = vpack.c.b16 %v234, %v232
  %v299 = vpack.c.b16 %v237, %v235
  %v300 = vpack.c.b16 %v238, %v236
  %v301 = vpack.c.b16 %v241, %v239
  %v302 = vpack.c.b16 %v242, %v240
  %v303 = vpack.c.b16 %v245, %v243
  %v304 = vpack.c.b16 %v246, %v244
  %v305 = vpack.c.b16 %v249, %v247
  %v306 = vpack.c.b16 %v250, %v248
  %v307 = vpack.c.b16 %v253, %v251
  %v308 = vpack.c.b16 %v254, %v252
  %v309 = vpack.c.b16 %v257, %v255
  %v310 = vpack.c.b16 %v258, %v256
  %v311 = vpack.c.b16 %v261, %v259
  %v312 = vpack.c.b16 %v262, %v260
  %v313 = vpack.c.b16 %v265, %v263
  %v314 = vpack.c.b16 %v266, %v264
  %363 = vmatprep.subr.bf16.mxu0 %v282
  %364 = vmatpush1.bf16.msra.mxu0 %v281
  %365 = vmatprep.subr.bf16.mxu0 %v280
  %366 = vmatpush1.bf16.msra.mxu0 %v279
  %367 = vmatprep.subr.bf16.mxu0 %v278
  %368 = vmatpush1.bf16.msra.mxu0 %v277
  %369 = vmatprep.subr.bf16.mxu0 %v276
  %370 = vmatpush1.bf16.msra.mxu0 %v275
  %371 = vmatprep.subr.bf16.mxu0 %v274
  %372 = vmatpush1.bf16.msra.mxu0 %v273
  %373 = vmatprep.subr.bf16.mxu0 %v272
  %374 = vmatpush1.bf16.msra.mxu0 %v271
  %375 = vmatprep.subr.bf16.mxu0 %v270
  %376 = vmatpush1.bf16.msra.mxu0 %v269
  %377 = vmatprep.subr.bf16.mxu0 %v268
  %378 = vmatpush1.bf16.msra.mxu0 %v267
  %379 = vmatprep.subr.bf16.mxu0 %v298
  %380 = vmatpush2.bf16.msra.mxu0 %v297
  %381 = vmatprep.subr.bf16.mxu0 %v296
  %382 = vmatpush2.bf16.msra.mxu0 %v295
  %383 = vmatprep.subr.bf16.mxu0 %v294
  %384 = vmatpush2.bf16.msra.mxu0 %v293
  %385 = vmatprep.subr.bf16.mxu0 %v292
  %386 = vmatpush2.bf16.msra.mxu0 %v291
  %387 = vmatprep.subr.bf16.mxu0 %v290
  %388 = vmatpush2.bf16.msra.mxu0 %v289
  %389 = vmatprep.subr.bf16.mxu0 %v288
  %390 = vmatpush2.bf16.msra.mxu0 %v287
  %391 = vmatprep.subr.bf16.mxu0 %v286
  %392 = vmatpush2.bf16.msra.mxu0 %v285
  %393 = vmatprep.subr.bf16.mxu0 %v284
  %394 = vmatpush2.bf16.msra.mxu0 %v283
  %395 = vmatprep.mubr.bf16.mxu0 %v112
  %396 = vmatmul.mubr.bf16.gmra.mxu0 %v111
  %v397 = vpop.f32.mrf.mxu0
  %v398 = vadd.f32 0.0, %v397
  %v399 = vpop.f32.mrf.mxu0
  %v400 = vadd.f32 0.0, %v399
  %v401 = vpop.f32.mrf.mxu0
  %v402 = vadd.f32 0.0, %v401
  %v403 = vpop.f32.mrf.mxu0
  %v404 = vadd.f32 0.0, %v403
  %405 = vmatprep.mubr.bf16.mxu0 %v115
  %406 = vmatmul.mubr.bf16.gmra.mxu0 %v114
  %v407 = vpop.f32.mrf.mxu0
  %v408 = vadd.f32 0.0, %v407
  %v409 = vpop.f32.mrf.mxu0
  %v410 = vadd.f32 0.0, %v409
  %v411 = vpop.f32.mrf.mxu0
  %v412 = vadd.f32 0.0, %v411
  %v413 = vpop.f32.mrf.mxu0
  %v414 = vadd.f32 0.0, %v413
  %415 = vdwg.mxu0
  %416 = vmatprep.subr.bf16.mxu0 %v314
  %417 = vmatpush1.bf16.msra.mxu0 %v313
  %418 = vmatprep.subr.bf16.mxu0 %v312
  %419 = vmatpush1.bf16.msra.mxu0 %v311
  %420 = vmatprep.subr.bf16.mxu0 %v310
  %421 = vmatpush1.bf16.msra.mxu0 %v309
  %422 = vmatprep.subr.bf16.mxu0 %v308
  %423 = vmatpush1.bf16.msra.mxu0 %v307
  %424 = vmatprep.subr.bf16.mxu0 %v306
  %425 = vmatpush1.bf16.msra.mxu0 %v305
  %426 = vmatprep.subr.bf16.mxu0 %v304
  %427 = vmatpush1.bf16.msra.mxu0 %v303
  %428 = vmatprep.subr.bf16.mxu0 %v302
  %429 = vmatpush1.bf16.msra.mxu0 %v301
  %430 = vmatprep.subr.bf16.mxu0 %v300
  %431 = vmatpush1.bf16.msra.mxu0 %v299
  %432 = vmatprep.subr.bf16.mxu0 0
  %433 = vmatpush2.bf16.msra.mxu0 0
  %434 = vmatprep.subr.bf16.mxu0 0
  %435 = vmatpush2.bf16.msra.mxu0 0
  %436 = vmatprep.subr.bf16.mxu0 0
  %437 = vmatpush2.bf16.msra.mxu0 0
  %438 = vmatprep.subr.bf16.mxu0 0
  %439 = vmatpush2.bf16.msra.mxu0 0
  %440 = vmatprep.subr.bf16.mxu0 0
  %441 = vmatpush2.bf16.msra.mxu0 0
  %442 = vmatprep.subr.bf16.mxu0 0
  %443 = vmatpush2.bf16.msra.mxu0 0
  %444 = vmatprep.subr.bf16.mxu0 0
  %445 = vmatpush2.bf16.msra.mxu0 0
  %446 = vmatprep.subr.bf16.mxu0 0
  %447 = vmatpush2.bf16.msra.mxu0 0
  %448 = vmatprep.mubr.bf16.mxu0 0
  %449 = vmatmul.mubr.bf16.gmra.mxu0 %v113
  %v450 = vpop.f32.mrf.mxu0
  %v451 = vadd.f32 %v398, %v450
  %v452 = vpop.f32.mrf.mxu0
  %v453 = vadd.f32 %v400, %v452
  %v454 = vpop.f32.mrf.mxu0
  %v455 = vadd.f32 %v402, %v454
  %v456 = vpop.f32.mrf.mxu0
  %v457 = vadd.f32 %v404, %v456
  %458 = vmatprep.mubr.bf16.mxu0 0
  %459 = vmatmul.mubr.bf16.gmra.mxu0 %v116
  %v460 = vpop.f32.mrf.mxu0
  %v461 = vadd.f32 %v408, %v460
  %v462 = vpop.f32.mrf.mxu0
  %v463 = vadd.f32 %v410, %v462
  %v464 = vpop.f32.mrf.mxu0
  %v465 = vadd.f32 %v412, %v464
  %v466 = vpop.f32.mrf.mxu0
  %v467 = vadd.f32 %v414, %v466
  %468 = vdwg.mxu0
  %v469 = vadd.f32 %v27, %v451
  %v470 = vadd.f32 %v28, %v453
  %v471 = vadd.f32 %v29, %v455
  %v472 = vadd.f32 %v30, %v457
  %v473 = vadd.f32 %v31, %v461
  %v474 = vadd.f32 %v32, %v463
  %v475 = vadd.f32 %v33, %v465
  %v476 = vadd.f32 %v34, %v467
  %477 = vst [vmem:[#allocation2] sm:$0xff] %v469
  %478 = vst [vmem:[#allocation2 + $0x8] sm:$0xff] %v470
  %479 = vst [vmem:[#allocation2 + $0x10] sm:$0xff] %v471
  %480 = vst [vmem:[#allocation2 + $0x18] sm:$0xff] %v472
  %481 = vst [vmem:[#allocation2 + $0x20] sm:$0xff] %v473
  %482 = vst [vmem:[#allocation2 + $0x28] sm:$0xff] %v474
  %483 = vst [vmem:[#allocation2 + $0x30] sm:$0xff] %v475
  %484 = vst [vmem:[#allocation2 + $0x38] sm:$0xff] %v476
  // Predicated region
  $region18: #{forward.22} parent=0 // pred_check
    %p485 = pneg %p15
  $region19: #{forward.22} parent=0 // pred_check_branch
    %487 = sbr.rel (%p485) target = $region21
  $region20: #{forward.22} parent=0 // pred_region
    %v488 = vld [vmem:[#allocation2] sm:$0xff]
    %v489 = vld [vmem:[#allocation2 + $0x8] sm:$0xff]
    %v490 = vld [vmem:[#allocation2 + $0x10] sm:$0xff]
    %v491 = vld [vmem:[#allocation2 + $0x18] sm:$0xff]
    %v492 = vld [vmem:[#allocation2 + $0x20] sm:$0xff]
    %v493 = vld [vmem:[#allocation2 + $0x28] sm:$0xff]
    %v494 = vld [vmem:[#allocation2 + $0x30] sm:$0xff]
    %v495 = vld [vmem:[#allocation2 + $0x38] sm:$0xff]
    %v496 = vld [vmem:[%s2] sm:$0x3]
    %v498 = vlaneseq
    %v499 = vshrl.u32 %v498, 7
    %v500 = vsub.s32 0, %v499
    %v501 = vrot.slane %v496, %v500
    %v502 = vlaneseq
    %v503 = vshrl.u32 %v502, 7
    %v504 = vsub.s32 1, %v503
    %v505 = vrot.slane %v496, %v504
    %v508 = vadd.f32 %v488, %v501
    %v509 = vadd.f32 %v489, %v505
    %v510 = vadd.f32 %v490, %v501
    %v511 = vadd.f32 %v491, %v505
    %v512 = vadd.f32 %v492, %v501
    %v513 = vadd.f32 %v493, %v505
    %v514 = vadd.f32 %v494, %v501
    %v515 = vadd.f32 %v495, %v505
    %516 = vst [vmem:[%s3] sm:$0xff] %v508
    %517 = vst [vmem:[%s3 + $0x8] sm:$0xff] %v509
    %518 = vst [vmem:[%s3 + $0x10] sm:$0xff] %v510
    %519 = vst [vmem:[%s3 + $0x18] sm:$0xff] %v511
    %520 = vst [vmem:[%s3 + $0x20] sm:$0xff] %v512
    %521 = vst [vmem:[%s3 + $0x28] sm:$0xff] %v513
    %522 = vst [vmem:[%s3 + $0x30] sm:$0xff] %v514
    %523 = vst [vmem:[%s3 + $0x38] sm:$0xff] %v515
  $region21: #{forward.22} parent=0 // pred_fallthru
    _
  // Predicated region
  $region22: #{forward.22} parent=0 // pred_check
    _
  $region23: #{forward.22} parent=0 // pred_check_branch
    %525 = sbr.rel (0) target = $region25
  $region24: #{forward.22} parent=0 // pred_region
    _
  $region25: #{forward.22} parent=0 // pred_fallthru
    _
  // Predicated region
  $region26: #{forward.22} parent=0 // pred_check
    _
  $region27: #{forward.22} parent=0 // pred_check_branch
    %527 = sbr.rel (0) target = $region29
  $region28: #{forward.22} parent=0 // pred_region
    _
  $region29: #{forward.22} parent=0 // pred_fallthru
    _

// kernel: forward.23
$region0: #{forward.23}
  #allocation0 [shape = 'u32[]', space=smem, size = 0x4, offset = 0x4, fixed_abs, tag = 'smem constant byte address 0x4 - core index']
  #allocation1 [shape = 'u32[144,128]{1,0:T(1,128)}', space=vmem, size = 0x12000, scoped, tag = 'internal scratch']
  #allocation2 [shape = 'f32[16,128]{1,0:T(8,128)}', space=vmem, size = 0x2000, scoped, tag = 'scratch operand']
  %s0 = inlined_call_operand.vmem [shape: bf16[16,256], index: 0, kind: input, shape index: {}]
  %s1 = inlined_call_operand.vmem [shape: bf16[256,128], index: 1, kind: input, shape index: {}]
  %s2 = inlined_call_operand.vmem [shape: f32[1,128], index: 2, kind: input, shape index: {}]
  %s3 = inlined_call_operand.vmem [shape: f32[16,128], index: 3, kind: output, shape index: {}]
  %s4 = sld [smem:[#allocation0]]
  $region30: #{forward.23} parent=0
    _
  %s6 = ssub.s32 1, %s4
  %s7 = scalar_select 0, %s6, %s4
  // Predicated region
  $region2: #{forward.23} parent=0 // pred_check
    _
  $region3: #{forward.23} parent=0 // pred_check_branch
    %9 = sbr.rel (0) target = $region5
  $region4: #{forward.23} parent=0 // pred_region
    _
  $region5: #{forward.23} parent=0 // pred_fallthru
    _
  // Predicated region
  $region6: #{forward.23} parent=0 // pred_check
    _
  $region7: #{forward.23} parent=0 // pred_check_branch
    %11 = sbr.rel (0) target = $region9
  $region8: #{forward.23} parent=0 // pred_region
    _
  $region9: #{forward.23} parent=0 // pred_fallthru
    _
  // Predicated region
  $region10: #{forward.23} parent=0 // pred_check
    _
  $region11: #{forward.23} parent=0 // pred_check_branch
    %13 = sbr.rel (0) target = $region13
  $region12: #{forward.23} parent=0 // pred_region
    _
  $region13: #{forward.23} parent=0 // pred_fallthru
    _
  %p15 = scmp.eq.s32.totalorder 0, 0
  // Predicated region
  $region14: #{forward.23} parent=0 // pred_check
    %p16 = pneg %p15
  $region15: #{forward.23} parent=0 // pred_check_branch
    %18 = sbr.rel (%p16) target = $region17
  $region16: #{forward.23} parent=0 // pred_region
    %19 = vst [vmem:[#allocation2] sm:$0xff] 0.0
    %20 = vst [vmem:[#allocation2 + $0x8] sm:$0xff] 0.0
  $region17: #{forward.23} parent=0 // pred_fallthru
    _
  %v21 = vld [vmem:[#allocation2] sm:$0xff]
  %v22 = vld [vmem:[#allocation2 + $0x8] sm:$0xff]
  %v23 = vld [vmem:[%s0] sm:$0xff]
  %v24 = vld [vmem:[%s0 + $0x8] sm:$0xff]
  %v25 = vld [vmem:[%s1] sm:$0xf]
  %v26 = vld [vmem:[%s1 + $0x4] sm:$0xf]
  %v27 = vld [vmem:[%s1 + $0x8] sm:$0xf]
  %v28 = vld [vmem:[%s1 + $0xc] sm:$0xf]
  %v29 = vld [vmem:[%s1 + $0x10] sm:$0xf]
  %v30 = vld [vmem:[%s1 + $0x14] sm:$0xf]
  %v31 = vld [vmem:[%s1 + $0x18] sm:$0xf]
  %v32 = vld [vmem:[%s1 + $0x1c] sm:$0xf]
  %v33 = vld [vmem:[%s1 + $0x20] sm:$0xf]
  %v34 = vld [vmem:[%s1 + $0x24] sm:$0xf]
  %v35 = vld [vmem:[%s1 + $0x28] sm:$0xf]
  %v36 = vld [vmem:[%s1 + $0x2c] sm:$0xf]
  %v37 = vld [vmem:[%s1 + $0x30] sm:$0xf]
  %v38 = vld [vmem:[%s1 + $0x34] sm:$0xf]
  %v39 = vld [vmem:[%s1 + $0x38] sm:$0xf]
  %v40 = vld [vmem:[%s1 + $0x3c] sm:$0xf]
  %v41 = vld [vmem:[%s1 + $0x40] sm:$0xf]
  %v42 = vld [vmem:[%s1 + $0x44] sm:$0xf]
  %v43 = vld [vmem:[%s1 + $0x48] sm:$0xf]
  %v44 = vld [vmem:[%s1 + $0x4c] sm:$0xf]
  %v45 = vld [vmem:[%s1 + $0x50] sm:$0xf]
  %v46 = vld [vmem:[%s1 + $0x54] sm:$0xf]
  %v47 = vld [vmem:[%s1 + $0x58] sm:$0xf]
  %v48 = vld [vmem:[%s1 + $0x5c] sm:$0xf]
  %v49 = vld [vmem:[%s1 + $0x60] sm:$0xf]
  %v50 = vld [vmem:[%s1 + $0x64] sm:$0xf]
  %v51 = vld [vmem:[%s1 + $0x68] sm:$0xf]
  %v52 = vld [vmem:[%s1 + $0x6c] sm:$0xf]
  %v53 = vld [vmem:[%s1 + $0x70] sm:$0xf]
  %v54 = vld [vmem:[%s1 + $0x74] sm:$0xf]
  %v55 = vld [vmem:[%s1 + $0x78] sm:$0xf]
  %v56 = vld [vmem:[%s1 + $0x7c] sm:$0xf]
  %v59 = vunpack.c.l.b16 %v23
  %v60 = vunpack.c.h.b16 %v23
  %v61 = vunpack.c.l.b16 %v24
  %v62 = vunpack.c.h.b16 %v24
  %v63 = vpack.c.b16 %v61, %v59
  %v64 = vpack.c.b16 %v62, %v60
  %v99 = vunpack.c.l.b16 %v25
  %v100 = vunpack.c.l.b16 %v26
  %v101 = vunpack.c.l.b16 %v27
  %v102 = vunpack.c.l.b16 %v28
  %v103 = vunpack.c.l.b16 %v29
  %v104 = vunpack.c.l.b16 %v30
  %v105 = vunpack.c.l.b16 %v31
  %v106 = vunpack.c.l.b16 %v32
  %v107 = vunpack.c.l.b16 %v33
  %v108 = vunpack.c.l.b16 %v34
  %v109 = vunpack.c.l.b16 %v35
  %v110 = vunpack.c.l.b16 %v36
  %v111 = vunpack.c.l.b16 %v37
  %v112 = vunpack.c.l.b16 %v38
  %v113 = vunpack.c.l.b16 %v39
  %v114 = vunpack.c.l.b16 %v40
  %v115 = vunpack.c.l.b16 %v41
  %v116 = vunpack.c.l.b16 %v42
  %v117 = vunpack.c.l.b16 %v43
  %v118 = vunpack.c.l.b16 %v44
  %v119 = vunpack.c.l.b16 %v45
  %v120 = vunpack.c.l.b16 %v46
  %v121 = vunpack.c.l.b16 %v47
  %v122 = vunpack.c.l.b16 %v48
  %v123 = vunpack.c.l.b16 %v49
  %v124 = vunpack.c.l.b16 %v50
  %v125 = vunpack.c.l.b16 %v51
  %v126 = vunpack.c.l.b16 %v52
  %v127 = vunpack.c.l.b16 %v53
  %v128 = vunpack.c.l.b16 %v54
  %v129 = vunpack.c.l.b16 %v55
  %v130 = vunpack.c.l.b16 %v56
  %v131 = vpack.c.b16 %v100, %v99
  %v132 = vpack.c.b16 %v102, %v101
  %v133 = vpack.c.b16 %v104, %v103
  %v134 = vpack.c.b16 %v106, %v105
  %v135 = vpack.c.b16 %v108, %v107
  %v136 = vpack.c.b16 %v110, %v109
  %v137 = vpack.c.b16 %v112, %v111
  %v138 = vpack.c.b16 %v114, %v113
  %v139 = vpack.c.b16 %v116, %v115
  %v140 = vpack.c.b16 %v118, %v117
  %v141 = vpack.c.b16 %v120, %v119
  %v142 = vpack.c.b16 %v122, %v121
  %v143 = vpack.c.b16 %v124, %v123
  %v144 = vpack.c.b16 %v126, %v125
  %v145 = vpack.c.b16 %v128, %v127
  %v146 = vpack.c.b16 %v130, %v129
  %163 = vmatprep.subr.bf16.mxu0 0
  %164 = vmatpush1.bf16.msra.mxu0 %v138
  %165 = vmatprep.subr.bf16.mxu0 0
  %166 = vmatpush1.bf16.msra.mxu0 %v137
  %167 = vmatprep.subr.bf16.mxu0 0
  %168 = vmatpush1.bf16.msra.mxu0 %v136
  %169 = vmatprep.subr.bf16.mxu0 0
  %170 = vmatpush1.bf16.msra.mxu0 %v135
  %171 = vmatprep.subr.bf16.mxu0 0
  %172 = vmatpush1.bf16.msra.mxu0 %v134
  %173 = vmatprep.subr.bf16.mxu0 0
  %174 = vmatpush1.bf16.msra.mxu0 %v133
  %175 = vmatprep.subr.bf16.mxu0 0
  %176 = vmatpush1.bf16.msra.mxu0 %v132
  %177 = vmatprep.subr.bf16.mxu0 0
  %178 = vmatpush1.bf16.msra.mxu0 %v131
  %179 = vmatprep.subr.bf16.mxu0 0
  %180 = vmatpush2.bf16.msra.mxu0 %v146
  %181 = vmatprep.subr.bf16.mxu0 0
  %182 = vmatpush2.bf16.msra.mxu0 %v145
  %183 = vmatprep.subr.bf16.mxu0 0
  %184 = vmatpush2.bf16.msra.mxu0 %v144
  %185 = vmatprep.subr.bf16.mxu0 0
  %186 = vmatpush2.bf16.msra.mxu0 %v143
  %187 = vmatprep.subr.bf16.mxu0 0
  %188 = vmatpush2.bf16.msra.mxu0 %v142
  %189 = vmatprep.subr.bf16.mxu0 0
  %190 = vmatpush2.bf16.msra.mxu0 %v141
  %191 = vmatprep.subr.bf16.mxu0 0
  %192 = vmatpush2.bf16.msra.mxu0 %v140
  %193 = vmatprep.subr.bf16.mxu0 0
  %194 = vmatpush2.bf16.msra.mxu0 %v139
  %195 = vmatprep.mubr.bf16.mxu0 %v64
  %196 = vmatmul.mubr.bf16.gmra.mxu0 %v63
  %v197 = vpop.f32.mrf.mxu0
  %v198 = vadd.f32 0.0, %v197
  %v199 = vpop.f32.mrf.mxu0
  %v200 = vpop.f32.mrf.mxu0
  %v201 = vadd.f32 0.0, %v200
  %v202 = vpop.f32.mrf.mxu0
  %203 = vdwg.mxu0
  %v204 = vadd.f32 %v21, %v198
  %v205 = vadd.f32 %v22, %v201
  %206 = vst [vmem:[#allocation2] sm:$0xff] %v204
  %207 = vst [vmem:[#allocation2 + $0x8] sm:$0xff] %v205
  // Predicated region
  $region18: #{forward.23} parent=0 // pred_check
    %p208 = pneg %p15
  $region19: #{forward.23} parent=0 // pred_check_branch
    %210 = sbr.rel (%p208) target = $region21
  $region20: #{forward.23} parent=0 // pred_region
    %v211 = vld [vmem:[#allocation2] sm:$0xff]
    %v212 = vld [vmem:[#allocation2 + $0x8] sm:$0xff]
    %v213 = vld [vmem:[%s2] sm:$0x1]
    %v215 = vlaneseq
    %v216 = vshrl.u32 %v215, 7
    %v217 = vsub.s32 0, %v216
    %v218 = vrot.slane %v213, %v217
    %v220 = vadd.f32 %v211, %v218
    %v221 = vadd.f32 %v212, %v218
    %222 = vst [vmem:[%s3] sm:$0xff] %v220
    %223 = vst [vmem:[%s3 + $0x8] sm:$0xff] %v221
  $region21: #{forward.23} parent=0 // pred_fallthru
    _
  // Predicated region
  $region22: #{forward.23} parent=0 // pred_check
    _
  $region23: #{forward.23} parent=0 // pred_check_branch
    %225 = sbr.rel (0) target = $region25
  $region24: #{forward.23} parent=0 // pred_region
    _
  $region25: #{forward.23} parent=0 // pred_fallthru
    _
  // Predicated region
  $region26: #{forward.23} parent=0 // pred_check
    _
  $region27: #{forward.23} parent=0 // pred_check_branch
    %227 = sbr.rel (0) target = $region29
  $region28: #{forward.23} parent=0 // pred_region
    _
  $region29: #{forward.23} parent=0 // pred_fallthru
    _

// kernel: forward.24
$region0: #{forward.24}
  #allocation0 [shape = 'u32[]', space=smem, size = 0x4, offset = 0x4, fixed_abs, tag = 'smem constant byte address 0x4 - core index']
  #allocation1 [shape = 'u32[144,128]{1,0:T(1,128)}', space=vmem, size = 0x12000, scoped, tag = 'internal scratch']
  #allocation2 [shape = 'f32[16,256]{1,0:T(8,128)}', space=vmem, size = 0x4000, scoped, tag = 'scratch operand']
  %s0 = inlined_call_operand.vmem [shape: bf16[16,128], index: 0, kind: input, shape index: {}]
  %s1 = inlined_call_operand.vmem [shape: bf16[128,256], index: 1, kind: input, shape index: {}]
  %s2 = inlined_call_operand.vmem [shape: f32[1,256], index: 2, kind: input, shape index: {}]
  %s3 = inlined_call_operand.vmem [shape: f32[16,256], index: 3, kind: output, shape index: {}]
  %s4 = sld [smem:[#allocation0]]
  $region30: #{forward.24} parent=0
    _
  %s6 = ssub.s32 1, %s4
  %s7 = scalar_select 0, %s6, %s4
  // Predicated region
  $region2: #{forward.24} parent=0 // pred_check
    _
  $region3: #{forward.24} parent=0 // pred_check_branch
    %9 = sbr.rel (0) target = $region5
  $region4: #{forward.24} parent=0 // pred_region
    _
  $region5: #{forward.24} parent=0 // pred_fallthru
    _
  // Predicated region
  $region6: #{forward.24} parent=0 // pred_check
    _
  $region7: #{forward.24} parent=0 // pred_check_branch
    %11 = sbr.rel (0) target = $region9
  $region8: #{forward.24} parent=0 // pred_region
    _
  $region9: #{forward.24} parent=0 // pred_fallthru
    _
  // Predicated region
  $region10: #{forward.24} parent=0 // pred_check
    _
  $region11: #{forward.24} parent=0 // pred_check_branch
    %13 = sbr.rel (0) target = $region13
  $region12: #{forward.24} parent=0 // pred_region
    _
  $region13: #{forward.24} parent=0 // pred_fallthru
    _
  %p15 = scmp.eq.s32.totalorder 0, 0
  // Predicated region
  $region14: #{forward.24} parent=0 // pred_check
    %p16 = pneg %p15
  $region15: #{forward.24} parent=0 // pred_check_branch
    %18 = sbr.rel (%p16) target = $region17
  $region16: #{forward.24} parent=0 // pred_region
    %19 = vst [vmem:[#allocation2] sm:$0xff] 0.0
    %20 = vst [vmem:[#allocation2 + $0x8] sm:$0xff] 0.0
    %21 = vst [vmem:[#allocation2 + $0x10] sm:$0xff] 0.0
    %22 = vst [vmem:[#allocation2 + $0x18] sm:$0xff] 0.0
  $region17: #{forward.24} parent=0 // pred_fallthru
    _
  %v23 = vld [vmem:[#allocation2] sm:$0xff]
  %v24 = vld [vmem:[#allocation2 + $0x8] sm:$0xff]
  %v25 = vld [vmem:[#allocation2 + $0x10] sm:$0xff]
  %v26 = vld [vmem:[#allocation2 + $0x18] sm:$0xff]
  %v27 = vld [vmem:[%s0] sm:$0xf]
  %v28 = vld [vmem:[%s0 + $0x4] sm:$0xf]
  %v29 = vld [vmem:[%s1] sm:$0xff]
  %v30 = vld [vmem:[%s1 + $0x8] sm:$0xff]
  %v31 = vld [vmem:[%s1 + $0x10] sm:$0xff]
  %v32 = vld [vmem:[%s1 + $0x18] sm:$0xff]
  %v33 = vld [vmem:[%s1 + $0x20] sm:$0xff]
  %v34 = vld [vmem:[%s1 + $0x28] sm:$0xff]
  %v35 = vld [vmem:[%s1 + $0x30] sm:$0xff]
  %v36 = vld [vmem:[%s1 + $0x38] sm:$0xff]
  %v37 = vld [vmem:[%s1 + $0x40] sm:$0xff]
  %v38 = vld [vmem:[%s1 + $0x48] sm:$0xff]
  %v39 = vld [vmem:[%s1 + $0x50] sm:$0xff]
  %v40 = vld [vmem:[%s1 + $0x58] sm:$0xff]
  %v41 = vld [vmem:[%s1 + $0x60] sm:$0xff]
  %v42 = vld [vmem:[%s1 + $0x68] sm:$0xff]
  %v43 = vld [vmem:[%s1 + $0x70] sm:$0xff]
  %v44 = vld [vmem:[%s1 + $0x78] sm:$0xff]
  %v47 = vunpack.c.l.b16 %v27
  %v48 = vunpack.c.l.b16 %v28
  %v49 = vpack.c.b16 %v48, %v47
  %v67 = vunpack.c.l.b16 %v29
  %v68 = vunpack.c.h.b16 %v29
  %v69 = vunpack.c.l.b16 %v30
  %v70 = vunpack.c.h.b16 %v30
  %v71 = vunpack.c.l.b16 %v31
  %v72 = vunpack.c.h.b16 %v31
  %v73 = vunpack.c.l.b16 %v32
  %v74 = vunpack.c.h.b16 %v32
  %v75 = vunpack.c.l.b16 %v33
  %v76 = vunpack.c.h.b16 %v33
  %v77 = vunpack.c.l.b16 %v34
  %v78 = vunpack.c.h.b16 %v34
  %v79 = vunpack.c.l.b16 %v35
  %v80 = vunpack.c.h.b16 %v35
  %v81 = vunpack.c.l.b16 %v36
  %v82 = vunpack.c.h.b16 %v36
  %v83 = vunpack.c.l.b16 %v37
  %v84 = vunpack.c.h.b16 %v37
  %v85 = vunpack.c.l.b16 %v38
  %v86 = vunpack.c.h.b16 %v38
  %v87 = vunpack.c.l.b16 %v39
  %v88 = vunpack.c.h.b16 %v39
  %v89 = vunpack.c.l.b16 %v40
  %v90 = vunpack.c.h.b16 %v40
  %v91 = vunpack.c.l.b16 %v41
  %v92 = vunpack.c.h.b16 %v41
  %v93 = vunpack.c.l.b16 %v42
  %v94 = vunpack.c.h.b16 %v42
  %v95 = vunpack.c.l.b16 %v43
  %v96 = vunpack.c.h.b16 %v43
  %v97 = vunpack.c.l.b16 %v44
  %v98 = vunpack.c.h.b16 %v44
  %v99 = vpack.c.b16 %v69, %v67
  %v100 = vpack.c.b16 %v70, %v68
  %v101 = vpack.c.b16 %v73, %v71
  %v102 = vpack.c.b16 %v74, %v72
  %v103 = vpack.c.b16 %v77, %v75
  %v104 = vpack.c.b16 %v78, %v76
  %v105 = vpack.c.b16 %v81, %v79
  %v106 = vpack.c.b16 %v82, %v80
  %v107 = vpack.c.b16 %v85, %v83
  %v108 = vpack.c.b16 %v86, %v84
  %v109 = vpack.c.b16 %v89, %v87
  %v110 = vpack.c.b16 %v90, %v88
  %v111 = vpack.c.b16 %v93, %v91
  %v112 = vpack.c.b16 %v94, %v92
  %v113 = vpack.c.b16 %v97, %v95
  %v114 = vpack.c.b16 %v98, %v96
  %131 = vmatprep.subr.bf16.mxu0 %v114
  %132 = vmatpush1.bf16.msra.mxu0 %v113
  %133 = vmatprep.subr.bf16.mxu0 %v112
  %134 = vmatpush1.bf16.msra.mxu0 %v111
  %135 = vmatprep.subr.bf16.mxu0 %v110
  %136 = vmatpush1.bf16.msra.mxu0 %v109
  %137 = vmatprep.subr.bf16.mxu0 %v108
  %138 = vmatpush1.bf16.msra.mxu0 %v107
  %139 = vmatprep.subr.bf16.mxu0 %v106
  %140 = vmatpush1.bf16.msra.mxu0 %v105
  %141 = vmatprep.subr.bf16.mxu0 %v104
  %142 = vmatpush1.bf16.msra.mxu0 %v103
  %143 = vmatprep.subr.bf16.mxu0 %v102
  %144 = vmatpush1.bf16.msra.mxu0 %v101
  %145 = vmatprep.subr.bf16.mxu0 %v100
  %146 = vmatpush1.bf16.msra.mxu0 %v99
  %147 = vmatprep.subr.bf16.mxu0 0
  %148 = vmatpush2.bf16.msra.mxu0 0
  %149 = vmatprep.subr.bf16.mxu0 0
  %150 = vmatpush2.bf16.msra.mxu0 0
  %151 = vmatprep.subr.bf16.mxu0 0
  %152 = vmatpush2.bf16.msra.mxu0 0
  %153 = vmatprep.subr.bf16.mxu0 0
  %154 = vmatpush2.bf16.msra.mxu0 0
  %155 = vmatprep.subr.bf16.mxu0 0
  %156 = vmatpush2.bf16.msra.mxu0 0
  %157 = vmatprep.subr.bf16.mxu0 0
  %158 = vmatpush2.bf16.msra.mxu0 0
  %159 = vmatprep.subr.bf16.mxu0 0
  %160 = vmatpush2.bf16.msra.mxu0 0
  %161 = vmatprep.subr.bf16.mxu0 0
  %162 = vmatpush2.bf16.msra.mxu0 0
  %163 = vmatprep.mubr.bf16.mxu0 0
  %164 = vmatmul.mubr.bf16.gmra.mxu0 %v49
  %v165 = vpop.f32.mrf.mxu0
  %v166 = vadd.f32 0.0, %v165
  %v167 = vpop.f32.mrf.mxu0
  %v168 = vadd.f32 0.0, %v167
  %v169 = vpop.f32.mrf.mxu0
  %v170 = vadd.f32 0.0, %v169
  %v171 = vpop.f32.mrf.mxu0
  %v172 = vadd.f32 0.0, %v171
  %173 = vdwg.mxu0
  %v174 = vadd.f32 %v23, %v166
  %v175 = vadd.f32 %v24, %v168
  %v176 = vadd.f32 %v25, %v170
  %v177 = vadd.f32 %v26, %v172
  %178 = vst [vmem:[#allocation2] sm:$0xff] %v174
  %179 = vst [vmem:[#allocation2 + $0x8] sm:$0xff] %v175
  %180 = vst [vmem:[#allocation2 + $0x10] sm:$0xff] %v176
  %181 = vst [vmem:[#allocation2 + $0x18] sm:$0xff] %v177
  // Predicated region
  $region18: #{forward.24} parent=0 // pred_check
    %p182 = pneg %p15
  $region19: #{forward.24} parent=0 // pred_check_branch
    %184 = sbr.rel (%p182) target = $region21
  $region20: #{forward.24} parent=0 // pred_region
    %v185 = vld [vmem:[#allocation2] sm:$0xff]
    %v186 = vld [vmem:[#allocation2 + $0x8] sm:$0xff]
    %v187 = vld [vmem:[#allocation2 + $0x10] sm:$0xff]
    %v188 = vld [vmem:[#allocation2 + $0x18] sm:$0xff]
    %v189 = vld [vmem:[%s2] sm:$0x3]
    %v191 = vlaneseq
    %v192 = vshrl.u32 %v191, 7
    %v193 = vsub.s32 0, %v192
    %v194 = vrot.slane %v189, %v193
    %v195 = vlaneseq
    %v196 = vshrl.u32 %v195, 7
    %v197 = vsub.s32 1, %v196
    %v198 = vrot.slane %v189, %v197
    %v201 = vadd.f32 %v185, %v194
    %v202 = vadd.f32 %v186, %v198
    %v203 = vadd.f32 %v187, %v194
    %v204 = vadd.f32 %v188, %v198
    %205 = vst [vmem:[%s3] sm:$0xff] %v201
    %206 = vst [vmem:[%s3 + $0x8] sm:$0xff] %v202
    %207 = vst [vmem:[%s3 + $0x10] sm:$0xff] %v203
    %208 = vst [vmem:[%s3 + $0x18] sm:$0xff] %v204
  $region21: #{forward.24} parent=0 // pred_fallthru
    _
  // Predicated region
  $region22: #{forward.24} parent=0 // pred_check
    _
  $region23: #{forward.24} parent=0 // pred_check_branch
    %210 = sbr.rel (0) target = $region25
  $region24: #{forward.24} parent=0 // pred_region
    _
  $region25: #{forward.24} parent=0 // pred_fallthru
    _
  // Predicated region
  $region26: #{forward.24} parent=0 // pred_check
    _
  $region27: #{forward.24} parent=0 // pred_check_branch
    %212 = sbr.rel (0) target = $region29
  $region28: #{forward.24} parent=0 // pred_region
    _
  $region29: #{forward.24} parent=0 // pred_fallthru
    _

// kernel: forward.25
$region0: #{forward.25}
  #allocation0 [shape = 'u32[]', space=smem, size = 0x4, offset = 0x4, fixed_abs, tag = 'smem constant byte address 0x4 - core index']
  #allocation1 [shape = 'u32[144,128]{1,0:T(1,128)}', space=vmem, size = 0x12000, scoped, tag = 'internal scratch']
  %s0 = inlined_call_operand.vmem [shape: bf16[8,8,16], index: 0, kind: input, shape index: {}]
  %s1 = inlined_call_operand.vmem [shape: bf16[8,8,16], index: 1, kind: input, shape index: {}]
  %s2 = inlined_call_operand.vmem [shape: bf16[8,8,16], index: 2, kind: input, shape index: {}]
  %s3 = inlined_call_operand.vmem [shape: f32[8,8,16], index: 3, kind: output, shape index: {}]
  %s4 = sld [smem:[#allocation0]]
  $region45: #{forward.25} parent=0
    _
  %s6 = ssub.s32 1, %s4
  %s7 = scalar_select 0, %s6, %s4
  loop: start=0, step=1, limit=4
  $region2: #{forward.25} parent=0 // loop_pre_header
    _
  $region3: #{forward.25} parent=0 // loop_header
    %s9 = sphi 0, %s13
    %p10 = scmp.ge.s32.totalorder %s9, 4
    %s19 = sphi 0, %s21
    %s22 = sphi 0, %s19
    %s23 = sphi 0, %s22
    %s39 = sphi 0, %s23
    %s45 = sphi 0, %s47
    %s48 = sphi 0, %s45
    %s49 = sphi 0, %s48
    %s65 = sphi 0, %s49
    %s71 = sphi 0, %s73
    %s74 = sphi 0, %s71
    %s75 = sphi 0, %s74
    %s91 = sphi 0, %s75
    %s97 = sphi 0, %s99
    %s100 = sphi 0, %s97
    %s101 = sphi 0, %s100
    %s117 = sphi 0, %s101
  $region4: #{forward.25} parent=0 // loop_header_branch
    %12 = sbr.rel (%p10) target = $region8
  $region5: #{forward.25} parent=0 // loop_body
    %s14 = ssub.s32 %s9, 1
    %s15 = ssub.s32 %s9, 2
    %s16 = sadd.s32 %s9, 1
    %s17 = ssub.s32 %s9, %s16
    %p18 = scmp.eq.s32.totalorder %s17, 0
    %s20 = sadd.s32 %s19, 1
    %s21 = scalar_select %p18, %s19, %s20
    %p24 = pneg %p18
    %p25 = scmp.eq.s32.totalorder %s9, 1
    %p26 = por %p24, %p25
    %p27 = scmp.ne.s32.totalorder %s19, %s22
    %p28 = scmp.eq.s32.totalorder %s9, 0
    %p29 = por %p27, %p28
    %p30 = scmp.ne.s32.totalorder %s19, %s22
    %p31 = scmp.eq.s32.totalorder %s14, 1
    %p32 = por %p30, %p31
    %p33 = scmp.ne.s32.totalorder %s22, %s23
    %p34 = scmp.eq.s32.totalorder %s14, 0
    %p35 = por %p33, %p34
    %p36 = scmp.ne.s32.totalorder %s22, %s23
    %p37 = scmp.eq.s32.totalorder %s15, 1
    %p38 = por %p36, %p37
    %p40 = scmp.ne.s32.totalorder %s23, %s39
    %p41 = scmp.eq.s32.totalorder %s15, 0
    %p42 = por %p40, %p41
    %s43 = ssub.s32 %s9, %s16
    %p44 = scmp.eq.s32.totalorder %s43, 0
    %s46 = sadd.s32 %s45, 1
    %s47 = scalar_select %p44, %s45, %s46
    %p50 = pneg %p44
    %p51 = scmp.eq.s32.totalorder %s9, 1
    %p52 = por %p50, %p51
    %p53 = scmp.ne.s32.totalorder %s45, %s48
    %p54 = scmp.eq.s32.totalorder %s9, 0
    %p55 = por %p53, %p54
    %p56 = scmp.ne.s32.totalorder %s45, %s48
    %p57 = scmp.eq.s32.totalorder %s14, 1
    %p58 = por %p56, %p57
    %p59 = scmp.ne.s32.totalorder %s48, %s49
    %p60 = scmp.eq.s32.totalorder %s14, 0
    %p61 = por %p59, %p60
    %p62 = scmp.ne.s32.totalorder %s48, %s49
    %p63 = scmp.eq.s32.totalorder %s15, 1
    %p64 = por %p62, %p63
    %p66 = scmp.ne.s32.totalorder %s49, %s65
    %p67 = scmp.eq.s32.totalorder %s15, 0
    %p68 = por %p66, %p67
    %s69 = ssub.s32 %s9, %s16
    %p70 = scmp.eq.s32.totalorder %s69, 0
    %s72 = sadd.s32 %s71, 1
    %s73 = scalar_select %p70, %s71, %s72
    %p76 = pneg %p70
    %p77 = scmp.eq.s32.totalorder %s9, 1
    %p78 = por %p76, %p77
    %p79 = scmp.ne.s32.totalorder %s71, %s74
    %p80 = scmp.eq.s32.totalorder %s9, 0
    %p81 = por %p79, %p80
    %p82 = scmp.ne.s32.totalorder %s71, %s74
    %p83 = scmp.eq.s32.totalorder %s14, 1
    %p84 = por %p82, %p83
    %p85 = scmp.ne.s32.totalorder %s74, %s75
    %p86 = scmp.eq.s32.totalorder %s14, 0
    %p87 = por %p85, %p86
    %p88 = scmp.ne.s32.totalorder %s74, %s75
    %p89 = scmp.eq.s32.totalorder %s15, 1
    %p90 = por %p88, %p89
    %p92 = scmp.ne.s32.totalorder %s75, %s91
    %p93 = scmp.eq.s32.totalorder %s15, 0
    %p94 = por %p92, %p93
    %s95 = ssub.s32 %s9, %s16
    %p96 = scmp.eq.s32.totalorder %s95, 0
    %s98 = sadd.s32 %s97, 1
    %s99 = scalar_select %p96, %s97, %s98
    %p102 = pneg %p96
    %p103 = scmp.eq.s32.totalorder %s9, 1
    %p104 = por %p102, %p103
    %p105 = scmp.ne.s32.totalorder %s97, %s100
    %p106 = scmp.eq.s32.totalorder %s9, 0
    %p107 = por %p105, %p106
    %p108 = scmp.ne.s32.totalorder %s97, %s100
    %p109 = scmp.eq.s32.totalorder %s14, 1
    %p110 = por %p108, %p109
    %p111 = scmp.ne.s32.totalorder %s100, %s101
    %p112 = scmp.eq.s32.totalorder %s14, 0
    %p113 = por %p111, %p112
    %p114 = scmp.ne.s32.totalorder %s100, %s101
    %p115 = scmp.eq.s32.totalorder %s15, 1
    %p116 = por %p114, %p115
    %p118 = scmp.ne.s32.totalorder %s101, %s117
    %p119 = scmp.eq.s32.totalorder %s15, 0
    %p120 = por %p118, %p119
    %p121 = scmp.le.s32.totalorder 1, %s9
    %p122 = scmp.lt.s32.totalorder %s9, 3
    %p123 = pnand %p121, %p122
    %p124 = pneg %p123
    // Predicated region
    $region9: #{forward.25} parent=5 // pred_check
      _
    $region10: #{forward.25} parent=5 // pred_check_branch
      %126 = sbr.rel (%p123) target = $region12
    $region11: #{forward.25} parent=5 // pred_region
      %s127 = ssub.s32 %s9, 1
    $region12: #{forward.25} parent=5 // pred_fallthru
      _
    %p128 = scmp.lt.s32.totalorder %s9, 2
    // Predicated region
    $region13: #{forward.25} parent=5 // pred_check
      %p129 = pneg %p128
    $region14: #{forward.25} parent=5 // pred_check_branch
      %131 = sbr.rel (%p129) target = $region16
    $region15: #{forward.25} parent=5 // pred_region
      // Predicated region
      $region17: #{forward.25} parent=15 // pred_check
        %p132 = pneg %p29
      $region18: #{forward.25} parent=15 // pred_check_branch
        %134 = sbr.rel (%p132) target = $region20
      $region19: #{forward.25} parent=15 // pred_region
        %s135 = smul.u32 4, %s9
        %p136 = scmp.lt.s32.totalorder %s135, 7
        %s137 = scalar_select %p136, %s135, 7
        %s138 = smul.addr %s137, 4
        %s139 = scalar_lea.vmem %s0, %s138
        %s140 = smul.u32 4, %s9
      $region20: #{forward.25} parent=15 // pred_fallthru
        _
      // Predicated region
      $region21: #{forward.25} parent=15 // pred_check
        %p141 = pneg %p55
      $region22: #{forward.25} parent=15 // pred_check_branch
        %143 = sbr.rel (%p141) target = $region24
      $region23: #{forward.25} parent=15 // pred_region
        %s144 = smul.u32 4, %s9
        %p145 = scmp.lt.s32.totalorder %s144, 7
        %s146 = scalar_select %p145, %s144, 7
        %s147 = smul.addr %s146, 4
        %s148 = scalar_lea.vmem %s1, %s147
        %s149 = smul.u32 4, %s9
      $region24: #{forward.25} parent=15 // pred_fallthru
        _
      // Predicated region
      $region25: #{forward.25} parent=15 // pred_check
        %p150 = pneg %p81
      $region26: #{forward.25} parent=15 // pred_check_branch
        %152 = sbr.rel (%p150) target = $region28
      $region27: #{forward.25} parent=15 // pred_region
        %s153 = smul.u32 4, %s9
        %p154 = scmp.lt.s32.totalorder %s153, 7
        %s155 = scalar_select %p154, %s153, 7
        %s156 = smul.addr %s155, 4
        %s157 = scalar_lea.vmem %s2, %s156
        %s158 = smul.u32 4, %s9
      $region28: #{forward.25} parent=15 // pred_fallthru
        _
    $region16: #{forward.25} parent=5 // pred_fallthru
      _
    %p159 = scmp.le.s32.totalorder 1, %s9
    %p160 = scmp.lt.s32.totalorder %s9, 3
    %p161 = pnand %p159, %p160
    %p162 = pneg %p161
    // Predicated region
    $region29: #{forward.25} parent=5 // pred_check
      _
    $region30: #{forward.25} parent=5 // pred_check_branch
      %164 = sbr.rel (%p161) target = $region32
    $region31: #{forward.25} parent=5 // pred_region
      %s165 = ssub.s32 %s9, 1
      %s166 = smul.u32 4, %s14
      %p167 = scmp.lt.s32.totalorder %s166, 7
      %s168 = scalar_select %p167, %s166, 7
      %s169 = smul.addr %s168, 4
      %s170 = scalar_lea.vmem %s0, %s169
      %p171 = pneg %p35
      %p172 = pneg %p32
      %s173 = smul.u32 4, %s14
      %p174 = scmp.lt.s32.totalorder %s173, 7
      %s175 = scalar_select %p174, %s173, 7
      %s176 = smul.addr %s175, 4
      %s177 = scalar_lea.vmem %s1, %s176
      %p178 = pneg %p61
      %p179 = pneg %p58
      %s180 = smul.u32 4, %s14
      %p181 = scmp.lt.s32.totalorder %s180, 7
      %s182 = scalar_select %p181, %s180, 7
      %s183 = smul.addr %s182, 4
      %s184 = scalar_lea.vmem %s2, %s183
      %p185 = pneg %p87
      %p186 = pneg %p84
      %p187 = pneg %p113
      %p188 = pneg %p110
      %s189 = smul.u32 4, %s14
      %p190 = scmp.lt.s32.totalorder %s189, 7
      %s191 = scalar_select %p190, %s189, 7
      %s192 = smul.addr %s191, 8
      %s193 = scalar_lea.vmem %s3, %s192
      %s194 = smul.u32 4, %s14
      %p195 = scmp.lt.s32.totalorder %s194, 7
      %s196 = scalar_select %p195, %s194, 7
      %s197 = smul.addr %s196, 4
      %s198 = scalar_lea.vmem %s0, %s197
      %s199 = smul.u32 4, %s14
      %s200 = smul.u32 4, %s14
      %p201 = scmp.lt.s32.totalorder %s200, 7
      %s202 = scalar_select %p201, %s200, 7
      %s203 = smul.addr %s202, 4
      %s204 = scalar_lea.vmem %s1, %s203
      %s205 = smul.u32 4, %s14
      %s206 = smul.u32 4, %s14
      %p207 = scmp.lt.s32.totalorder %s206, 7
      %s208 = scalar_select %p207, %s206, 7
      %s209 = smul.addr %s208, 4
      %s210 = scalar_lea.vmem %s2, %s209
      %s211 = smul.u32 4, %s14
      %s212 = smul.u32 4, %s14
      %p213 = scmp.lt.s32.totalorder %s212, 7
      %s214 = scalar_select %p213, %s212, 7
      %s215 = smul.addr %s214, 8
      %s216 = scalar_lea.vmem %s3, %s215
      %s217 = smul.u32 4, %s14
      %v219 = vld [vmem:[%s198] sm:$0xf]
      %v220 = vld [vmem:[%s198 + $0x4] sm:$0xf]
      %v221 = vld [vmem:[%s198 + $0x8] sm:$0xf]
      %v222 = vld [vmem:[%s198 + $0xc] sm:$0xf]
      %v223 = vld [vmem:[%s204] sm:$0xf]
      %v224 = vld [vmem:[%s204 + $0x4] sm:$0xf]
      %v225 = vld [vmem:[%s204 + $0x8] sm:$0xf]
      %v226 = vld [vmem:[%s204 + $0xc] sm:$0xf]
      %v227 = vld [vmem:[%s210] sm:$0xf]
      %v228 = vld [vmem:[%s210 + $0x4] sm:$0xf]
      %v229 = vld [vmem:[%s210 + $0x8] sm:$0xf]
      %v230 = vld [vmem:[%s210 + $0xc] sm:$0xf]
      %vm231 = vcmask 130048
      %v233 = vsel %vm231, %v219, 0
      %v236 = vsel %vm231, %v223, 0
      %238 = vmatprep.subr.bf16.mxu0 0
      %239 = vmatpush1.bf16.xpose.msra.mxu0 0
      %240 = vmatprep.subr.bf16.mxu0 0
      %241 = vmatpush1.bf16.xpose.msra.mxu0 0
      %242 = vmatprep.subr.bf16.mxu0 0
      %243 = vmatpush1.bf16.xpose.msra.mxu0 0
      %244 = vmatprep.subr.bf16.mxu0 0
      %245 = vmatpush1.bf16.xpose.msra.mxu0 0
      %246 = vmatprep.subr.bf16.mxu0 0
      %247 = vmatpush1.bf16.xpose.msra.mxu0 0
      %248 = vmatprep.subr.bf16.mxu0 0
      %249 = vmatpush1.bf16.xpose.msra.mxu0 0
      %250 = vmatprep.subr.bf16.mxu0 0
      %251 = vmatpush1.bf16.xpose.msra.mxu0 0
      %252 = vmatprep.subr.bf16.mxu0 0
      %253 = vmatpush1.bf16.xpose.msra.mxu0 %v236
      %254 = vmatprep.subr.bf16.mxu0 0
      %255 = vmatpush2.bf16.xpose.msra.mxu0 0
      %256 = vmatprep.subr.bf16.mxu0 0
      %257 = vmatpush2.bf16.xpose.msra.mxu0 0
      %258 = vmatprep.subr.bf16.mxu0 0
      %259 = vmatpush2.bf16.xpose.msra.mxu0 0
      %260 = vmatprep.subr.bf16.mxu0 0
      %261 = vmatpush2.bf16.xpose.msra.mxu0 0
      %262 = vmatprep.subr.bf16.mxu0 0
      %263 = vmatpush2.bf16.xpose.msra.mxu0 0
      %264 = vmatprep.subr.bf16.mxu0 0
      %265 = vmatpush2.bf16.xpose.msra.mxu0 0
      %266 = vmatprep.subr.bf16.mxu0 0
      %267 = vmatpush2.bf16.xpose.msra.mxu0 0
      %268 = vmatprep.subr.bf16.mxu0 0
      %269 = vmatpush2.bf16.xpose.msra.mxu0 0
      %270 = vmatprep.mubr.bf16.mxu0 0
      %271 = vmatmul.mubr.bf16.gmra.mxu0 %v233
      %v272 = vpop.f32.mrf.mxu0
      %v273 = vadd.f32 0.0, %v272
      %v274 = vpop.f32.mrf.mxu0
      %v275 = vpop.f32.mrf.mxu0
      %v276 = vpop.f32.mrf.mxu0
      %277 = vdwg.mxu0
      %v279 = vsel %vm231, %v220, 0
      %v282 = vsel %vm231, %v224, 0
      %284 = vmatprep.subr.bf16.mxu0 0
      %285 = vmatpush1.bf16.xpose.msra.mxu0 0
      %286 = vmatprep.subr.bf16.mxu0 0
      %287 = vmatpush1.bf16.xpose.msra.mxu0 0
      %288 = vmatprep.subr.bf16.mxu0 0
      %289 = vmatpush1.bf16.xpose.msra.mxu0 0
      %290 = vmatprep.subr.bf16.mxu0 0
      %291 = vmatpush1.bf16.xpose.msra.mxu0 0
      %292 = vmatprep.subr.bf16.mxu0 0
      %293 = vmatpush1.bf16.xpose.msra.mxu0 0
      %294 = vmatprep.subr.bf16.mxu0 0
      %295 = vmatpush1.bf16.xpose.msra.mxu0 0
      %296 = vmatprep.subr.bf16.mxu0 0
      %297 = vmatpush1.bf16.xpose.msra.mxu0 0
      %298 = vmatprep.subr.bf16.mxu0 0
      %299 = vmatpush1.bf16.xpose.msra.mxu0 %v282
      %300 = vmatprep.subr.bf16.mxu0 0
      %301 = vmatpush2.bf16.xpose.msra.mxu0 0
      %302 = vmatprep.subr.bf16.mxu0 0
      %303 = vmatpush2.bf16.xpose.msra.mxu0 0
      %304 = vmatprep.subr.bf16.mxu0 0
      %305 = vmatpush2.bf16.xpose.msra.mxu0 0
      %306 = vmatprep.subr.bf16.mxu0 0
      %307 = vmatpush2.bf16.xpose.msra.mxu0 0
      %308 = vmatprep.subr.bf16.mxu0 0
      %309 = vmatpush2.bf16.xpose.msra.mxu0 0
      %310 = vmatprep.subr.bf16.mxu0 0
      %311 = vmatpush2.bf16.xpose.msra.mxu0 0
      %312 = vmatprep.subr.bf16.mxu0 0
      %313 = vmatpush2.bf16.xpose.msra.mxu0 0
      %314 = vmatprep.subr.bf16.mxu0 0
      %315 = vmatpush2.bf16.xpose.msra.mxu0 0
      %316 = vmatprep.mubr.bf16.mxu0 0
      %317 = vmatmul.mubr.bf16.gmra.mxu0 %v279
      %v318 = vpop.f32.mrf.mxu0
      %v319 = vadd.f32 0.0, %v318
      %v320 = vpop.f32.mrf.mxu0
      %v321 = vpop.f32.mrf.mxu0
      %v322 = vpop.f32.mrf.mxu0
      %323 = vdwg.mxu0
      %v325 = vsel %vm231, %v221, 0
      %v328 = vsel %vm231, %v225, 0
      %330 = vmatprep.subr.bf16.mxu0 0
      %331 = vmatpush1.bf16.xpose.msra.mxu0 0
      %332 = vmatprep.subr.bf16.mxu0 0
      %333 = vmatpush1.bf16.xpose.msra.mxu0 0
      %334 = vmatprep.subr.bf16.mxu0 0
      %335 = vmatpush1.bf16.xpose.msra.mxu0 0
      %336 = vmatprep.subr.bf16.mxu0 0
      %337 = vmatpush1.bf16.xpose.msra.mxu0 0
      %338 = vmatprep.subr.bf16.mxu0 0
      %339 = vmatpush1.bf16.xpose.msra.mxu0 0
      %340 = vmatprep.subr.bf16.mxu0 0
      %341 = vmatpush1.bf16.xpose.msra.mxu0 0
      %342 = vmatprep.subr.bf16.mxu0 0
      %343 = vmatpush1.bf16.xpose.msra.mxu0 0
      %344 = vmatprep.subr.bf16.mxu0 0
      %345 = vmatpush1.bf16.xpose.msra.mxu0 %v328
      %346 = vmatprep.subr.bf16.mxu0 0
      %347 = vmatpush2.bf16.xpose.msra.mxu0 0
      %348 = vmatprep.subr.bf16.mxu0 0
      %349 = vmatpush2.bf16.xpose.msra.mxu0 0
      %350 = vmatprep.subr.bf16.mxu0 0
      %351 = vmatpush2.bf16.xpose.msra.mxu0 0
      %352 = vmatprep.subr.bf16.mxu0 0
      %353 = vmatpush2.bf16.xpose.msra.mxu0 0
      %354 = vmatprep.subr.bf16.mxu0 0
      %355 = vmatpush2.bf16.xpose.msra.mxu0 0
      %356 = vmatprep.subr.bf16.mxu0 0
      %357 = vmatpush2.bf16.xpose.msra.mxu0 0
      %358 = vmatprep.subr.bf16.mxu0 0
      %359 = vmatpush2.bf16.xpose.msra.mxu0 0
      %360 = vmatprep.subr.bf16.mxu0 0
      %361 = vmatpush2.bf16.xpose.msra.mxu0 0
      %362 = vmatprep.mubr.bf16.mxu0 0
      %363 = vmatmul.mubr.bf16.gmra.mxu0 %v325
      %v364 = vpop.f32.mrf.mxu0
      %v365 = vadd.f32 0.0, %v364
      %v366 = vpop.f32.mrf.mxu0
      %v367 = vpop.f32.mrf.mxu0
      %v368 = vpop.f32.mrf.mxu0
      %369 = vdwg.mxu0
      %v371 = vsel %vm231, %v222, 0
      %v374 = vsel %vm231, %v226, 0
      %376 = vmatprep.subr.bf16.mxu0 0
      %377 = vmatpush1.bf16.xpose.msra.mxu0 0
      %378 = vmatprep.subr.bf16.mxu0 0
      %379 = vmatpush1.bf16.xpose.msra.mxu0 0
      %380 = vmatprep.subr.bf16.mxu0 0
      %381 = vmatpush1.bf16.xpose.msra.mxu0 0
      %382 = vmatprep.subr.bf16.mxu0 0
      %383 = vmatpush1.bf16.xpose.msra.mxu0 0
      %384 = vmatprep.subr.bf16.mxu0 0
      %385 = vmatpush1.bf16.xpose.msra.mxu0 0
      %386 = vmatprep.subr.bf16.mxu0 0
      %387 = vmatpush1.bf16.xpose.msra.mxu0 0
      %388 = vmatprep.subr.bf16.mxu0 0
      %389 = vmatpush1.bf16.xpose.msra.mxu0 0
      %390 = vmatprep.subr.bf16.mxu0 0
      %391 = vmatpush1.bf16.xpose.msra.mxu0 %v374
      %392 = vmatprep.subr.bf16.mxu0 0
      %393 = vmatpush2.bf16.xpose.msra.mxu0 0
      %394 = vmatprep.subr.bf16.mxu0 0
      %395 = vmatpush2.bf16.xpose.msra.mxu0 0
      %396 = vmatprep.subr.bf16.mxu0 0
      %397 = vmatpush2.bf16.xpose.msra.mxu0 0
      %398 = vmatprep.subr.bf16.mxu0 0
      %399 = vmatpush2.bf16.xpose.msra.mxu0 0
      %400 = vmatprep.subr.bf16.mxu0 0
      %401 = vmatpush2.bf16.xpose.msra.mxu0 0
      %402 = vmatprep.subr.bf16.mxu0 0
      %403 = vmatpush2.bf16.xpose.msra.mxu0 0
      %404 = vmatprep.subr.bf16.mxu0 0
      %405 = vmatpush2.bf16.xpose.msra.mxu0 0
      %406 = vmatprep.subr.bf16.mxu0 0
      %407 = vmatpush2.bf16.xpose.msra.mxu0 0
      %408 = vmatprep.mubr.bf16.mxu0 0
      %409 = vmatmul.mubr.bf16.gmra.mxu0 %v371
      %v410 = vpop.f32.mrf.mxu0
      %v411 = vadd.f32 0.0, %v410
      %v412 = vpop.f32.mrf.mxu0
      %v413 = vpop.f32.mrf.mxu0
      %v414 = vpop.f32.mrf.mxu0
      %415 = vdwg.mxu0
      %v416 = vmul.f32 %v273, 0.35355338
      %v417 = vmul.f32 %v319, 0.35355338
      %v418 = vmul.f32 %v365, 0.35355338
      %v419 = vmul.f32 %v411, 0.35355338
      %vm420 = vcmask 64512
      %v421 = vsel %vm420, %v416, -inf
      %422 = vmax.xlane.f32.xlu0 %v421
      %v423 = vpop.xlane.xlu0 %422
      %v424 = vsel %vm420, %v417, -inf
      %425 = vmax.xlane.f32.xlu0 %v424
      %v426 = vpop.xlane.xlu0 %425
      %v427 = vsel %vm420, %v418, -inf
      %428 = vmax.xlane.f32.xlu0 %v427
      %v429 = vpop.xlane.xlu0 %428
      %v430 = vsel %vm420, %v419, -inf
      %431 = vmax.xlane.f32.xlu0 %v430
      %v432 = vpop.xlane.xlu0 %431
      %v433 = vsub.f32 %v416, %v423
      %v434 = vsub.f32 %v417, %v426
      %v435 = vsub.f32 %v418, %v429
      %v436 = vsub.f32 %v419, %v432
      %v437 = vmul.f32 %v433, 1.442695
      %v438 = vpow.pop %v437
      %v439 = vmul.f32 %v434, 1.442695
      %v440 = vpow.pop %v439
      %v441 = vmul.f32 %v435, 1.442695
      %v442 = vpow.pop %v441
      %v443 = vmul.f32 %v436, 1.442695
      %v444 = vpow.pop %v443
      %v445 = vsel %vm420, %v438, 0.0
      %446 = vadd.xlane.f32.xlu0 %v445
      %v447 = vpop.xlane.xlu0 %446
      %v448 = vsel %vm420, %v440, 0.0
      %449 = vadd.xlane.f32.xlu0 %v448
      %v450 = vpop.xlane.xlu0 %449
      %v451 = vsel %vm420, %v442, 0.0
      %452 = vadd.xlane.f32.xlu0 %v451
      %v453 = vpop.xlane.xlu0 %452
      %v454 = vsel %vm420, %v444, 0.0
      %455 = vadd.xlane.f32.xlu0 %v454
      %v456 = vpop.xlane.xlu0 %455
      %v457 = vrcp.pop %v447
      %v458 = vrcp.pop %v450
      %v459 = vrcp.pop %v453
      %v460 = vrcp.pop %v456
      %v461 = vmul.f32 %v438, %v457
      %v462 = vmul.f32 %v440, %v458
      %v463 = vmul.f32 %v442, %v459
      %v464 = vmul.f32 %v444, %v460
      %v465 = vpack.c.bf16 %v461, %v461
      %v466 = vpack.c.bf16 %v462, %v462
      %v467 = vpack.c.bf16 %v463, %v463
      %v468 = vpack.c.bf16 %v464, %v464
      %v470 = vsel %vm420, %v465, 0
      %vm472 = vcmask 1043456
      %v474 = vsel %vm472, %v227, 0
      %476 = vmatprep.subr.bf16.mxu0 0
      %477 = vmatpush1.bf16.msra.mxu0 0
      %478 = vmatprep.subr.bf16.mxu0 0
      %479 = vmatpush1.bf16.msra.mxu0 0
      %480 = vmatprep.subr.bf16.mxu0 0
      %481 = vmatpush1.bf16.msra.mxu0 0
      %482 = vmatprep.subr.bf16.mxu0 0
      %483 = vmatpush1.bf16.msra.mxu0 0
      %484 = vmatprep.subr.bf16.mxu0 0
      %485 = vmatpush1.bf16.msra.mxu0 0
      %486 = vmatprep.subr.bf16.mxu0 0
      %487 = vmatpush1.bf16.msra.mxu0 0
      %488 = vmatprep.subr.bf16.mxu0 0
      %489 = vmatpush1.bf16.msra.mxu0 0
      %490 = vmatprep.subr.bf16.mxu0 0
      %491 = vmatpush1.bf16.msra.mxu0 %v474
      %492 = vmatprep.subr.bf16.mxu0 0
      %493 = vmatpush2.bf16.msra.mxu0 0
      %494 = vmatprep.subr.bf16.mxu0 0
      %495 = vmatpush2.bf16.msra.mxu0 0
      %496 = vmatprep.subr.bf16.mxu0 0
      %497 = vmatpush2.bf16.msra.mxu0 0
      %498 = vmatprep.subr.bf16.mxu0 0
      %499 = vmatpush2.bf16.msra.mxu0 0
      %500 = vmatprep.subr.bf16.mxu0 0
      %501 = vmatpush2.bf16.msra.mxu0 0
      %502 = vmatprep.subr.bf16.mxu0 0
      %503 = vmatpush2.bf16.msra.mxu0 0
      %504 = vmatprep.subr.bf16.mxu0 0
      %505 = vmatpush2.bf16.msra.mxu0 0
      %506 = vmatprep.subr.bf16.mxu0 0
      %507 = vmatpush2.bf16.msra.mxu0 0
      %508 = vmatprep.mubr.bf16.mxu0 0
      %509 = vmatmul.mubr.bf16.gmra.mxu0 %v470
      %v510 = vpop.f32.mrf.mxu0
      %v511 = vadd.f32 0.0, %v510
      %v512 = vpop.f32.mrf.mxu0
      %v513 = vpop.f32.mrf.mxu0
      %v514 = vpop.f32.mrf.mxu0
      %515 = vdwg.mxu0
      %v517 = vsel %vm420, %v466, 0
      %v520 = vsel %vm472, %v228, 0
      %522 = vmatprep.subr.bf16.mxu0 0
      %523 = vmatpush1.bf16.msra.mxu0 0
      %524 = vmatprep.subr.bf16.mxu0 0
      %525 = vmatpush1.bf16.msra.mxu0 0
      %526 = vmatprep.subr.bf16.mxu0 0
      %527 = vmatpush1.bf16.msra.mxu0 0
      %528 = vmatprep.subr.bf16.mxu0 0
      %529 = vmatpush1.bf16.msra.mxu0 0
      %530 = vmatprep.subr.bf16.mxu0 0
      %531 = vmatpush1.bf16.msra.mxu0 0
      %532 = vmatprep.subr.bf16.mxu0 0
      %533 = vmatpush1.bf16.msra.mxu0 0
      %534 = vmatprep.subr.bf16.mxu0 0
      %535 = vmatpush1.bf16.msra.mxu0 0
      %536 = vmatprep.subr.bf16.mxu0 0
      %537 = vmatpush1.bf16.msra.mxu0 %v520
      %538 = vmatprep.subr.bf16.mxu0 0
      %539 = vmatpush2.bf16.msra.mxu0 0
      %540 = vmatprep.subr.bf16.mxu0 0
      %541 = vmatpush2.bf16.msra.mxu0 0
      %542 = vmatprep.subr.bf16.mxu0 0
      %543 = vmatpush2.bf16.msra.mxu0 0
      %544 = vmatprep.subr.bf16.mxu0 0
      %545 = vmatpush2.bf16.msra.mxu0 0
      %546 = vmatprep.subr.bf16.mxu0 0
      %547 = vmatpush2.bf16.msra.mxu0 0
      %548 = vmatprep.subr.bf16.mxu0 0
      %549 = vmatpush2.bf16.msra.mxu0 0
      %550 = vmatprep.subr.bf16.mxu0 0
      %551 = vmatpush2.bf16.msra.mxu0 0
      %552 = vmatprep.subr.bf16.mxu0 0
      %553 = vmatpush2.bf16.msra.mxu0 0
      %554 = vmatprep.mubr.bf16.mxu0 0
      %555 = vmatmul.mubr.bf16.gmra.mxu0 %v517
      %v556 = vpop.f32.mrf.mxu0
      %v557 = vadd.f32 0.0, %v556
      %v558 = vpop.f32.mrf.mxu0
      %v559 = vpop.f32.mrf.mxu0
      %v560 = vpop.f32.mrf.mxu0
      %561 = vdwg.mxu0
      %v563 = vsel %vm420, %v467, 0
      %v566 = vsel %vm472, %v229, 0
      %568 = vmatprep.subr.bf16.mxu0 0
      %569 = vmatpush1.bf16.msra.mxu0 0
      %570 = vmatprep.subr.bf16.mxu0 0
      %571 = vmatpush1.bf16.msra.mxu0 0
      %572 = vmatprep.subr.bf16.mxu0 0
      %573 = vmatpush1.bf16.msra.mxu0 0
      %574 = vmatprep.subr.bf16.mxu0 0
      %575 = vmatpush1.bf16.msra.mxu0 0
      %576 = vmatprep.subr.bf16.mxu0 0
      %577 = vmatpush1.bf16.msra.mxu0 0
      %578 = vmatprep.subr.bf16.mxu0 0
      %579 = vmatpush1.bf16.msra.mxu0 0
      %580 = vmatprep.subr.bf16.mxu0 0
      %581 = vmatpush1.bf16.msra.mxu0 0
      %582 = vmatprep.subr.bf16.mxu0 0
      %583 = vmatpush1.bf16.msra.mxu0 %v566
      %584 = vmatprep.subr.bf16.mxu0 0
      %585 = vmatpush2.bf16.msra.mxu0 0
      %586 = vmatprep.subr.bf16.mxu0 0
      %587 = vmatpush2.bf16.msra.mxu0 0
      %588 = vmatprep.subr.bf16.mxu0 0
      %589 = vmatpush2.bf16.msra.mxu0 0
      %590 = vmatprep.subr.bf16.mxu0 0
      %591 = vmatpush2.bf16.msra.mxu0 0
      %592 = vmatprep.subr.bf16.mxu0 0
      %593 = vmatpush2.bf16.msra.mxu0 0
      %594 = vmatprep.subr.bf16.mxu0 0
      %595 = vmatpush2.bf16.msra.mxu0 0
      %596 = vmatprep.subr.bf16.mxu0 0
      %597 = vmatpush2.bf16.msra.mxu0 0
      %598 = vmatprep.subr.bf16.mxu0 0
      %599 = vmatpush2.bf16.msra.mxu0 0
      %600 = vmatprep.mubr.bf16.mxu0 0
      %601 = vmatmul.mubr.bf16.gmra.mxu0 %v563
      %v602 = vpop.f32.mrf.mxu0
      %v603 = vadd.f32 0.0, %v602
      %v604 = vpop.f32.mrf.mxu0
      %v605 = vpop.f32.mrf.mxu0
      %v606 = vpop.f32.mrf.mxu0
      %607 = vdwg.mxu0
      %v609 = vsel %vm420, %v468, 0
      %v612 = vsel %vm472, %v230, 0
      %614 = vmatprep.subr.bf16.mxu0 0
      %615 = vmatpush1.bf16.msra.mxu0 0
      %616 = vmatprep.subr.bf16.mxu0 0
      %617 = vmatpush1.bf16.msra.mxu0 0
      %618 = vmatprep.subr.bf16.mxu0 0
      %619 = vmatpush1.bf16.msra.mxu0 0
      %620 = vmatprep.subr.bf16.mxu0 0
      %621 = vmatpush1.bf16.msra.mxu0 0
      %622 = vmatprep.subr.bf16.mxu0 0
      %623 = vmatpush1.bf16.msra.mxu0 0
      %624 = vmatprep.subr.bf16.mxu0 0
      %625 = vmatpush1.bf16.msra.mxu0 0
      %626 = vmatprep.subr.bf16.mxu0 0
      %627 = vmatpush1.bf16.msra.mxu0 0
      %628 = vmatprep.subr.bf16.mxu0 0
      %629 = vmatpush1.bf16.msra.mxu0 %v612
      %630 = vmatprep.subr.bf16.mxu0 0
      %631 = vmatpush2.bf16.msra.mxu0 0
      %632 = vmatprep.subr.bf16.mxu0 0
      %633 = vmatpush2.bf16.msra.mxu0 0
      %634 = vmatprep.subr.bf16.mxu0 0
      %635 = vmatpush2.bf16.msra.mxu0 0
      %636 = vmatprep.subr.bf16.mxu0 0
      %637 = vmatpush2.bf16.msra.mxu0 0
      %638 = vmatprep.subr.bf16.mxu0 0
      %639 = vmatpush2.bf16.msra.mxu0 0
      %640 = vmatprep.subr.bf16.mxu0 0
      %641 = vmatpush2.bf16.msra.mxu0 0
      %642 = vmatprep.subr.bf16.mxu0 0
      %643 = vmatpush2.bf16.msra.mxu0 0
      %644 = vmatprep.subr.bf16.mxu0 0
      %645 = vmatpush2.bf16.msra.mxu0 0
      %646 = vmatprep.mubr.bf16.mxu0 0
      %647 = vmatmul.mubr.bf16.gmra.mxu0 %v609
      %v648 = vpop.f32.mrf.mxu0
      %v649 = vadd.f32 0.0, %v648
      %v650 = vpop.f32.mrf.mxu0
      %v651 = vpop.f32.mrf.mxu0
      %v652 = vpop.f32.mrf.mxu0
      %653 = vdwg.mxu0
      %654 = vst.msk [vmem:[%s216] sm:$0xff] %vm231, %v511
      %655 = vst.msk [vmem:[%s216 + $0x8] sm:$0xff] %vm231, %v557
      %656 = vst.msk [vmem:[%s216 + $0x10] sm:$0xff] %vm231, %v603
      %657 = vst.msk [vmem:[%s216 + $0x18] sm:$0xff] %vm231, %v649
      %s658 = smul.u32 4, %s14
      %p659 = scmp.lt.s32.totalorder %s658, 7
      %s660 = scalar_select %p659, %s658, 7
      %s661 = smul.addr %s660, 8
      %s662 = scalar_lea.vmem %s3, %s661
      // Predicated region
      $region33: #{forward.25} parent=31 // pred_check
        %p663 = pneg %p110
      $region34: #{forward.25} parent=31 // pred_check_branch
        %665 = sbr.rel (%p663) target = $region36
      $region35: #{forward.25} parent=31 // pred_region
        %s666 = smul.u32 4, %s14
      $region36: #{forward.25} parent=31 // pred_fallthru
        _
    $region32: #{forward.25} parent=5 // pred_fallthru
      _
    %p667 = scmp.le.s32.totalorder 2, %s9
    // Predicated region
    $region37: #{forward.25} parent=5 // pred_check
      %p668 = pneg %p667
    $region38: #{forward.25} parent=5 // pred_check_branch
      %670 = sbr.rel (%p668) target = $region40
    $region39: #{forward.25} parent=5 // pred_region
      %s671 = ssub.s32 %s9, 2
      // Predicated region
      $region41: #{forward.25} parent=39 // pred_check
        %p672 = pneg %p116
      $region42: #{forward.25} parent=39 // pred_check_branch
        %674 = sbr.rel (%p672) target = $region44
      $region43: #{forward.25} parent=39 // pred_region
        %s675 = smul.u32 4, %s15
        %p676 = scmp.lt.s32.totalorder %s675, 7
        %s677 = scalar_select %p676, %s675, 7
        %s678 = smul.addr %s677, 8
        %s679 = scalar_lea.vmem %s3, %s678
      $region44: #{forward.25} parent=39 // pred_fallthru
        _
    $region40: #{forward.25} parent=5 // pred_fallthru
      _
  $region6: #{forward.25} parent=0 // loop_footer
    %s13 = sadd.s32 1, %s9
  $region7: #{forward.25} parent=0 // loop_footer_branch
    %8 = sbr.rel target = $region3
  $region8: #{forward.25} parent=0 // loop_exit
    _

// kernel: forward.26
$region0: #{forward.26}
  #allocation0 [shape = 'u32[]', space=smem, size = 0x4, offset = 0x4, fixed_abs, tag = 'smem constant byte address 0x4 - core index']
  #allocation1 [shape = 'u32[144,128]{1,0:T(1,128)}', space=vmem, size = 0x12000, scoped, tag = 'internal scratch']
  #allocation2 [shape = 'f32[16,128]{1,0:T(8,128)}', space=vmem, size = 0x2000, scoped, tag = 'scratch operand']
  %s0 = inlined_call_operand.vmem [shape: bf16[16,128], index: 0, kind: input, shape index: {}]
  %s1 = inlined_call_operand.vmem [shape: bf16[128,128], index: 1, kind: input, shape index: {}]
  %s2 = inlined_call_operand.vmem [shape: f32[1,128], index: 2, kind: input, shape index: {}]
  %s3 = inlined_call_operand.vmem [shape: f32[16,128], index: 3, kind: input, shape index: {}]
  %s4 = inlined_call_operand.vmem [shape: f32[16,128], index: 4, kind: output, shape index: {}]
  %s5 = sld [smem:[#allocation0]]
  $region34: #{forward.26} parent=0
    _
  %s7 = ssub.s32 1, %s5
  %s8 = scalar_select 0, %s7, %s5
  // Predicated region
  $region2: #{forward.26} parent=0 // pred_check
    _
  $region3: #{forward.26} parent=0 // pred_check_branch
    %10 = sbr.rel (0) target = $region5
  $region4: #{forward.26} parent=0 // pred_region
    _
  $region5: #{forward.26} parent=0 // pred_fallthru
    _
  // Predicated region
  $region6: #{forward.26} parent=0 // pred_check
    _
  $region7: #{forward.26} parent=0 // pred_check_branch
    %12 = sbr.rel (0) target = $region9
  $region8: #{forward.26} parent=0 // pred_region
    _
  $region9: #{forward.26} parent=0 // pred_fallthru
    _
  // Predicated region
  $region10: #{forward.26} parent=0 // pred_check
    _
  $region11: #{forward.26} parent=0 // pred_check_branch
    %14 = sbr.rel (0) target = $region13
  $region12: #{forward.26} parent=0 // pred_region
    _
  $region13: #{forward.26} parent=0 // pred_fallthru
    _
  // Predicated region
  $region14: #{forward.26} parent=0 // pred_check
    _
  $region15: #{forward.26} parent=0 // pred_check_branch
    %16 = sbr.rel (0) target = $region17
  $region16: #{forward.26} parent=0 // pred_region
    _
  $region17: #{forward.26} parent=0 // pred_fallthru
    _
  %p18 = scmp.eq.s32.totalorder 0, 0
  // Predicated region
  $region18: #{forward.26} parent=0 // pred_check
    %p19 = pneg %p18
  $region19: #{forward.26} parent=0 // pred_check_branch
    %21 = sbr.rel (%p19) target = $region21
  $region20: #{forward.26} parent=0 // pred_region
    %22 = vst [vmem:[#allocation2] sm:$0xff] 0.0
    %23 = vst [vmem:[#allocation2 + $0x8] sm:$0xff] 0.0
  $region21: #{forward.26} parent=0 // pred_fallthru
    _
  %v24 = vld [vmem:[#allocation2] sm:$0xff]
  %v25 = vld [vmem:[#allocation2 + $0x8] sm:$0xff]
  %v26 = vld [vmem:[%s0] sm:$0xf]
  %v27 = vld [vmem:[%s0 + $0x4] sm:$0xf]
  %v28 = vld [vmem:[%s1] sm:$0xf]
  %v29 = vld [vmem:[%s1 + $0x4] sm:$0xf]
  %v30 = vld [vmem:[%s1 + $0x8] sm:$0xf]
  %v31 = vld [vmem:[%s1 + $0xc] sm:$0xf]
  %v32 = vld [vmem:[%s1 + $0x10] sm:$0xf]
  %v33 = vld [vmem:[%s1 + $0x14] sm:$0xf]
  %v34 = vld [vmem:[%s1 + $0x18] sm:$0xf]
  %v35 = vld [vmem:[%s1 + $0x1c] sm:$0xf]
  %v36 = vld [vmem:[%s1 + $0x20] sm:$0xf]
  %v37 = vld [vmem:[%s1 + $0x24] sm:$0xf]
  %v38 = vld [vmem:[%s1 + $0x28] sm:$0xf]
  %v39 = vld [vmem:[%s1 + $0x2c] sm:$0xf]
  %v40 = vld [vmem:[%s1 + $0x30] sm:$0xf]
  %v41 = vld [vmem:[%s1 + $0x34] sm:$0xf]
  %v42 = vld [vmem:[%s1 + $0x38] sm:$0xf]
  %v43 = vld [vmem:[%s1 + $0x3c] sm:$0xf]
  %v46 = vunpack.c.l.b16 %v26
  %v47 = vunpack.c.l.b16 %v27
  %v48 = vpack.c.b16 %v47, %v46
  %v66 = vunpack.c.l.b16 %v28
  %v67 = vunpack.c.l.b16 %v29
  %v68 = vunpack.c.l.b16 %v30
  %v69 = vunpack.c.l.b16 %v31
  %v70 = vunpack.c.l.b16 %v32
  %v71 = vunpack.c.l.b16 %v33
  %v72 = vunpack.c.l.b16 %v34
  %v73 = vunpack.c.l.b16 %v35
  %v74 = vunpack.c.l.b16 %v36
  %v75 = vunpack.c.l.b16 %v37
  %v76 = vunpack.c.l.b16 %v38
  %v77 = vunpack.c.l.b16 %v39
  %v78 = vunpack.c.l.b16 %v40
  %v79 = vunpack.c.l.b16 %v41
  %v80 = vunpack.c.l.b16 %v42
  %v81 = vunpack.c.l.b16 %v43
  %v82 = vpack.c.b16 %v67, %v66
  %v83 = vpack.c.b16 %v69, %v68
  %v84 = vpack.c.b16 %v71, %v70
  %v85 = vpack.c.b16 %v73, %v72
  %v86 = vpack.c.b16 %v75, %v74
  %v87 = vpack.c.b16 %v77, %v76
  %v88 = vpack.c.b16 %v79, %v78
  %v89 = vpack.c.b16 %v81, %v80
  %98 = vmatprep.subr.bf16.mxu0 0
  %99 = vmatpush1.bf16.msra.mxu0 %v89
  %100 = vmatprep.subr.bf16.mxu0 0
  %101 = vmatpush1.bf16.msra.mxu0 %v88
  %102 = vmatprep.subr.bf16.mxu0 0
  %103 = vmatpush1.bf16.msra.mxu0 %v87
  %104 = vmatprep.subr.bf16.mxu0 0
  %105 = vmatpush1.bf16.msra.mxu0 %v86
  %106 = vmatprep.subr.bf16.mxu0 0
  %107 = vmatpush1.bf16.msra.mxu0 %v85
  %108 = vmatprep.subr.bf16.mxu0 0
  %109 = vmatpush1.bf16.msra.mxu0 %v84
  %110 = vmatprep.subr.bf16.mxu0 0
  %111 = vmatpush1.bf16.msra.mxu0 %v83
  %112 = vmatprep.subr.bf16.mxu0 0
  %113 = vmatpush1.bf16.msra.mxu0 %v82
  %114 = vmatprep.subr.bf16.mxu0 0
  %115 = vmatpush2.bf16.msra.mxu0 0
  %116 = vmatprep.subr.bf16.mxu0 0
  %117 = vmatpush2.bf16.msra.mxu0 0
  %118 = vmatprep.subr.bf16.mxu0 0
  %119 = vmatpush2.bf16.msra.mxu0 0
  %120 = vmatprep.subr.bf16.mxu0 0
  %121 = vmatpush2.bf16.msra.mxu0 0
  %122 = vmatprep.subr.bf16.mxu0 0
  %123 = vmatpush2.bf16.msra.mxu0 0
  %124 = vmatprep.subr.bf16.mxu0 0
  %125 = vmatpush2.bf16.msra.mxu0 0
  %126 = vmatprep.subr.bf16.mxu0 0
  %127 = vmatpush2.bf16.msra.mxu0 0
  %128 = vmatprep.subr.bf16.mxu0 0
  %129 = vmatpush2.bf16.msra.mxu0 0
  %130 = vmatprep.mubr.bf16.mxu0 0
  %131 = vmatmul.mubr.bf16.gmra.mxu0 %v48
  %v132 = vpop.f32.mrf.mxu0
  %v133 = vadd.f32 0.0, %v132
  %v134 = vpop.f32.mrf.mxu0
  %v135 = vpop.f32.mrf.mxu0
  %v136 = vadd.f32 0.0, %v135
  %v137 = vpop.f32.mrf.mxu0
  %138 = vdwg.mxu0
  %v139 = vadd.f32 %v24, %v133
  %v140 = vadd.f32 %v25, %v136
  %141 = vst [vmem:[#allocation2] sm:$0xff] %v139
  %142 = vst [vmem:[#allocation2 + $0x8] sm:$0xff] %v140
  // Predicated region
  $region22: #{forward.26} parent=0 // pred_check
    %p143 = pneg %p18
  $region23: #{forward.26} parent=0 // pred_check_branch
    %145 = sbr.rel (%p143) target = $region25
  $region24: #{forward.26} parent=0 // pred_region
    %v146 = vld [vmem:[#allocation2] sm:$0xff]
    %v147 = vld [vmem:[#allocation2 + $0x8] sm:$0xff]
    %v148 = vld [vmem:[%s2] sm:$0x1]
    %v150 = vlaneseq
    %v151 = vshrl.u32 %v150, 7
    %v152 = vsub.s32 0, %v151
    %v153 = vrot.slane %v148, %v152
    %v155 = vadd.f32 %v146, %v153
    %v156 = vadd.f32 %v147, %v153
    %v157 = vld [vmem:[%s3] sm:$0xff]
    %v158 = vld [vmem:[%s3 + $0x8] sm:$0xff]
    %v159 = vadd.f32 %v155, %v157
    %v160 = vadd.f32 %v156, %v158
    %161 = vst [vmem:[%s4] sm:$0xff] %v159
    %162 = vst [vmem:[%s4 + $0x8] sm:$0xff] %v160
  $region25: #{forward.26} parent=0 // pred_fallthru
    _
  // Predicated region
  $region26: #{forward.26} parent=0 // pred_check
    _
  $region27: #{forward.26} parent=0 // pred_check_branch
    %164 = sbr.rel (0) target = $region29
  $region28: #{forward.26} parent=0 // pred_region
    _
  $region29: #{forward.26} parent=0 // pred_fallthru
    _
  // Predicated region
  $region30: #{forward.26} parent=0 // pred_check
    _
  $region31: #{forward.26} parent=0 // pred_check_branch
    %166 = sbr.rel (0) target = $region33
  $region32: #{forward.26} parent=0 // pred_region
    _
  $region33: #{forward.26} parent=0 // pred_fallthru
    _

// kernel: forward.27
$region0: #{forward.27}
  #allocation0 [shape = 'u32[]', space=smem, size = 0x4, offset = 0x4, fixed_abs, tag = 'smem constant byte address 0x4 - core index']
  #allocation1 [shape = 'u32[144,128]{1,0:T(1,128)}', space=vmem, size = 0x12000, scoped, tag = 'internal scratch']
  #allocation2 [shape = 'f32[16,256]{1,0:T(8,128)}', space=vmem, size = 0x4000, scoped, tag = 'scratch operand']
  %s0 = inlined_call_operand.vmem [shape: bf16[16,128], index: 0, kind: input, shape index: {}]
  %s1 = inlined_call_operand.vmem [shape: bf16[128,256], index: 1, kind: input, shape index: {}]
  %s2 = inlined_call_operand.vmem [shape: f32[1,256], index: 2, kind: input, shape index: {}]
  %s3 = inlined_call_operand.vmem [shape: f32[16,256], index: 3, kind: output, shape index: {}]
  %s4 = sld [smem:[#allocation0]]
  $region30: #{forward.27} parent=0
    _
  %s6 = ssub.s32 1, %s4
  %s7 = scalar_select 0, %s6, %s4
  // Predicated region
  $region2: #{forward.27} parent=0 // pred_check
    _
  $region3: #{forward.27} parent=0 // pred_check_branch
    %9 = sbr.rel (0) target = $region5
  $region4: #{forward.27} parent=0 // pred_region
    _
  $region5: #{forward.27} parent=0 // pred_fallthru
    _
  // Predicated region
  $region6: #{forward.27} parent=0 // pred_check
    _
  $region7: #{forward.27} parent=0 // pred_check_branch
    %11 = sbr.rel (0) target = $region9
  $region8: #{forward.27} parent=0 // pred_region
    _
  $region9: #{forward.27} parent=0 // pred_fallthru
    _
  // Predicated region
  $region10: #{forward.27} parent=0 // pred_check
    _
  $region11: #{forward.27} parent=0 // pred_check_branch
    %13 = sbr.rel (0) target = $region13
  $region12: #{forward.27} parent=0 // pred_region
    _
  $region13: #{forward.27} parent=0 // pred_fallthru
    _
  %p15 = scmp.eq.s32.totalorder 0, 0
  // Predicated region
  $region14: #{forward.27} parent=0 // pred_check
    %p16 = pneg %p15
  $region15: #{forward.27} parent=0 // pred_check_branch
    %18 = sbr.rel (%p16) target = $region17
  $region16: #{forward.27} parent=0 // pred_region
    %19 = vst [vmem:[#allocation2] sm:$0xff] 0.0
    %20 = vst [vmem:[#allocation2 + $0x8] sm:$0xff] 0.0
    %21 = vst [vmem:[#allocation2 + $0x10] sm:$0xff] 0.0
    %22 = vst [vmem:[#allocation2 + $0x18] sm:$0xff] 0.0
  $region17: #{forward.27} parent=0 // pred_fallthru
    _
  %v23 = vld [vmem:[#allocation2] sm:$0xff]
  %v24 = vld [vmem:[#allocation2 + $0x8] sm:$0xff]
  %v25 = vld [vmem:[#allocation2 + $0x10] sm:$0xff]
  %v26 = vld [vmem:[#allocation2 + $0x18] sm:$0xff]
  %v27 = vld [vmem:[%s0] sm:$0xf]
  %v28 = vld [vmem:[%s0 + $0x4] sm:$0xf]
  %v29 = vld [vmem:[%s1] sm:$0xff]
  %v30 = vld [vmem:[%s1 + $0x8] sm:$0xff]
  %v31 = vld [vmem:[%s1 + $0x10] sm:$0xff]
  %v32 = vld [vmem:[%s1 + $0x18] sm:$0xff]
  %v33 = vld [vmem:[%s1 + $0x20] sm:$0xff]
  %v34 = vld [vmem:[%s1 + $0x28] sm:$0xff]
  %v35 = vld [vmem:[%s1 + $0x30] sm:$0xff]
  %v36 = vld [vmem:[%s1 + $0x38] sm:$0xff]
  %v37 = vld [vmem:[%s1 + $0x40] sm:$0xff]
  %v38 = vld [vmem:[%s1 + $0x48] sm:$0xff]
  %v39 = vld [vmem:[%s1 + $0x50] sm:$0xff]
  %v40 = vld [vmem:[%s1 + $0x58] sm:$0xff]
  %v41 = vld [vmem:[%s1 + $0x60] sm:$0xff]
  %v42 = vld [vmem:[%s1 + $0x68] sm:$0xff]
  %v43 = vld [vmem:[%s1 + $0x70] sm:$0xff]
  %v44 = vld [vmem:[%s1 + $0x78] sm:$0xff]
  %v47 = vunpack.c.l.b16 %v27
  %v48 = vunpack.c.l.b16 %v28
  %v49 = vpack.c.b16 %v48, %v47
  %v67 = vunpack.c.l.b16 %v29
  %v68 = vunpack.c.h.b16 %v29
  %v69 = vunpack.c.l.b16 %v30
  %v70 = vunpack.c.h.b16 %v30
  %v71 = vunpack.c.l.b16 %v31
  %v72 = vunpack.c.h.b16 %v31
  %v73 = vunpack.c.l.b16 %v32
  %v74 = vunpack.c.h.b16 %v32
  %v75 = vunpack.c.l.b16 %v33
  %v76 = vunpack.c.h.b16 %v33
  %v77 = vunpack.c.l.b16 %v34
  %v78 = vunpack.c.h.b16 %v34
  %v79 = vunpack.c.l.b16 %v35
  %v80 = vunpack.c.h.b16 %v35
  %v81 = vunpack.c.l.b16 %v36
  %v82 = vunpack.c.h.b16 %v36
  %v83 = vunpack.c.l.b16 %v37
  %v84 = vunpack.c.h.b16 %v37
  %v85 = vunpack.c.l.b16 %v38
  %v86 = vunpack.c.h.b16 %v38
  %v87 = vunpack.c.l.b16 %v39
  %v88 = vunpack.c.h.b16 %v39
  %v89 = vunpack.c.l.b16 %v40
  %v90 = vunpack.c.h.b16 %v40
  %v91 = vunpack.c.l.b16 %v41
  %v92 = vunpack.c.h.b16 %v41
  %v93 = vunpack.c.l.b16 %v42
  %v94 = vunpack.c.h.b16 %v42
  %v95 = vunpack.c.l.b16 %v43
  %v96 = vunpack.c.h.b16 %v43
  %v97 = vunpack.c.l.b16 %v44
  %v98 = vunpack.c.h.b16 %v44
  %v99 = vpack.c.b16 %v69, %v67
  %v100 = vpack.c.b16 %v70, %v68
  %v101 = vpack.c.b16 %v73, %v71
  %v102 = vpack.c.b16 %v74, %v72
  %v103 = vpack.c.b16 %v77, %v75
  %v104 = vpack.c.b16 %v78, %v76
  %v105 = vpack.c.b16 %v81, %v79
  %v106 = vpack.c.b16 %v82, %v80
  %v107 = vpack.c.b16 %v85, %v83
  %v108 = vpack.c.b16 %v86, %v84
  %v109 = vpack.c.b16 %v89, %v87
  %v110 = vpack.c.b16 %v90, %v88
  %v111 = vpack.c.b16 %v93, %v91
  %v112 = vpack.c.b16 %v94, %v92
  %v113 = vpack.c.b16 %v97, %v95
  %v114 = vpack.c.b16 %v98, %v96
  %131 = vmatprep.subr.bf16.mxu0 %v114
  %132 = vmatpush1.bf16.msra.mxu0 %v113
  %133 = vmatprep.subr.bf16.mxu0 %v112
  %134 = vmatpush1.bf16.msra.mxu0 %v111
  %135 = vmatprep.subr.bf16.mxu0 %v110
  %136 = vmatpush1.bf16.msra.mxu0 %v109
  %137 = vmatprep.subr.bf16.mxu0 %v108
  %138 = vmatpush1.bf16.msra.mxu0 %v107
  %139 = vmatprep.subr.bf16.mxu0 %v106
  %140 = vmatpush1.bf16.msra.mxu0 %v105
  %141 = vmatprep.subr.bf16.mxu0 %v104
  %142 = vmatpush1.bf16.msra.mxu0 %v103
  %143 = vmatprep.subr.bf16.mxu0 %v102
  %144 = vmatpush1.bf16.msra.mxu0 %v101
  %145 = vmatprep.subr.bf16.mxu0 %v100
  %146 = vmatpush1.bf16.msra.mxu0 %v99
  %147 = vmatprep.subr.bf16.mxu0 0
  %148 = vmatpush2.bf16.msra.mxu0 0
  %149 = vmatprep.subr.bf16.mxu0 0
  %150 = vmatpush2.bf16.msra.mxu0 0
  %151 = vmatprep.subr.bf16.mxu0 0
  %152 = vmatpush2.bf16.msra.mxu0 0
  %153 = vmatprep.subr.bf16.mxu0 0
  %154 = vmatpush2.bf16.msra.mxu0 0
  %155 = vmatprep.subr.bf16.mxu0 0
  %156 = vmatpush2.bf16.msra.mxu0 0
  %157 = vmatprep.subr.bf16.mxu0 0
  %158 = vmatpush2.bf16.msra.mxu0 0
  %159 = vmatprep.subr.bf16.mxu0 0
  %160 = vmatpush2.bf16.msra.mxu0 0
  %161 = vmatprep.subr.bf16.mxu0 0
  %162 = vmatpush2.bf16.msra.mxu0 0
  %163 = vmatprep.mubr.bf16.mxu0 0
  %164 = vmatmul.mubr.bf16.gmra.mxu0 %v49
  %v165 = vpop.f32.mrf.mxu0
  %v166 = vadd.f32 0.0, %v165
  %v167 = vpop.f32.mrf.mxu0
  %v168 = vadd.f32 0.0, %v167
  %v169 = vpop.f32.mrf.mxu0
  %v170 = vadd.f32 0.0, %v169
  %v171 = vpop.f32.mrf.mxu0
  %v172 = vadd.f32 0.0, %v171
  %173 = vdwg.mxu0
  %v174 = vadd.f32 %v23, %v166
  %v175 = vadd.f32 %v24, %v168
  %v176 = vadd.f32 %v25, %v170
  %v177 = vadd.f32 %v26, %v172
  %178 = vst [vmem:[#allocation2] sm:$0xff] %v174
  %179 = vst [vmem:[#allocation2 + $0x8] sm:$0xff] %v175
  %180 = vst [vmem:[#allocation2 + $0x10] sm:$0xff] %v176
  %181 = vst [vmem:[#allocation2 + $0x18] sm:$0xff] %v177
  // Predicated region
  $region18: #{forward.27} parent=0 // pred_check
    %p182 = pneg %p15
  $region19: #{forward.27} parent=0 // pred_check_branch
    %184 = sbr.rel (%p182) target = $region21
  $region20: #{forward.27} parent=0 // pred_region
    %v185 = vld [vmem:[#allocation2] sm:$0xff]
    %v186 = vld [vmem:[#allocation2 + $0x8] sm:$0xff]
    %v187 = vld [vmem:[#allocation2 + $0x10] sm:$0xff]
    %v188 = vld [vmem:[#allocation2 + $0x18] sm:$0xff]
    %v189 = vld [vmem:[%s2] sm:$0x3]
    %v191 = vlaneseq
    %v192 = vshrl.u32 %v191, 7
    %v193 = vsub.s32 0, %v192
    %v194 = vrot.slane %v189, %v193
    %v195 = vlaneseq
    %v196 = vshrl.u32 %v195, 7
    %v197 = vsub.s32 1, %v196
    %v198 = vrot.slane %v189, %v197
    %v201 = vadd.f32 %v185, %v194
    %v202 = vadd.f32 %v186, %v198
    %v203 = vadd.f32 %v187, %v194
    %v204 = vadd.f32 %v188, %v198
    %v205 = vmax.f32 %v201, 0.0
    %v206 = vmax.f32 %v202, 0.0
    %v207 = vmax.f32 %v203, 0.0
    %v208 = vmax.f32 %v204, 0.0
    %209 = vst [vmem:[%s3] sm:$0xff] %v205
    %210 = vst [vmem:[%s3 + $0x8] sm:$0xff] %v206
    %211 = vst [vmem:[%s3 + $0x10] sm:$0xff] %v207
    %212 = vst [vmem:[%s3 + $0x18] sm:$0xff] %v208
  $region21: #{forward.27} parent=0 // pred_fallthru
    _
  // Predicated region
  $region22: #{forward.27} parent=0 // pred_check
    _
  $region23: #{forward.27} parent=0 // pred_check_branch
    %214 = sbr.rel (0) target = $region25
  $region24: #{forward.27} parent=0 // pred_region
    _
  $region25: #{forward.27} parent=0 // pred_fallthru
    _
  // Predicated region
  $region26: #{forward.27} parent=0 // pred_check
    _
  $region27: #{forward.27} parent=0 // pred_check_branch
    %216 = sbr.rel (0) target = $region29
  $region28: #{forward.27} parent=0 // pred_region
    _
  $region29: #{forward.27} parent=0 // pred_fallthru
    _

// kernel: forward.28
$region0: #{forward.28}
  #allocation0 [shape = 'u32[]', space=smem, size = 0x4, offset = 0x4, fixed_abs, tag = 'smem constant byte address 0x4 - core index']
  #allocation1 [shape = 'u32[144,128]{1,0:T(1,128)}', space=vmem, size = 0x12000, scoped, tag = 'internal scratch']
  #allocation2 [shape = 'f32[16,128]{1,0:T(8,128)}', space=vmem, size = 0x2000, scoped, tag = 'scratch operand']
  %s0 = inlined_call_operand.vmem [shape: bf16[16,256], index: 0, kind: input, shape index: {}]
  %s1 = inlined_call_operand.vmem [shape: bf16[256,128], index: 1, kind: input, shape index: {}]
  %s2 = inlined_call_operand.vmem [shape: f32[1,128], index: 2, kind: input, shape index: {}]
  %s3 = inlined_call_operand.vmem [shape: f32[16,128], index: 3, kind: input, shape index: {}]
  %s4 = inlined_call_operand.vmem [shape: f32[16,128], index: 4, kind: output, shape index: {}]
  %s5 = sld [smem:[#allocation0]]
  $region34: #{forward.28} parent=0
    _
  %s7 = ssub.s32 1, %s5
  %s8 = scalar_select 0, %s7, %s5
  // Predicated region
  $region2: #{forward.28} parent=0 // pred_check
    _
  $region3: #{forward.28} parent=0 // pred_check_branch
    %10 = sbr.rel (0) target = $region5
  $region4: #{forward.28} parent=0 // pred_region
    _
  $region5: #{forward.28} parent=0 // pred_fallthru
    _
  // Predicated region
  $region6: #{forward.28} parent=0 // pred_check
    _
  $region7: #{forward.28} parent=0 // pred_check_branch
    %12 = sbr.rel (0) target = $region9
  $region8: #{forward.28} parent=0 // pred_region
    _
  $region9: #{forward.28} parent=0 // pred_fallthru
    _
  // Predicated region
  $region10: #{forward.28} parent=0 // pred_check
    _
  $region11: #{forward.28} parent=0 // pred_check_branch
    %14 = sbr.rel (0) target = $region13
  $region12: #{forward.28} parent=0 // pred_region
    _
  $region13: #{forward.28} parent=0 // pred_fallthru
    _
  // Predicated region
  $region14: #{forward.28} parent=0 // pred_check
    _
  $region15: #{forward.28} parent=0 // pred_check_branch
    %16 = sbr.rel (0) target = $region17
  $region16: #{forward.28} parent=0 // pred_region
    _
  $region17: #{forward.28} parent=0 // pred_fallthru
    _
  %p18 = scmp.eq.s32.totalorder 0, 0
  // Predicated region
  $region18: #{forward.28} parent=0 // pred_check
    %p19 = pneg %p18
  $region19: #{forward.28} parent=0 // pred_check_branch
    %21 = sbr.rel (%p19) target = $region21
  $region20: #{forward.28} parent=0 // pred_region
    %22 = vst [vmem:[#allocation2] sm:$0xff] 0.0
    %23 = vst [vmem:[#allocation2 + $0x8] sm:$0xff] 0.0
  $region21: #{forward.28} parent=0 // pred_fallthru
    _
  %v24 = vld [vmem:[#allocation2] sm:$0xff]
  %v25 = vld [vmem:[#allocation2 + $0x8] sm:$0xff]
  %v26 = vld [vmem:[%s0] sm:$0xff]
  %v27 = vld [vmem:[%s0 + $0x8] sm:$0xff]
  %v28 = vld [vmem:[%s1] sm:$0xf]
  %v29 = vld [vmem:[%s1 + $0x4] sm:$0xf]
  %v30 = vld [vmem:[%s1 + $0x8] sm:$0xf]
  %v31 = vld [vmem:[%s1 + $0xc] sm:$0xf]
  %v32 = vld [vmem:[%s1 + $0x10] sm:$0xf]
  %v33 = vld [vmem:[%s1 + $0x14] sm:$0xf]
  %v34 = vld [vmem:[%s1 + $0x18] sm:$0xf]
  %v35 = vld [vmem:[%s1 + $0x1c] sm:$0xf]
  %v36 = vld [vmem:[%s1 + $0x20] sm:$0xf]
  %v37 = vld [vmem:[%s1 + $0x24] sm:$0xf]
  %v38 = vld [vmem:[%s1 + $0x28] sm:$0xf]
  %v39 = vld [vmem:[%s1 + $0x2c] sm:$0xf]
  %v40 = vld [vmem:[%s1 + $0x30] sm:$0xf]
  %v41 = vld [vmem:[%s1 + $0x34] sm:$0xf]
  %v42 = vld [vmem:[%s1 + $0x38] sm:$0xf]
  %v43 = vld [vmem:[%s1 + $0x3c] sm:$0xf]
  %v44 = vld [vmem:[%s1 + $0x40] sm:$0xf]
  %v45 = vld [vmem:[%s1 + $0x44] sm:$0xf]
  %v46 = vld [vmem:[%s1 + $0x48] sm:$0xf]
  %v47 = vld [vmem:[%s1 + $0x4c] sm:$0xf]
  %v48 = vld [vmem:[%s1 + $0x50] sm:$0xf]
  %v49 = vld [vmem:[%s1 + $0x54] sm:$0xf]
  %v50 = vld [vmem:[%s1 + $0x58] sm:$0xf]
  %v51 = vld [vmem:[%s1 + $0x5c] sm:$0xf]
  %v52 = vld [vmem:[%s1 + $0x60] sm:$0xf]
  %v53 = vld [vmem:[%s1 + $0x64] sm:$0xf]
  %v54 = vld [vmem:[%s1 + $0x68] sm:$0xf]
  %v55 = vld [vmem:[%s1 + $0x6c] sm:$0xf]
  %v56 = vld [vmem:[%s1 + $0x70] sm:$0xf]
  %v57 = vld [vmem:[%s1 + $0x74] sm:$0xf]
  %v58 = vld [vmem:[%s1 + $0x78] sm:$0xf]
  %v59 = vld [vmem:[%s1 + $0x7c] sm:$0xf]
  %v62 = vunpack.c.l.b16 %v26
  %v63 = vunpack.c.h.b16 %v26
  %v64 = vunpack.c.l.b16 %v27
  %v65 = vunpack.c.h.b16 %v27
  %v66 = vpack.c.b16 %v64, %v62
  %v67 = vpack.c.b16 %v65, %v63
  %v102 = vunpack.c.l.b16 %v28
  %v103 = vunpack.c.l.b16 %v29
  %v104 = vunpack.c.l.b16 %v30
  %v105 = vunpack.c.l.b16 %v31
  %v106 = vunpack.c.l.b16 %v32
  %v107 = vunpack.c.l.b16 %v33
  %v108 = vunpack.c.l.b16 %v34
  %v109 = vunpack.c.l.b16 %v35
  %v110 = vunpack.c.l.b16 %v36
  %v111 = vunpack.c.l.b16 %v37
  %v112 = vunpack.c.l.b16 %v38
  %v113 = vunpack.c.l.b16 %v39
  %v114 = vunpack.c.l.b16 %v40
  %v115 = vunpack.c.l.b16 %v41
  %v116 = vunpack.c.l.b16 %v42
  %v117 = vunpack.c.l.b16 %v43
  %v118 = vunpack.c.l.b16 %v44
  %v119 = vunpack.c.l.b16 %v45
  %v120 = vunpack.c.l.b16 %v46
  %v121 = vunpack.c.l.b16 %v47
  %v122 = vunpack.c.l.b16 %v48
  %v123 = vunpack.c.l.b16 %v49
  %v124 = vunpack.c.l.b16 %v50
  %v125 = vunpack.c.l.b16 %v51
  %v126 = vunpack.c.l.b16 %v52
  %v127 = vunpack.c.l.b16 %v53
  %v128 = vunpack.c.l.b16 %v54
  %v129 = vunpack.c.l.b16 %v55
  %v130 = vunpack.c.l.b16 %v56
  %v131 = vunpack.c.l.b16 %v57
  %v132 = vunpack.c.l.b16 %v58
  %v133 = vunpack.c.l.b16 %v59
  %v134 = vpack.c.b16 %v103, %v102
  %v135 = vpack.c.b16 %v105, %v104
  %v136 = vpack.c.b16 %v107, %v106
  %v137 = vpack.c.b16 %v109, %v108
  %v138 = vpack.c.b16 %v111, %v110
  %v139 = vpack.c.b16 %v113, %v112
  %v140 = vpack.c.b16 %v115, %v114
  %v141 = vpack.c.b16 %v117, %v116
  %v142 = vpack.c.b16 %v119, %v118
  %v143 = vpack.c.b16 %v121, %v120
  %v144 = vpack.c.b16 %v123, %v122
  %v145 = vpack.c.b16 %v125, %v124
  %v146 = vpack.c.b16 %v127, %v126
  %v147 = vpack.c.b16 %v129, %v128
  %v148 = vpack.c.b16 %v131, %v130
  %v149 = vpack.c.b16 %v133, %v132
  %166 = vmatprep.subr.bf16.mxu0 0
  %167 = vmatpush1.bf16.msra.mxu0 %v141
  %168 = vmatprep.subr.bf16.mxu0 0
  %169 = vmatpush1.bf16.msra.mxu0 %v140
  %170 = vmatprep.subr.bf16.mxu0 0
  %171 = vmatpush1.bf16.msra.mxu0 %v139
  %172 = vmatprep.subr.bf16.mxu0 0
  %173 = vmatpush1.bf16.msra.mxu0 %v138
  %174 = vmatprep.subr.bf16.mxu0 0
  %175 = vmatpush1.bf16.msra.mxu0 %v137
  %176 = vmatprep.subr.bf16.mxu0 0
  %177 = vmatpush1.bf16.msra.mxu0 %v136
  %178 = vmatprep.subr.bf16.mxu0 0
  %179 = vmatpush1.bf16.msra.mxu0 %v135
  %180 = vmatprep.subr.bf16.mxu0 0
  %181 = vmatpush1.bf16.msra.mxu0 %v134
  %182 = vmatprep.subr.bf16.mxu0 0
  %183 = vmatpush2.bf16.msra.mxu0 %v149
  %184 = vmatprep.subr.bf16.mxu0 0
  %185 = vmatpush2.bf16.msra.mxu0 %v148
  %186 = vmatprep.subr.bf16.mxu0 0
  %187 = vmatpush2.bf16.msra.mxu0 %v147
  %188 = vmatprep.subr.bf16.mxu0 0
  %189 = vmatpush2.bf16.msra.mxu0 %v146
  %190 = vmatprep.subr.bf16.mxu0 0
  %191 = vmatpush2.bf16.msra.mxu0 %v145
  %192 = vmatprep.subr.bf16.mxu0 0
  %193 = vmatpush2.bf16.msra.mxu0 %v144
  %194 = vmatprep.subr.bf16.mxu0 0
  %195 = vmatpush2.bf16.msra.mxu0 %v143
  %196 = vmatprep.subr.bf16.mxu0 0
  %197 = vmatpush2.bf16.msra.mxu0 %v142
  %198 = vmatprep.mubr.bf16.mxu0 %v67
  %199 = vmatmul.mubr.bf16.gmra.mxu0 %v66
  %v200 = vpop.f32.mrf.mxu0
  %v201 = vadd.f32 0.0, %v200
  %v202 = vpop.f32.mrf.mxu0
  %v203 = vpop.f32.mrf.mxu0
  %v204 = vadd.f32 0.0, %v203
  %v205 = vpop.f32.mrf.mxu0
  %206 = vdwg.mxu0
  %v207 = vadd.f32 %v24, %v201
  %v208 = vadd.f32 %v25, %v204
  %209 = vst [vmem:[#allocation2] sm:$0xff] %v207
  %210 = vst [vmem:[#allocation2 + $0x8] sm:$0xff] %v208
  // Predicated region
  $region22: #{forward.28} parent=0 // pred_check
    %p211 = pneg %p18
  $region23: #{forward.28} parent=0 // pred_check_branch
    %213 = sbr.rel (%p211) target = $region25
  $region24: #{forward.28} parent=0 // pred_region
    %v214 = vld [vmem:[#allocation2] sm:$0xff]
    %v215 = vld [vmem:[#allocation2 + $0x8] sm:$0xff]
    %v216 = vld [vmem:[%s2] sm:$0x1]
    %v218 = vlaneseq
    %v219 = vshrl.u32 %v218, 7
    %v220 = vsub.s32 0, %v219
    %v221 = vrot.slane %v216, %v220
    %v223 = vadd.f32 %v214, %v221
    %v224 = vadd.f32 %v215, %v221
    %v225 = vld [vmem:[%s3] sm:$0xff]
    %v226 = vld [vmem:[%s3 + $0x8] sm:$0xff]
    %v227 = vadd.f32 %v223, %v225
    %v228 = vadd.f32 %v224, %v226
    %229 = vst [vmem:[%s4] sm:$0xff] %v227
    %230 = vst [vmem:[%s4 + $0x8] sm:$0xff] %v228
  $region25: #{forward.28} parent=0 // pred_fallthru
    _
  // Predicated region
  $region26: #{forward.28} parent=0 // pred_check
    _
  $region27: #{forward.28} parent=0 // pred_check_branch
    %232 = sbr.rel (0) target = $region29
  $region28: #{forward.28} parent=0 // pred_region
    _
  $region29: #{forward.28} parent=0 // pred_fallthru
    _
  // Predicated region
  $region30: #{forward.28} parent=0 // pred_check
    _
  $region31: #{forward.28} parent=0 // pred_check_branch
    %234 = sbr.rel (0) target = $region33
  $region32: #{forward.28} parent=0 // pred_region
    _
  $region33: #{forward.28} parent=0 // pred_fallthru
    _

// kernel: forward.34
$region0: #{forward.34}
  #allocation0 [shape = 'u32[]', space=smem, size = 0x4, offset = 0x4, fixed_abs, tag = 'smem constant byte address 0x4 - core index']
  #allocation1 [shape = 'u32[144,128]{1,0:T(1,128)}', space=vmem, size = 0x12000, scoped, tag = 'internal scratch']
  #allocation2 [shape = 'f32[16,128]{1,0:T(8,128)}', space=vmem, size = 0x2000, scoped, tag = 'scratch operand']
  %s0 = inlined_call_operand.vmem [shape: bf16[16,128], index: 0, kind: input, shape index: {}]
  %s1 = inlined_call_operand.vmem [shape: bf16[128,128], index: 1, kind: input, shape index: {}]
  %s2 = inlined_call_operand.vmem [shape: f32[1,128], index: 2, kind: input, shape index: {}]
  %s3 = inlined_call_operand.vmem [shape: f32[16,128], index: 3, kind: output, shape index: {}]
  %s4 = sld [smem:[#allocation0]]
  $region30: #{forward.34} parent=0
    _
  %s6 = ssub.s32 1, %s4
  %s7 = scalar_select 0, %s6, %s4
  // Predicated region
  $region2: #{forward.34} parent=0 // pred_check
    _
  $region3: #{forward.34} parent=0 // pred_check_branch
    %9 = sbr.rel (0) target = $region5
  $region4: #{forward.34} parent=0 // pred_region
    _
  $region5: #{forward.34} parent=0 // pred_fallthru
    _
  // Predicated region
  $region6: #{forward.34} parent=0 // pred_check
    _
  $region7: #{forward.34} parent=0 // pred_check_branch
    %11 = sbr.rel (0) target = $region9
  $region8: #{forward.34} parent=0 // pred_region
    _
  $region9: #{forward.34} parent=0 // pred_fallthru
    _
  // Predicated region
  $region10: #{forward.34} parent=0 // pred_check
    _
  $region11: #{forward.34} parent=0 // pred_check_branch
    %13 = sbr.rel (0) target = $region13
  $region12: #{forward.34} parent=0 // pred_region
    _
  $region13: #{forward.34} parent=0 // pred_fallthru
    _
  %p15 = scmp.eq.s32.totalorder 0, 0
  // Predicated region
  $region14: #{forward.34} parent=0 // pred_check
    %p16 = pneg %p15
  $region15: #{forward.34} parent=0 // pred_check_branch
    %18 = sbr.rel (%p16) target = $region17
  $region16: #{forward.34} parent=0 // pred_region
    %19 = vst [vmem:[#allocation2] sm:$0xff] 0.0
    %20 = vst [vmem:[#allocation2 + $0x8] sm:$0xff] 0.0
  $region17: #{forward.34} parent=0 // pred_fallthru
    _
  %v21 = vld [vmem:[#allocation2] sm:$0xff]
  %v22 = vld [vmem:[#allocation2 + $0x8] sm:$0xff]
  %v23 = vld [vmem:[%s0] sm:$0xf]
  %v24 = vld [vmem:[%s0 + $0x4] sm:$0xf]
  %v25 = vld [vmem:[%s1] sm:$0xf]
  %v26 = vld [vmem:[%s1 + $0x4] sm:$0xf]
  %v27 = vld [vmem:[%s1 + $0x8] sm:$0xf]
  %v28 = vld [vmem:[%s1 + $0xc] sm:$0xf]
  %v29 = vld [vmem:[%s1 + $0x10] sm:$0xf]
  %v30 = vld [vmem:[%s1 + $0x14] sm:$0xf]
  %v31 = vld [vmem:[%s1 + $0x18] sm:$0xf]
  %v32 = vld [vmem:[%s1 + $0x1c] sm:$0xf]
  %v33 = vld [vmem:[%s1 + $0x20] sm:$0xf]
  %v34 = vld [vmem:[%s1 + $0x24] sm:$0xf]
  %v35 = vld [vmem:[%s1 + $0x28] sm:$0xf]
  %v36 = vld [vmem:[%s1 + $0x2c] sm:$0xf]
  %v37 = vld [vmem:[%s1 + $0x30] sm:$0xf]
  %v38 = vld [vmem:[%s1 + $0x34] sm:$0xf]
  %v39 = vld [vmem:[%s1 + $0x38] sm:$0xf]
  %v40 = vld [vmem:[%s1 + $0x3c] sm:$0xf]
  %v43 = vunpack.c.l.b16 %v23
  %v44 = vunpack.c.l.b16 %v24
  %v45 = vpack.c.b16 %v44, %v43
  %v63 = vunpack.c.l.b16 %v25
  %v64 = vunpack.c.l.b16 %v26
  %v65 = vunpack.c.l.b16 %v27
  %v66 = vunpack.c.l.b16 %v28
  %v67 = vunpack.c.l.b16 %v29
  %v68 = vunpack.c.l.b16 %v30
  %v69 = vunpack.c.l.b16 %v31
  %v70 = vunpack.c.l.b16 %v32
  %v71 = vunpack.c.l.b16 %v33
  %v72 = vunpack.c.l.b16 %v34
  %v73 = vunpack.c.l.b16 %v35
  %v74 = vunpack.c.l.b16 %v36
  %v75 = vunpack.c.l.b16 %v37
  %v76 = vunpack.c.l.b16 %v38
  %v77 = vunpack.c.l.b16 %v39
  %v78 = vunpack.c.l.b16 %v40
  %v79 = vpack.c.b16 %v64, %v63
  %v80 = vpack.c.b16 %v66, %v65
  %v81 = vpack.c.b16 %v68, %v67
  %v82 = vpack.c.b16 %v70, %v69
  %v83 = vpack.c.b16 %v72, %v71
  %v84 = vpack.c.b16 %v74, %v73
  %v85 = vpack.c.b16 %v76, %v75
  %v86 = vpack.c.b16 %v78, %v77
  %95 = vmatprep.subr.bf16.mxu0 0
  %96 = vmatpush1.bf16.msra.mxu0 %v86
  %97 = vmatprep.subr.bf16.mxu0 0
  %98 = vmatpush1.bf16.msra.mxu0 %v85
  %99 = vmatprep.subr.bf16.mxu0 0
  %100 = vmatpush1.bf16.msra.mxu0 %v84
  %101 = vmatprep.subr.bf16.mxu0 0
  %102 = vmatpush1.bf16.msra.mxu0 %v83
  %103 = vmatprep.subr.bf16.mxu0 0
  %104 = vmatpush1.bf16.msra.mxu0 %v82
  %105 = vmatprep.subr.bf16.mxu0 0
  %106 = vmatpush1.bf16.msra.mxu0 %v81
  %107 = vmatprep.subr.bf16.mxu0 0
  %108 = vmatpush1.bf16.msra.mxu0 %v80
  %109 = vmatprep.subr.bf16.mxu0 0
  %110 = vmatpush1.bf16.msra.mxu0 %v79
  %111 = vmatprep.subr.bf16.mxu0 0
  %112 = vmatpush2.bf16.msra.mxu0 0
  %113 = vmatprep.subr.bf16.mxu0 0
  %114 = vmatpush2.bf16.msra.mxu0 0
  %115 = vmatprep.subr.bf16.mxu0 0
  %116 = vmatpush2.bf16.msra.mxu0 0
  %117 = vmatprep.subr.bf16.mxu0 0
  %118 = vmatpush2.bf16.msra.mxu0 0
  %119 = vmatprep.subr.bf16.mxu0 0
  %120 = vmatpush2.bf16.msra.mxu0 0
  %121 = vmatprep.subr.bf16.mxu0 0
  %122 = vmatpush2.bf16.msra.mxu0 0
  %123 = vmatprep.subr.bf16.mxu0 0
  %124 = vmatpush2.bf16.msra.mxu0 0
  %125 = vmatprep.subr.bf16.mxu0 0
  %126 = vmatpush2.bf16.msra.mxu0 0
  %127 = vmatprep.mubr.bf16.mxu0 0
  %128 = vmatmul.mubr.bf16.gmra.mxu0 %v45
  %v129 = vpop.f32.mrf.mxu0
  %v130 = vadd.f32 0.0, %v129
  %v131 = vpop.f32.mrf.mxu0
  %v132 = vpop.f32.mrf.mxu0
  %v133 = vadd.f32 0.0, %v132
  %v134 = vpop.f32.mrf.mxu0
  %135 = vdwg.mxu0
  %v136 = vadd.f32 %v21, %v130
  %v137 = vadd.f32 %v22, %v133
  %138 = vst [vmem:[#allocation2] sm:$0xff] %v136
  %139 = vst [vmem:[#allocation2 + $0x8] sm:$0xff] %v137
  // Predicated region
  $region18: #{forward.34} parent=0 // pred_check
    %p140 = pneg %p15
  $region19: #{forward.34} parent=0 // pred_check_branch
    %142 = sbr.rel (%p140) target = $region21
  $region20: #{forward.34} parent=0 // pred_region
    %v143 = vld [vmem:[#allocation2] sm:$0xff]
    %v144 = vld [vmem:[#allocation2 + $0x8] sm:$0xff]
    %v145 = vld [vmem:[%s2] sm:$0x1]
    %v147 = vlaneseq
    %v148 = vshrl.u32 %v147, 7
    %v149 = vsub.s32 0, %v148
    %v150 = vrot.slane %v145, %v149
    %v152 = vadd.f32 %v143, %v150
    %v153 = vadd.f32 %v144, %v150
    %v154 = vmax.f32 %v152, 0.0
    %v155 = vmax.f32 %v153, 0.0
    %156 = vst [vmem:[%s3] sm:$0xff] %v154
    %157 = vst [vmem:[%s3 + $0x8] sm:$0xff] %v155
  $region21: #{forward.34} parent=0 // pred_fallthru
    _
  // Predicated region
  $region22: #{forward.34} parent=0 // pred_check
    _
  $region23: #{forward.34} parent=0 // pred_check_branch
    %159 = sbr.rel (0) target = $region25
  $region24: #{forward.34} parent=0 // pred_region
    _
  $region25: #{forward.34} parent=0 // pred_fallthru
    _
  // Predicated region
  $region26: #{forward.34} parent=0 // pred_check
    _
  $region27: #{forward.34} parent=0 // pred_check_branch
    %161 = sbr.rel (0) target = $region29
  $region28: #{forward.34} parent=0 // pred_region
    _
  $region29: #{forward.34} parent=0 // pred_fallthru
    _

// kernel: forward.35
$region0: #{forward.35}
  #allocation0 [shape = 'u32[]', space=smem, size = 0x4, offset = 0x4, fixed_abs, tag = 'smem constant byte address 0x4 - core index']
  #allocation1 [shape = 'u32[144,128]{1,0:T(1,128)}', space=vmem, size = 0x12000, scoped, tag = 'internal scratch']
  #allocation2 [shape = 'f32[16,128]{1,0:T(8,128)}', space=vmem, size = 0x2000, scoped, tag = 'scratch operand']
  %s0 = inlined_call_operand.vmem [shape: bf16[16,128], index: 0, kind: input, shape index: {}]
  %s1 = inlined_call_operand.vmem [shape: bf16[128,128], index: 1, kind: input, shape index: {}]
  %s2 = inlined_call_operand.vmem [shape: f32[1,128], index: 2, kind: input, shape index: {}]
  %s3 = inlined_call_operand.hbm [shape: f32[16,128], index: 3, kind: output, shape index: {}]
  %s4 = sld [smem:[#allocation0]]
  $region30: #{forward.35} parent=0
    _
  %s6 = ssub.s32 1, %s4
  %s7 = scalar_select 0, %s6, %s4
  $region1: #{forward.35} parent=0
    #allocation3 [shape = 'u8[8192]{0}', space=vmem, size = 0x2000, scoped, tag = 'output window, operand 0, single buffered']
    #allocation4 [shape = 's32[1]{0}', space=sflag, size = 0x4, scoped, tag = 'scoped memory for forward.35']
    %8 = vsyncpa [#allocation4], 0
    // Predicated region
    $region2: #{forward.35} parent=1 // pred_check
      _
    $region3: #{forward.35} parent=1 // pred_check_branch
      %10 = sbr.rel (0) target = $region5
    $region4: #{forward.35} parent=1 // pred_region
      _
    $region5: #{forward.35} parent=1 // pred_fallthru
      _
    // Predicated region
    $region6: #{forward.35} parent=1 // pred_check
      _
    $region7: #{forward.35} parent=1 // pred_check_branch
      %12 = sbr.rel (0) target = $region9
    $region8: #{forward.35} parent=1 // pred_region
      _
    $region9: #{forward.35} parent=1 // pred_fallthru
      _
    // Predicated region
    $region10: #{forward.35} parent=1 // pred_check
      _
    $region11: #{forward.35} parent=1 // pred_check_branch
      %14 = sbr.rel (0) target = $region13
    $region12: #{forward.35} parent=1 // pred_region
      _
    $region13: #{forward.35} parent=1 // pred_fallthru
      _
    %p16 = scmp.eq.s32.totalorder 0, 0
    // Predicated region
    $region14: #{forward.35} parent=1 // pred_check
      %p17 = pneg %p16
    $region15: #{forward.35} parent=1 // pred_check_branch
      %19 = sbr.rel (%p17) target = $region17
    $region16: #{forward.35} parent=1 // pred_region
      %20 = vst [vmem:[#allocation2] sm:$0xff] 0.0
      %21 = vst [vmem:[#allocation2 + $0x8] sm:$0xff] 0.0
    $region17: #{forward.35} parent=1 // pred_fallthru
      _
    %v22 = vld [vmem:[#allocation2] sm:$0xff]
    %v23 = vld [vmem:[#allocation2 + $0x8] sm:$0xff]
    %v24 = vld [vmem:[%s0] sm:$0xf]
    %v25 = vld [vmem:[%s0 + $0x4] sm:$0xf]
    %v26 = vld [vmem:[%s1] sm:$0xf]
    %v27 = vld [vmem:[%s1 + $0x4] sm:$0xf]
    %v28 = vld [vmem:[%s1 + $0x8] sm:$0xf]
    %v29 = vld [vmem:[%s1 + $0xc] sm:$0xf]
    %v30 = vld [vmem:[%s1 + $0x10] sm:$0xf]
    %v31 = vld [vmem:[%s1 + $0x14] sm:$0xf]
    %v32 = vld [vmem:[%s1 + $0x18] sm:$0xf]
    %v33 = vld [vmem:[%s1 + $0x1c] sm:$0xf]
    %v34 = vld [vmem:[%s1 + $0x20] sm:$0xf]
    %v35 = vld [vmem:[%s1 + $0x24] sm:$0xf]
    %v36 = vld [vmem:[%s1 + $0x28] sm:$0xf]
    %v37 = vld [vmem:[%s1 + $0x2c] sm:$0xf]
    %v38 = vld [vmem:[%s1 + $0x30] sm:$0xf]
    %v39 = vld [vmem:[%s1 + $0x34] sm:$0xf]
    %v40 = vld [vmem:[%s1 + $0x38] sm:$0xf]
    %v41 = vld [vmem:[%s1 + $0x3c] sm:$0xf]
    %v44 = vunpack.c.l.b16 %v24
    %v45 = vunpack.c.l.b16 %v25
    %v46 = vpack.c.b16 %v45, %v44
    %v64 = vunpack.c.l.b16 %v26
    %v65 = vunpack.c.l.b16 %v27
    %v66 = vunpack.c.l.b16 %v28
    %v67 = vunpack.c.l.b16 %v29
    %v68 = vunpack.c.l.b16 %v30
    %v69 = vunpack.c.l.b16 %v31
    %v70 = vunpack.c.l.b16 %v32
    %v71 = vunpack.c.l.b16 %v33
    %v72 = vunpack.c.l.b16 %v34
    %v73 = vunpack.c.l.b16 %v35
    %v74 = vunpack.c.l.b16 %v36
    %v75 = vunpack.c.l.b16 %v37
    %v76 = vunpack.c.l.b16 %v38
    %v77 = vunpack.c.l.b16 %v39
    %v78 = vunpack.c.l.b16 %v40
    %v79 = vunpack.c.l.b16 %v41
    %v80 = vpack.c.b16 %v65, %v64
    %v81 = vpack.c.b16 %v67, %v66
    %v82 = vpack.c.b16 %v69, %v68
    %v83 = vpack.c.b16 %v71, %v70
    %v84 = vpack.c.b16 %v73, %v72
    %v85 = vpack.c.b16 %v75, %v74
    %v86 = vpack.c.b16 %v77, %v76
    %v87 = vpack.c.b16 %v79, %v78
    %96 = vmatprep.subr.bf16.mxu0 0
    %97 = vmatpush1.bf16.msra.mxu0 %v87
    %98 = vmatprep.subr.bf16.mxu0 0
    %99 = vmatpush1.bf16.msra.mxu0 %v86
    %100 = vmatprep.subr.bf16.mxu0 0
    %101 = vmatpush1.bf16.msra.mxu0 %v85
    %102 = vmatprep.subr.bf16.mxu0 0
    %103 = vmatpush1.bf16.msra.mxu0 %v84
    %104 = vmatprep.subr.bf16.mxu0 0
    %105 = vmatpush1.bf16.msra.mxu0 %v83
    %106 = vmatprep.subr.bf16.mxu0 0
    %107 = vmatpush1.bf16.msra.mxu0 %v82
    %108 = vmatprep.subr.bf16.mxu0 0
    %109 = vmatpush1.bf16.msra.mxu0 %v81
    %110 = vmatprep.subr.bf16.mxu0 0
    %111 = vmatpush1.bf16.msra.mxu0 %v80
    %112 = vmatprep.subr.bf16.mxu0 0
    %113 = vmatpush2.bf16.msra.mxu0 0
    %114 = vmatprep.subr.bf16.mxu0 0
    %115 = vmatpush2.bf16.msra.mxu0 0
    %116 = vmatprep.subr.bf16.mxu0 0
    %117 = vmatpush2.bf16.msra.mxu0 0
    %118 = vmatprep.subr.bf16.mxu0 0
    %119 = vmatpush2.bf16.msra.mxu0 0
    %120 = vmatprep.subr.bf16.mxu0 0
    %121 = vmatpush2.bf16.msra.mxu0 0
    %122 = vmatprep.subr.bf16.mxu0 0
    %123 = vmatpush2.bf16.msra.mxu0 0
    %124 = vmatprep.subr.bf16.mxu0 0
    %125 = vmatpush2.bf16.msra.mxu0 0
    %126 = vmatprep.subr.bf16.mxu0 0
    %127 = vmatpush2.bf16.msra.mxu0 0
    %128 = vmatprep.mubr.bf16.mxu0 0
    %129 = vmatmul.mubr.bf16.gmra.mxu0 %v46
    %v130 = vpop.f32.mrf.mxu0
    %v131 = vadd.f32 0.0, %v130
    %v132 = vpop.f32.mrf.mxu0
    %v133 = vpop.f32.mrf.mxu0
    %v134 = vadd.f32 0.0, %v133
    %v135 = vpop.f32.mrf.mxu0
    %136 = vdwg.mxu0
    %v137 = vadd.f32 %v22, %v131
    %v138 = vadd.f32 %v23, %v134
    %139 = vst [vmem:[#allocation2] sm:$0xff] %v137
    %140 = vst [vmem:[#allocation2 + $0x8] sm:$0xff] %v138
    // Predicated region
    $region18: #{forward.35} parent=1 // pred_check
      %p141 = pneg %p16
    $region19: #{forward.35} parent=1 // pred_check_branch
      %143 = sbr.rel (%p141) target = $region21
    $region20: #{forward.35} parent=1 // pred_region
      %v144 = vld [vmem:[#allocation2] sm:$0xff]
      %v145 = vld [vmem:[#allocation2 + $0x8] sm:$0xff]
      %v146 = vld [vmem:[%s2] sm:$0x1]
      %v148 = vlaneseq
      %v149 = vshrl.u32 %v148, 7
      %v150 = vsub.s32 0, %v149
      %v151 = vrot.slane %v146, %v150
      %v153 = vadd.f32 %v144, %v151
      %v154 = vadd.f32 %v145, %v151
      %155 = vst [vmem:[#allocation3] sm:$0xff] %v153
      %156 = vst [vmem:[#allocation3 + $0x8] sm:$0xff] %v154
    $region21: #{forward.35} parent=1 // pred_fallthru
      _
    // Predicated region
    $region22: #{forward.35} parent=1 // pred_check
      _
    $region23: #{forward.35} parent=1 // pred_check_branch
      %158 = sbr.rel (0) target = $region25
    $region24: #{forward.35} parent=1 // pred_region
      %s160 = ssub.s32 256, 256
      %161 = vsyncadd [#allocation4], %s160
      %s162 = sshll.u32 [#allocation3], 4
      %s163 = int_to_ptr.vmem [resolvable:$true] %s162
      %168 = dma.vmem_to_hbm [thread:$0]  %s163, 256, %s3, [#allocation4], 128, 128, 8
    $region25: #{forward.35} parent=1 // pred_fallthru
      _
    // Predicated region
    $region26: #{forward.35} parent=1 // pred_check
      _
    $region27: #{forward.35} parent=1 // pred_check_branch
      %170 = sbr.rel (0) target = $region29
    $region28: #{forward.35} parent=1 // pred_region
      %171 = dma.done [#allocation4], 256
    $region29: #{forward.35} parent=1 // pred_fallthru
      _
    %172 = vsyncpa [#allocation4], 1

</llo_original>
